<compile_context>
chip_gen: v6e
topology: v6e:2x2x1
jax: 0.10.0
libtpu: 0.0.40
codegen_flags: <defaults>
</compile_context>

<pallas_src>
import functools

import jax
import jax.numpy as jnp
from jax.experimental import pallas as pl
from jax.experimental.pallas import tpu as pltpu

C_PAD = 128      # lane-dense padding for all block/feature channels
CI_IMG = 32      # padded image channels (3 -> 32); tiny tensor, keeps tap matmuls simple


def _rup(v, m=C_PAD):
    return ((v + m - 1) // m) * m


def _relu6(x):
    return jnp.clip(x, 0.0, 6.0)


def _cparams():
    return pltpu.CompilerParams(
        dimension_semantics=("parallel",),           # batch grid -> megacore on v7x
        vmem_limit_bytes=32 * 1024 * 1024,
    )


def _tap_stride2(src_ref, kh, kw, ho, wo):
    """Tap (kh, kw) of a stride-2 3x3 conv read from a column-phase buffer.

    src_ref[r, c, :] == padded_source[r, 2*c + (kw % 2), :].  Rows are de-interleaved with a
    free leading-dim reshape, so the access is a contiguous static slice (sublane-aligned).
    """
    c = src_ref.shape[-1]
    rows = src_ref[pl.ds(kh, 2 * ho), pl.ds(kw // 2, wo), :]      # rows kh .. kh+2*ho-1
    rows = rows.reshape(ho, 2, wo, c)
    return rows[:, 0]                                             # rows kh + 2*i


# ------------------------------ stem (3x3, stride 2) ------------------------------ #

def _stem_kernel(p0_ref, p1_ref, w_ref, b_ref, o_ref, *, ho, wo):
    ci = p0_ref.shape[-1]
    co = o_ref.shape[-1]
    acc = jnp.zeros((ho * wo, co), jnp.float32)
    for kh in range(3):
        for kw in range(3):
            src = p0_ref if kw % 2 == 0 else p1_ref
            tap = _tap_stride2(src, kh, kw, ho, wo)               # (ho, wo, ci) bf16
            acc = acc + jnp.dot(tap.reshape(ho * wo, ci), w_ref[kh * 3 + kw],
                                preferred_element_type=jnp.float32)
    y = _relu6(acc + b_ref[...])
    o_ref[...] = y.reshape(ho, wo, co).astype(o_ref.dtype)


def stem_conv(x, w, b):
    # x: (N, Hin, Win, CI_IMG) bf16; 'same' 3x3 stride-2 conv, im2col done in-kernel.
    n, hin, win, ci = x.shape
    assert hin % 2 == 0 and win % 2 == 0
    co = w.shape[-1]
    ho, wo = hin // 2, win // 2
    hp, wp2 = hin + 2, win // 2 + 1
    xp = jnp.pad(x, ((0, 0), (1, 1), (1, 1), (0, 0)))
    p0 = xp[:, :, 0::2, :]      # even columns of the padded image
    p1 = xp[:, :, 1::2, :]      # odd columns
    return pl.pallas_call(
        functools.partial(_stem_kernel, ho=ho, wo=wo),
        out_shape=jax.ShapeDtypeStruct((n, ho, wo, co), jnp.bfloat16),
        grid=(n,),
        in_specs=[
            pl.BlockSpec((None, hp, wp2, ci), lambda b: (b, 0, 0, 0)),
            pl.BlockSpec((None, hp, wp2, ci), lambda b: (b, 0, 0, 0)),
            pl.BlockSpec((9, ci, co), lambda b: (0, 0, 0)),
            pl.BlockSpec((1, co), lambda b: (0, 0)),
        ],
        out_specs=pl.BlockSpec((None, ho, wo, co), lambda b: (b, 0, 0, 0)),
        compiler_params=_cparams(),
    )(p0, p1, w, b)


# -------------------- fused inverted-residual blocks (one pallas_call each) -------------------- #

def _block_s1_kernel(*args, has_expand, has_residual, h, w):
    if has_expand:
        (x_ref, ew_ref, eb_ref, dw_ref, db_ref, pw_ref, pb_ref, o_ref, exp_s) = args
    else:
        (x_ref, dw_ref, db_ref, pw_ref, pb_ref, o_ref, exp_s) = args
    chid = exp_s.shape[-1]
    cout = o_ref.shape[-1]
    cin = x_ref.shape[-1]

    # zero the 1-pixel border of the expanded activation (lives only in VMEM scratch)
    zrow = jnp.zeros((1, w + 2, chid), jnp.float32)
    zcol = jnp.zeros((h + 2, 1, chid), jnp.float32)
    exp_s[0:1, :, :] = zrow
    exp_s[h + 1:h + 2, :, :] = zrow
    exp_s[:, 0:1, :] = zcol
    exp_s[:, w + 1:w + 2, :] = zcol

    x = x_ref[...]                                                # (h, w, cin) bf16
    if has_expand:
        e = jnp.dot(x.reshape(h * w, cin), ew_ref[...],
                    preferred_element_type=jnp.float32) + eb_ref[...]
        exp_s[1:h + 1, 1:w + 1, :] = _relu6(e).reshape(h, w, chid)
    else:
        exp_s[1:h + 1, 1:w + 1, :] = x.astype(jnp.float32)

    # depthwise 3x3, stride 1 (f32 VPU path)
    acc = jnp.zeros((h, w, chid), jnp.float32)
    for kh in range(3):
        for kw in range(3):
            tap = exp_s[pl.ds(kh, h), pl.ds(kw, w), :]
            wk = dw_ref[pl.ds(kh * 3 + kw, 1), :].reshape(1, 1, chid)
            acc = acc + tap * wk
    acc = _relu6(acc + db_ref[...].reshape(1, 1, chid))

    # project 1x1 + fused residual
    y = jnp.dot(acc.reshape(h * w, chid).astype(jnp.bfloat16), pw_ref[...],
                preferred_element_type=jnp.float32) + pb_ref[...]
    if has_residual:
        y = y + x.reshape(h * w, cin).astype(jnp.float32)
    o_ref[...] = y.reshape(h, w, cout).astype(o_ref.dtype)


def _block_s2_kernel(xe_ref, xo_ref, ew_ref, eb_ref, dw_ref, db_ref,
                     pw_ref, pb_ref, o_ref, s0, s1, *, h, w):
    chid = s0.shape[-1]
    cout = o_ref.shape[-1]
    cin = xe_ref.shape[-1]
    ho, wo = h // 2, w // 2
    whalf, wp2 = w // 2, w // 2 + 1

    # column-phase scratch buffers of the padded expanded tensor; zero the padded border
    zrow = jnp.zeros((1, wp2, chid), jnp.float32)
    zcol = jnp.zeros((h + 2, 1, chid), jnp.float32)
    s0[0:1, :, :] = zrow
    s0[h + 1:h + 2, :, :] = zrow
    s1[0:1, :, :] = zrow
    s1[h + 1:h + 2, :, :] = zrow
    s0[:, 0:1, :] = zcol
    s1[:, wp2 - 1:wp2, :] = zcol

    def expand(xv):
        e = jnp.dot(xv.reshape(h * whalf, cin), ew_ref[...],
                    preferred_element_type=jnp.float32) + eb_ref[...]
        return _relu6(e).reshape(h, whalf, chid)

    # even input columns land on odd columns of the padded expanded tensor and vice versa
    s1[1:h + 1, 0:whalf, :] = expand(xe_ref[...])
    s0[1:h + 1, 1:wp2, :] = expand(xo_ref[...])

    # depthwise 3x3, stride 2, computed directly at output resolution
    acc = jnp.zeros((ho, wo, chid), jnp.float32)
    for kh in range(3):
        for kw in range(3):
            src = s0 if kw % 2 == 0 else s1
            tap = _tap_stride2(src, kh, kw, ho, wo)
            wk = dw_ref[pl.ds(kh * 3 + kw, 1), :].reshape(1, 1, chid)
            acc = acc + tap * wk
    acc = _relu6(acc + db_ref[...].reshape(1, 1, chid))

    y = jnp.dot(acc.reshape(ho * wo, chid).astype(jnp.bfloat16), pw_ref[...],
                preferred_element_type=jnp.float32) + pb_ref[...]
    o_ref[...] = y.reshape(ho, wo, cout).astype(o_ref.dtype)


def fused_block(x, blk):
    n, h, w, cin = x.shape
    chid = blk["dw_w"].shape[-1]
    cout = blk["proj_w"].shape[-1]
    has_expand = blk["exp_w"] is not None

    weights, wspecs = [], []
    if has_expand:
        weights += [blk["exp_w"], blk["exp_b"]]
        wspecs += [pl.BlockSpec((cin, chid), lambda b: (0, 0)),
                   pl.BlockSpec((1, chid), lambda b: (0, 0))]
    weights += [blk["dw_w"], blk["dw_b"], blk["proj_w"], blk["proj_b"]]
    wspecs += [pl.BlockSpec((9, chid), lambda b: (0, 0)),
               pl.BlockSpec((1, chid), lambda b: (0, 0)),
               pl.BlockSpec((chid, cout), lambda b: (0, 0)),
               pl.BlockSpec((1, cout), lambda b: (0, 0))]

    if blk["s"] == 1:
        kern = functools.partial(_block_s1_kernel, has_expand=has_expand,
                                 has_residual=blk["res"], h=h, w=w)
        ins = [x] + weights
        in_specs = [pl.BlockSpec((None, h, w, cin), lambda b: (b, 0, 0, 0))] + wspecs
        out_shape = jax.ShapeDtypeStruct((n, h, w, cout), jnp.bfloat16)
        out_spec = pl.BlockSpec((None, h, w, cout), lambda b: (b, 0, 0, 0))
        scratch = [pltpu.VMEM((h + 2, w + 2, chid), jnp.float32)]
    else:
        assert h % 2 == 0 and w % 2 == 0 and has_expand
        kern = functools.partial(_block_s2_kernel, h=h, w=w)
        xe = x[:, :, 0::2, :]
        xo = x[:, :, 1::2, :]
        ins = [xe, xo] + weights
        in_specs = [pl.BlockSpec((None, h, w // 2, cin), lambda b: (b, 0, 0, 0)),
                    pl.BlockSpec((None, h, w // 2, cin), lambda b: (b, 0, 0, 0))] + wspecs
        out_shape = jax.ShapeDtypeStruct((n, h // 2, w // 2, cout), jnp.bfloat16)
        out_spec = pl.BlockSpec((None, h // 2, w // 2, cout), lambda b: (b, 0, 0, 0))
        scratch = [pltpu.VMEM((h + 2, w // 2 + 1, chid), jnp.float32),
                   pltpu.VMEM((h + 2, w // 2 + 1, chid), jnp.float32)]

    return pl.pallas_call(
        kern, out_shape=out_shape, grid=(n,),
        in_specs=in_specs, out_specs=out_spec, scratch_shapes=scratch,
        compiler_params=_cparams(),
    )(*ins)


# ---------------------- head: 1x1 conv + global-avg-pool + FC (fused) ---------------------- #

def _head_kernel(x_ref, hw_ref, hb_ref, fw_ref, fb_ref, o_ref, *, h, w):
    c = x_ref.shape[-1]
    y = jnp.dot(x_ref[...].reshape(h * w, c), hw_ref[...],
                preferred_element_type=jnp.float32) + hb_ref[...]
    y = _relu6(y)
    feat = jnp.mean(y, axis=0, keepdims=True)                    # (1, F) global avg pool
    pts = jnp.dot(feat.astype(jnp.bfloat16), fw_ref[...],
                  preferred_element_type=jnp.float32) + fb_ref[...]
    o_ref[...] = pts.astype(o_ref.dtype)


def head(x, hw, hb, fw, fb):
    n, h, w, c = x.shape
    f = hw.shape[-1]
    p = fw.shape[-1]
    out = pl.pallas_call(
        functools.partial(_head_kernel, h=h, w=w),
        out_shape=jax.ShapeDtypeStruct((n, 1, p), jnp.float32),
        grid=(n,),
        in_specs=[pl.BlockSpec((None, h, w, c), lambda b: (b, 0, 0, 0)),
                  pl.BlockSpec((c, f), lambda b: (0, 0)),
                  pl.BlockSpec((1, f), lambda b: (0, 0)),
                  pl.BlockSpec((f, p), lambda b: (0, 0)),
                  pl.BlockSpec((1, p), lambda b: (0, 0))],
        out_specs=pl.BlockSpec((None, 1, p), lambda b: (b, 0, 0)),
        compiler_params=_cparams(),
    )(x, hw, hb, fw, fb)
    return out[:, 0, :]


# ------------------------------- params & forward pass ------------------------------- #

def _pad_to(a, shape):
    return jnp.pad(a, [(0, t - s) for s, t in zip(a.shape, shape)])


def make_params(key):
    """Reduced-width MobileNetV2 weights, zero-padded to lane-dense (128-multiple) channels."""
    keys = iter(jax.random.split(key, 64))

    def init(shape):
        return 0.1 * jax.random.normal(next(keys), shape, dtype=jnp.float32)

    p = {}
    # stem: 3x3 stride-2 conv, 3 -> 16 channels (BN folded into bias)
    stem_w = init((3, 3, 3, 16)).reshape(9, 3, 16)
    p["stem_w"] = _pad_to(stem_w, (9, CI_IMG, C_PAD)).astype(jnp.bfloat16)
    p["stem_b"] = jnp.zeros((1, C_PAD), jnp.float32)

    # inverted residual blocks: (expand_ratio, out_channels, stride)
    cfg = [(1, 16, 1), (6, 24, 2), (6, 24, 1), (6, 32, 2)]
    cin = 16
    blocks = []
    for (t, c, s) in cfg:
        hid = cin * t
        hid_p = _rup(hid)
        blk = {"t": t, "c": c, "s": s, "cin": cin, "res": (s == 1 and cin == c)}
        if t != 1:
            blk["exp_w"] = _pad_to(init((cin, hid)), (C_PAD, hid_p)).astype(jnp.bfloat16)
            blk["exp_b"] = jnp.zeros((1, hid_p), jnp.float32)
        else:
            blk["exp_w"] = None
        blk["dw_w"] = _pad_to(init((3, 3, hid)).reshape(9, hid), (9, hid_p))   # f32 VPU path
        blk["dw_b"] = jnp.zeros((1, hid_p), jnp.float32)
        blk["proj_w"] = _pad_to(init((hid, c)), (hid_p, C_PAD)).astype(jnp.bfloat16)
        blk["proj_b"] = jnp.zeros((1, C_PAD), jnp.float32)
        blocks.append(blk)
        cin = c
    p["blocks"] = blocks

    # final 1x1 conv -> 64 features, then linear head -> 21 joints * 3 coords
    p["head_w"] = _pad_to(init((cin, 64)), (C_PAD, C_PAD)).astype(jnp.bfloat16)
    p["head_b"] = jnp.zeros((1, C_PAD), jnp.float32)
    p["fc_w"] = _pad_to(init((64, 63)), (C_PAD, C_PAD)).astype(jnp.bfloat16)
    p["fc_b"] = jnp.zeros((1, C_PAD), jnp.float32)
    return p


def backbone_net(img_nchw, params):
    # img: (N, 3, H, W), matching the PyTorch module's NCHW input convention.
    n, c, hin, win = img_nchw.shape
    x = jnp.transpose(img_nchw, (0, 2, 3, 1))                         # -> NHWC
    x = jnp.pad(x, ((0, 0), (0, 0), (0, 0), (0, CI_IMG - c))).astype(jnp.bfloat16)
    x = stem_conv(x, params["stem_w"], params["stem_b"])              # (N, H/2, W/2, 128)
    for blk in params["blocks"]:
        x = fused_block(x, blk)                                       # fully fused block
    pts = head(x, params["head_w"], params["head_b"],
               params["fc_w"], params["fc_b"])                        # (N, 128) f32
    return pts[:, :63].reshape(n, 21, 3)


if __name__ == "__main__":
    img = jax.random.normal(jax.random.PRNGKey(0), (2, 3, 16, 16), dtype=jnp.float32)
    params = make_params(jax.random.PRNGKey(42))

    fn = jax.jit(lambda im: backbone_net(im, params))
    out = fn(img)
    jax.block_until_ready(out)

    assert out.shape == (2, 21, 3), out.shape
    assert out.dtype == jnp.float32
    assert bool(jnp.all(jnp.isfinite(out)))
    print("KERNEL_OK")
</pallas_src>

<mosaic_0001>
module attributes {stable_mosaic.version = 11 : i64} {
  func.func @_stem_kernel(%arg0: i32, %arg1: memref<1x18x9x32xbf16, #tpu.memory_space<vmem>>, %arg2: memref<1x18x9x32xbf16, #tpu.memory_space<vmem>>, %arg3: memref<9x32x128xbf16, #tpu.memory_space<vmem>>, %arg4: memref<1x128xf32, #tpu.memory_space<vmem>>, %arg5: memref<1x8x8x128xbf16, #tpu.memory_space<vmem>>) attributes {dimension_semantics = [#tpu.dimension_semantics<parallel>], iteration_bounds = array<i64: 2>, scalar_prefetch = 0 : i64, scratch_operands = 0 : i64, tpu.core_type = #tpu.core_type<tc>, window_params = [{transform_indices = @transform_0, window_bounds = array<i64: 1, 18, 9, 32>}, {transform_indices = @transform_1, window_bounds = array<i64: 1, 18, 9, 32>}, {pipeline_mode = #tpu.pipeline_mode<synchronous>, transform_indices = @transform_2, window_bounds = array<i64: 9, 32, 128>}, {pipeline_mode = #tpu.pipeline_mode<synchronous>, transform_indices = @transform_3, window_bounds = array<i64: 1, 128>}, {transform_indices = @transform_4, window_bounds = array<i64: 1, 8, 8, 128>}]} {
    %cst = arith.constant 0.000000e+00 : f32
    %0 = vector.broadcast %cst : f32 to vector<64x128xf32>
    %c0 = arith.constant 0 : index
    %c0_0 = arith.constant 0 : index
    %c0_1 = arith.constant 0 : index
    %c0_2 = arith.constant 0 : index
    %1 = vector.load %arg1[%c0, %c0_0, %c0_1, %c0_2] : memref<1x18x9x32xbf16, #tpu.memory_space<vmem>>, vector<1x16x8x32xbf16>
    %2 = vector.shape_cast %1 : vector<1x16x8x32xbf16> to vector<16x8x32xbf16>
    %3 = vector.shape_cast %2 : vector<16x8x32xbf16> to vector<8x2x8x32xbf16>
    %4 = vector.extract_strided_slice %3 {offsets = [0, 0, 0, 0], sizes = [8, 1, 8, 32], strides = [1, 1, 1, 1]} : vector<8x2x8x32xbf16> to vector<8x1x8x32xbf16>
    %5 = vector.shape_cast %4 : vector<8x1x8x32xbf16> to vector<8x8x32xbf16>
    %6 = vector.shape_cast %5 : vector<8x8x32xbf16> to vector<64x32xbf16>
    %c0_3 = arith.constant 0 : index
    %c0_4 = arith.constant 0 : index
    %c0_5 = arith.constant 0 : index
    %7 = vector.load %arg3[%c0_3, %c0_4, %c0_5] : memref<9x32x128xbf16, #tpu.memory_space<vmem>>, vector<1x32x128xbf16>
    %8 = vector.shape_cast %7 : vector<1x32x128xbf16> to vector<32x128xbf16>
    %cst_6 = arith.constant dense<0.000000e+00> : vector<64x128xf32>
    %9 = tpu.matmul %6, %8, %cst_6 {dimension_numbers = #tpu.dot_dimension_numbers<[1], [0], [0], [1], [0, 0, 1, 1], [], []>} : vector<64x32xbf16>, vector<32x128xbf16>, vector<64x128xf32> -> vector<64x128xf32>
    %10 = arith.addf %0, %9 : vector<64x128xf32>
    %c0_7 = arith.constant 0 : index
    %c0_8 = arith.constant 0 : index
    %c0_9 = arith.constant 0 : index
    %c0_10 = arith.constant 0 : index
    %11 = vector.load %arg2[%c0_7, %c0_8, %c0_9, %c0_10] : memref<1x18x9x32xbf16, #tpu.memory_space<vmem>>, vector<1x16x8x32xbf16>
    %12 = vector.shape_cast %11 : vector<1x16x8x32xbf16> to vector<16x8x32xbf16>
    %13 = vector.shape_cast %12 : vector<16x8x32xbf16> to vector<8x2x8x32xbf16>
    %14 = vector.extract_strided_slice %13 {offsets = [0, 0, 0, 0], sizes = [8, 1, 8, 32], strides = [1, 1, 1, 1]} : vector<8x2x8x32xbf16> to vector<8x1x8x32xbf16>
    %15 = vector.shape_cast %14 : vector<8x1x8x32xbf16> to vector<8x8x32xbf16>
    %16 = vector.shape_cast %15 : vector<8x8x32xbf16> to vector<64x32xbf16>
    %c1 = arith.constant 1 : index
    %c0_11 = arith.constant 0 : index
    %c0_12 = arith.constant 0 : index
    %17 = vector.load %arg3[%c1, %c0_11, %c0_12] : memref<9x32x128xbf16, #tpu.memory_space<vmem>>, vector<1x32x128xbf16>
    %18 = vector.shape_cast %17 : vector<1x32x128xbf16> to vector<32x128xbf16>
    %cst_13 = arith.constant dense<0.000000e+00> : vector<64x128xf32>
    %19 = tpu.matmul %16, %18, %cst_13 {dimension_numbers = #tpu.dot_dimension_numbers<[1], [0], [0], [1], [0, 0, 1, 1], [], []>} : vector<64x32xbf16>, vector<32x128xbf16>, vector<64x128xf32> -> vector<64x128xf32>
    %20 = arith.addf %10, %19 : vector<64x128xf32>
    %c0_14 = arith.constant 0 : index
    %c0_15 = arith.constant 0 : index
    %c1_16 = arith.constant 1 : index
    %c0_17 = arith.constant 0 : index
    %21 = vector.load %arg1[%c0_14, %c0_15, %c1_16, %c0_17] : memref<1x18x9x32xbf16, #tpu.memory_space<vmem>>, vector<1x16x8x32xbf16>
    %22 = vector.shape_cast %21 : vector<1x16x8x32xbf16> to vector<16x8x32xbf16>
    %23 = vector.shape_cast %22 : vector<16x8x32xbf16> to vector<8x2x8x32xbf16>
    %24 = vector.extract_strided_slice %23 {offsets = [0, 0, 0, 0], sizes = [8, 1, 8, 32], strides = [1, 1, 1, 1]} : vector<8x2x8x32xbf16> to vector<8x1x8x32xbf16>
    %25 = vector.shape_cast %24 : vector<8x1x8x32xbf16> to vector<8x8x32xbf16>
    %26 = vector.shape_cast %25 : vector<8x8x32xbf16> to vector<64x32xbf16>
    %c2 = arith.constant 2 : index
    %c0_18 = arith.constant 0 : index
    %c0_19 = arith.constant 0 : index
    %27 = vector.load %arg3[%c2, %c0_18, %c0_19] : memref<9x32x128xbf16, #tpu.memory_space<vmem>>, vector<1x32x128xbf16>
    %28 = vector.shape_cast %27 : vector<1x32x128xbf16> to vector<32x128xbf16>
    %cst_20 = arith.constant dense<0.000000e+00> : vector<64x128xf32>
    %29 = tpu.matmul %26, %28, %cst_20 {dimension_numbers = #tpu.dot_dimension_numbers<[1], [0], [0], [1], [0, 0, 1, 1], [], []>} : vector<64x32xbf16>, vector<32x128xbf16>, vector<64x128xf32> -> vector<64x128xf32>
    %30 = arith.addf %20, %29 : vector<64x128xf32>
    %c0_21 = arith.constant 0 : index
    %c1_22 = arith.constant 1 : index
    %c0_23 = arith.constant 0 : index
    %c0_24 = arith.constant 0 : index
    %31 = vector.load %arg1[%c0_21, %c1_22, %c0_23, %c0_24] : memref<1x18x9x32xbf16, #tpu.memory_space<vmem>>, vector<1x16x8x32xbf16>
    %32 = vector.shape_cast %31 : vector<1x16x8x32xbf16> to vector<16x8x32xbf16>
    %33 = vector.shape_cast %32 : vector<16x8x32xbf16> to vector<8x2x8x32xbf16>
    %34 = vector.extract_strided_slice %33 {offsets = [0, 0, 0, 0], sizes = [8, 1, 8, 32], strides = [1, 1, 1, 1]} : vector<8x2x8x32xbf16> to vector<8x1x8x32xbf16>
    %35 = vector.shape_cast %34 : vector<8x1x8x32xbf16> to vector<8x8x32xbf16>
    %36 = vector.shape_cast %35 : vector<8x8x32xbf16> to vector<64x32xbf16>
    %c3 = arith.constant 3 : index
    %c0_25 = arith.constant 0 : index
    %c0_26 = arith.constant 0 : index
    %37 = vector.load %arg3[%c3, %c0_25, %c0_26] : memref<9x32x128xbf16, #tpu.memory_space<vmem>>, vector<1x32x128xbf16>
    %38 = vector.shape_cast %37 : vector<1x32x128xbf16> to vector<32x128xbf16>
    %cst_27 = arith.constant dense<0.000000e+00> : vector<64x128xf32>
    %39 = tpu.matmul %36, %38, %cst_27 {dimension_numbers = #tpu.dot_dimension_numbers<[1], [0], [0], [1], [0, 0, 1, 1], [], []>} : vector<64x32xbf16>, vector<32x128xbf16>, vector<64x128xf32> -> vector<64x128xf32>
    %40 = arith.addf %30, %39 : vector<64x128xf32>
    %c0_28 = arith.constant 0 : index
    %c1_29 = arith.constant 1 : index
    %c0_30 = arith.constant 0 : index
    %c0_31 = arith.constant 0 : index
    %41 = vector.load %arg2[%c0_28, %c1_29, %c0_30, %c0_31] : memref<1x18x9x32xbf16, #tpu.memory_space<vmem>>, vector<1x16x8x32xbf16>
    %42 = vector.shape_cast %41 : vector<1x16x8x32xbf16> to vector<16x8x32xbf16>
    %43 = vector.shape_cast %42 : vector<16x8x32xbf16> to vector<8x2x8x32xbf16>
    %44 = vector.extract_strided_slice %43 {offsets = [0, 0, 0, 0], sizes = [8, 1, 8, 32], strides = [1, 1, 1, 1]} : vector<8x2x8x32xbf16> to vector<8x1x8x32xbf16>
    %45 = vector.shape_cast %44 : vector<8x1x8x32xbf16> to vector<8x8x32xbf16>
    %46 = vector.shape_cast %45 : vector<8x8x32xbf16> to vector<64x32xbf16>
    %c4 = arith.constant 4 : index
    %c0_32 = arith.constant 0 : index
    %c0_33 = arith.constant 0 : index
    %47 = vector.load %arg3[%c4, %c0_32, %c0_33] : memref<9x32x128xbf16, #tpu.memory_space<vmem>>, vector<1x32x128xbf16>
    %48 = vector.shape_cast %47 : vector<1x32x128xbf16> to vector<32x128xbf16>
    %cst_34 = arith.constant dense<0.000000e+00> : vector<64x128xf32>
    %49 = tpu.matmul %46, %48, %cst_34 {dimension_numbers = #tpu.dot_dimension_numbers<[1], [0], [0], [1], [0, 0, 1, 1], [], []>} : vector<64x32xbf16>, vector<32x128xbf16>, vector<64x128xf32> -> vector<64x128xf32>
    %50 = arith.addf %40, %49 : vector<64x128xf32>
    %c0_35 = arith.constant 0 : index
    %c1_36 = arith.constant 1 : index
    %c1_37 = arith.constant 1 : index
    %c0_38 = arith.constant 0 : index
    %51 = vector.load %arg1[%c0_35, %c1_36, %c1_37, %c0_38] : memref<1x18x9x32xbf16, #tpu.memory_space<vmem>>, vector<1x16x8x32xbf16>
    %52 = vector.shape_cast %51 : vector<1x16x8x32xbf16> to vector<16x8x32xbf16>
    %53 = vector.shape_cast %52 : vector<16x8x32xbf16> to vector<8x2x8x32xbf16>
    %54 = vector.extract_strided_slice %53 {offsets = [0, 0, 0, 0], sizes = [8, 1, 8, 32], strides = [1, 1, 1, 1]} : vector<8x2x8x32xbf16> to vector<8x1x8x32xbf16>
    %55 = vector.shape_cast %54 : vector<8x1x8x32xbf16> to vector<8x8x32xbf16>
    %56 = vector.shape_cast %55 : vector<8x8x32xbf16> to vector<64x32xbf16>
    %c5 = arith.constant 5 : index
    %c0_39 = arith.constant 0 : index
    %c0_40 = arith.constant 0 : index
    %57 = vector.load %arg3[%c5, %c0_39, %c0_40] : memref<9x32x128xbf16, #tpu.memory_space<vmem>>, vector<1x32x128xbf16>
    %58 = vector.shape_cast %57 : vector<1x32x128xbf16> to vector<32x128xbf16>
    %cst_41 = arith.constant dense<0.000000e+00> : vector<64x128xf32>
    %59 = tpu.matmul %56, %58, %cst_41 {dimension_numbers = #tpu.dot_dimension_numbers<[1], [0], [0], [1], [0, 0, 1, 1], [], []>} : vector<64x32xbf16>, vector<32x128xbf16>, vector<64x128xf32> -> vector<64x128xf32>
    %60 = arith.addf %50, %59 : vector<64x128xf32>
    %c0_42 = arith.constant 0 : index
    %c2_43 = arith.constant 2 : index
    %c0_44 = arith.constant 0 : index
    %c0_45 = arith.constant 0 : index
    %61 = vector.load %arg1[%c0_42, %c2_43, %c0_44, %c0_45] : memref<1x18x9x32xbf16, #tpu.memory_space<vmem>>, vector<1x16x8x32xbf16>
    %62 = vector.shape_cast %61 : vector<1x16x8x32xbf16> to vector<16x8x32xbf16>
    %63 = vector.shape_cast %62 : vector<16x8x32xbf16> to vector<8x2x8x32xbf16>
    %64 = vector.extract_strided_slice %63 {offsets = [0, 0, 0, 0], sizes = [8, 1, 8, 32], strides = [1, 1, 1, 1]} : vector<8x2x8x32xbf16> to vector<8x1x8x32xbf16>
    %65 = vector.shape_cast %64 : vector<8x1x8x32xbf16> to vector<8x8x32xbf16>
    %66 = vector.shape_cast %65 : vector<8x8x32xbf16> to vector<64x32xbf16>
    %c6 = arith.constant 6 : index
    %c0_46 = arith.constant 0 : index
    %c0_47 = arith.constant 0 : index
    %67 = vector.load %arg3[%c6, %c0_46, %c0_47] : memref<9x32x128xbf16, #tpu.memory_space<vmem>>, vector<1x32x128xbf16>
    %68 = vector.shape_cast %67 : vector<1x32x128xbf16> to vector<32x128xbf16>
    %cst_48 = arith.constant dense<0.000000e+00> : vector<64x128xf32>
    %69 = tpu.matmul %66, %68, %cst_48 {dimension_numbers = #tpu.dot_dimension_numbers<[1], [0], [0], [1], [0, 0, 1, 1], [], []>} : vector<64x32xbf16>, vector<32x128xbf16>, vector<64x128xf32> -> vector<64x128xf32>
    %70 = arith.addf %60, %69 : vector<64x128xf32>
    %c0_49 = arith.constant 0 : index
    %c2_50 = arith.constant 2 : index
    %c0_51 = arith.constant 0 : index
    %c0_52 = arith.constant 0 : index
    %71 = vector.load %arg2[%c0_49, %c2_50, %c0_51, %c0_52] : memref<1x18x9x32xbf16, #tpu.memory_space<vmem>>, vector<1x16x8x32xbf16>
    %72 = vector.shape_cast %71 : vector<1x16x8x32xbf16> to vector<16x8x32xbf16>
    %73 = vector.shape_cast %72 : vector<16x8x32xbf16> to vector<8x2x8x32xbf16>
    %74 = vector.extract_strided_slice %73 {offsets = [0, 0, 0, 0], sizes = [8, 1, 8, 32], strides = [1, 1, 1, 1]} : vector<8x2x8x32xbf16> to vector<8x1x8x32xbf16>
    %75 = vector.shape_cast %74 : vector<8x1x8x32xbf16> to vector<8x8x32xbf16>
    %76 = vector.shape_cast %75 : vector<8x8x32xbf16> to vector<64x32xbf16>
    %c7 = arith.constant 7 : index
    %c0_53 = arith.constant 0 : index
    %c0_54 = arith.constant 0 : index
    %77 = vector.load %arg3[%c7, %c0_53, %c0_54] : memref<9x32x128xbf16, #tpu.memory_space<vmem>>, vector<1x32x128xbf16>
    %78 = vector.shape_cast %77 : vector<1x32x128xbf16> to vector<32x128xbf16>
    %cst_55 = arith.constant dense<0.000000e+00> : vector<64x128xf32>
    %79 = tpu.matmul %76, %78, %cst_55 {dimension_numbers = #tpu.dot_dimension_numbers<[1], [0], [0], [1], [0, 0, 1, 1], [], []>} : vector<64x32xbf16>, vector<32x128xbf16>, vector<64x128xf32> -> vector<64x128xf32>
    %80 = arith.addf %70, %79 : vector<64x128xf32>
    %c0_56 = arith.constant 0 : index
    %c2_57 = arith.constant 2 : index
    %c1_58 = arith.constant 1 : index
    %c0_59 = arith.constant 0 : index
    %81 = vector.load %arg1[%c0_56, %c2_57, %c1_58, %c0_59] : memref<1x18x9x32xbf16, #tpu.memory_space<vmem>>, vector<1x16x8x32xbf16>
    %82 = vector.shape_cast %81 : vector<1x16x8x32xbf16> to vector<16x8x32xbf16>
    %83 = vector.shape_cast %82 : vector<16x8x32xbf16> to vector<8x2x8x32xbf16>
    %84 = vector.extract_strided_slice %83 {offsets = [0, 0, 0, 0], sizes = [8, 1, 8, 32], strides = [1, 1, 1, 1]} : vector<8x2x8x32xbf16> to vector<8x1x8x32xbf16>
    %85 = vector.shape_cast %84 : vector<8x1x8x32xbf16> to vector<8x8x32xbf16>
    %86 = vector.shape_cast %85 : vector<8x8x32xbf16> to vector<64x32xbf16>
    %c8 = arith.constant 8 : index
    %c0_60 = arith.constant 0 : index
    %c0_61 = arith.constant 0 : index
    %87 = vector.load %arg3[%c8, %c0_60, %c0_61] : memref<9x32x128xbf16, #tpu.memory_space<vmem>>, vector<1x32x128xbf16>
    %88 = vector.shape_cast %87 : vector<1x32x128xbf16> to vector<32x128xbf16>
    %cst_62 = arith.constant dense<0.000000e+00> : vector<64x128xf32>
    %89 = tpu.matmul %86, %88, %cst_62 {dimension_numbers = #tpu.dot_dimension_numbers<[1], [0], [0], [1], [0, 0, 1, 1], [], []>} : vector<64x32xbf16>, vector<32x128xbf16>, vector<64x128xf32> -> vector<64x128xf32>
    %90 = arith.addf %80, %89 : vector<64x128xf32>
    %c0_63 = arith.constant 0 : index
    %c0_64 = arith.constant 0 : index
    %91 = vector.load %arg4[%c0_63, %c0_64] : memref<1x128xf32, #tpu.memory_space<vmem>>, vector<1x128xf32>
    %92 = vector.broadcast %91 : vector<1x128xf32> to vector<64x128xf32>
    %93 = arith.addf %90, %92 : vector<64x128xf32>
    %cst_65 = arith.constant 0.000000e+00 : f32
    %cst_66 = arith.constant 6.000000e+00 : f32
    %94 = vector.broadcast %cst_65 : f32 to vector<64x128xf32>
    %95 = arith.maximumf %94, %93 : vector<64x128xf32>
    %96 = vector.broadcast %cst_66 : f32 to vector<64x128xf32>
    %97 = arith.minimumf %96, %95 : vector<64x128xf32>
    %98 = vector.shape_cast %97 : vector<64x128xf32> to vector<8x8x128xf32>
    %99 = arith.truncf %98 : vector<8x8x128xf32> to vector<8x8x128xbf16>
    %c0_67 = arith.constant 0 : index
    %c0_68 = arith.constant 0 : index
    %c0_69 = arith.constant 0 : index
    %c0_70 = arith.constant 0 : index
    %100 = vector.load %arg5[%c0_67, %c0_68, %c0_69, %c0_70] : memref<1x8x8x128xbf16, #tpu.memory_space<vmem>>, vector<1x8x8x128xbf16>
    %101 = vector.shape_cast %100 : vector<1x8x8x128xbf16> to vector<8x8x128xbf16>
    %102 = vector.shape_cast %99 : vector<8x8x128xbf16> to vector<1x8x8x128xbf16>
    tpu.vector_store %arg5[%c0_67, %c0_68, %c0_69, %c0_70], %102 {strides = array<i32>} : memref<1x8x8x128xbf16, #tpu.memory_space<vmem>>, vector<1x8x8x128xbf16>,
    return
  }
  func.func @transform_0(%arg0: i32) -> (i32, i32, i32, i32) {
    %c0_i32 = arith.constant 0 : i32
    %c0_i32_0 = arith.constant 0 : i32
    %c0_i32_1 = arith.constant 0 : i32
    %c0_i32_2 = arith.constant 0 : i32
    return %arg0, %c0_i32, %c0_i32_0, %c0_i32_1 : i32, i32, i32, i32
  }
  func.func @transform_1(%arg0: i32) -> (i32, i32, i32, i32) {
    %c0_i32 = arith.constant 0 : i32
    %c0_i32_0 = arith.constant 0 : i32
    %c0_i32_1 = arith.constant 0 : i32
    %c0_i32_2 = arith.constant 0 : i32
    return %arg0, %c0_i32, %c0_i32_0, %c0_i32_1 : i32, i32, i32, i32
  }
  func.func @transform_2(%arg0: i32) -> (i32, i32, i32) {
    %c0_i32 = arith.constant 0 : i32
    %c0_i32_0 = arith.constant 0 : i32
    %c0_i32_1 = arith.constant 0 : i32
    %c0_i32_2 = arith.constant 0 : i32
    return %c0_i32, %c0_i32_0, %c0_i32_1 : i32, i32, i32
  }
  func.func @transform_3(%arg0: i32) -> (i32, i32) {
    %c0_i32 = arith.constant 0 : i32
    %c0_i32_0 = arith.constant 0 : i32
    %c0_i32_1 = arith.constant 0 : i32
    return %c0_i32, %c0_i32_0 : i32, i32
  }
  func.func @transform_4(%arg0: i32) -> (i32, i32, i32, i32) {
    %c0_i32 = arith.constant 0 : i32
    %c0_i32_0 = arith.constant 0 : i32
    %c0_i32_1 = arith.constant 0 : i32
    %c0_i32_2 = arith.constant 0 : i32
    return %arg0, %c0_i32, %c0_i32_0, %c0_i32_1 : i32, i32, i32, i32
  }
}

module attributes {stable_mosaic.version = 11 : i64} {
  func.func @_block_s1_kernel(%arg0: i32, %arg1: memref<1x8x8x128xbf16, #tpu.memory_space<vmem>>, %arg2: memref<9x128xf32, #tpu.memory_space<vmem>>, %arg3: memref<1x128xf32, #tpu.memory_space<vmem>>, %arg4: memref<128x128xbf16, #tpu.memory_space<vmem>>, %arg5: memref<1x128xf32, #tpu.memory_space<vmem>>, %arg6: memref<1x8x8x128xbf16, #tpu.memory_space<vmem>>, %arg7: memref<10x10x128xf32, #tpu.memory_space<vmem>>) attributes {dimension_semantics = [#tpu.dimension_semantics<parallel>], iteration_bounds = array<i64: 2>, scalar_prefetch = 0 : i64, scratch_operands = 1 : i64, tpu.core_type = #tpu.core_type<tc>, window_params = [{transform_indices = @transform_0, window_bounds = array<i64: 1, 8, 8, 128>}, {pipeline_mode = #tpu.pipeline_mode<synchronous>, transform_indices = @transform_1, window_bounds = array<i64: 9, 128>}, {pipeline_mode = #tpu.pipeline_mode<synchronous>, transform_indices = @transform_2, window_bounds = array<i64: 1, 128>}, {pipeline_mode = #tpu.pipeline_mode<synchronous>, transform_indices = @transform_3, window_bounds = array<i64: 128, 128>}, {pipeline_mode = #tpu.pipeline_mode<synchronous>, transform_indices = @transform_4, window_bounds = array<i64: 1, 128>}, {transform_indices = @transform_5, window_bounds = array<i64: 1, 8, 8, 128>}]} {
    %cst = arith.constant 0.000000e+00 : f32
    %0 = vector.broadcast %cst : f32 to vector<1x10x128xf32>
    %cst_0 = arith.constant 0.000000e+00 : f32
    %1 = vector.broadcast %cst_0 : f32 to vector<10x1x128xf32>
    %c0 = arith.constant 0 : index
    %c0_1 = arith.constant 0 : index
    %c0_2 = arith.constant 0 : index
    %2 = vector.load %arg7[%c0, %c0_1, %c0_2] : memref<10x10x128xf32, #tpu.memory_space<vmem>>, vector<1x10x128xf32>
    tpu.vector_store %arg7[%c0, %c0_1, %c0_2], %0 {strides = array<i32>} : memref<10x10x128xf32, #tpu.memory_space<vmem>>, vector<1x10x128xf32>,
    %c9 = arith.constant 9 : index
    %c0_3 = arith.constant 0 : index
    %c0_4 = arith.constant 0 : index
    %3 = vector.load %arg7[%c9, %c0_3, %c0_4] : memref<10x10x128xf32, #tpu.memory_space<vmem>>, vector<1x10x128xf32>
    tpu.vector_store %arg7[%c9, %c0_3, %c0_4], %0 {strides = array<i32>} : memref<10x10x128xf32, #tpu.memory_space<vmem>>, vector<1x10x128xf32>,
    %c0_5 = arith.constant 0 : index
    %c0_6 = arith.constant 0 : index
    %c0_7 = arith.constant 0 : index
    %4 = vector.load %arg7[%c0_5, %c0_6, %c0_7] : memref<10x10x128xf32, #tpu.memory_space<vmem>>, vector<10x1x128xf32>
    tpu.vector_store %arg7[%c0_5, %c0_6, %c0_7], %1 {strides = array<i32>} : memref<10x10x128xf32, #tpu.memory_space<vmem>>, vector<10x1x128xf32>,
    %c0_8 = arith.constant 0 : index
    %c9_9 = arith.constant 9 : index
    %c0_10 = arith.constant 0 : index
    %5 = vector.load %arg7[%c0_8, %c9_9, %c0_10] : memref<10x10x128xf32, #tpu.memory_space<vmem>>, vector<10x1x128xf32>
    tpu.vector_store %arg7[%c0_8, %c9_9, %c0_10], %1 {strides = array<i32>} : memref<10x10x128xf32, #tpu.memory_space<vmem>>, vector<10x1x128xf32>,
    %c0_11 = arith.constant 0 : index
    %c0_12 = arith.constant 0 : index
    %c0_13 = arith.constant 0 : index
    %c0_14 = arith.constant 0 : index
    %6 = vector.load %arg1[%c0_11, %c0_12, %c0_13, %c0_14] : memref<1x8x8x128xbf16, #tpu.memory_space<vmem>>, vector<1x8x8x128xbf16>
    %7 = vector.shape_cast %6 : vector<1x8x8x128xbf16> to vector<8x8x128xbf16>
    %8 = arith.extf %7 : vector<8x8x128xbf16> to vector<8x8x128xf32>
    %c1 = arith.constant 1 : index
    %c1_15 = arith.constant 1 : index
    %c0_16 = arith.constant 0 : index
    %9 = vector.load %arg7[%c1, %c1_15, %c0_16] : memref<10x10x128xf32, #tpu.memory_space<vmem>>, vector<8x8x128xf32>
    tpu.vector_store %arg7[%c1, %c1_15, %c0_16], %8 {strides = array<i32>} : memref<10x10x128xf32, #tpu.memory_space<vmem>>, vector<8x8x128xf32>,
    %cst_17 = arith.constant 0.000000e+00 : f32
    %10 = vector.broadcast %cst_17 : f32 to vector<8x8x128xf32>
    %c0_18 = arith.constant 0 : index
    %c0_19 = arith.constant 0 : index
    %c0_20 = arith.constant 0 : index
    %11 = vector.load %arg7[%c0_18, %c0_19, %c0_20] : memref<10x10x128xf32, #tpu.memory_space<vmem>>, vector<8x8x128xf32>
    %c0_21 = arith.constant 0 : index
    %c0_22 = arith.constant 0 : index
    %12 = vector.load %arg2[%c0_21, %c0_22] : memref<9x128xf32, #tpu.memory_space<vmem>>, vector<1x128xf32>
    %13 = vector.shape_cast %12 : vector<1x128xf32> to vector<1x1x128xf32>
    %14 = vector.broadcast %13 : vector<1x1x128xf32> to vector<8x8x128xf32>
    %15 = arith.mulf %11, %14 : vector<8x8x128xf32>
    %16 = arith.addf %10, %15 : vector<8x8x128xf32>
    %c0_23 = arith.constant 0 : index
    %c1_24 = arith.constant 1 : index
    %c0_25 = arith.constant 0 : index
    %17 = vector.load %arg7[%c0_23, %c1_24, %c0_25] : memref<10x10x128xf32, #tpu.memory_space<vmem>>, vector<8x8x128xf32>
    %c1_26 = arith.constant 1 : index
    %c0_27 = arith.constant 0 : index
    %18 = vector.load %arg2[%c1_26, %c0_27] : memref<9x128xf32, #tpu.memory_space<vmem>>, vector<1x128xf32>
    %19 = vector.shape_cast %18 : vector<1x128xf32> to vector<1x1x128xf32>
    %20 = vector.broadcast %19 : vector<1x1x128xf32> to vector<8x8x128xf32>
    %21 = arith.mulf %17, %20 : vector<8x8x128xf32>
    %22 = arith.addf %16, %21 : vector<8x8x128xf32>
    %c0_28 = arith.constant 0 : index
    %c2 = arith.constant 2 : index
    %c0_29 = arith.constant 0 : index
    %23 = vector.load %arg7[%c0_28, %c2, %c0_29] : memref<10x10x128xf32, #tpu.memory_space<vmem>>, vector<8x8x128xf32>
    %c2_30 = arith.constant 2 : index
    %c0_31 = arith.constant 0 : index
    %24 = vector.load %arg2[%c2_30, %c0_31] : memref<9x128xf32, #tpu.memory_space<vmem>>, vector<1x128xf32>
    %25 = vector.shape_cast %24 : vector<1x128xf32> to vector<1x1x128xf32>
    %26 = vector.broadcast %25 : vector<1x1x128xf32> to vector<8x8x128xf32>
    %27 = arith.mulf %23, %26 : vector<8x8x128xf32>
    %28 = arith.addf %22, %27 : vector<8x8x128xf32>
    %c1_32 = arith.constant 1 : index
    %c0_33 = arith.constant 0 : index
    %c0_34 = arith.constant 0 : index
    %29 = vector.load %arg7[%c1_32, %c0_33, %c0_34] : memref<10x10x128xf32, #tpu.memory_space<vmem>>, vector<8x8x128xf32>
    %c3 = arith.constant 3 : index
    %c0_35 = arith.constant 0 : index
    %30 = vector.load %arg2[%c3, %c0_35] : memref<9x128xf32, #tpu.memory_space<vmem>>, vector<1x128xf32>
    %31 = vector.shape_cast %30 : vector<1x128xf32> to vector<1x1x128xf32>
    %32 = vector.broadcast %31 : vector<1x1x128xf32> to vector<8x8x128xf32>
    %33 = arith.mulf %29, %32 : vector<8x8x128xf32>
    %34 = arith.addf %28, %33 : vector<8x8x128xf32>
    %c1_36 = arith.constant 1 : index
    %c1_37 = arith.constant 1 : index
    %c0_38 = arith.constant 0 : index
    %35 = vector.load %arg7[%c1_36, %c1_37, %c0_38] : memref<10x10x128xf32, #tpu.memory_space<vmem>>, vector<8x8x128xf32>
    %c4 = arith.constant 4 : index
    %c0_39 = arith.constant 0 : index
    %36 = vector.load %arg2[%c4, %c0_39] : memref<9x128xf32, #tpu.memory_space<vmem>>, vector<1x128xf32>
    %37 = vector.shape_cast %36 : vector<1x128xf32> to vector<1x1x128xf32>
    %38 = vector.broadcast %37 : vector<1x1x128xf32> to vector<8x8x128xf32>
    %39 = arith.mulf %35, %38 : vector<8x8x128xf32>
    %40 = arith.addf %34, %39 : vector<8x8x128xf32>
    %c1_40 = arith.constant 1 : index
    %c2_41 = arith.constant 2 : index
    %c0_42 = arith.constant 0 : index
    %41 = vector.load %arg7[%c1_40, %c2_41, %c0_42] : memref<10x10x128xf32, #tpu.memory_space<vmem>>, vector<8x8x128xf32>
    %c5 = arith.constant 5 : index
    %c0_43 = arith.constant 0 : index
    %42 = vector.load %arg2[%c5, %c0_43] : memref<9x128xf32, #tpu.memory_space<vmem>>, vector<1x128xf32>
    %43 = vector.shape_cast %42 : vector<1x128xf32> to vector<1x1x128xf32>
    %44 = vector.broadcast %43 : vector<1x1x128xf32> to vector<8x8x128xf32>
    %45 = arith.mulf %41, %44 : vector<8x8x128xf32>
    %46 = arith.addf %40, %45 : vector<8x8x128xf32>
    %c2_44 = arith.constant 2 : index
    %c0_45 = arith.constant 0 : index
    %c0_46 = arith.constant 0 : index
    %47 = vector.load %arg7[%c2_44, %c0_45, %c0_46] : memref<10x10x128xf32, #tpu.memory_space<vmem>>, vector<8x8x128xf32>
    %c6 = arith.constant 6 : index
    %c0_47 = arith.constant 0 : index
    %48 = vector.load %arg2[%c6, %c0_47] : memref<9x128xf32, #tpu.memory_space<vmem>>, vector<1x128xf32>
    %49 = vector.shape_cast %48 : vector<1x128xf32> to vector<1x1x128xf32>
    %50 = vector.broadcast %49 : vector<1x1x128xf32> to vector<8x8x128xf32>
    %51 = arith.mulf %47, %50 : vector<8x8x128xf32>
    %52 = arith.addf %46, %51 : vector<8x8x128xf32>
    %c2_48 = arith.constant 2 : index
    %c1_49 = arith.constant 1 : index
    %c0_50 = arith.constant 0 : index
    %53 = vector.load %arg7[%c2_48, %c1_49, %c0_50] : memref<10x10x128xf32, #tpu.memory_space<vmem>>, vector<8x8x128xf32>
    %c7 = arith.constant 7 : index
    %c0_51 = arith.constant 0 : index
    %54 = vector.load %arg2[%c7, %c0_51] : memref<9x128xf32, #tpu.memory_space<vmem>>, vector<1x128xf32>
    %55 = vector.shape_cast %54 : vector<1x128xf32> to vector<1x1x128xf32>
    %56 = vector.broadcast %55 : vector<1x1x128xf32> to vector<8x8x128xf32>
    %57 = arith.mulf %53, %56 : vector<8x8x128xf32>
    %58 = arith.addf %52, %57 : vector<8x8x128xf32>
    %c2_52 = arith.constant 2 : index
    %c2_53 = arith.constant 2 : index
    %c0_54 = arith.constant 0 : index
    %59 = vector.load %arg7[%c2_52, %c2_53, %c0_54] : memref<10x10x128xf32, #tpu.memory_space<vmem>>, vector<8x8x128xf32>
    %c8 = arith.constant 8 : index
    %c0_55 = arith.constant 0 : index
    %60 = vector.load %arg2[%c8, %c0_55] : memref<9x128xf32, #tpu.memory_space<vmem>>, vector<1x128xf32>
    %61 = vector.shape_cast %60 : vector<1x128xf32> to vector<1x1x128xf32>
    %62 = vector.broadcast %61 : vector<1x1x128xf32> to vector<8x8x128xf32>
    %63 = arith.mulf %59, %62 : vector<8x8x128xf32>
    %64 = arith.addf %58, %63 : vector<8x8x128xf32>
    %c0_56 = arith.constant 0 : index
    %c0_57 = arith.constant 0 : index
    %65 = vector.load %arg3[%c0_56, %c0_57] : memref<1x128xf32, #tpu.memory_space<vmem>>, vector<1x128xf32>
    %66 = vector.shape_cast %65 : vector<1x128xf32> to vector<1x1x128xf32>
    %67 = vector.broadcast %66 : vector<1x1x128xf32> to vector<8x8x128xf32>
    %68 = arith.addf %64, %67 : vector<8x8x128xf32>
    %cst_58 = arith.constant 0.000000e+00 : f32
    %cst_59 = arith.constant 6.000000e+00 : f32
    %69 = vector.broadcast %cst_58 : f32 to vector<8x8x128xf32>
    %70 = arith.maximumf %69, %68 : vector<8x8x128xf32>
    %71 = vector.broadcast %cst_59 : f32 to vector<8x8x128xf32>
    %72 = arith.minimumf %71, %70 : vector<8x8x128xf32>
    %73 = vector.shape_cast %72 : vector<8x8x128xf32> to vector<64x128xf32>
    %74 = arith.truncf %73 : vector<64x128xf32> to vector<64x128xbf16>
    %c0_60 = arith.constant 0 : index
    %c0_61 = arith.constant 0 : index
    %75 = vector.load %arg4[%c0_60, %c0_61] : memref<128x128xbf16, #tpu.memory_space<vmem>>, vector<128x128xbf16>
    %cst_62 = arith.constant dense<0.000000e+00> : vector<64x128xf32>
    %76 = tpu.matmul %74, %75, %cst_62 {dimension_numbers = #tpu.dot_dimension_numbers<[1], [0], [0], [1], [0, 0, 1, 1], [], []>} : vector<64x128xbf16>, vector<128x128xbf16>, vector<64x128xf32> -> vector<64x128xf32>
    %c0_63 = arith.constant 0 : index
    %c0_64 = arith.constant 0 : index
    %77 = vector.load %arg5[%c0_63, %c0_64] : memref<1x128xf32, #tpu.memory_space<vmem>>, vector<1x128xf32>
    %78 = vector.broadcast %77 : vector<1x128xf32> to vector<64x128xf32>
    %79 = arith.addf %76, %78 : vector<64x128xf32>
    %80 = vector.shape_cast %7 : vector<8x8x128xbf16> to vector<64x128xbf16>
    %81 = arith.extf %80 : vector<64x128xbf16> to vector<64x128xf32>
    %82 = arith.addf %79, %81 : vector<64x128xf32>
    %83 = vector.shape_cast %82 : vector<64x128xf32> to vector<8x8x128xf32>
    %84 = arith.truncf %83 : vector<8x8x128xf32> to vector<8x8x128xbf16>
    %c0_65 = arith.constant 0 : index
    %c0_66 = arith.constant 0 : index
    %c0_67 = arith.constant 0 : index
    %c0_68 = arith.constant 0 : index
    %85 = vector.load %arg6[%c0_65, %c0_66, %c0_67, %c0_68] : memref<1x8x8x128xbf16, #tpu.memory_space<vmem>>, vector<1x8x8x128xbf16>
    %86 = vector.shape_cast %85 : vector<1x8x8x128xbf16> to vector<8x8x128xbf16>
    %87 = vector.shape_cast %84 : vector<8x8x128xbf16> to vector<1x8x8x128xbf16>
    tpu.vector_store %arg6[%c0_65, %c0_66, %c0_67, %c0_68], %87 {strides = array<i32>} : memref<1x8x8x128xbf16, #tpu.memory_space<vmem>>, vector<1x8x8x128xbf16>,
    return
  }
  func.func @transform_0(%arg0: i32) -> (i32, i32, i32, i32) {
    %c0_i32 = arith.constant 0 : i32
    %c0_i32_0 = arith.constant 0 : i32
    %c0_i32_1 = arith.constant 0 : i32
    %c0_i32_2 = arith.constant 0 : i32
    return %arg0, %c0_i32, %c0_i32_0, %c0_i32_1 : i32, i32, i32, i32
  }
  func.func @transform_1(%arg0: i32) -> (i32, i32) {
    %c0_i32 = arith.constant 0 : i32
    %c0_i32_0 = arith.constant 0 : i32
    %c0_i32_1 = arith.constant 0 : i32
    return %c0_i32, %c0_i32_0 : i32, i32
  }
  func.func @transform_2(%arg0: i32) -> (i32, i32) {
    %c0_i32 = arith.constant 0 : i32
    %c0_i32_0 = arith.constant 0 : i32
    %c0_i32_1 = arith.constant 0 : i32
    return %c0_i32, %c0_i32_0 : i32, i32
  }
  func.func @transform_3(%arg0: i32) -> (i32, i32) {
    %c0_i32 = arith.constant 0 : i32
    %c0_i32_0 = arith.constant 0 : i32
    %c0_i32_1 = arith.constant 0 : i32
    return %c0_i32, %c0_i32_0 : i32, i32
  }
  func.func @transform_4(%arg0: i32) -> (i32, i32) {
    %c0_i32 = arith.constant 0 : i32
    %c0_i32_0 = arith.constant 0 : i32
    %c0_i32_1 = arith.constant 0 : i32
    return %c0_i32, %c0_i32_0 : i32, i32
  }
  func.func @transform_5(%arg0: i32) -> (i32, i32, i32, i32) {
    %c0_i32 = arith.constant 0 : i32
    %c0_i32_0 = arith.constant 0 : i32
    %c0_i32_1 = arith.constant 0 : i32
    %c0_i32_2 = arith.constant 0 : i32
    return %arg0, %c0_i32, %c0_i32_0, %c0_i32_1 : i32, i32, i32, i32
  }
}

module attributes {stable_mosaic.version = 11 : i64} {
  func.func @_block_s1_kernel(%arg0: i32, %arg1: memref<1x4x4x128xbf16, #tpu.memory_space<vmem>>, %arg2: memref<128x256xbf16, #tpu.memory_space<vmem>>, %arg3: memref<1x256xf32, #tpu.memory_space<vmem>>, %arg4: memref<9x256xf32, #tpu.memory_space<vmem>>, %arg5: memref<1x256xf32, #tpu.memory_space<vmem>>, %arg6: memref<256x128xbf16, #tpu.memory_space<vmem>>, %arg7: memref<1x128xf32, #tpu.memory_space<vmem>>, %arg8: memref<1x4x4x128xbf16, #tpu.memory_space<vmem>>, %arg9: memref<6x6x256xf32, #tpu.memory_space<vmem>>) attributes {dimension_semantics = [#tpu.dimension_semantics<parallel>], iteration_bounds = array<i64: 2>, scalar_prefetch = 0 : i64, scratch_operands = 1 : i64, tpu.core_type = #tpu.core_type<tc>, window_params = [{transform_indices = @transform_0, window_bounds = array<i64: 1, 4, 4, 128>}, {pipeline_mode = #tpu.pipeline_mode<synchronous>, transform_indices = @transform_1, window_bounds = array<i64: 128, 256>}, {pipeline_mode = #tpu.pipeline_mode<synchronous>, transform_indices = @transform_2, window_bounds = array<i64: 1, 256>}, {pipeline_mode = #tpu.pipeline_mode<synchronous>, transform_indices = @transform_3, window_bounds = array<i64: 9, 256>}, {pipeline_mode = #tpu.pipeline_mode<synchronous>, transform_indices = @transform_4, window_bounds = array<i64: 1, 256>}, {pipeline_mode = #tpu.pipeline_mode<synchronous>, transform_indices = @transform_5, window_bounds = array<i64: 256, 128>}, {pipeline_mode = #tpu.pipeline_mode<synchronous>, transform_indices = @transform_6, window_bounds = array<i64: 1, 128>}, {transform_indices = @transform_7, window_bounds = array<i64: 1, 4, 4, 128>}]} {
    %cst = arith.constant 0.000000e+00 : f32
    %0 = vector.broadcast %cst : f32 to vector<1x6x256xf32>
    %cst_0 = arith.constant 0.000000e+00 : f32
    %1 = vector.broadcast %cst_0 : f32 to vector<6x1x256xf32>
    %c0 = arith.constant 0 : index
    %c0_1 = arith.constant 0 : index
    %c0_2 = arith.constant 0 : index
    %2 = vector.load %arg9[%c0, %c0_1, %c0_2] : memref<6x6x256xf32, #tpu.memory_space<vmem>>, vector<1x6x256xf32>
    tpu.vector_store %arg9[%c0, %c0_1, %c0_2], %0 {strides = array<i32>} : memref<6x6x256xf32, #tpu.memory_space<vmem>>, vector<1x6x256xf32>,
    %c5 = arith.constant 5 : index
    %c0_3 = arith.constant 0 : index
    %c0_4 = arith.constant 0 : index
    %3 = vector.load %arg9[%c5, %c0_3, %c0_4] : memref<6x6x256xf32, #tpu.memory_space<vmem>>, vector<1x6x256xf32>
    tpu.vector_store %arg9[%c5, %c0_3, %c0_4], %0 {strides = array<i32>} : memref<6x6x256xf32, #tpu.memory_space<vmem>>, vector<1x6x256xf32>,
    %c0_5 = arith.constant 0 : index
    %c0_6 = arith.constant 0 : index
    %c0_7 = arith.constant 0 : index
    %4 = vector.load %arg9[%c0_5, %c0_6, %c0_7] : memref<6x6x256xf32, #tpu.memory_space<vmem>>, vector<6x1x256xf32>
    tpu.vector_store %arg9[%c0_5, %c0_6, %c0_7], %1 {strides = array<i32>} : memref<6x6x256xf32, #tpu.memory_space<vmem>>, vector<6x1x256xf32>,
    %c0_8 = arith.constant 0 : index
    %c5_9 = arith.constant 5 : index
    %c0_10 = arith.constant 0 : index
    %5 = vector.load %arg9[%c0_8, %c5_9, %c0_10] : memref<6x6x256xf32, #tpu.memory_space<vmem>>, vector<6x1x256xf32>
    tpu.vector_store %arg9[%c0_8, %c5_9, %c0_10], %1 {strides = array<i32>} : memref<6x6x256xf32, #tpu.memory_space<vmem>>, vector<6x1x256xf32>,
    %c0_11 = arith.constant 0 : index
    %c0_12 = arith.constant 0 : index
    %c0_13 = arith.constant 0 : index
    %c0_14 = arith.constant 0 : index
    %6 = vector.load %arg1[%c0_11, %c0_12, %c0_13, %c0_14] : memref<1x4x4x128xbf16, #tpu.memory_space<vmem>>, vector<1x4x4x128xbf16>
    %7 = vector.shape_cast %6 : vector<1x4x4x128xbf16> to vector<4x4x128xbf16>
    %8 = vector.shape_cast %7 : vector<4x4x128xbf16> to vector<16x128xbf16>
    %c0_15 = arith.constant 0 : index
    %c0_16 = arith.constant 0 : index
    %9 = vector.load %arg2[%c0_15, %c0_16] : memref<128x256xbf16, #tpu.memory_space<vmem>>, vector<128x256xbf16>
    %cst_17 = arith.constant dense<0.000000e+00> : vector<16x256xf32>
    %10 = tpu.matmul %8, %9, %cst_17 {dimension_numbers = #tpu.dot_dimension_numbers<[1], [0], [0], [1], [0, 0, 1, 1], [], []>} : vector<16x128xbf16>, vector<128x256xbf16>, vector<16x256xf32> -> vector<16x256xf32>
    %c0_18 = arith.constant 0 : index
    %c0_19 = arith.constant 0 : index
    %11 = vector.load %arg3[%c0_18, %c0_19] : memref<1x256xf32, #tpu.memory_space<vmem>>, vector<1x256xf32>
    %12 = vector.broadcast %11 : vector<1x256xf32> to vector<16x256xf32>
    %13 = arith.addf %10, %12 : vector<16x256xf32>
    %cst_20 = arith.constant 0.000000e+00 : f32
    %cst_21 = arith.constant 6.000000e+00 : f32
    %14 = vector.broadcast %cst_20 : f32 to vector<16x256xf32>
    %15 = arith.maximumf %14, %13 : vector<16x256xf32>
    %16 = vector.broadcast %cst_21 : f32 to vector<16x256xf32>
    %17 = arith.minimumf %16, %15 : vector<16x256xf32>
    %18 = vector.shape_cast %17 : vector<16x256xf32> to vector<4x4x256xf32>
    %c1 = arith.constant 1 : index
    %c1_22 = arith.constant 1 : index
    %c0_23 = arith.constant 0 : index
    %19 = vector.load %arg9[%c1, %c1_22, %c0_23] : memref<6x6x256xf32, #tpu.memory_space<vmem>>, vector<4x4x256xf32>
    tpu.vector_store %arg9[%c1, %c1_22, %c0_23], %18 {strides = array<i32>} : memref<6x6x256xf32, #tpu.memory_space<vmem>>, vector<4x4x256xf32>,
    %cst_24 = arith.constant 0.000000e+00 : f32
    %20 = vector.broadcast %cst_24 : f32 to vector<4x4x256xf32>
    %c0_25 = arith.constant 0 : index
    %c0_26 = arith.constant 0 : index
    %c0_27 = arith.constant 0 : index
    %21 = vector.load %arg9[%c0_25, %c0_26, %c0_27] : memref<6x6x256xf32, #tpu.memory_space<vmem>>, vector<4x4x256xf32>
    %c0_28 = arith.constant 0 : index
    %c0_29 = arith.constant 0 : index
    %22 = vector.load %arg4[%c0_28, %c0_29] : memref<9x256xf32, #tpu.memory_space<vmem>>, vector<1x256xf32>
    %23 = vector.shape_cast %22 : vector<1x256xf32> to vector<1x1x256xf32>
    %24 = vector.broadcast %23 : vector<1x1x256xf32> to vector<4x4x256xf32>
    %25 = arith.mulf %21, %24 : vector<4x4x256xf32>
    %26 = arith.addf %20, %25 : vector<4x4x256xf32>
    %c0_30 = arith.constant 0 : index
    %c1_31 = arith.constant 1 : index
    %c0_32 = arith.constant 0 : index
    %27 = vector.load %arg9[%c0_30, %c1_31, %c0_32] : memref<6x6x256xf32, #tpu.memory_space<vmem>>, vector<4x4x256xf32>
    %c1_33 = arith.constant 1 : index
    %c0_34 = arith.constant 0 : index
    %28 = vector.load %arg4[%c1_33, %c0_34] : memref<9x256xf32, #tpu.memory_space<vmem>>, vector<1x256xf32>
    %29 = vector.shape_cast %28 : vector<1x256xf32> to vector<1x1x256xf32>
    %30 = vector.broadcast %29 : vector<1x1x256xf32> to vector<4x4x256xf32>
    %31 = arith.mulf %27, %30 : vector<4x4x256xf32>
    %32 = arith.addf %26, %31 : vector<4x4x256xf32>
    %c0_35 = arith.constant 0 : index
    %c2 = arith.constant 2 : index
    %c0_36 = arith.constant 0 : index
    %33 = vector.load %arg9[%c0_35, %c2, %c0_36] : memref<6x6x256xf32, #tpu.memory_space<vmem>>, vector<4x4x256xf32>
    %c2_37 = arith.constant 2 : index
    %c0_38 = arith.constant 0 : index
    %34 = vector.load %arg4[%c2_37, %c0_38] : memref<9x256xf32, #tpu.memory_space<vmem>>, vector<1x256xf32>
    %35 = vector.shape_cast %34 : vector<1x256xf32> to vector<1x1x256xf32>
    %36 = vector.broadcast %35 : vector<1x1x256xf32> to vector<4x4x256xf32>
    %37 = arith.mulf %33, %36 : vector<4x4x256xf32>
    %38 = arith.addf %32, %37 : vector<4x4x256xf32>
    %c1_39 = arith.constant 1 : index
    %c0_40 = arith.constant 0 : index
    %c0_41 = arith.constant 0 : index
    %39 = vector.load %arg9[%c1_39, %c0_40, %c0_41] : memref<6x6x256xf32, #tpu.memory_space<vmem>>, vector<4x4x256xf32>
    %c3 = arith.constant 3 : index
    %c0_42 = arith.constant 0 : index
    %40 = vector.load %arg4[%c3, %c0_42] : memref<9x256xf32, #tpu.memory_space<vmem>>, vector<1x256xf32>
    %41 = vector.shape_cast %40 : vector<1x256xf32> to vector<1x1x256xf32>
    %42 = vector.broadcast %41 : vector<1x1x256xf32> to vector<4x4x256xf32>
    %43 = arith.mulf %39, %42 : vector<4x4x256xf32>
    %44 = arith.addf %38, %43 : vector<4x4x256xf32>
    %c1_43 = arith.constant 1 : index
    %c1_44 = arith.constant 1 : index
    %c0_45 = arith.constant 0 : index
    %45 = vector.load %arg9[%c1_43, %c1_44, %c0_45] : memref<6x6x256xf32, #tpu.memory_space<vmem>>, vector<4x4x256xf32>
    %c4 = arith.constant 4 : index
    %c0_46 = arith.constant 0 : index
    %46 = vector.load %arg4[%c4, %c0_46] : memref<9x256xf32, #tpu.memory_space<vmem>>, vector<1x256xf32>
    %47 = vector.shape_cast %46 : vector<1x256xf32> to vector<1x1x256xf32>
    %48 = vector.broadcast %47 : vector<1x1x256xf32> to vector<4x4x256xf32>
    %49 = arith.mulf %45, %48 : vector<4x4x256xf32>
    %50 = arith.addf %44, %49 : vector<4x4x256xf32>
    %c1_47 = arith.constant 1 : index
    %c2_48 = arith.constant 2 : index
    %c0_49 = arith.constant 0 : index
    %51 = vector.load %arg9[%c1_47, %c2_48, %c0_49] : memref<6x6x256xf32, #tpu.memory_space<vmem>>, vector<4x4x256xf32>
    %c5_50 = arith.constant 5 : index
    %c0_51 = arith.constant 0 : index
    %52 = vector.load %arg4[%c5_50, %c0_51] : memref<9x256xf32, #tpu.memory_space<vmem>>, vector<1x256xf32>
    %53 = vector.shape_cast %52 : vector<1x256xf32> to vector<1x1x256xf32>
    %54 = vector.broadcast %53 : vector<1x1x256xf32> to vector<4x4x256xf32>
    %55 = arith.mulf %51, %54 : vector<4x4x256xf32>
    %56 = arith.addf %50, %55 : vector<4x4x256xf32>
    %c2_52 = arith.constant 2 : index
    %c0_53 = arith.constant 0 : index
    %c0_54 = arith.constant 0 : index
    %57 = vector.load %arg9[%c2_52, %c0_53, %c0_54] : memref<6x6x256xf32, #tpu.memory_space<vmem>>, vector<4x4x256xf32>
    %c6 = arith.constant 6 : index
    %c0_55 = arith.constant 0 : index
    %58 = vector.load %arg4[%c6, %c0_55] : memref<9x256xf32, #tpu.memory_space<vmem>>, vector<1x256xf32>
    %59 = vector.shape_cast %58 : vector<1x256xf32> to vector<1x1x256xf32>
    %60 = vector.broadcast %59 : vector<1x1x256xf32> to vector<4x4x256xf32>
    %61 = arith.mulf %57, %60 : vector<4x4x256xf32>
    %62 = arith.addf %56, %61 : vector<4x4x256xf32>
    %c2_56 = arith.constant 2 : index
    %c1_57 = arith.constant 1 : index
    %c0_58 = arith.constant 0 : index
    %63 = vector.load %arg9[%c2_56, %c1_57, %c0_58] : memref<6x6x256xf32, #tpu.memory_space<vmem>>, vector<4x4x256xf32>
    %c7 = arith.constant 7 : index
    %c0_59 = arith.constant 0 : index
    %64 = vector.load %arg4[%c7, %c0_59] : memref<9x256xf32, #tpu.memory_space<vmem>>, vector<1x256xf32>
    %65 = vector.shape_cast %64 : vector<1x256xf32> to vector<1x1x256xf32>
    %66 = vector.broadcast %65 : vector<1x1x256xf32> to vector<4x4x256xf32>
    %67 = arith.mulf %63, %66 : vector<4x4x256xf32>
    %68 = arith.addf %62, %67 : vector<4x4x256xf32>
    %c2_60 = arith.constant 2 : index
    %c2_61 = arith.constant 2 : index
    %c0_62 = arith.constant 0 : index
    %69 = vector.load %arg9[%c2_60, %c2_61, %c0_62] : memref<6x6x256xf32, #tpu.memory_space<vmem>>, vector<4x4x256xf32>
    %c8 = arith.constant 8 : index
    %c0_63 = arith.constant 0 : index
    %70 = vector.load %arg4[%c8, %c0_63] : memref<9x256xf32, #tpu.memory_space<vmem>>, vector<1x256xf32>
    %71 = vector.shape_cast %70 : vector<1x256xf32> to vector<1x1x256xf32>
    %72 = vector.broadcast %71 : vector<1x1x256xf32> to vector<4x4x256xf32>
    %73 = arith.mulf %69, %72 : vector<4x4x256xf32>
    %74 = arith.addf %68, %73 : vector<4x4x256xf32>
    %c0_64 = arith.constant 0 : index
    %c0_65 = arith.constant 0 : index
    %75 = vector.load %arg5[%c0_64, %c0_65] : memref<1x256xf32, #tpu.memory_space<vmem>>, vector<1x256xf32>
    %76 = vector.shape_cast %75 : vector<1x256xf32> to vector<1x1x256xf32>
    %77 = vector.broadcast %76 : vector<1x1x256xf32> to vector<4x4x256xf32>
    %78 = arith.addf %74, %77 : vector<4x4x256xf32>
    %cst_66 = arith.constant 0.000000e+00 : f32
    %cst_67 = arith.constant 6.000000e+00 : f32
    %79 = vector.broadcast %cst_66 : f32 to vector<4x4x256xf32>
    %80 = arith.maximumf %79, %78 : vector<4x4x256xf32>
    %81 = vector.broadcast %cst_67 : f32 to vector<4x4x256xf32>
    %82 = arith.minimumf %81, %80 : vector<4x4x256xf32>
    %83 = vector.shape_cast %82 : vector<4x4x256xf32> to vector<16x256xf32>
    %84 = arith.truncf %83 : vector<16x256xf32> to vector<16x256xbf16>
    %c0_68 = arith.constant 0 : index
    %c0_69 = arith.constant 0 : index
    %85 = vector.load %arg6[%c0_68, %c0_69] : memref<256x128xbf16, #tpu.memory_space<vmem>>, vector<256x128xbf16>
    %cst_70 = arith.constant dense<0.000000e+00> : vector<16x128xf32>
    %86 = tpu.matmul %84, %85, %cst_70 {dimension_numbers = #tpu.dot_dimension_numbers<[1], [0], [0], [1], [0, 0, 1, 1], [], []>} : vector<16x256xbf16>, vector<256x128xbf16>, vector<16x128xf32> -> vector<16x128xf32>
    %c0_71 = arith.constant 0 : index
    %c0_72 = arith.constant 0 : index
    %87 = vector.load %arg7[%c0_71, %c0_72] : memref<1x128xf32, #tpu.memory_space<vmem>>, vector<1x128xf32>
    %88 = vector.broadcast %87 : vector<1x128xf32> to vector<16x128xf32>
    %89 = arith.addf %86, %88 : vector<16x128xf32>
    %90 = vector.shape_cast %7 : vector<4x4x128xbf16> to vector<16x128xbf16>
    %91 = arith.extf %90 : vector<16x128xbf16> to vector<16x128xf32>
    %92 = arith.addf %89, %91 : vector<16x128xf32>
    %93 = vector.shape_cast %92 : vector<16x128xf32> to vector<4x4x128xf32>
    %94 = arith.truncf %93 : vector<4x4x128xf32> to vector<4x4x128xbf16>
    %c0_73 = arith.constant 0 : index
    %c0_74 = arith.constant 0 : index
    %c0_75 = arith.constant 0 : index
    %c0_76 = arith.constant 0 : index
    %95 = vector.load %arg8[%c0_73, %c0_74, %c0_75, %c0_76] : memref<1x4x4x128xbf16, #tpu.memory_space<vmem>>, vector<1x4x4x128xbf16>
    %96 = vector.shape_cast %95 : vector<1x4x4x128xbf16> to vector<4x4x128xbf16>
    %97 = vector.shape_cast %94 : vector<4x4x128xbf16> to vector<1x4x4x128xbf16>
    tpu.vector_store %arg8[%c0_73, %c0_74, %c0_75, %c0_76], %97 {strides = array<i32>} : memref<1x4x4x128xbf16, #tpu.memory_space<vmem>>, vector<1x4x4x128xbf16>,
    return
  }
  func.func @transform_0(%arg0: i32) -> (i32, i32, i32, i32) {
    %c0_i32 = arith.constant 0 : i32
    %c0_i32_0 = arith.constant 0 : i32
    %c0_i32_1 = arith.constant 0 : i32
    %c0_i32_2 = arith.constant 0 : i32
    return %arg0, %c0_i32, %c0_i32_0, %c0_i32_1 : i32, i32, i32, i32
  }
  func.func @transform_1(%arg0: i32) -> (i32, i32) {
    %c0_i32 = arith.constant 0 : i32
    %c0_i32_0 = arith.constant 0 : i32
    %c0_i32_1 = arith.constant 0 : i32
    return %c0_i32, %c0_i32_0 : i32, i32
  }
  func.func @transform_2(%arg0: i32) -> (i32, i32) {
    %c0_i32 = arith.constant 0 : i32
    %c0_i32_0 = arith.constant 0 : i32
    %c0_i32_1 = arith.constant 0 : i32
    return %c0_i32, %c0_i32_0 : i32, i32
  }
  func.func @transform_3(%arg0: i32) -> (i32, i32) {
    %c0_i32 = arith.constant 0 : i32
    %c0_i32_0 = arith.constant 0 : i32
    %c0_i32_1 = arith.constant 0 : i32
    return %c0_i32, %c0_i32_0 : i32, i32
  }
  func.func @transform_4(%arg0: i32) -> (i32, i32) {
    %c0_i32 = arith.constant 0 : i32
    %c0_i32_0 = arith.constant 0 : i32
    %c0_i32_1 = arith.constant 0 : i32
    return %c0_i32, %c0_i32_0 : i32, i32
  }
  func.func @transform_5(%arg0: i32) -> (i32, i32) {
    %c0_i32 = arith.constant 0 : i32
    %c0_i32_0 = arith.constant 0 : i32
    %c0_i32_1 = arith.constant 0 : i32
    return %c0_i32, %c0_i32_0 : i32, i32
  }
  func.func @transform_6(%arg0: i32) -> (i32, i32) {
    %c0_i32 = arith.constant 0 : i32
    %c0_i32_0 = arith.constant 0 : i32
    %c0_i32_1 = arith.constant 0 : i32
    return %c0_i32, %c0_i32_0 : i32, i32
  }
  func.func @transform_7(%arg0: i32) -> (i32, i32, i32, i32) {
    %c0_i32 = arith.constant 0 : i32
    %c0_i32_0 = arith.constant 0 : i32
    %c0_i32_1 = arith.constant 0 : i32
    %c0_i32_2 = arith.constant 0 : i32
    return %arg0, %c0_i32, %c0_i32_0, %c0_i32_1 : i32, i32, i32, i32
  }
}

module attributes {stable_mosaic.version = 11 : i64} {
  func.func @_block_s2_kernel(%arg0: i32, %arg1: memref<1x8x4x128xbf16, #tpu.memory_space<vmem>>, %arg2: memref<1x8x4x128xbf16, #tpu.memory_space<vmem>>, %arg3: memref<128x128xbf16, #tpu.memory_space<vmem>>, %arg4: memref<1x128xf32, #tpu.memory_space<vmem>>, %arg5: memref<9x128xf32, #tpu.memory_space<vmem>>, %arg6: memref<1x128xf32, #tpu.memory_space<vmem>>, %arg7: memref<128x128xbf16, #tpu.memory_space<vmem>>, %arg8: memref<1x128xf32, #tpu.memory_space<vmem>>, %arg9: memref<1x4x4x128xbf16, #tpu.memory_space<vmem>>, %arg10: memref<10x5x128xf32, #tpu.memory_space<vmem>>, %arg11: memref<10x5x128xf32, #tpu.memory_space<vmem>>) attributes {dimension_semantics = [#tpu.dimension_semantics<parallel>], iteration_bounds = array<i64: 2>, scalar_prefetch = 0 : i64, scratch_operands = 2 : i64, tpu.core_type = #tpu.core_type<tc>, window_params = [{transform_indices = @transform_0, window_bounds = array<i64: 1, 8, 4, 128>}, {transform_indices = @transform_1, window_bounds = array<i64: 1, 8, 4, 128>}, {pipeline_mode = #tpu.pipeline_mode<synchronous>, transform_indices = @transform_2, window_bounds = array<i64: 128, 128>}, {pipeline_mode = #tpu.pipeline_mode<synchronous>, transform_indices = @transform_3, window_bounds = array<i64: 1, 128>}, {pipeline_mode = #tpu.pipeline_mode<synchronous>, transform_indices = @transform_4, window_bounds = array<i64: 9, 128>}, {pipeline_mode = #tpu.pipeline_mode<synchronous>, transform_indices = @transform_5, window_bounds = array<i64: 1, 128>}, {pipeline_mode = #tpu.pipeline_mode<synchronous>, transform_indices = @transform_6, window_bounds = array<i64: 128, 128>}, {pipeline_mode = #tpu.pipeline_mode<synchronous>, transform_indices = @transform_7, window_bounds = array<i64: 1, 128>}, {transform_indices = @transform_8, window_bounds = array<i64: 1, 4, 4, 128>}]} {
    %cst = arith.constant 0.000000e+00 : f32
    %0 = vector.broadcast %cst : f32 to vector<1x5x128xf32>
    %cst_0 = arith.constant 0.000000e+00 : f32
    %1 = vector.broadcast %cst_0 : f32 to vector<10x1x128xf32>
    %c0 = arith.constant 0 : index
    %c0_1 = arith.constant 0 : index
    %c0_2 = arith.constant 0 : index
    %2 = vector.load %arg10[%c0, %c0_1, %c0_2] : memref<10x5x128xf32, #tpu.memory_space<vmem>>, vector<1x5x128xf32>
    tpu.vector_store %arg10[%c0, %c0_1, %c0_2], %0 {strides = array<i32>} : memref<10x5x128xf32, #tpu.memory_space<vmem>>, vector<1x5x128xf32>,
    %c9 = arith.constant 9 : index
    %c0_3 = arith.constant 0 : index
    %c0_4 = arith.constant 0 : index
    %3 = vector.load %arg10[%c9, %c0_3, %c0_4] : memref<10x5x128xf32, #tpu.memory_space<vmem>>, vector<1x5x128xf32>
    tpu.vector_store %arg10[%c9, %c0_3, %c0_4], %0 {strides = array<i32>} : memref<10x5x128xf32, #tpu.memory_space<vmem>>, vector<1x5x128xf32>,
    %c0_5 = arith.constant 0 : index
    %c0_6 = arith.constant 0 : index
    %c0_7 = arith.constant 0 : index
    %4 = vector.load %arg11[%c0_5, %c0_6, %c0_7] : memref<10x5x128xf32, #tpu.memory_space<vmem>>, vector<1x5x128xf32>
    tpu.vector_store %arg11[%c0_5, %c0_6, %c0_7], %0 {strides = array<i32>} : memref<10x5x128xf32, #tpu.memory_space<vmem>>, vector<1x5x128xf32>,
    %c9_8 = arith.constant 9 : index
    %c0_9 = arith.constant 0 : index
    %c0_10 = arith.constant 0 : index
    %5 = vector.load %arg11[%c9_8, %c0_9, %c0_10] : memref<10x5x128xf32, #tpu.memory_space<vmem>>, vector<1x5x128xf32>
    tpu.vector_store %arg11[%c9_8, %c0_9, %c0_10], %0 {strides = array<i32>} : memref<10x5x128xf32, #tpu.memory_space<vmem>>, vector<1x5x128xf32>,
    %c0_11 = arith.constant 0 : index
    %c0_12 = arith.constant 0 : index
    %c0_13 = arith.constant 0 : index
    %6 = vector.load %arg10[%c0_11, %c0_12, %c0_13] : memref<10x5x128xf32, #tpu.memory_space<vmem>>, vector<10x1x128xf32>
    tpu.vector_store %arg10[%c0_11, %c0_12, %c0_13], %1 {strides = array<i32>} : memref<10x5x128xf32, #tpu.memory_space<vmem>>, vector<10x1x128xf32>,
    %c0_14 = arith.constant 0 : index
    %c4 = arith.constant 4 : index
    %c0_15 = arith.constant 0 : index
    %7 = vector.load %arg11[%c0_14, %c4, %c0_15] : memref<10x5x128xf32, #tpu.memory_space<vmem>>, vector<10x1x128xf32>
    tpu.vector_store %arg11[%c0_14, %c4, %c0_15], %1 {strides = array<i32>} : memref<10x5x128xf32, #tpu.memory_space<vmem>>, vector<10x1x128xf32>,
    %c0_16 = arith.constant 0 : index
    %c0_17 = arith.constant 0 : index
    %c0_18 = arith.constant 0 : index
    %c0_19 = arith.constant 0 : index
    %8 = vector.load %arg1[%c0_16, %c0_17, %c0_18, %c0_19] : memref<1x8x4x128xbf16, #tpu.memory_space<vmem>>, vector<1x8x4x128xbf16>
    %9 = vector.shape_cast %8 : vector<1x8x4x128xbf16> to vector<8x4x128xbf16>
    %10 = vector.shape_cast %9 : vector<8x4x128xbf16> to vector<32x128xbf16>
    %c0_20 = arith.constant 0 : index
    %c0_21 = arith.constant 0 : index
    %11 = vector.load %arg3[%c0_20, %c0_21] : memref<128x128xbf16, #tpu.memory_space<vmem>>, vector<128x128xbf16>
    %cst_22 = arith.constant dense<0.000000e+00> : vector<32x128xf32>
    %12 = tpu.matmul %10, %11, %cst_22 {dimension_numbers = #tpu.dot_dimension_numbers<[1], [0], [0], [1], [0, 0, 1, 1], [], []>} : vector<32x128xbf16>, vector<128x128xbf16>, vector<32x128xf32> -> vector<32x128xf32>
    %c0_23 = arith.constant 0 : index
    %c0_24 = arith.constant 0 : index
    %13 = vector.load %arg4[%c0_23, %c0_24] : memref<1x128xf32, #tpu.memory_space<vmem>>, vector<1x128xf32>
    %14 = vector.broadcast %13 : vector<1x128xf32> to vector<32x128xf32>
    %15 = arith.addf %12, %14 : vector<32x128xf32>
    %cst_25 = arith.constant 0.000000e+00 : f32
    %cst_26 = arith.constant 6.000000e+00 : f32
    %16 = vector.broadcast %cst_25 : f32 to vector<32x128xf32>
    %17 = arith.maximumf %16, %15 : vector<32x128xf32>
    %18 = vector.broadcast %cst_26 : f32 to vector<32x128xf32>
    %19 = arith.minimumf %18, %17 : vector<32x128xf32>
    %20 = vector.shape_cast %19 : vector<32x128xf32> to vector<8x4x128xf32>
    %c1 = arith.constant 1 : index
    %c0_27 = arith.constant 0 : index
    %c0_28 = arith.constant 0 : index
    %21 = vector.load %arg11[%c1, %c0_27, %c0_28] : memref<10x5x128xf32, #tpu.memory_space<vmem>>, vector<8x4x128xf32>
    tpu.vector_store %arg11[%c1, %c0_27, %c0_28], %20 {strides = array<i32>} : memref<10x5x128xf32, #tpu.memory_space<vmem>>, vector<8x4x128xf32>,
    %c0_29 = arith.constant 0 : index
    %c0_30 = arith.constant 0 : index
    %c0_31 = arith.constant 0 : index
    %c0_32 = arith.constant 0 : index
    %22 = vector.load %arg2[%c0_29, %c0_30, %c0_31, %c0_32] : memref<1x8x4x128xbf16, #tpu.memory_space<vmem>>, vector<1x8x4x128xbf16>
    %23 = vector.shape_cast %22 : vector<1x8x4x128xbf16> to vector<8x4x128xbf16>
    %24 = vector.shape_cast %23 : vector<8x4x128xbf16> to vector<32x128xbf16>
    %c0_33 = arith.constant 0 : index
    %c0_34 = arith.constant 0 : index
    %25 = vector.load %arg3[%c0_33, %c0_34] : memref<128x128xbf16, #tpu.memory_space<vmem>>, vector<128x128xbf16>
    %cst_35 = arith.constant dense<0.000000e+00> : vector<32x128xf32>
    %26 = tpu.matmul %24, %25, %cst_35 {dimension_numbers = #tpu.dot_dimension_numbers<[1], [0], [0], [1], [0, 0, 1, 1], [], []>} : vector<32x128xbf16>, vector<128x128xbf16>, vector<32x128xf32> -> vector<32x128xf32>
    %c0_36 = arith.constant 0 : index
    %c0_37 = arith.constant 0 : index
    %27 = vector.load %arg4[%c0_36, %c0_37] : memref<1x128xf32, #tpu.memory_space<vmem>>, vector<1x128xf32>
    %28 = vector.broadcast %27 : vector<1x128xf32> to vector<32x128xf32>
    %29 = arith.addf %26, %28 : vector<32x128xf32>
    %cst_38 = arith.constant 0.000000e+00 : f32
    %cst_39 = arith.constant 6.000000e+00 : f32
    %30 = vector.broadcast %cst_38 : f32 to vector<32x128xf32>
    %31 = arith.maximumf %30, %29 : vector<32x128xf32>
    %32 = vector.broadcast %cst_39 : f32 to vector<32x128xf32>
    %33 = arith.minimumf %32, %31 : vector<32x128xf32>
    %34 = vector.shape_cast %33 : vector<32x128xf32> to vector<8x4x128xf32>
    %c1_40 = arith.constant 1 : index
    %c1_41 = arith.constant 1 : index
    %c0_42 = arith.constant 0 : index
    %35 = vector.load %arg10[%c1_40, %c1_41, %c0_42] : memref<10x5x128xf32, #tpu.memory_space<vmem>>, vector<8x4x128xf32>
    tpu.vector_store %arg10[%c1_40, %c1_41, %c0_42], %34 {strides = array<i32>} : memref<10x5x128xf32, #tpu.memory_space<vmem>>, vector<8x4x128xf32>,
    %cst_43 = arith.constant 0.000000e+00 : f32
    %36 = vector.broadcast %cst_43 : f32 to vector<4x4x128xf32>
    %c0_44 = arith.constant 0 : index
    %c0_45 = arith.constant 0 : index
    %c0_46 = arith.constant 0 : index
    %37 = vector.load %arg10[%c0_44, %c0_45, %c0_46] : memref<10x5x128xf32, #tpu.memory_space<vmem>>, vector<8x4x128xf32>
    %38 = vector.shape_cast %37 : vector<8x4x128xf32> to vector<4x2x4x128xf32>
    %39 = vector.extract_strided_slice %38 {offsets = [0, 0, 0, 0], sizes = [4, 1, 4, 128], strides = [1, 1, 1, 1]} : vector<4x2x4x128xf32> to vector<4x1x4x128xf32>
    %40 = vector.shape_cast %39 : vector<4x1x4x128xf32> to vector<4x4x128xf32>
    %c0_47 = arith.constant 0 : index
    %c0_48 = arith.constant 0 : index
    %41 = vector.load %arg5[%c0_47, %c0_48] : memref<9x128xf32, #tpu.memory_space<vmem>>, vector<1x128xf32>
    %42 = vector.shape_cast %41 : vector<1x128xf32> to vector<1x1x128xf32>
    %43 = vector.broadcast %42 : vector<1x1x128xf32> to vector<4x4x128xf32>
    %44 = arith.mulf %40, %43 : vector<4x4x128xf32>
    %45 = arith.addf %36, %44 : vector<4x4x128xf32>
    %c0_49 = arith.constant 0 : index
    %c0_50 = arith.constant 0 : index
    %c0_51 = arith.constant 0 : index
    %46 = vector.load %arg11[%c0_49, %c0_50, %c0_51] : memref<10x5x128xf32, #tpu.memory_space<vmem>>, vector<8x4x128xf32>
    %47 = vector.shape_cast %46 : vector<8x4x128xf32> to vector<4x2x4x128xf32>
    %48 = vector.extract_strided_slice %47 {offsets = [0, 0, 0, 0], sizes = [4, 1, 4, 128], strides = [1, 1, 1, 1]} : vector<4x2x4x128xf32> to vector<4x1x4x128xf32>
    %49 = vector.shape_cast %48 : vector<4x1x4x128xf32> to vector<4x4x128xf32>
    %c1_52 = arith.constant 1 : index
    %c0_53 = arith.constant 0 : index
    %50 = vector.load %arg5[%c1_52, %c0_53] : memref<9x128xf32, #tpu.memory_space<vmem>>, vector<1x128xf32>
    %51 = vector.shape_cast %50 : vector<1x128xf32> to vector<1x1x128xf32>
    %52 = vector.broadcast %51 : vector<1x1x128xf32> to vector<4x4x128xf32>
    %53 = arith.mulf %49, %52 : vector<4x4x128xf32>
    %54 = arith.addf %45, %53 : vector<4x4x128xf32>
    %c0_54 = arith.constant 0 : index
    %c1_55 = arith.constant 1 : index
    %c0_56 = arith.constant 0 : index
    %55 = vector.load %arg10[%c0_54, %c1_55, %c0_56] : memref<10x5x128xf32, #tpu.memory_space<vmem>>, vector<8x4x128xf32>
    %56 = vector.shape_cast %55 : vector<8x4x128xf32> to vector<4x2x4x128xf32>
    %57 = vector.extract_strided_slice %56 {offsets = [0, 0, 0, 0], sizes = [4, 1, 4, 128], strides = [1, 1, 1, 1]} : vector<4x2x4x128xf32> to vector<4x1x4x128xf32>
    %58 = vector.shape_cast %57 : vector<4x1x4x128xf32> to vector<4x4x128xf32>
    %c2 = arith.constant 2 : index
    %c0_57 = arith.constant 0 : index
    %59 = vector.load %arg5[%c2, %c0_57] : memref<9x128xf32, #tpu.memory_space<vmem>>, vector<1x128xf32>
    %60 = vector.shape_cast %59 : vector<1x128xf32> to vector<1x1x128xf32>
    %61 = vector.broadcast %60 : vector<1x1x128xf32> to vector<4x4x128xf32>
    %62 = arith.mulf %58, %61 : vector<4x4x128xf32>
    %63 = arith.addf %54, %62 : vector<4x4x128xf32>
    %c1_58 = arith.constant 1 : index
    %c0_59 = arith.constant 0 : index
    %c0_60 = arith.constant 0 : index
    %64 = vector.load %arg10[%c1_58, %c0_59, %c0_60] : memref<10x5x128xf32, #tpu.memory_space<vmem>>, vector<8x4x128xf32>
    %65 = vector.shape_cast %64 : vector<8x4x128xf32> to vector<4x2x4x128xf32>
    %66 = vector.extract_strided_slice %65 {offsets = [0, 0, 0, 0], sizes = [4, 1, 4, 128], strides = [1, 1, 1, 1]} : vector<4x2x4x128xf32> to vector<4x1x4x128xf32>
    %67 = vector.shape_cast %66 : vector<4x1x4x128xf32> to vector<4x4x128xf32>
    %c3 = arith.constant 3 : index
    %c0_61 = arith.constant 0 : index
    %68 = vector.load %arg5[%c3, %c0_61] : memref<9x128xf32, #tpu.memory_space<vmem>>, vector<1x128xf32>
    %69 = vector.shape_cast %68 : vector<1x128xf32> to vector<1x1x128xf32>
    %70 = vector.broadcast %69 : vector<1x1x128xf32> to vector<4x4x128xf32>
    %71 = arith.mulf %67, %70 : vector<4x4x128xf32>
    %72 = arith.addf %63, %71 : vector<4x4x128xf32>
    %c1_62 = arith.constant 1 : index
    %c0_63 = arith.constant 0 : index
    %c0_64 = arith.constant 0 : index
    %73 = vector.load %arg11[%c1_62, %c0_63, %c0_64] : memref<10x5x128xf32, #tpu.memory_space<vmem>>, vector<8x4x128xf32>
    %74 = vector.shape_cast %73 : vector<8x4x128xf32> to vector<4x2x4x128xf32>
    %75 = vector.extract_strided_slice %74 {offsets = [0, 0, 0, 0], sizes = [4, 1, 4, 128], strides = [1, 1, 1, 1]} : vector<4x2x4x128xf32> to vector<4x1x4x128xf32>
    %76 = vector.shape_cast %75 : vector<4x1x4x128xf32> to vector<4x4x128xf32>
    %c4_65 = arith.constant 4 : index
    %c0_66 = arith.constant 0 : index
    %77 = vector.load %arg5[%c4_65, %c0_66] : memref<9x128xf32, #tpu.memory_space<vmem>>, vector<1x128xf32>
    %78 = vector.shape_cast %77 : vector<1x128xf32> to vector<1x1x128xf32>
    %79 = vector.broadcast %78 : vector<1x1x128xf32> to vector<4x4x128xf32>
    %80 = arith.mulf %76, %79 : vector<4x4x128xf32>
    %81 = arith.addf %72, %80 : vector<4x4x128xf32>
    %c1_67 = arith.constant 1 : index
    %c1_68 = arith.constant 1 : index
    %c0_69 = arith.constant 0 : index
    %82 = vector.load %arg10[%c1_67, %c1_68, %c0_69] : memref<10x5x128xf32, #tpu.memory_space<vmem>>, vector<8x4x128xf32>
    %83 = vector.shape_cast %82 : vector<8x4x128xf32> to vector<4x2x4x128xf32>
    %84 = vector.extract_strided_slice %83 {offsets = [0, 0, 0, 0], sizes = [4, 1, 4, 128], strides = [1, 1, 1, 1]} : vector<4x2x4x128xf32> to vector<4x1x4x128xf32>
    %85 = vector.shape_cast %84 : vector<4x1x4x128xf32> to vector<4x4x128xf32>
    %c5 = arith.constant 5 : index
    %c0_70 = arith.constant 0 : index
    %86 = vector.load %arg5[%c5, %c0_70] : memref<9x128xf32, #tpu.memory_space<vmem>>, vector<1x128xf32>
    %87 = vector.shape_cast %86 : vector<1x128xf32> to vector<1x1x128xf32>
    %88 = vector.broadcast %87 : vector<1x1x128xf32> to vector<4x4x128xf32>
    %89 = arith.mulf %85, %88 : vector<4x4x128xf32>
    %90 = arith.addf %81, %89 : vector<4x4x128xf32>
    %c2_71 = arith.constant 2 : index
    %c0_72 = arith.constant 0 : index
    %c0_73 = arith.constant 0 : index
    %91 = vector.load %arg10[%c2_71, %c0_72, %c0_73] : memref<10x5x128xf32, #tpu.memory_space<vmem>>, vector<8x4x128xf32>
    %92 = vector.shape_cast %91 : vector<8x4x128xf32> to vector<4x2x4x128xf32>
    %93 = vector.extract_strided_slice %92 {offsets = [0, 0, 0, 0], sizes = [4, 1, 4, 128], strides = [1, 1, 1, 1]} : vector<4x2x4x128xf32> to vector<4x1x4x128xf32>
    %94 = vector.shape_cast %93 : vector<4x1x4x128xf32> to vector<4x4x128xf32>
    %c6 = arith.constant 6 : index
    %c0_74 = arith.constant 0 : index
    %95 = vector.load %arg5[%c6, %c0_74] : memref<9x128xf32, #tpu.memory_space<vmem>>, vector<1x128xf32>
    %96 = vector.shape_cast %95 : vector<1x128xf32> to vector<1x1x128xf32>
    %97 = vector.broadcast %96 : vector<1x1x128xf32> to vector<4x4x128xf32>
    %98 = arith.mulf %94, %97 : vector<4x4x128xf32>
    %99 = arith.addf %90, %98 : vector<4x4x128xf32>
    %c2_75 = arith.constant 2 : index
    %c0_76 = arith.constant 0 : index
    %c0_77 = arith.constant 0 : index
    %100 = vector.load %arg11[%c2_75, %c0_76, %c0_77] : memref<10x5x128xf32, #tpu.memory_space<vmem>>, vector<8x4x128xf32>
    %101 = vector.shape_cast %100 : vector<8x4x128xf32> to vector<4x2x4x128xf32>
    %102 = vector.extract_strided_slice %101 {offsets = [0, 0, 0, 0], sizes = [4, 1, 4, 128], strides = [1, 1, 1, 1]} : vector<4x2x4x128xf32> to vector<4x1x4x128xf32>
    %103 = vector.shape_cast %102 : vector<4x1x4x128xf32> to vector<4x4x128xf32>
    %c7 = arith.constant 7 : index
    %c0_78 = arith.constant 0 : index
    %104 = vector.load %arg5[%c7, %c0_78] : memref<9x128xf32, #tpu.memory_space<vmem>>, vector<1x128xf32>
    %105 = vector.shape_cast %104 : vector<1x128xf32> to vector<1x1x128xf32>
    %106 = vector.broadcast %105 : vector<1x1x128xf32> to vector<4x4x128xf32>
    %107 = arith.mulf %103, %106 : vector<4x4x128xf32>
    %108 = arith.addf %99, %107 : vector<4x4x128xf32>
    %c2_79 = arith.constant 2 : index
    %c1_80 = arith.constant 1 : index
    %c0_81 = arith.constant 0 : index
    %109 = vector.load %arg10[%c2_79, %c1_80, %c0_81] : memref<10x5x128xf32, #tpu.memory_space<vmem>>, vector<8x4x128xf32>
    %110 = vector.shape_cast %109 : vector<8x4x128xf32> to vector<4x2x4x128xf32>
    %111 = vector.extract_strided_slice %110 {offsets = [0, 0, 0, 0], sizes = [4, 1, 4, 128], strides = [1, 1, 1, 1]} : vector<4x2x4x128xf32> to vector<4x1x4x128xf32>
    %112 = vector.shape_cast %111 : vector<4x1x4x128xf32> to vector<4x4x128xf32>
    %c8 = arith.constant 8 : index
    %c0_82 = arith.constant 0 : index
    %113 = vector.load %arg5[%c8, %c0_82] : memref<9x128xf32, #tpu.memory_space<vmem>>, vector<1x128xf32>
    %114 = vector.shape_cast %113 : vector<1x128xf32> to vector<1x1x128xf32>
    %115 = vector.broadcast %114 : vector<1x1x128xf32> to vector<4x4x128xf32>
    %116 = arith.mulf %112, %115 : vector<4x4x128xf32>
    %117 = arith.addf %108, %116 : vector<4x4x128xf32>
    %c0_83 = arith.constant 0 : index
    %c0_84 = arith.constant 0 : index
    %118 = vector.load %arg6[%c0_83, %c0_84] : memref<1x128xf32, #tpu.memory_space<vmem>>, vector<1x128xf32>
    %119 = vector.shape_cast %118 : vector<1x128xf32> to vector<1x1x128xf32>
    %120 = vector.broadcast %119 : vector<1x1x128xf32> to vector<4x4x128xf32>
    %121 = arith.addf %117, %120 : vector<4x4x128xf32>
    %cst_85 = arith.constant 0.000000e+00 : f32
    %cst_86 = arith.constant 6.000000e+00 : f32
    %122 = vector.broadcast %cst_85 : f32 to vector<4x4x128xf32>
    %123 = arith.maximumf %122, %121 : vector<4x4x128xf32>
    %124 = vector.broadcast %cst_86 : f32 to vector<4x4x128xf32>
    %125 = arith.minimumf %124, %123 : vector<4x4x128xf32>
    %126 = vector.shape_cast %125 : vector<4x4x128xf32> to vector<16x128xf32>
    %127 = arith.truncf %126 : vector<16x128xf32> to vector<16x128xbf16>
    %c0_87 = arith.constant 0 : index
    %c0_88 = arith.constant 0 : index
    %128 = vector.load %arg7[%c0_87, %c0_88] : memref<128x128xbf16, #tpu.memory_space<vmem>>, vector<128x128xbf16>
    %cst_89 = arith.constant dense<0.000000e+00> : vector<16x128xf32>
    %129 = tpu.matmul %127, %128, %cst_89 {dimension_numbers = #tpu.dot_dimension_numbers<[1], [0], [0], [1], [0, 0, 1, 1], [], []>} : vector<16x128xbf16>, vector<128x128xbf16>, vector<16x128xf32> -> vector<16x128xf32>
    %c0_90 = arith.constant 0 : index
    %c0_91 = arith.constant 0 : index
    %130 = vector.load %arg8[%c0_90, %c0_91] : memref<1x128xf32, #tpu.memory_space<vmem>>, vector<1x128xf32>
    %131 = vector.broadcast %130 : vector<1x128xf32> to vector<16x128xf32>
    %132 = arith.addf %129, %131 : vector<16x128xf32>
    %133 = vector.shape_cast %132 : vector<16x128xf32> to vector<4x4x128xf32>
    %134 = arith.truncf %133 : vector<4x4x128xf32> to vector<4x4x128xbf16>
    %c0_92 = arith.constant 0 : index
    %c0_93 = arith.constant 0 : index
    %c0_94 = arith.constant 0 : index
    %c0_95 = arith.constant 0 : index
    %135 = vector.load %arg9[%c0_92, %c0_93, %c0_94, %c0_95] : memref<1x4x4x128xbf16, #tpu.memory_space<vmem>>, vector<1x4x4x128xbf16>
    %136 = vector.shape_cast %135 : vector<1x4x4x128xbf16> to vector<4x4x128xbf16>
    %137 = vector.shape_cast %134 : vector<4x4x128xbf16> to vector<1x4x4x128xbf16>
    tpu.vector_store %arg9[%c0_92, %c0_93, %c0_94, %c0_95], %137 {strides = array<i32>} : memref<1x4x4x128xbf16, #tpu.memory_space<vmem>>, vector<1x4x4x128xbf16>,
    return
  }
  func.func @transform_0(%arg0: i32) -> (i32, i32, i32, i32) {
    %c0_i32 = arith.constant 0 : i32
    %c0_i32_0 = arith.constant 0 : i32
    %c0_i32_1 = arith.constant 0 : i32
    %c0_i32_2 = arith.constant 0 : i32
    return %arg0, %c0_i32, %c0_i32_0, %c0_i32_1 : i32, i32, i32, i32
  }
  func.func @transform_1(%arg0: i32) -> (i32, i32, i32, i32) {
    %c0_i32 = arith.constant 0 : i32
    %c0_i32_0 = arith.constant 0 : i32
    %c0_i32_1 = arith.constant 0 : i32
    %c0_i32_2 = arith.constant 0 : i32
    return %arg0, %c0_i32, %c0_i32_0, %c0_i32_1 : i32, i32, i32, i32
  }
  func.func @transform_2(%arg0: i32) -> (i32, i32) {
    %c0_i32 = arith.constant 0 : i32
    %c0_i32_0 = arith.constant 0 : i32
    %c0_i32_1 = arith.constant 0 : i32
    return %c0_i32, %c0_i32_0 : i32, i32
  }
  func.func @transform_3(%arg0: i32) -> (i32, i32) {
    %c0_i32 = arith.constant 0 : i32
    %c0_i32_0 = arith.constant 0 : i32
    %c0_i32_1 = arith.constant 0 : i32
    return %c0_i32, %c0_i32_0 : i32, i32
  }
  func.func @transform_4(%arg0: i32) -> (i32, i32) {
    %c0_i32 = arith.constant 0 : i32
    %c0_i32_0 = arith.constant 0 : i32
    %c0_i32_1 = arith.constant 0 : i32
    return %c0_i32, %c0_i32_0 : i32, i32
  }
  func.func @transform_5(%arg0: i32) -> (i32, i32) {
    %c0_i32 = arith.constant 0 : i32
    %c0_i32_0 = arith.constant 0 : i32
    %c0_i32_1 = arith.constant 0 : i32
    return %c0_i32, %c0_i32_0 : i32, i32
  }
  func.func @transform_6(%arg0: i32) -> (i32, i32) {
    %c0_i32 = arith.constant 0 : i32
    %c0_i32_0 = arith.constant 0 : i32
    %c0_i32_1 = arith.constant 0 : i32
    return %c0_i32, %c0_i32_0 : i32, i32
  }
  func.func @transform_7(%arg0: i32) -> (i32, i32) {
    %c0_i32 = arith.constant 0 : i32
    %c0_i32_0 = arith.constant 0 : i32
    %c0_i32_1 = arith.constant 0 : i32
    return %c0_i32, %c0_i32_0 : i32, i32
  }
  func.func @transform_8(%arg0: i32) -> (i32, i32, i32, i32) {
    %c0_i32 = arith.constant 0 : i32
    %c0_i32_0 = arith.constant 0 : i32
    %c0_i32_1 = arith.constant 0 : i32
    %c0_i32_2 = arith.constant 0 : i32
    return %arg0, %c0_i32, %c0_i32_0, %c0_i32_1 : i32, i32, i32, i32
  }
}

module attributes {stable_mosaic.version = 11 : i64} {
  func.func @_head_kernel(%arg0: i32, %arg1: memref<1x2x2x128xbf16, #tpu.memory_space<vmem>>, %arg2: memref<128x128xbf16, #tpu.memory_space<vmem>>, %arg3: memref<1x128xf32, #tpu.memory_space<vmem>>, %arg4: memref<128x128xbf16, #tpu.memory_space<vmem>>, %arg5: memref<1x128xf32, #tpu.memory_space<vmem>>, %arg6: memref<1x1x128xf32, #tpu.memory_space<vmem>>) attributes {dimension_semantics = [#tpu.dimension_semantics<parallel>], iteration_bounds = array<i64: 2>, scalar_prefetch = 0 : i64, scratch_operands = 0 : i64, tpu.core_type = #tpu.core_type<tc>, window_params = [{transform_indices = @transform_0, window_bounds = array<i64: 1, 2, 2, 128>}, {pipeline_mode = #tpu.pipeline_mode<synchronous>, transform_indices = @transform_1, window_bounds = array<i64: 128, 128>}, {pipeline_mode = #tpu.pipeline_mode<synchronous>, transform_indices = @transform_2, window_bounds = array<i64: 1, 128>}, {pipeline_mode = #tpu.pipeline_mode<synchronous>, transform_indices = @transform_3, window_bounds = array<i64: 128, 128>}, {pipeline_mode = #tpu.pipeline_mode<synchronous>, transform_indices = @transform_4, window_bounds = array<i64: 1, 128>}, {transform_indices = @transform_5, window_bounds = array<i64: 1, 1, 128>}]} {
    %c0 = arith.constant 0 : index
    %c0_0 = arith.constant 0 : index
    %c0_1 = arith.constant 0 : index
    %c0_2 = arith.constant 0 : index
    %0 = vector.load %arg1[%c0, %c0_0, %c0_1, %c0_2] : memref<1x2x2x128xbf16, #tpu.memory_space<vmem>>, vector<1x2x2x128xbf16>
    %1 = vector.shape_cast %0 : vector<1x2x2x128xbf16> to vector<2x2x128xbf16>
    %2 = vector.shape_cast %1 : vector<2x2x128xbf16> to vector<4x128xbf16>
    %c0_3 = arith.constant 0 : index
    %c0_4 = arith.constant 0 : index
    %3 = vector.load %arg2[%c0_3, %c0_4] : memref<128x128xbf16, #tpu.memory_space<vmem>>, vector<128x128xbf16>
    %cst = arith.constant dense<0.000000e+00> : vector<4x128xf32>
    %4 = tpu.matmul %2, %3, %cst {dimension_numbers = #tpu.dot_dimension_numbers<[1], [0], [0], [1], [0, 0, 1, 1], [], []>} : vector<4x128xbf16>, vector<128x128xbf16>, vector<4x128xf32> -> vector<4x128xf32>
    %c0_5 = arith.constant 0 : index
    %c0_6 = arith.constant 0 : index
    %5 = vector.load %arg3[%c0_5, %c0_6] : memref<1x128xf32, #tpu.memory_space<vmem>>, vector<1x128xf32>
    %6 = vector.broadcast %5 : vector<1x128xf32> to vector<4x128xf32>
    %7 = arith.addf %4, %6 : vector<4x128xf32>
    %cst_7 = arith.constant 0.000000e+00 : f32
    %cst_8 = arith.constant 6.000000e+00 : f32
    %8 = vector.broadcast %cst_7 : f32 to vector<4x128xf32>
    %9 = arith.maximumf %8, %7 : vector<4x128xf32>
    %10 = vector.broadcast %cst_8 : f32 to vector<4x128xf32>
    %11 = arith.minimumf %10, %9 : vector<4x128xf32>
    %cst_9 = arith.constant dense<0.000000e+00> : vector<128xf32>
    %12 = vector.multi_reduction <add>, %11, %cst_9 [0] : vector<4x128xf32> to vector<128xf32>
    %13 = vector.shape_cast %12 : vector<128xf32> to vector<1x128xf32>
    %cst_10 = arith.constant 4.000000e+00 : f32
    %14 = vector.broadcast %cst_10 : f32 to vector<1x128xf32>
    %15 = arith.divf %13, %14 : vector<1x128xf32>
    %16 = arith.truncf %15 : vector<1x128xf32> to vector<1x128xbf16>
    %c0_11 = arith.constant 0 : index
    %c0_12 = arith.constant 0 : index
    %17 = vector.load %arg4[%c0_11, %c0_12] : memref<128x128xbf16, #tpu.memory_space<vmem>>, vector<128x128xbf16>
    %cst_13 = arith.constant dense<0.000000e+00> : vector<1x128xf32>
    %18 = tpu.matmul %16, %17, %cst_13 {dimension_numbers = #tpu.dot_dimension_numbers<[1], [0], [0], [1], [0, 0, 1, 1], [], []>} : vector<1x128xbf16>, vector<128x128xbf16>, vector<1x128xf32> -> vector<1x128xf32>
    %c0_14 = arith.constant 0 : index
    %c0_15 = arith.constant 0 : index
    %19 = vector.load %arg5[%c0_14, %c0_15] : memref<1x128xf32, #tpu.memory_space<vmem>>, vector<1x128xf32>
    %20 = arith.addf %18, %19 : vector<1x128xf32>
    %c0_16 = arith.constant 0 : index
    %c0_17 = arith.constant 0 : index
    %c0_18 = arith.constant 0 : index
    %21 = vector.load %arg6[%c0_16, %c0_17, %c0_18] : memref<1x1x128xf32, #tpu.memory_space<vmem>>, vector<1x1x128xf32>
    %22 = vector.shape_cast %21 : vector<1x1x128xf32> to vector<1x128xf32>
    %23 = vector.shape_cast %20 : vector<1x128xf32> to vector<1x1x128xf32>
    tpu.vector_store %arg6[%c0_16, %c0_17, %c0_18], %23 {strides = array<i32>} : memref<1x1x128xf32, #tpu.memory_space<vmem>>, vector<1x1x128xf32>,
    return
  }
  func.func @transform_0(%arg0: i32) -> (i32, i32, i32, i32) {
    %c0_i32 = arith.constant 0 : i32
    %c0_i32_0 = arith.constant 0 : i32
    %c0_i32_1 = arith.constant 0 : i32
    %c0_i32_2 = arith.constant 0 : i32
    return %arg0, %c0_i32, %c0_i32_0, %c0_i32_1 : i32, i32, i32, i32
  }
  func.func @transform_1(%arg0: i32) -> (i32, i32) {
    %c0_i32 = arith.constant 0 : i32
    %c0_i32_0 = arith.constant 0 : i32
    %c0_i32_1 = arith.constant 0 : i32
    return %c0_i32, %c0_i32_0 : i32, i32
  }
  func.func @transform_2(%arg0: i32) -> (i32, i32) {
    %c0_i32 = arith.constant 0 : i32
    %c0_i32_0 = arith.constant 0 : i32
    %c0_i32_1 = arith.constant 0 : i32
    return %c0_i32, %c0_i32_0 : i32, i32
  }
  func.func @transform_3(%arg0: i32) -> (i32, i32) {
    %c0_i32 = arith.constant 0 : i32
    %c0_i32_0 = arith.constant 0 : i32
    %c0_i32_1 = arith.constant 0 : i32
    return %c0_i32, %c0_i32_0 : i32, i32
  }
  func.func @transform_4(%arg0: i32) -> (i32, i32) {
    %c0_i32 = arith.constant 0 : i32
    %c0_i32_0 = arith.constant 0 : i32
    %c0_i32_1 = arith.constant 0 : i32
    return %c0_i32, %c0_i32_0 : i32, i32
  }
  func.func @transform_5(%arg0: i32) -> (i32, i32, i32) {
    %c0_i32 = arith.constant 0 : i32
    %c0_i32_0 = arith.constant 0 : i32
    %c0_i32_1 = arith.constant 0 : i32
    return %arg0, %c0_i32, %c0_i32_0 : i32, i32, i32
  }
}

module attributes {stable_mosaic.version = 11 : i64} {
  func.func @_block_s2_kernel(%arg0: i32, %arg1: memref<1x4x2x128xbf16, #tpu.memory_space<vmem>>, %arg2: memref<1x4x2x128xbf16, #tpu.memory_space<vmem>>, %arg3: memref<128x256xbf16, #tpu.memory_space<vmem>>, %arg4: memref<1x256xf32, #tpu.memory_space<vmem>>, %arg5: memref<9x256xf32, #tpu.memory_space<vmem>>, %arg6: memref<1x256xf32, #tpu.memory_space<vmem>>, %arg7: memref<256x128xbf16, #tpu.memory_space<vmem>>, %arg8: memref<1x128xf32, #tpu.memory_space<vmem>>, %arg9: memref<1x2x2x128xbf16, #tpu.memory_space<vmem>>, %arg10: memref<6x3x256xf32, #tpu.memory_space<vmem>>, %arg11: memref<6x3x256xf32, #tpu.memory_space<vmem>>) attributes {dimension_semantics = [#tpu.dimension_semantics<parallel>], iteration_bounds = array<i64: 2>, scalar_prefetch = 0 : i64, scratch_operands = 2 : i64, tpu.core_type = #tpu.core_type<tc>, window_params = [{transform_indices = @transform_0, window_bounds = array<i64: 1, 4, 2, 128>}, {transform_indices = @transform_1, window_bounds = array<i64: 1, 4, 2, 128>}, {pipeline_mode = #tpu.pipeline_mode<synchronous>, transform_indices = @transform_2, window_bounds = array<i64: 128, 256>}, {pipeline_mode = #tpu.pipeline_mode<synchronous>, transform_indices = @transform_3, window_bounds = array<i64: 1, 256>}, {pipeline_mode = #tpu.pipeline_mode<synchronous>, transform_indices = @transform_4, window_bounds = array<i64: 9, 256>}, {pipeline_mode = #tpu.pipeline_mode<synchronous>, transform_indices = @transform_5, window_bounds = array<i64: 1, 256>}, {pipeline_mode = #tpu.pipeline_mode<synchronous>, transform_indices = @transform_6, window_bounds = array<i64: 256, 128>}, {pipeline_mode = #tpu.pipeline_mode<synchronous>, transform_indices = @transform_7, window_bounds = array<i64: 1, 128>}, {transform_indices = @transform_8, window_bounds = array<i64: 1, 2, 2, 128>}]} {
    %cst = arith.constant 0.000000e+00 : f32
    %0 = vector.broadcast %cst : f32 to vector<1x3x256xf32>
    %cst_0 = arith.constant 0.000000e+00 : f32
    %1 = vector.broadcast %cst_0 : f32 to vector<6x1x256xf32>
    %c0 = arith.constant 0 : index
    %c0_1 = arith.constant 0 : index
    %c0_2 = arith.constant 0 : index
    %2 = vector.load %arg10[%c0, %c0_1, %c0_2] : memref<6x3x256xf32, #tpu.memory_space<vmem>>, vector<1x3x256xf32>
    tpu.vector_store %arg10[%c0, %c0_1, %c0_2], %0 {strides = array<i32>} : memref<6x3x256xf32, #tpu.memory_space<vmem>>, vector<1x3x256xf32>,
    %c5 = arith.constant 5 : index
    %c0_3 = arith.constant 0 : index
    %c0_4 = arith.constant 0 : index
    %3 = vector.load %arg10[%c5, %c0_3, %c0_4] : memref<6x3x256xf32, #tpu.memory_space<vmem>>, vector<1x3x256xf32>
    tpu.vector_store %arg10[%c5, %c0_3, %c0_4], %0 {strides = array<i32>} : memref<6x3x256xf32, #tpu.memory_space<vmem>>, vector<1x3x256xf32>,
    %c0_5 = arith.constant 0 : index
    %c0_6 = arith.constant 0 : index
    %c0_7 = arith.constant 0 : index
    %4 = vector.load %arg11[%c0_5, %c0_6, %c0_7] : memref<6x3x256xf32, #tpu.memory_space<vmem>>, vector<1x3x256xf32>
    tpu.vector_store %arg11[%c0_5, %c0_6, %c0_7], %0 {strides = array<i32>} : memref<6x3x256xf32, #tpu.memory_space<vmem>>, vector<1x3x256xf32>,
    %c5_8 = arith.constant 5 : index
    %c0_9 = arith.constant 0 : index
    %c0_10 = arith.constant 0 : index
    %5 = vector.load %arg11[%c5_8, %c0_9, %c0_10] : memref<6x3x256xf32, #tpu.memory_space<vmem>>, vector<1x3x256xf32>
    tpu.vector_store %arg11[%c5_8, %c0_9, %c0_10], %0 {strides = array<i32>} : memref<6x3x256xf32, #tpu.memory_space<vmem>>, vector<1x3x256xf32>,
    %c0_11 = arith.constant 0 : index
    %c0_12 = arith.constant 0 : index
    %c0_13 = arith.constant 0 : index
    %6 = vector.load %arg10[%c0_11, %c0_12, %c0_13] : memref<6x3x256xf32, #tpu.memory_space<vmem>>, vector<6x1x256xf32>
    tpu.vector_store %arg10[%c0_11, %c0_12, %c0_13], %1 {strides = array<i32>} : memref<6x3x256xf32, #tpu.memory_space<vmem>>, vector<6x1x256xf32>,
    %c0_14 = arith.constant 0 : index
    %c2 = arith.constant 2 : index
    %c0_15 = arith.constant 0 : index
    %7 = vector.load %arg11[%c0_14, %c2, %c0_15] : memref<6x3x256xf32, #tpu.memory_space<vmem>>, vector<6x1x256xf32>
    tpu.vector_store %arg11[%c0_14, %c2, %c0_15], %1 {strides = array<i32>} : memref<6x3x256xf32, #tpu.memory_space<vmem>>, vector<6x1x256xf32>,
    %c0_16 = arith.constant 0 : index
    %c0_17 = arith.constant 0 : index
    %c0_18 = arith.constant 0 : index
    %c0_19 = arith.constant 0 : index
    %8 = vector.load %arg1[%c0_16, %c0_17, %c0_18, %c0_19] : memref<1x4x2x128xbf16, #tpu.memory_space<vmem>>, vector<1x4x2x128xbf16>
    %9 = vector.shape_cast %8 : vector<1x4x2x128xbf16> to vector<4x2x128xbf16>
    %10 = vector.shape_cast %9 : vector<4x2x128xbf16> to vector<8x128xbf16>
    %c0_20 = arith.constant 0 : index
    %c0_21 = arith.constant 0 : index
    %11 = vector.load %arg3[%c0_20, %c0_21] : memref<128x256xbf16, #tpu.memory_space<vmem>>, vector<128x256xbf16>
    %cst_22 = arith.constant dense<0.000000e+00> : vector<8x256xf32>
    %12 = tpu.matmul %10, %11, %cst_22 {dimension_numbers = #tpu.dot_dimension_numbers<[1], [0], [0], [1], [0, 0, 1, 1], [], []>} : vector<8x128xbf16>, vector<128x256xbf16>, vector<8x256xf32> -> vector<8x256xf32>
    %c0_23 = arith.constant 0 : index
    %c0_24 = arith.constant 0 : index
    %13 = vector.load %arg4[%c0_23, %c0_24] : memref<1x256xf32, #tpu.memory_space<vmem>>, vector<1x256xf32>
    %14 = vector.broadcast %13 : vector<1x256xf32> to vector<8x256xf32>
    %15 = arith.addf %12, %14 : vector<8x256xf32>
    %cst_25 = arith.constant 0.000000e+00 : f32
    %cst_26 = arith.constant 6.000000e+00 : f32
    %16 = vector.broadcast %cst_25 : f32 to vector<8x256xf32>
    %17 = arith.maximumf %16, %15 : vector<8x256xf32>
    %18 = vector.broadcast %cst_26 : f32 to vector<8x256xf32>
    %19 = arith.minimumf %18, %17 : vector<8x256xf32>
    %20 = vector.shape_cast %19 : vector<8x256xf32> to vector<4x2x256xf32>
    %c1 = arith.constant 1 : index
    %c0_27 = arith.constant 0 : index
    %c0_28 = arith.constant 0 : index
    %21 = vector.load %arg11[%c1, %c0_27, %c0_28] : memref<6x3x256xf32, #tpu.memory_space<vmem>>, vector<4x2x256xf32>
    tpu.vector_store %arg11[%c1, %c0_27, %c0_28], %20 {strides = array<i32>} : memref<6x3x256xf32, #tpu.memory_space<vmem>>, vector<4x2x256xf32>,
    %c0_29 = arith.constant 0 : index
    %c0_30 = arith.constant 0 : index
    %c0_31 = arith.constant 0 : index
    %c0_32 = arith.constant 0 : index
    %22 = vector.load %arg2[%c0_29, %c0_30, %c0_31, %c0_32] : memref<1x4x2x128xbf16, #tpu.memory_space<vmem>>, vector<1x4x2x128xbf16>
    %23 = vector.shape_cast %22 : vector<1x4x2x128xbf16> to vector<4x2x128xbf16>
    %24 = vector.shape_cast %23 : vector<4x2x128xbf16> to vector<8x128xbf16>
    %c0_33 = arith.constant 0 : index
    %c0_34 = arith.constant 0 : index
    %25 = vector.load %arg3[%c0_33, %c0_34] : memref<128x256xbf16, #tpu.memory_space<vmem>>, vector<128x256xbf16>
    %cst_35 = arith.constant dense<0.000000e+00> : vector<8x256xf32>
    %26 = tpu.matmul %24, %25, %cst_35 {dimension_numbers = #tpu.dot_dimension_numbers<[1], [0], [0], [1], [0, 0, 1, 1], [], []>} : vector<8x128xbf16>, vector<128x256xbf16>, vector<8x256xf32> -> vector<8x256xf32>
    %c0_36 = arith.constant 0 : index
    %c0_37 = arith.constant 0 : index
    %27 = vector.load %arg4[%c0_36, %c0_37] : memref<1x256xf32, #tpu.memory_space<vmem>>, vector<1x256xf32>
    %28 = vector.broadcast %27 : vector<1x256xf32> to vector<8x256xf32>
    %29 = arith.addf %26, %28 : vector<8x256xf32>
    %cst_38 = arith.constant 0.000000e+00 : f32
    %cst_39 = arith.constant 6.000000e+00 : f32
    %30 = vector.broadcast %cst_38 : f32 to vector<8x256xf32>
    %31 = arith.maximumf %30, %29 : vector<8x256xf32>
    %32 = vector.broadcast %cst_39 : f32 to vector<8x256xf32>
    %33 = arith.minimumf %32, %31 : vector<8x256xf32>
    %34 = vector.shape_cast %33 : vector<8x256xf32> to vector<4x2x256xf32>
    %c1_40 = arith.constant 1 : index
    %c1_41 = arith.constant 1 : index
    %c0_42 = arith.constant 0 : index
    %35 = vector.load %arg10[%c1_40, %c1_41, %c0_42] : memref<6x3x256xf32, #tpu.memory_space<vmem>>, vector<4x2x256xf32>
    tpu.vector_store %arg10[%c1_40, %c1_41, %c0_42], %34 {strides = array<i32>} : memref<6x3x256xf32, #tpu.memory_space<vmem>>, vector<4x2x256xf32>,
    %cst_43 = arith.constant 0.000000e+00 : f32
    %36 = vector.broadcast %cst_43 : f32 to vector<2x2x256xf32>
    %c0_44 = arith.constant 0 : index
    %c0_45 = arith.constant 0 : index
    %c0_46 = arith.constant 0 : index
    %37 = vector.load %arg10[%c0_44, %c0_45, %c0_46] : memref<6x3x256xf32, #tpu.memory_space<vmem>>, vector<4x2x256xf32>
    %38 = vector.shape_cast %37 : vector<4x2x256xf32> to vector<2x2x2x256xf32>
    %39 = vector.extract_strided_slice %38 {offsets = [0, 0, 0, 0], sizes = [2, 1, 2, 256], strides = [1, 1, 1, 1]} : vector<2x2x2x256xf32> to vector<2x1x2x256xf32>
    %40 = vector.shape_cast %39 : vector<2x1x2x256xf32> to vector<2x2x256xf32>
    %c0_47 = arith.constant 0 : index
    %c0_48 = arith.constant 0 : index
    %41 = vector.load %arg5[%c0_47, %c0_48] : memref<9x256xf32, #tpu.memory_space<vmem>>, vector<1x256xf32>
    %42 = vector.shape_cast %41 : vector<1x256xf32> to vector<1x1x256xf32>
    %43 = vector.broadcast %42 : vector<1x1x256xf32> to vector<2x2x256xf32>
    %44 = arith.mulf %40, %43 : vector<2x2x256xf32>
    %45 = arith.addf %36, %44 : vector<2x2x256xf32>
    %c0_49 = arith.constant 0 : index
    %c0_50 = arith.constant 0 : index
    %c0_51 = arith.constant 0 : index
    %46 = vector.load %arg11[%c0_49, %c0_50, %c0_51] : memref<6x3x256xf32, #tpu.memory_space<vmem>>, vector<4x2x256xf32>
    %47 = vector.shape_cast %46 : vector<4x2x256xf32> to vector<2x2x2x256xf32>
    %48 = vector.extract_strided_slice %47 {offsets = [0, 0, 0, 0], sizes = [2, 1, 2, 256], strides = [1, 1, 1, 1]} : vector<2x2x2x256xf32> to vector<2x1x2x256xf32>
    %49 = vector.shape_cast %48 : vector<2x1x2x256xf32> to vector<2x2x256xf32>
    %c1_52 = arith.constant 1 : index
    %c0_53 = arith.constant 0 : index
    %50 = vector.load %arg5[%c1_52, %c0_53] : memref<9x256xf32, #tpu.memory_space<vmem>>, vector<1x256xf32>
    %51 = vector.shape_cast %50 : vector<1x256xf32> to vector<1x1x256xf32>
    %52 = vector.broadcast %51 : vector<1x1x256xf32> to vector<2x2x256xf32>
    %53 = arith.mulf %49, %52 : vector<2x2x256xf32>
    %54 = arith.addf %45, %53 : vector<2x2x256xf32>
    %c0_54 = arith.constant 0 : index
    %c1_55 = arith.constant 1 : index
    %c0_56 = arith.constant 0 : index
    %55 = vector.load %arg10[%c0_54, %c1_55, %c0_56] : memref<6x3x256xf32, #tpu.memory_space<vmem>>, vector<4x2x256xf32>
    %56 = vector.shape_cast %55 : vector<4x2x256xf32> to vector<2x2x2x256xf32>
    %57 = vector.extract_strided_slice %56 {offsets = [0, 0, 0, 0], sizes = [2, 1, 2, 256], strides = [1, 1, 1, 1]} : vector<2x2x2x256xf32> to vector<2x1x2x256xf32>
    %58 = vector.shape_cast %57 : vector<2x1x2x256xf32> to vector<2x2x256xf32>
    %c2_57 = arith.constant 2 : index
    %c0_58 = arith.constant 0 : index
    %59 = vector.load %arg5[%c2_57, %c0_58] : memref<9x256xf32, #tpu.memory_space<vmem>>, vector<1x256xf32>
    %60 = vector.shape_cast %59 : vector<1x256xf32> to vector<1x1x256xf32>
    %61 = vector.broadcast %60 : vector<1x1x256xf32> to vector<2x2x256xf32>
    %62 = arith.mulf %58, %61 : vector<2x2x256xf32>
    %63 = arith.addf %54, %62 : vector<2x2x256xf32>
    %c1_59 = arith.constant 1 : index
    %c0_60 = arith.constant 0 : index
    %c0_61 = arith.constant 0 : index
    %64 = vector.load %arg10[%c1_59, %c0_60, %c0_61] : memref<6x3x256xf32, #tpu.memory_space<vmem>>, vector<4x2x256xf32>
    %65 = vector.shape_cast %64 : vector<4x2x256xf32> to vector<2x2x2x256xf32>
    %66 = vector.extract_strided_slice %65 {offsets = [0, 0, 0, 0], sizes = [2, 1, 2, 256], strides = [1, 1, 1, 1]} : vector<2x2x2x256xf32> to vector<2x1x2x256xf32>
    %67 = vector.shape_cast %66 : vector<2x1x2x256xf32> to vector<2x2x256xf32>
    %c3 = arith.constant 3 : index
    %c0_62 = arith.constant 0 : index
    %68 = vector.load %arg5[%c3, %c0_62] : memref<9x256xf32, #tpu.memory_space<vmem>>, vector<1x256xf32>
    %69 = vector.shape_cast %68 : vector<1x256xf32> to vector<1x1x256xf32>
    %70 = vector.broadcast %69 : vector<1x1x256xf32> to vector<2x2x256xf32>
    %71 = arith.mulf %67, %70 : vector<2x2x256xf32>
    %72 = arith.addf %63, %71 : vector<2x2x256xf32>
    %c1_63 = arith.constant 1 : index
    %c0_64 = arith.constant 0 : index
    %c0_65 = arith.constant 0 : index
    %73 = vector.load %arg11[%c1_63, %c0_64, %c0_65] : memref<6x3x256xf32, #tpu.memory_space<vmem>>, vector<4x2x256xf32>
    %74 = vector.shape_cast %73 : vector<4x2x256xf32> to vector<2x2x2x256xf32>
    %75 = vector.extract_strided_slice %74 {offsets = [0, 0, 0, 0], sizes = [2, 1, 2, 256], strides = [1, 1, 1, 1]} : vector<2x2x2x256xf32> to vector<2x1x2x256xf32>
    %76 = vector.shape_cast %75 : vector<2x1x2x256xf32> to vector<2x2x256xf32>
    %c4 = arith.constant 4 : index
    %c0_66 = arith.constant 0 : index
    %77 = vector.load %arg5[%c4, %c0_66] : memref<9x256xf32, #tpu.memory_space<vmem>>, vector<1x256xf32>
    %78 = vector.shape_cast %77 : vector<1x256xf32> to vector<1x1x256xf32>
    %79 = vector.broadcast %78 : vector<1x1x256xf32> to vector<2x2x256xf32>
    %80 = arith.mulf %76, %79 : vector<2x2x256xf32>
    %81 = arith.addf %72, %80 : vector<2x2x256xf32>
    %c1_67 = arith.constant 1 : index
    %c1_68 = arith.constant 1 : index
    %c0_69 = arith.constant 0 : index
    %82 = vector.load %arg10[%c1_67, %c1_68, %c0_69] : memref<6x3x256xf32, #tpu.memory_space<vmem>>, vector<4x2x256xf32>
    %83 = vector.shape_cast %82 : vector<4x2x256xf32> to vector<2x2x2x256xf32>
    %84 = vector.extract_strided_slice %83 {offsets = [0, 0, 0, 0], sizes = [2, 1, 2, 256], strides = [1, 1, 1, 1]} : vector<2x2x2x256xf32> to vector<2x1x2x256xf32>
    %85 = vector.shape_cast %84 : vector<2x1x2x256xf32> to vector<2x2x256xf32>
    %c5_70 = arith.constant 5 : index
    %c0_71 = arith.constant 0 : index
    %86 = vector.load %arg5[%c5_70, %c0_71] : memref<9x256xf32, #tpu.memory_space<vmem>>, vector<1x256xf32>
    %87 = vector.shape_cast %86 : vector<1x256xf32> to vector<1x1x256xf32>
    %88 = vector.broadcast %87 : vector<1x1x256xf32> to vector<2x2x256xf32>
    %89 = arith.mulf %85, %88 : vector<2x2x256xf32>
    %90 = arith.addf %81, %89 : vector<2x2x256xf32>
    %c2_72 = arith.constant 2 : index
    %c0_73 = arith.constant 0 : index
    %c0_74 = arith.constant 0 : index
    %91 = vector.load %arg10[%c2_72, %c0_73, %c0_74] : memref<6x3x256xf32, #tpu.memory_space<vmem>>, vector<4x2x256xf32>
    %92 = vector.shape_cast %91 : vector<4x2x256xf32> to vector<2x2x2x256xf32>
    %93 = vector.extract_strided_slice %92 {offsets = [0, 0, 0, 0], sizes = [2, 1, 2, 256], strides = [1, 1, 1, 1]} : vector<2x2x2x256xf32> to vector<2x1x2x256xf32>
    %94 = vector.shape_cast %93 : vector<2x1x2x256xf32> to vector<2x2x256xf32>
    %c6 = arith.constant 6 : index
    %c0_75 = arith.constant 0 : index
    %95 = vector.load %arg5[%c6, %c0_75] : memref<9x256xf32, #tpu.memory_space<vmem>>, vector<1x256xf32>
    %96 = vector.shape_cast %95 : vector<1x256xf32> to vector<1x1x256xf32>
    %97 = vector.broadcast %96 : vector<1x1x256xf32> to vector<2x2x256xf32>
    %98 = arith.mulf %94, %97 : vector<2x2x256xf32>
    %99 = arith.addf %90, %98 : vector<2x2x256xf32>
    %c2_76 = arith.constant 2 : index
    %c0_77 = arith.constant 0 : index
    %c0_78 = arith.constant 0 : index
    %100 = vector.load %arg11[%c2_76, %c0_77, %c0_78] : memref<6x3x256xf32, #tpu.memory_space<vmem>>, vector<4x2x256xf32>
    %101 = vector.shape_cast %100 : vector<4x2x256xf32> to vector<2x2x2x256xf32>
    %102 = vector.extract_strided_slice %101 {offsets = [0, 0, 0, 0], sizes = [2, 1, 2, 256], strides = [1, 1, 1, 1]} : vector<2x2x2x256xf32> to vector<2x1x2x256xf32>
    %103 = vector.shape_cast %102 : vector<2x1x2x256xf32> to vector<2x2x256xf32>
    %c7 = arith.constant 7 : index
    %c0_79 = arith.constant 0 : index
    %104 = vector.load %arg5[%c7, %c0_79] : memref<9x256xf32, #tpu.memory_space<vmem>>, vector<1x256xf32>
    %105 = vector.shape_cast %104 : vector<1x256xf32> to vector<1x1x256xf32>
    %106 = vector.broadcast %105 : vector<1x1x256xf32> to vector<2x2x256xf32>
    %107 = arith.mulf %103, %106 : vector<2x2x256xf32>
    %108 = arith.addf %99, %107 : vector<2x2x256xf32>
    %c2_80 = arith.constant 2 : index
    %c1_81 = arith.constant 1 : index
    %c0_82 = arith.constant 0 : index
    %109 = vector.load %arg10[%c2_80, %c1_81, %c0_82] : memref<6x3x256xf32, #tpu.memory_space<vmem>>, vector<4x2x256xf32>
    %110 = vector.shape_cast %109 : vector<4x2x256xf32> to vector<2x2x2x256xf32>
    %111 = vector.extract_strided_slice %110 {offsets = [0, 0, 0, 0], sizes = [2, 1, 2, 256], strides = [1, 1, 1, 1]} : vector<2x2x2x256xf32> to vector<2x1x2x256xf32>
    %112 = vector.shape_cast %111 : vector<2x1x2x256xf32> to vector<2x2x256xf32>
    %c8 = arith.constant 8 : index
    %c0_83 = arith.constant 0 : index
    %113 = vector.load %arg5[%c8, %c0_83] : memref<9x256xf32, #tpu.memory_space<vmem>>, vector<1x256xf32>
    %114 = vector.shape_cast %113 : vector<1x256xf32> to vector<1x1x256xf32>
    %115 = vector.broadcast %114 : vector<1x1x256xf32> to vector<2x2x256xf32>
    %116 = arith.mulf %112, %115 : vector<2x2x256xf32>
    %117 = arith.addf %108, %116 : vector<2x2x256xf32>
    %c0_84 = arith.constant 0 : index
    %c0_85 = arith.constant 0 : index
    %118 = vector.load %arg6[%c0_84, %c0_85] : memref<1x256xf32, #tpu.memory_space<vmem>>, vector<1x256xf32>
    %119 = vector.shape_cast %118 : vector<1x256xf32> to vector<1x1x256xf32>
    %120 = vector.broadcast %119 : vector<1x1x256xf32> to vector<2x2x256xf32>
    %121 = arith.addf %117, %120 : vector<2x2x256xf32>
    %cst_86 = arith.constant 0.000000e+00 : f32
    %cst_87 = arith.constant 6.000000e+00 : f32
    %122 = vector.broadcast %cst_86 : f32 to vector<2x2x256xf32>
    %123 = arith.maximumf %122, %121 : vector<2x2x256xf32>
    %124 = vector.broadcast %cst_87 : f32 to vector<2x2x256xf32>
    %125 = arith.minimumf %124, %123 : vector<2x2x256xf32>
    %126 = vector.shape_cast %125 : vector<2x2x256xf32> to vector<4x256xf32>
    %127 = arith.truncf %126 : vector<4x256xf32> to vector<4x256xbf16>
    %c0_88 = arith.constant 0 : index
    %c0_89 = arith.constant 0 : index
    %128 = vector.load %arg7[%c0_88, %c0_89] : memref<256x128xbf16, #tpu.memory_space<vmem>>, vector<256x128xbf16>
    %cst_90 = arith.constant dense<0.000000e+00> : vector<4x128xf32>
    %129 = tpu.matmul %127, %128, %cst_90 {dimension_numbers = #tpu.dot_dimension_numbers<[1], [0], [0], [1], [0, 0, 1, 1], [], []>} : vector<4x256xbf16>, vector<256x128xbf16>, vector<4x128xf32> -> vector<4x128xf32>
    %c0_91 = arith.constant 0 : index
    %c0_92 = arith.constant 0 : index
    %130 = vector.load %arg8[%c0_91, %c0_92] : memref<1x128xf32, #tpu.memory_space<vmem>>, vector<1x128xf32>
    %131 = vector.broadcast %130 : vector<1x128xf32> to vector<4x128xf32>
    %132 = arith.addf %129, %131 : vector<4x128xf32>
    %133 = vector.shape_cast %132 : vector<4x128xf32> to vector<2x2x128xf32>
    %134 = arith.truncf %133 : vector<2x2x128xf32> to vector<2x2x128xbf16>
    %c0_93 = arith.constant 0 : index
    %c0_94 = arith.constant 0 : index
    %c0_95 = arith.constant 0 : index
    %c0_96 = arith.constant 0 : index
    %135 = vector.load %arg9[%c0_93, %c0_94, %c0_95, %c0_96] : memref<1x2x2x128xbf16, #tpu.memory_space<vmem>>, vector<1x2x2x128xbf16>
    %136 = vector.shape_cast %135 : vector<1x2x2x128xbf16> to vector<2x2x128xbf16>
    %137 = vector.shape_cast %134 : vector<2x2x128xbf16> to vector<1x2x2x128xbf16>
    tpu.vector_store %arg9[%c0_93, %c0_94, %c0_95, %c0_96], %137 {strides = array<i32>} : memref<1x2x2x128xbf16, #tpu.memory_space<vmem>>, vector<1x2x2x128xbf16>,
    return
  }
  func.func @transform_0(%arg0: i32) -> (i32, i32, i32, i32) {
    %c0_i32 = arith.constant 0 : i32
    %c0_i32_0 = arith.constant 0 : i32
    %c0_i32_1 = arith.constant 0 : i32
    %c0_i32_2 = arith.constant 0 : i32
    return %arg0, %c0_i32, %c0_i32_0, %c0_i32_1 : i32, i32, i32, i32
  }
  func.func @transform_1(%arg0: i32) -> (i32, i32, i32, i32) {
    %c0_i32 = arith.constant 0 : i32
    %c0_i32_0 = arith.constant 0 : i32
    %c0_i32_1 = arith.constant 0 : i32
    %c0_i32_2 = arith.constant 0 : i32
    return %arg0, %c0_i32, %c0_i32_0, %c0_i32_1 : i32, i32, i32, i32
  }
  func.func @transform_2(%arg0: i32) -> (i32, i32) {
    %c0_i32 = arith.constant 0 : i32
    %c0_i32_0 = arith.constant 0 : i32
    %c0_i32_1 = arith.constant 0 : i32
    return %c0_i32, %c0_i32_0 : i32, i32
  }
  func.func @transform_3(%arg0: i32) -> (i32, i32) {
    %c0_i32 = arith.constant 0 : i32
    %c0_i32_0 = arith.constant 0 : i32
    %c0_i32_1 = arith.constant 0 : i32
    return %c0_i32, %c0_i32_0 : i32, i32
  }
  func.func @transform_4(%arg0: i32) -> (i32, i32) {
    %c0_i32 = arith.constant 0 : i32
    %c0_i32_0 = arith.constant 0 : i32
    %c0_i32_1 = arith.constant 0 : i32
    return %c0_i32, %c0_i32_0 : i32, i32
  }
  func.func @transform_5(%arg0: i32) -> (i32, i32) {
    %c0_i32 = arith.constant 0 : i32
    %c0_i32_0 = arith.constant 0 : i32
    %c0_i32_1 = arith.constant 0 : i32
    return %c0_i32, %c0_i32_0 : i32, i32
  }
  func.func @transform_6(%arg0: i32) -> (i32, i32) {
    %c0_i32 = arith.constant 0 : i32
    %c0_i32_0 = arith.constant 0 : i32
    %c0_i32_1 = arith.constant 0 : i32
    return %c0_i32, %c0_i32_0 : i32, i32
  }
  func.func @transform_7(%arg0: i32) -> (i32, i32) {
    %c0_i32 = arith.constant 0 : i32
    %c0_i32_0 = arith.constant 0 : i32
    %c0_i32_1 = arith.constant 0 : i32
    return %c0_i32, %c0_i32_0 : i32, i32
  }
  func.func @transform_8(%arg0: i32) -> (i32, i32, i32, i32) {
    %c0_i32 = arith.constant 0 : i32
    %c0_i32_0 = arith.constant 0 : i32
    %c0_i32_1 = arith.constant 0 : i32
    %c0_i32_2 = arith.constant 0 : i32
    return %arg0, %c0_i32, %c0_i32_0, %c0_i32_1 : i32, i32, i32, i32
  }
}

</mosaic_0001>

<llo_original>
// kernel: _lambda_.7
$region0: #{_lambda_.7}
  #allocation0 [shape = 'u32[]', space=smem, size = 0x4, offset = 0x4, fixed_abs, tag = 'smem constant byte address 0x4 - core index']
  #allocation1 [shape = 'u32[144,128]{1,0:T(1,128)}', space=vmem, size = 0x12000, scoped, tag = 'internal scratch']
  #allocation2 [shape = 'f32[10,10,128]{2,1,0:T(8,128)}', space=vmem, size = 0x14000, scoped, tag = 'scratch operand']
  %s0 = inlined_call_operand.vmem [shape: bf16[2,8,8,128], index: 0, kind: input, shape index: {}]
  %s1 = inlined_call_operand.vmem [shape: f32[9,128], index: 1, kind: input, shape index: {}]
  %s2 = inlined_call_operand.vmem [shape: f32[1,128], index: 2, kind: input, shape index: {}, may-alias: {2,4}]
  %s3 = inlined_call_operand.vmem [shape: bf16[128,128], index: 3, kind: input, shape index: {}]
  %s4 = inlined_call_operand.vmem [shape: f32[1,128], index: 4, kind: input, shape index: {}, may-alias: {2,4}]
  %s5 = inlined_call_operand.vmem [shape: bf16[2,8,8,128], index: 5, kind: output, shape index: {}]
  %s6 = sld [smem:[#allocation0]]
  $region53: #{_lambda_.7} parent=0
    _
  %s8 = ssub.s32 1, %s6
  %s9 = scalar_select 0, %s8, %s6
  loop: start=0, step=1, limit=4
  $region2: #{_lambda_.7} parent=0 // loop_pre_header
    _
  $region3: #{_lambda_.7} parent=0 // loop_header
    %s11 = sphi 0, %s15
    %p12 = scmp.ge.s32.totalorder %s11, 4
    %s21 = sphi 0, %s23
    %s24 = sphi 0, %s21
    %s25 = sphi 0, %s24
    %s41 = sphi 0, %s25
    %s45 = sphi 0, %s45
    %s47 = sphi 0, %s45
    %s48 = sphi 0, %s47
    %s62 = sphi 0, %s48
    %s66 = sphi 0, %s66
    %s68 = sphi 0, %s66
    %s69 = sphi 0, %s68
    %s83 = sphi 0, %s69
    %s87 = sphi 0, %s87
    %s89 = sphi 0, %s87
    %s90 = sphi 0, %s89
    %s104 = sphi 0, %s90
    %s108 = sphi 0, %s108
    %s110 = sphi 0, %s108
    %s111 = sphi 0, %s110
    %s125 = sphi 0, %s111
    %s131 = sphi 0, %s133
    %s134 = sphi 0, %s131
    %s135 = sphi 0, %s134
    %s151 = sphi 0, %s135
  $region4: #{_lambda_.7} parent=0 // loop_header_branch
    %14 = sbr.rel (%p12) target = $region8
  $region5: #{_lambda_.7} parent=0 // loop_body
    %s16 = ssub.s32 %s11, 1
    %s17 = ssub.s32 %s11, 2
    %s18 = sadd.s32 %s11, 1
    %s19 = ssub.s32 %s11, %s18
    %p20 = scmp.eq.s32.totalorder %s19, 0
    %s22 = sadd.s32 %s21, 1
    %s23 = scalar_select %p20, %s21, %s22
    %p26 = pneg %p20
    %p27 = scmp.eq.s32.totalorder %s11, 1
    %p28 = por %p26, %p27
    %p29 = scmp.ne.s32.totalorder %s21, %s24
    %p30 = scmp.eq.s32.totalorder %s11, 0
    %p31 = por %p29, %p30
    %p32 = scmp.ne.s32.totalorder %s21, %s24
    %p33 = scmp.eq.s32.totalorder %s16, 1
    %p34 = por %p32, %p33
    %p35 = scmp.ne.s32.totalorder %s24, %s25
    %p36 = scmp.eq.s32.totalorder %s16, 0
    %p37 = por %p35, %p36
    %p38 = scmp.ne.s32.totalorder %s24, %s25
    %p39 = scmp.eq.s32.totalorder %s17, 1
    %p40 = por %p38, %p39
    %p42 = scmp.ne.s32.totalorder %s25, %s41
    %p43 = scmp.eq.s32.totalorder %s17, 0
    %p44 = por %p42, %p43
    %s46 = sadd.s32 %s45, 1
    %p49 = scmp.eq.s32.totalorder %s11, 1
    %p50 = scmp.ne.s32.totalorder %s45, %s47
    %p51 = scmp.eq.s32.totalorder %s11, 0
    %p52 = por %p50, %p51
    %p53 = scmp.ne.s32.totalorder %s45, %s47
    %p54 = scmp.eq.s32.totalorder %s16, 1
    %p55 = por %p53, %p54
    %p56 = scmp.ne.s32.totalorder %s47, %s48
    %p57 = scmp.eq.s32.totalorder %s16, 0
    %p58 = por %p56, %p57
    %p59 = scmp.ne.s32.totalorder %s47, %s48
    %p60 = scmp.eq.s32.totalorder %s17, 1
    %p61 = por %p59, %p60
    %p63 = scmp.ne.s32.totalorder %s48, %s62
    %p64 = scmp.eq.s32.totalorder %s17, 0
    %p65 = por %p63, %p64
    %s67 = sadd.s32 %s66, 1
    %p70 = scmp.eq.s32.totalorder %s11, 1
    %p71 = scmp.ne.s32.totalorder %s66, %s68
    %p72 = scmp.eq.s32.totalorder %s11, 0
    %p73 = por %p71, %p72
    %p74 = scmp.ne.s32.totalorder %s66, %s68
    %p75 = scmp.eq.s32.totalorder %s16, 1
    %p76 = por %p74, %p75
    %p77 = scmp.ne.s32.totalorder %s68, %s69
    %p78 = scmp.eq.s32.totalorder %s16, 0
    %p79 = por %p77, %p78
    %p80 = scmp.ne.s32.totalorder %s68, %s69
    %p81 = scmp.eq.s32.totalorder %s17, 1
    %p82 = por %p80, %p81
    %p84 = scmp.ne.s32.totalorder %s69, %s83
    %p85 = scmp.eq.s32.totalorder %s17, 0
    %p86 = por %p84, %p85
    %s88 = sadd.s32 %s87, 1
    %p91 = scmp.eq.s32.totalorder %s11, 1
    %p92 = scmp.ne.s32.totalorder %s87, %s89
    %p93 = scmp.eq.s32.totalorder %s11, 0
    %p94 = por %p92, %p93
    %p95 = scmp.ne.s32.totalorder %s87, %s89
    %p96 = scmp.eq.s32.totalorder %s16, 1
    %p97 = por %p95, %p96
    %p98 = scmp.ne.s32.totalorder %s89, %s90
    %p99 = scmp.eq.s32.totalorder %s16, 0
    %p100 = por %p98, %p99
    %p101 = scmp.ne.s32.totalorder %s89, %s90
    %p102 = scmp.eq.s32.totalorder %s17, 1
    %p103 = por %p101, %p102
    %p105 = scmp.ne.s32.totalorder %s90, %s104
    %p106 = scmp.eq.s32.totalorder %s17, 0
    %p107 = por %p105, %p106
    %s109 = sadd.s32 %s108, 1
    %p112 = scmp.eq.s32.totalorder %s11, 1
    %p113 = scmp.ne.s32.totalorder %s108, %s110
    %p114 = scmp.eq.s32.totalorder %s11, 0
    %p115 = por %p113, %p114
    %p116 = scmp.ne.s32.totalorder %s108, %s110
    %p117 = scmp.eq.s32.totalorder %s16, 1
    %p118 = por %p116, %p117
    %p119 = scmp.ne.s32.totalorder %s110, %s111
    %p120 = scmp.eq.s32.totalorder %s16, 0
    %p121 = por %p119, %p120
    %p122 = scmp.ne.s32.totalorder %s110, %s111
    %p123 = scmp.eq.s32.totalorder %s17, 1
    %p124 = por %p122, %p123
    %p126 = scmp.ne.s32.totalorder %s111, %s125
    %p127 = scmp.eq.s32.totalorder %s17, 0
    %p128 = por %p126, %p127
    %s129 = ssub.s32 %s11, %s18
    %p130 = scmp.eq.s32.totalorder %s129, 0
    %s132 = sadd.s32 %s131, 1
    %s133 = scalar_select %p130, %s131, %s132
    %p136 = pneg %p130
    %p137 = scmp.eq.s32.totalorder %s11, 1
    %p138 = por %p136, %p137
    %p139 = scmp.ne.s32.totalorder %s131, %s134
    %p140 = scmp.eq.s32.totalorder %s11, 0
    %p141 = por %p139, %p140
    %p142 = scmp.ne.s32.totalorder %s131, %s134
    %p143 = scmp.eq.s32.totalorder %s16, 1
    %p144 = por %p142, %p143
    %p145 = scmp.ne.s32.totalorder %s134, %s135
    %p146 = scmp.eq.s32.totalorder %s16, 0
    %p147 = por %p145, %p146
    %p148 = scmp.ne.s32.totalorder %s134, %s135
    %p149 = scmp.eq.s32.totalorder %s17, 1
    %p150 = por %p148, %p149
    %p152 = scmp.ne.s32.totalorder %s135, %s151
    %p153 = scmp.eq.s32.totalorder %s17, 0
    %p154 = por %p152, %p153
    %p155 = scmp.le.s32.totalorder 1, %s11
    %p156 = scmp.lt.s32.totalorder %s11, 3
    %p157 = pnand %p155, %p156
    %p158 = pneg %p157
    // Predicated region
    $region9: #{_lambda_.7} parent=5 // pred_check
      _
    $region10: #{_lambda_.7} parent=5 // pred_check_branch
      %160 = sbr.rel (%p157) target = $region12
    $region11: #{_lambda_.7} parent=5 // pred_region
      %s161 = ssub.s32 %s11, 1
      // Predicated region
      $region13: #{_lambda_.7} parent=11 // pred_check
        %p162 = pneg %p58
      $region14: #{_lambda_.7} parent=11 // pred_check_branch
        %164 = sbr.rel (%p162) target = $region16
      $region15: #{_lambda_.7} parent=11 // pred_region
        _
      $region16: #{_lambda_.7} parent=11 // pred_fallthru
        _
      // Predicated region
      $region17: #{_lambda_.7} parent=11 // pred_check
        %p165 = pneg %p79
      $region18: #{_lambda_.7} parent=11 // pred_check_branch
        %167 = sbr.rel (%p165) target = $region20
      $region19: #{_lambda_.7} parent=11 // pred_region
        _
      $region20: #{_lambda_.7} parent=11 // pred_fallthru
        _
      // Predicated region
      $region21: #{_lambda_.7} parent=11 // pred_check
        %p168 = pneg %p100
      $region22: #{_lambda_.7} parent=11 // pred_check_branch
        %170 = sbr.rel (%p168) target = $region24
      $region23: #{_lambda_.7} parent=11 // pred_region
        _
      $region24: #{_lambda_.7} parent=11 // pred_fallthru
        _
      // Predicated region
      $region25: #{_lambda_.7} parent=11 // pred_check
        %p171 = pneg %p121
      $region26: #{_lambda_.7} parent=11 // pred_check_branch
        %173 = sbr.rel (%p171) target = $region28
      $region27: #{_lambda_.7} parent=11 // pred_region
        _
      $region28: #{_lambda_.7} parent=11 // pred_fallthru
        _
    $region12: #{_lambda_.7} parent=5 // pred_fallthru
      _
    %p174 = scmp.lt.s32.totalorder %s11, 2
    // Predicated region
    $region29: #{_lambda_.7} parent=5 // pred_check
      %p175 = pneg %p174
    $region30: #{_lambda_.7} parent=5 // pred_check_branch
      %177 = sbr.rel (%p175) target = $region32
    $region31: #{_lambda_.7} parent=5 // pred_region
      // Predicated region
      $region33: #{_lambda_.7} parent=31 // pred_check
        %p178 = pneg %p31
      $region34: #{_lambda_.7} parent=31 // pred_check_branch
        %180 = sbr.rel (%p178) target = $region36
      $region35: #{_lambda_.7} parent=31 // pred_region
        %p181 = scmp.lt.s32.totalorder %s11, 1
        %s182 = scalar_select %p181, %s11, 1
        %s183 = smul.addr %s182, 8
        %s184 = smul.addr %s183, 4
        %s185 = scalar_lea.vmem %s0, %s184
      $region36: #{_lambda_.7} parent=31 // pred_fallthru
        _
    $region32: #{_lambda_.7} parent=5 // pred_fallthru
      _
    %p186 = scmp.le.s32.totalorder 1, %s11
    %p187 = scmp.lt.s32.totalorder %s11, 3
    %p188 = pnand %p186, %p187
    %p189 = pneg %p188
    // Predicated region
    $region37: #{_lambda_.7} parent=5 // pred_check
      _
    $region38: #{_lambda_.7} parent=5 // pred_check_branch
      %191 = sbr.rel (%p188) target = $region40
    $region39: #{_lambda_.7} parent=5 // pred_region
      %s192 = ssub.s32 %s11, 1
      %p193 = scmp.lt.s32.totalorder %s16, 1
      %s194 = scalar_select %p193, %s16, 1
      %s195 = smul.addr %s194, 8
      %s196 = smul.addr %s195, 4
      %s197 = scalar_lea.vmem %s0, %s196
      %p198 = pneg %p37
      %p199 = pneg %p34
      %p200 = pneg %p58
      %p201 = pneg %p55
      %p202 = pneg %p79
      %p203 = pneg %p76
      %p204 = pneg %p100
      %p205 = pneg %p97
      %p206 = pneg %p121
      %p207 = pneg %p118
      %p208 = pneg %p147
      %p209 = pneg %p144
      %p210 = scmp.lt.s32.totalorder %s16, 1
      %s211 = scalar_select %p210, %s16, 1
      %s212 = smul.addr %s211, 8
      %s213 = smul.addr %s212, 4
      %s214 = scalar_lea.vmem %s5, %s213
      %p215 = scmp.lt.s32.totalorder %s16, 1
      %s216 = scalar_select %p215, %s16, 1
      %s217 = smul.addr %s216, 8
      %s218 = smul.addr %s217, 4
      %s219 = scalar_lea.vmem %s0, %s218
      %p220 = scmp.lt.s32.totalorder %s16, 1
      %s221 = scalar_select %p220, %s16, 1
      %s222 = smul.addr %s221, 8
      %s223 = smul.addr %s222, 4
      %s224 = scalar_lea.vmem %s5, %s223
      %226 = vst [vmem:[#allocation2] sm:$0xff] 0.0
      %227 = vst [vmem:[#allocation2 + $0x8] sm:$0x3] 0.0
      %s228 = scalar_lea.vmem [#allocation2], 144
      %229 = vst [vmem:[%s228] sm:$0xff] 0.0
      %230 = vst [vmem:[%s228 + $0x8] sm:$0x3] 0.0
      %231 = vst [vmem:[#allocation2] sm:$0x1] 0.0
      %232 = vst [vmem:[#allocation2 + $0x10] sm:$0x1] 0.0
      %233 = vst [vmem:[#allocation2 + $0x20] sm:$0x1] 0.0
      %234 = vst [vmem:[#allocation2 + $0x30] sm:$0x1] 0.0
      %235 = vst [vmem:[#allocation2 + $0x40] sm:$0x1] 0.0
      %236 = vst [vmem:[#allocation2 + $0x50] sm:$0x1] 0.0
      %237 = vst [vmem:[#allocation2 + $0x60] sm:$0x1] 0.0
      %238 = vst [vmem:[#allocation2 + $0x70] sm:$0x1] 0.0
      %239 = vst [vmem:[#allocation2 + $0x80] sm:$0x1] 0.0
      %240 = vst [vmem:[#allocation2 + $0x90] sm:$0x1] 0.0
      %241 = vst [vmem:[#allocation2 + $0x9] sm:$0x1] 0.0
      %242 = vst [vmem:[#allocation2 + $0x19] sm:$0x1] 0.0
      %243 = vst [vmem:[#allocation2 + $0x29] sm:$0x1] 0.0
      %244 = vst [vmem:[#allocation2 + $0x39] sm:$0x1] 0.0
      %245 = vst [vmem:[#allocation2 + $0x49] sm:$0x1] 0.0
      %246 = vst [vmem:[#allocation2 + $0x59] sm:$0x1] 0.0
      %247 = vst [vmem:[#allocation2 + $0x69] sm:$0x1] 0.0
      %248 = vst [vmem:[#allocation2 + $0x79] sm:$0x1] 0.0
      %249 = vst [vmem:[#allocation2 + $0x89] sm:$0x1] 0.0
      %250 = vst [vmem:[#allocation2 + $0x99] sm:$0x1] 0.0
      %v251 = vld [vmem:[%s219] sm:$0xf]
      %v252 = vld [vmem:[%s219 + $0x4] sm:$0xf]
      %v253 = vld [vmem:[%s219 + $0x8] sm:$0xf]
      %v254 = vld [vmem:[%s219 + $0xc] sm:$0xf]
      %v255 = vld [vmem:[%s219 + $0x10] sm:$0xf]
      %v256 = vld [vmem:[%s219 + $0x14] sm:$0xf]
      %v257 = vld [vmem:[%s219 + $0x18] sm:$0xf]
      %v258 = vld [vmem:[%s219 + $0x1c] sm:$0xf]
      %v259 = vunpack.c.l.bf16 %v251
      %v260 = vunpack.c.l.bf16 %v252
      %v261 = vunpack.c.l.bf16 %v253
      %v262 = vunpack.c.l.bf16 %v254
      %v263 = vunpack.c.l.bf16 %v255
      %v264 = vunpack.c.l.bf16 %v256
      %v265 = vunpack.c.l.bf16 %v257
      %v266 = vunpack.c.l.bf16 %v258
      %s267 = scalar_lea.vmem [#allocation2], 16
      %268 = vst [vmem:[%s267 + $0x1] sm:$0xff] %v259
      %269 = vst [vmem:[%s267 + $0x11] sm:$0xff] %v260
      %270 = vst [vmem:[%s267 + $0x21] sm:$0xff] %v261
      %271 = vst [vmem:[%s267 + $0x31] sm:$0xff] %v262
      %272 = vst [vmem:[%s267 + $0x41] sm:$0xff] %v263
      %273 = vst [vmem:[%s267 + $0x51] sm:$0xff] %v264
      %274 = vst [vmem:[%s267 + $0x61] sm:$0xff] %v265
      %275 = vst [vmem:[%s267 + $0x71] sm:$0xff] %v266
      %v276 = vld [vmem:[#allocation2] sm:$0xff]
      %v277 = vld [vmem:[#allocation2 + $0x10] sm:$0xff]
      %v278 = vld [vmem:[#allocation2 + $0x20] sm:$0xff]
      %v279 = vld [vmem:[#allocation2 + $0x30] sm:$0xff]
      %v280 = vld [vmem:[#allocation2 + $0x40] sm:$0xff]
      %v281 = vld [vmem:[#allocation2 + $0x50] sm:$0xff]
      %v282 = vld [vmem:[#allocation2 + $0x60] sm:$0xff]
      %v283 = vld [vmem:[#allocation2 + $0x70] sm:$0xff]
      %v284 = vld [vmem:[%s1] sm:$0x1]
      %v285 = vlaneseq
      %v286 = vshrl.u32 %v285, 7
      %v287 = vsub.s32 0, %v286
      %v288 = vrot.slane %v284, %v287
      %v289 = vmul.f32 %v276, %v288
      %v290 = vmul.f32 %v277, %v288
      %v291 = vmul.f32 %v278, %v288
      %v292 = vmul.f32 %v279, %v288
      %v293 = vmul.f32 %v280, %v288
      %v294 = vmul.f32 %v281, %v288
      %v295 = vmul.f32 %v282, %v288
      %v296 = vmul.f32 %v283, %v288
      %v297 = vadd.f32 %v289, 0.0
      %v298 = vadd.f32 %v290, 0.0
      %v299 = vadd.f32 %v291, 0.0
      %v300 = vadd.f32 %v292, 0.0
      %v301 = vadd.f32 %v293, 0.0
      %v302 = vadd.f32 %v294, 0.0
      %v303 = vadd.f32 %v295, 0.0
      %v304 = vadd.f32 %v296, 0.0
      %v305 = vld [vmem:[#allocation2 + $0x1] sm:$0xff]
      %v306 = vld [vmem:[#allocation2 + $0x11] sm:$0xff]
      %v307 = vld [vmem:[#allocation2 + $0x21] sm:$0xff]
      %v308 = vld [vmem:[#allocation2 + $0x31] sm:$0xff]
      %v309 = vld [vmem:[#allocation2 + $0x41] sm:$0xff]
      %v310 = vld [vmem:[#allocation2 + $0x51] sm:$0xff]
      %v311 = vld [vmem:[#allocation2 + $0x61] sm:$0xff]
      %v312 = vld [vmem:[#allocation2 + $0x71] sm:$0xff]
      %v313 = vld [vmem:[%s1 + $0x1] sm:$0x1]
      %v314 = vlaneseq
      %v315 = vshrl.u32 %v314, 7
      %v316 = vsub.s32 0, %v315
      %v317 = vrot.slane %v313, %v316
      %v318 = vmul.f32 %v305, %v317
      %v319 = vmul.f32 %v306, %v317
      %v320 = vmul.f32 %v307, %v317
      %v321 = vmul.f32 %v308, %v317
      %v322 = vmul.f32 %v309, %v317
      %v323 = vmul.f32 %v310, %v317
      %v324 = vmul.f32 %v311, %v317
      %v325 = vmul.f32 %v312, %v317
      %v326 = vadd.f32 %v297, %v318
      %v327 = vadd.f32 %v298, %v319
      %v328 = vadd.f32 %v299, %v320
      %v329 = vadd.f32 %v300, %v321
      %v330 = vadd.f32 %v301, %v322
      %v331 = vadd.f32 %v302, %v323
      %v332 = vadd.f32 %v303, %v324
      %v333 = vadd.f32 %v304, %v325
      %v334 = vld [vmem:[#allocation2 + $0x2] sm:$0xff]
      %v335 = vld [vmem:[#allocation2 + $0x12] sm:$0xff]
      %v336 = vld [vmem:[#allocation2 + $0x22] sm:$0xff]
      %v337 = vld [vmem:[#allocation2 + $0x32] sm:$0xff]
      %v338 = vld [vmem:[#allocation2 + $0x42] sm:$0xff]
      %v339 = vld [vmem:[#allocation2 + $0x52] sm:$0xff]
      %v340 = vld [vmem:[#allocation2 + $0x62] sm:$0xff]
      %v341 = vld [vmem:[#allocation2 + $0x72] sm:$0xff]
      %v342 = vld [vmem:[%s1 + $0x2] sm:$0x1]
      %v343 = vlaneseq
      %v344 = vshrl.u32 %v343, 7
      %v345 = vsub.s32 0, %v344
      %v346 = vrot.slane %v342, %v345
      %v347 = vmul.f32 %v334, %v346
      %v348 = vmul.f32 %v335, %v346
      %v349 = vmul.f32 %v336, %v346
      %v350 = vmul.f32 %v337, %v346
      %v351 = vmul.f32 %v338, %v346
      %v352 = vmul.f32 %v339, %v346
      %v353 = vmul.f32 %v340, %v346
      %v354 = vmul.f32 %v341, %v346
      %v355 = vadd.f32 %v326, %v347
      %v356 = vadd.f32 %v327, %v348
      %v357 = vadd.f32 %v328, %v349
      %v358 = vadd.f32 %v329, %v350
      %v359 = vadd.f32 %v330, %v351
      %v360 = vadd.f32 %v331, %v352
      %v361 = vadd.f32 %v332, %v353
      %v362 = vadd.f32 %v333, %v354
      %v363 = vld [vmem:[%s267] sm:$0xff]
      %v364 = vld [vmem:[%s267 + $0x10] sm:$0xff]
      %v365 = vld [vmem:[%s267 + $0x20] sm:$0xff]
      %v366 = vld [vmem:[%s267 + $0x30] sm:$0xff]
      %v367 = vld [vmem:[%s267 + $0x40] sm:$0xff]
      %v368 = vld [vmem:[%s267 + $0x50] sm:$0xff]
      %v369 = vld [vmem:[%s267 + $0x60] sm:$0xff]
      %v370 = vld [vmem:[%s267 + $0x70] sm:$0xff]
      %v371 = vld [vmem:[%s1 + $0x3] sm:$0x1]
      %v372 = vlaneseq
      %v373 = vshrl.u32 %v372, 7
      %v374 = vsub.s32 0, %v373
      %v375 = vrot.slane %v371, %v374
      %v376 = vmul.f32 %v363, %v375
      %v377 = vmul.f32 %v364, %v375
      %v378 = vmul.f32 %v365, %v375
      %v379 = vmul.f32 %v366, %v375
      %v380 = vmul.f32 %v367, %v375
      %v381 = vmul.f32 %v368, %v375
      %v382 = vmul.f32 %v369, %v375
      %v383 = vmul.f32 %v370, %v375
      %v384 = vadd.f32 %v355, %v376
      %v385 = vadd.f32 %v356, %v377
      %v386 = vadd.f32 %v357, %v378
      %v387 = vadd.f32 %v358, %v379
      %v388 = vadd.f32 %v359, %v380
      %v389 = vadd.f32 %v360, %v381
      %v390 = vadd.f32 %v361, %v382
      %v391 = vadd.f32 %v362, %v383
      %v392 = vld [vmem:[%s267 + $0x1] sm:$0xff]
      %v393 = vld [vmem:[%s267 + $0x11] sm:$0xff]
      %v394 = vld [vmem:[%s267 + $0x21] sm:$0xff]
      %v395 = vld [vmem:[%s267 + $0x31] sm:$0xff]
      %v396 = vld [vmem:[%s267 + $0x41] sm:$0xff]
      %v397 = vld [vmem:[%s267 + $0x51] sm:$0xff]
      %v398 = vld [vmem:[%s267 + $0x61] sm:$0xff]
      %v399 = vld [vmem:[%s267 + $0x71] sm:$0xff]
      %v400 = vld [vmem:[%s1 + $0x4] sm:$0x1]
      %v401 = vlaneseq
      %v402 = vshrl.u32 %v401, 7
      %v403 = vsub.s32 0, %v402
      %v404 = vrot.slane %v400, %v403
      %v405 = vmul.f32 %v392, %v404
      %v406 = vmul.f32 %v393, %v404
      %v407 = vmul.f32 %v394, %v404
      %v408 = vmul.f32 %v395, %v404
      %v409 = vmul.f32 %v396, %v404
      %v410 = vmul.f32 %v397, %v404
      %v411 = vmul.f32 %v398, %v404
      %v412 = vmul.f32 %v399, %v404
      %v413 = vadd.f32 %v384, %v405
      %v414 = vadd.f32 %v385, %v406
      %v415 = vadd.f32 %v386, %v407
      %v416 = vadd.f32 %v387, %v408
      %v417 = vadd.f32 %v388, %v409
      %v418 = vadd.f32 %v389, %v410
      %v419 = vadd.f32 %v390, %v411
      %v420 = vadd.f32 %v391, %v412
      %v421 = vld [vmem:[%s267 + $0x2] sm:$0xff]
      %v422 = vld [vmem:[%s267 + $0x12] sm:$0xff]
      %v423 = vld [vmem:[%s267 + $0x22] sm:$0xff]
      %v424 = vld [vmem:[%s267 + $0x32] sm:$0xff]
      %v425 = vld [vmem:[%s267 + $0x42] sm:$0xff]
      %v426 = vld [vmem:[%s267 + $0x52] sm:$0xff]
      %v427 = vld [vmem:[%s267 + $0x62] sm:$0xff]
      %v428 = vld [vmem:[%s267 + $0x72] sm:$0xff]
      %v429 = vld [vmem:[%s1 + $0x5] sm:$0x1]
      %v430 = vlaneseq
      %v431 = vshrl.u32 %v430, 7
      %v432 = vsub.s32 0, %v431
      %v433 = vrot.slane %v429, %v432
      %v434 = vmul.f32 %v421, %v433
      %v435 = vmul.f32 %v422, %v433
      %v436 = vmul.f32 %v423, %v433
      %v437 = vmul.f32 %v424, %v433
      %v438 = vmul.f32 %v425, %v433
      %v439 = vmul.f32 %v426, %v433
      %v440 = vmul.f32 %v427, %v433
      %v441 = vmul.f32 %v428, %v433
      %v442 = vadd.f32 %v413, %v434
      %v443 = vadd.f32 %v414, %v435
      %v444 = vadd.f32 %v415, %v436
      %v445 = vadd.f32 %v416, %v437
      %v446 = vadd.f32 %v417, %v438
      %v447 = vadd.f32 %v418, %v439
      %v448 = vadd.f32 %v419, %v440
      %v449 = vadd.f32 %v420, %v441
      %s450 = scalar_lea.vmem [#allocation2], 32
      %v451 = vld [vmem:[%s450] sm:$0xff]
      %v452 = vld [vmem:[%s450 + $0x10] sm:$0xff]
      %v453 = vld [vmem:[%s450 + $0x20] sm:$0xff]
      %v454 = vld [vmem:[%s450 + $0x30] sm:$0xff]
      %v455 = vld [vmem:[%s450 + $0x40] sm:$0xff]
      %v456 = vld [vmem:[%s450 + $0x50] sm:$0xff]
      %v457 = vld [vmem:[%s450 + $0x60] sm:$0xff]
      %v458 = vld [vmem:[%s450 + $0x70] sm:$0xff]
      %v459 = vld [vmem:[%s1 + $0x6] sm:$0x1]
      %v460 = vlaneseq
      %v461 = vshrl.u32 %v460, 7
      %v462 = vsub.s32 0, %v461
      %v463 = vrot.slane %v459, %v462
      %v464 = vmul.f32 %v451, %v463
      %v465 = vmul.f32 %v452, %v463
      %v466 = vmul.f32 %v453, %v463
      %v467 = vmul.f32 %v454, %v463
      %v468 = vmul.f32 %v455, %v463
      %v469 = vmul.f32 %v456, %v463
      %v470 = vmul.f32 %v457, %v463
      %v471 = vmul.f32 %v458, %v463
      %v472 = vadd.f32 %v442, %v464
      %v473 = vadd.f32 %v443, %v465
      %v474 = vadd.f32 %v444, %v466
      %v475 = vadd.f32 %v445, %v467
      %v476 = vadd.f32 %v446, %v468
      %v477 = vadd.f32 %v447, %v469
      %v478 = vadd.f32 %v448, %v470
      %v479 = vadd.f32 %v449, %v471
      %v480 = vld [vmem:[%s450 + $0x1] sm:$0xff]
      %v481 = vld [vmem:[%s450 + $0x11] sm:$0xff]
      %v482 = vld [vmem:[%s450 + $0x21] sm:$0xff]
      %v483 = vld [vmem:[%s450 + $0x31] sm:$0xff]
      %v484 = vld [vmem:[%s450 + $0x41] sm:$0xff]
      %v485 = vld [vmem:[%s450 + $0x51] sm:$0xff]
      %v486 = vld [vmem:[%s450 + $0x61] sm:$0xff]
      %v487 = vld [vmem:[%s450 + $0x71] sm:$0xff]
      %v488 = vld [vmem:[%s1 + $0x7] sm:$0x1]
      %v489 = vlaneseq
      %v490 = vshrl.u32 %v489, 7
      %v491 = vsub.s32 0, %v490
      %v492 = vrot.slane %v488, %v491
      %v493 = vmul.f32 %v480, %v492
      %v494 = vmul.f32 %v481, %v492
      %v495 = vmul.f32 %v482, %v492
      %v496 = vmul.f32 %v483, %v492
      %v497 = vmul.f32 %v484, %v492
      %v498 = vmul.f32 %v485, %v492
      %v499 = vmul.f32 %v486, %v492
      %v500 = vmul.f32 %v487, %v492
      %v501 = vadd.f32 %v472, %v493
      %v502 = vadd.f32 %v473, %v494
      %v503 = vadd.f32 %v474, %v495
      %v504 = vadd.f32 %v475, %v496
      %v505 = vadd.f32 %v476, %v497
      %v506 = vadd.f32 %v477, %v498
      %v507 = vadd.f32 %v478, %v499
      %v508 = vadd.f32 %v479, %v500
      %v509 = vld [vmem:[%s450 + $0x2] sm:$0xff]
      %v510 = vld [vmem:[%s450 + $0x12] sm:$0xff]
      %v511 = vld [vmem:[%s450 + $0x22] sm:$0xff]
      %v512 = vld [vmem:[%s450 + $0x32] sm:$0xff]
      %v513 = vld [vmem:[%s450 + $0x42] sm:$0xff]
      %v514 = vld [vmem:[%s450 + $0x52] sm:$0xff]
      %v515 = vld [vmem:[%s450 + $0x62] sm:$0xff]
      %v516 = vld [vmem:[%s450 + $0x72] sm:$0xff]
      %v517 = vld [vmem:[%s1 + $0x8] sm:$0x1]
      %v518 = vlaneseq
      %v519 = vshrl.u32 %v518, 7
      %v520 = vsub.s32 0, %v519
      %v521 = vrot.slane %v517, %v520
      %v522 = vmul.f32 %v509, %v521
      %v523 = vmul.f32 %v510, %v521
      %v524 = vmul.f32 %v511, %v521
      %v525 = vmul.f32 %v512, %v521
      %v526 = vmul.f32 %v513, %v521
      %v527 = vmul.f32 %v514, %v521
      %v528 = vmul.f32 %v515, %v521
      %v529 = vmul.f32 %v516, %v521
      %v530 = vadd.f32 %v501, %v522
      %v531 = vadd.f32 %v502, %v523
      %v532 = vadd.f32 %v503, %v524
      %v533 = vadd.f32 %v504, %v525
      %v534 = vadd.f32 %v505, %v526
      %v535 = vadd.f32 %v506, %v527
      %v536 = vadd.f32 %v507, %v528
      %v537 = vadd.f32 %v508, %v529
      %v538 = vld [vmem:[%s2] sm:$0x1]
      %v540 = vlaneseq
      %v541 = vshrl.u32 %v540, 7
      %v542 = vsub.s32 0, %v541
      %v543 = vrot.slane %v538, %v542
      %v545 = vadd.f32 %v530, %v543
      %v546 = vadd.f32 %v531, %v543
      %v547 = vadd.f32 %v532, %v543
      %v548 = vadd.f32 %v533, %v543
      %v549 = vadd.f32 %v534, %v543
      %v550 = vadd.f32 %v535, %v543
      %v551 = vadd.f32 %v536, %v543
      %v552 = vadd.f32 %v537, %v543
      %v553 = vmax.f32 %v545, 0.0
      %v554 = vmax.f32 %v546, 0.0
      %v555 = vmax.f32 %v547, 0.0
      %v556 = vmax.f32 %v548, 0.0
      %v557 = vmax.f32 %v549, 0.0
      %v558 = vmax.f32 %v550, 0.0
      %v559 = vmax.f32 %v551, 0.0
      %v560 = vmax.f32 %v552, 0.0
      %v561 = vmin.f32 %v553, 6.0
      %v562 = vmin.f32 %v554, 6.0
      %v563 = vmin.f32 %v555, 6.0
      %v564 = vmin.f32 %v556, 6.0
      %v565 = vmin.f32 %v557, 6.0
      %v566 = vmin.f32 %v558, 6.0
      %v567 = vmin.f32 %v559, 6.0
      %v568 = vmin.f32 %v560, 6.0
      %v569 = vpack.c.bf16 %v562, %v561
      %v570 = vpack.c.bf16 %v564, %v563
      %v571 = vpack.c.bf16 %v566, %v565
      %v572 = vpack.c.bf16 %v568, %v567
      %v573 = vld [vmem:[%s3] sm:$0xf]
      %v574 = vld [vmem:[%s3 + $0x4] sm:$0xf]
      %v575 = vld [vmem:[%s3 + $0x8] sm:$0xf]
      %v576 = vld [vmem:[%s3 + $0xc] sm:$0xf]
      %v577 = vld [vmem:[%s3 + $0x10] sm:$0xf]
      %v578 = vld [vmem:[%s3 + $0x14] sm:$0xf]
      %v579 = vld [vmem:[%s3 + $0x18] sm:$0xf]
      %v580 = vld [vmem:[%s3 + $0x1c] sm:$0xf]
      %v581 = vld [vmem:[%s3 + $0x20] sm:$0xf]
      %v582 = vld [vmem:[%s3 + $0x24] sm:$0xf]
      %v583 = vld [vmem:[%s3 + $0x28] sm:$0xf]
      %v584 = vld [vmem:[%s3 + $0x2c] sm:$0xf]
      %v585 = vld [vmem:[%s3 + $0x30] sm:$0xf]
      %v586 = vld [vmem:[%s3 + $0x34] sm:$0xf]
      %v587 = vld [vmem:[%s3 + $0x38] sm:$0xf]
      %v588 = vld [vmem:[%s3 + $0x3c] sm:$0xf]
      %v589 = vld [vmem:[%s4] sm:$0x1]
      %v591 = vlaneseq
      %v592 = vshrl.u32 %v591, 7
      %v593 = vsub.s32 0, %v592
      %v594 = vrot.slane %v589, %v593
      %v612 = vunpack.c.l.b16 %v573
      %v613 = vunpack.c.l.b16 %v574
      %v614 = vunpack.c.l.b16 %v575
      %v615 = vunpack.c.l.b16 %v576
      %v616 = vunpack.c.l.b16 %v577
      %v617 = vunpack.c.l.b16 %v578
      %v618 = vunpack.c.l.b16 %v579
      %v619 = vunpack.c.l.b16 %v580
      %v620 = vunpack.c.l.b16 %v581
      %v621 = vunpack.c.l.b16 %v582
      %v622 = vunpack.c.l.b16 %v583
      %v623 = vunpack.c.l.b16 %v584
      %v624 = vunpack.c.l.b16 %v585
      %v625 = vunpack.c.l.b16 %v586
      %v626 = vunpack.c.l.b16 %v587
      %v627 = vunpack.c.l.b16 %v588
      %v628 = vpack.c.b16 %v613, %v612
      %v629 = vpack.c.b16 %v615, %v614
      %v630 = vpack.c.b16 %v617, %v616
      %v631 = vpack.c.b16 %v619, %v618
      %v632 = vpack.c.b16 %v621, %v620
      %v633 = vpack.c.b16 %v623, %v622
      %v634 = vpack.c.b16 %v625, %v624
      %v635 = vpack.c.b16 %v627, %v626
      %644 = vmatprep.subr.bf16.mxu0 0
      %645 = vmatpush1.bf16.msra.mxu0 %v635
      %646 = vmatprep.subr.bf16.mxu0 0
      %647 = vmatpush1.bf16.msra.mxu0 %v634
      %648 = vmatprep.subr.bf16.mxu0 0
      %649 = vmatpush1.bf16.msra.mxu0 %v633
      %650 = vmatprep.subr.bf16.mxu0 0
      %651 = vmatpush1.bf16.msra.mxu0 %v632
      %652 = vmatprep.subr.bf16.mxu0 0
      %653 = vmatpush1.bf16.msra.mxu0 %v631
      %654 = vmatprep.subr.bf16.mxu0 0
      %655 = vmatpush1.bf16.msra.mxu0 %v630
      %656 = vmatprep.subr.bf16.mxu0 0
      %657 = vmatpush1.bf16.msra.mxu0 %v629
      %658 = vmatprep.subr.bf16.mxu0 0
      %659 = vmatpush1.bf16.msra.mxu0 %v628
      %660 = vmatprep.subr.bf16.mxu0 0
      %661 = vmatpush2.bf16.msra.mxu0 0
      %662 = vmatprep.subr.bf16.mxu0 0
      %663 = vmatpush2.bf16.msra.mxu0 0
      %664 = vmatprep.subr.bf16.mxu0 0
      %665 = vmatpush2.bf16.msra.mxu0 0
      %666 = vmatprep.subr.bf16.mxu0 0
      %667 = vmatpush2.bf16.msra.mxu0 0
      %668 = vmatprep.subr.bf16.mxu0 0
      %669 = vmatpush2.bf16.msra.mxu0 0
      %670 = vmatprep.subr.bf16.mxu0 0
      %671 = vmatpush2.bf16.msra.mxu0 0
      %672 = vmatprep.subr.bf16.mxu0 0
      %673 = vmatpush2.bf16.msra.mxu0 0
      %674 = vmatprep.subr.bf16.mxu0 0
      %675 = vmatpush2.bf16.msra.mxu0 0
      %676 = vmatprep.mubr.bf16.mxu0 0
      %677 = vmatmul.mubr.bf16.gmra.mxu0 %v569
      %v678 = vpop.f32.mrf.mxu0
      %v679 = vadd.f32 %v594, %v678
      %v680 = vpop.f32.mrf.mxu0
      %v681 = vpop.f32.mrf.mxu0
      %v682 = vadd.f32 %v594, %v681
      %v683 = vpop.f32.mrf.mxu0
      %684 = vmatprep.mubr.bf16.mxu0 0
      %685 = vmatmul.mubr.bf16.gmra.mxu0 %v570
      %v686 = vpop.f32.mrf.mxu0
      %v687 = vadd.f32 %v594, %v686
      %v688 = vpop.f32.mrf.mxu0
      %v689 = vpop.f32.mrf.mxu0
      %v690 = vadd.f32 %v594, %v689
      %v691 = vpop.f32.mrf.mxu0
      %692 = vmatprep.mubr.bf16.mxu0 0
      %693 = vmatmul.mubr.bf16.gmra.mxu0 %v571
      %v694 = vpop.f32.mrf.mxu0
      %v695 = vadd.f32 %v594, %v694
      %v696 = vpop.f32.mrf.mxu0
      %v697 = vpop.f32.mrf.mxu0
      %v698 = vadd.f32 %v594, %v697
      %v699 = vpop.f32.mrf.mxu0
      %700 = vmatprep.mubr.bf16.mxu0 0
      %701 = vmatmul.mubr.bf16.gmra.mxu0 %v572
      %v702 = vpop.f32.mrf.mxu0
      %v703 = vadd.f32 %v594, %v702
      %v704 = vpop.f32.mrf.mxu0
      %v705 = vpop.f32.mrf.mxu0
      %v706 = vadd.f32 %v594, %v705
      %v707 = vpop.f32.mrf.mxu0
      %708 = vdwg.mxu0
      %v709 = vadd.f32 %v679, %v259
      %v710 = vadd.f32 %v682, %v260
      %v711 = vadd.f32 %v687, %v261
      %v712 = vadd.f32 %v690, %v262
      %v713 = vadd.f32 %v695, %v263
      %v714 = vadd.f32 %v698, %v264
      %v715 = vadd.f32 %v703, %v265
      %v716 = vadd.f32 %v706, %v266
      %v717 = vpack.c.bf16 %v709, %v709
      %v718 = vpack.c.bf16 %v710, %v710
      %v719 = vpack.c.bf16 %v711, %v711
      %v720 = vpack.c.bf16 %v712, %v712
      %v721 = vpack.c.bf16 %v713, %v713
      %v722 = vpack.c.bf16 %v714, %v714
      %v723 = vpack.c.bf16 %v715, %v715
      %v724 = vpack.c.bf16 %v716, %v716
      %725 = vst [vmem:[%s224] sm:$0xf] %v717
      %726 = vst [vmem:[%s224 + $0x4] sm:$0xf] %v718
      %727 = vst [vmem:[%s224 + $0x8] sm:$0xf] %v719
      %728 = vst [vmem:[%s224 + $0xc] sm:$0xf] %v720
      %729 = vst [vmem:[%s224 + $0x10] sm:$0xf] %v721
      %730 = vst [vmem:[%s224 + $0x14] sm:$0xf] %v722
      %731 = vst [vmem:[%s224 + $0x18] sm:$0xf] %v723
      %732 = vst [vmem:[%s224 + $0x1c] sm:$0xf] %v724
      %p733 = scmp.lt.s32.totalorder %s16, 1
      %s734 = scalar_select %p733, %s16, 1
      %s735 = smul.addr %s734, 8
      %s736 = smul.addr %s735, 4
      %s737 = scalar_lea.vmem %s5, %s736
      // Predicated region
      $region41: #{_lambda_.7} parent=39 // pred_check
        %p738 = pneg %p144
      $region42: #{_lambda_.7} parent=39 // pred_check_branch
        %740 = sbr.rel (%p738) target = $region44
      $region43: #{_lambda_.7} parent=39 // pred_region
        _
      $region44: #{_lambda_.7} parent=39 // pred_fallthru
        _
    $region40: #{_lambda_.7} parent=5 // pred_fallthru
      _
    %p741 = scmp.le.s32.totalorder 2, %s11
    // Predicated region
    $region45: #{_lambda_.7} parent=5 // pred_check
      %p742 = pneg %p741
    $region46: #{_lambda_.7} parent=5 // pred_check_branch
      %744 = sbr.rel (%p742) target = $region48
    $region47: #{_lambda_.7} parent=5 // pred_region
      %s745 = ssub.s32 %s11, 2
      // Predicated region
      $region49: #{_lambda_.7} parent=47 // pred_check
        %p746 = pneg %p150
      $region50: #{_lambda_.7} parent=47 // pred_check_branch
        %748 = sbr.rel (%p746) target = $region52
      $region51: #{_lambda_.7} parent=47 // pred_region
        %p749 = scmp.lt.s32.totalorder %s17, 1
        %s750 = scalar_select %p749, %s17, 1
        %s751 = smul.addr %s750, 8
        %s752 = smul.addr %s751, 4
        %s753 = scalar_lea.vmem %s5, %s752
      $region52: #{_lambda_.7} parent=47 // pred_fallthru
        _
    $region48: #{_lambda_.7} parent=5 // pred_fallthru
      _
  $region6: #{_lambda_.7} parent=0 // loop_footer
    %s15 = sadd.s32 1, %s11
  $region7: #{_lambda_.7} parent=0 // loop_footer_branch
    %10 = sbr.rel target = $region3
  $region8: #{_lambda_.7} parent=0 // loop_exit
    _

// kernel: _lambda_.6
$region0: #{_lambda_.6}
  #allocation0 [shape = 'u32[]', space=smem, size = 0x4, offset = 0x4, fixed_abs, tag = 'smem constant byte address 0x4 - core index']
  #allocation1 [shape = 'u32[144,128]{1,0:T(1,128)}', space=vmem, size = 0x12000, scoped, tag = 'internal scratch']
  %s0 = inlined_call_operand.vmem [shape: bf16[2,18,9,32], index: 0, kind: input, shape index: {}]
  %s1 = inlined_call_operand.vmem [shape: bf16[2,18,9,32], index: 1, kind: input, shape index: {}]
  %s2 = inlined_call_operand.vmem [shape: bf16[9,32,128], index: 2, kind: input, shape index: {}]
  %s3 = inlined_call_operand.vmem [shape: f32[1,128], index: 3, kind: input, shape index: {}]
  %s4 = inlined_call_operand.vmem [shape: bf16[2,8,8,128], index: 4, kind: output, shape index: {}]
  %s5 = sld [smem:[#allocation0]]
  $region49: #{_lambda_.6} parent=0
    _
  %s7 = ssub.s32 1, %s5
  %s8 = scalar_select 0, %s7, %s5
  loop: start=0, step=1, limit=4
  $region2: #{_lambda_.6} parent=0 // loop_pre_header
    _
  $region3: #{_lambda_.6} parent=0 // loop_header
    %s10 = sphi 0, %s14
    %p11 = scmp.ge.s32.totalorder %s10, 4
    %s20 = sphi 0, %s22
    %s23 = sphi 0, %s20
    %s24 = sphi 0, %s23
    %s40 = sphi 0, %s24
    %s46 = sphi 0, %s48
    %s49 = sphi 0, %s46
    %s50 = sphi 0, %s49
    %s66 = sphi 0, %s50
    %s70 = sphi 0, %s70
    %s72 = sphi 0, %s70
    %s73 = sphi 0, %s72
    %s87 = sphi 0, %s73
    %s91 = sphi 0, %s91
    %s93 = sphi 0, %s91
    %s94 = sphi 0, %s93
    %s108 = sphi 0, %s94
    %s114 = sphi 0, %s116
    %s117 = sphi 0, %s114
    %s118 = sphi 0, %s117
    %s134 = sphi 0, %s118
  $region4: #{_lambda_.6} parent=0 // loop_header_branch
    %13 = sbr.rel (%p11) target = $region8
  $region5: #{_lambda_.6} parent=0 // loop_body
    %s15 = ssub.s32 %s10, 1
    %s16 = ssub.s32 %s10, 2
    %s17 = sadd.s32 %s10, 1
    %s18 = ssub.s32 %s10, %s17
    %p19 = scmp.eq.s32.totalorder %s18, 0
    %s21 = sadd.s32 %s20, 1
    %s22 = scalar_select %p19, %s20, %s21
    %p25 = pneg %p19
    %p26 = scmp.eq.s32.totalorder %s10, 1
    %p27 = por %p25, %p26
    %p28 = scmp.ne.s32.totalorder %s20, %s23
    %p29 = scmp.eq.s32.totalorder %s10, 0
    %p30 = por %p28, %p29
    %p31 = scmp.ne.s32.totalorder %s20, %s23
    %p32 = scmp.eq.s32.totalorder %s15, 1
    %p33 = por %p31, %p32
    %p34 = scmp.ne.s32.totalorder %s23, %s24
    %p35 = scmp.eq.s32.totalorder %s15, 0
    %p36 = por %p34, %p35
    %p37 = scmp.ne.s32.totalorder %s23, %s24
    %p38 = scmp.eq.s32.totalorder %s16, 1
    %p39 = por %p37, %p38
    %p41 = scmp.ne.s32.totalorder %s24, %s40
    %p42 = scmp.eq.s32.totalorder %s16, 0
    %p43 = por %p41, %p42
    %s44 = ssub.s32 %s10, %s17
    %p45 = scmp.eq.s32.totalorder %s44, 0
    %s47 = sadd.s32 %s46, 1
    %s48 = scalar_select %p45, %s46, %s47
    %p51 = pneg %p45
    %p52 = scmp.eq.s32.totalorder %s10, 1
    %p53 = por %p51, %p52
    %p54 = scmp.ne.s32.totalorder %s46, %s49
    %p55 = scmp.eq.s32.totalorder %s10, 0
    %p56 = por %p54, %p55
    %p57 = scmp.ne.s32.totalorder %s46, %s49
    %p58 = scmp.eq.s32.totalorder %s15, 1
    %p59 = por %p57, %p58
    %p60 = scmp.ne.s32.totalorder %s49, %s50
    %p61 = scmp.eq.s32.totalorder %s15, 0
    %p62 = por %p60, %p61
    %p63 = scmp.ne.s32.totalorder %s49, %s50
    %p64 = scmp.eq.s32.totalorder %s16, 1
    %p65 = por %p63, %p64
    %p67 = scmp.ne.s32.totalorder %s50, %s66
    %p68 = scmp.eq.s32.totalorder %s16, 0
    %p69 = por %p67, %p68
    %s71 = sadd.s32 %s70, 1
    %p74 = scmp.eq.s32.totalorder %s10, 1
    %p75 = scmp.ne.s32.totalorder %s70, %s72
    %p76 = scmp.eq.s32.totalorder %s10, 0
    %p77 = por %p75, %p76
    %p78 = scmp.ne.s32.totalorder %s70, %s72
    %p79 = scmp.eq.s32.totalorder %s15, 1
    %p80 = por %p78, %p79
    %p81 = scmp.ne.s32.totalorder %s72, %s73
    %p82 = scmp.eq.s32.totalorder %s15, 0
    %p83 = por %p81, %p82
    %p84 = scmp.ne.s32.totalorder %s72, %s73
    %p85 = scmp.eq.s32.totalorder %s16, 1
    %p86 = por %p84, %p85
    %p88 = scmp.ne.s32.totalorder %s73, %s87
    %p89 = scmp.eq.s32.totalorder %s16, 0
    %p90 = por %p88, %p89
    %s92 = sadd.s32 %s91, 1
    %p95 = scmp.eq.s32.totalorder %s10, 1
    %p96 = scmp.ne.s32.totalorder %s91, %s93
    %p97 = scmp.eq.s32.totalorder %s10, 0
    %p98 = por %p96, %p97
    %p99 = scmp.ne.s32.totalorder %s91, %s93
    %p100 = scmp.eq.s32.totalorder %s15, 1
    %p101 = por %p99, %p100
    %p102 = scmp.ne.s32.totalorder %s93, %s94
    %p103 = scmp.eq.s32.totalorder %s15, 0
    %p104 = por %p102, %p103
    %p105 = scmp.ne.s32.totalorder %s93, %s94
    %p106 = scmp.eq.s32.totalorder %s16, 1
    %p107 = por %p105, %p106
    %p109 = scmp.ne.s32.totalorder %s94, %s108
    %p110 = scmp.eq.s32.totalorder %s16, 0
    %p111 = por %p109, %p110
    %s112 = ssub.s32 %s10, %s17
    %p113 = scmp.eq.s32.totalorder %s112, 0
    %s115 = sadd.s32 %s114, 1
    %s116 = scalar_select %p113, %s114, %s115
    %p119 = pneg %p113
    %p120 = scmp.eq.s32.totalorder %s10, 1
    %p121 = por %p119, %p120
    %p122 = scmp.ne.s32.totalorder %s114, %s117
    %p123 = scmp.eq.s32.totalorder %s10, 0
    %p124 = por %p122, %p123
    %p125 = scmp.ne.s32.totalorder %s114, %s117
    %p126 = scmp.eq.s32.totalorder %s15, 1
    %p127 = por %p125, %p126
    %p128 = scmp.ne.s32.totalorder %s117, %s118
    %p129 = scmp.eq.s32.totalorder %s15, 0
    %p130 = por %p128, %p129
    %p131 = scmp.ne.s32.totalorder %s117, %s118
    %p132 = scmp.eq.s32.totalorder %s16, 1
    %p133 = por %p131, %p132
    %p135 = scmp.ne.s32.totalorder %s118, %s134
    %p136 = scmp.eq.s32.totalorder %s16, 0
    %p137 = por %p135, %p136
    %p138 = scmp.le.s32.totalorder 1, %s10
    %p139 = scmp.lt.s32.totalorder %s10, 3
    %p140 = pnand %p138, %p139
    %p141 = pneg %p140
    // Predicated region
    $region9: #{_lambda_.6} parent=5 // pred_check
      _
    $region10: #{_lambda_.6} parent=5 // pred_check_branch
      %143 = sbr.rel (%p140) target = $region12
    $region11: #{_lambda_.6} parent=5 // pred_region
      %s144 = ssub.s32 %s10, 1
      // Predicated region
      $region13: #{_lambda_.6} parent=11 // pred_check
        %p145 = pneg %p83
      $region14: #{_lambda_.6} parent=11 // pred_check_branch
        %147 = sbr.rel (%p145) target = $region16
      $region15: #{_lambda_.6} parent=11 // pred_region
        _
      $region16: #{_lambda_.6} parent=11 // pred_fallthru
        _
      // Predicated region
      $region17: #{_lambda_.6} parent=11 // pred_check
        %p148 = pneg %p104
      $region18: #{_lambda_.6} parent=11 // pred_check_branch
        %150 = sbr.rel (%p148) target = $region20
      $region19: #{_lambda_.6} parent=11 // pred_region
        _
      $region20: #{_lambda_.6} parent=11 // pred_fallthru
        _
    $region12: #{_lambda_.6} parent=5 // pred_fallthru
      _
    %p151 = scmp.lt.s32.totalorder %s10, 2
    // Predicated region
    $region21: #{_lambda_.6} parent=5 // pred_check
      %p152 = pneg %p151
    $region22: #{_lambda_.6} parent=5 // pred_check_branch
      %154 = sbr.rel (%p152) target = $region24
    $region23: #{_lambda_.6} parent=5 // pred_region
      // Predicated region
      $region25: #{_lambda_.6} parent=23 // pred_check
        %p155 = pneg %p30
      $region26: #{_lambda_.6} parent=23 // pred_check_branch
        %157 = sbr.rel (%p155) target = $region28
      $region27: #{_lambda_.6} parent=23 // pred_region
        %p158 = scmp.lt.s32.totalorder %s10, 1
        %s159 = scalar_select %p158, %s10, 1
        %s160 = smul.addr %s159, 36
        %s161 = smul.addr %s160, 4
        %s162 = scalar_lea.vmem %s0, %s161
      $region28: #{_lambda_.6} parent=23 // pred_fallthru
        _
      // Predicated region
      $region29: #{_lambda_.6} parent=23 // pred_check
        %p163 = pneg %p56
      $region30: #{_lambda_.6} parent=23 // pred_check_branch
        %165 = sbr.rel (%p163) target = $region32
      $region31: #{_lambda_.6} parent=23 // pred_region
        %p166 = scmp.lt.s32.totalorder %s10, 1
        %s167 = scalar_select %p166, %s10, 1
        %s168 = smul.addr %s167, 36
        %s169 = smul.addr %s168, 4
        %s170 = scalar_lea.vmem %s1, %s169
      $region32: #{_lambda_.6} parent=23 // pred_fallthru
        _
    $region24: #{_lambda_.6} parent=5 // pred_fallthru
      _
    %p171 = scmp.le.s32.totalorder 1, %s10
    %p172 = scmp.lt.s32.totalorder %s10, 3
    %p173 = pnand %p171, %p172
    %p174 = pneg %p173
    // Predicated region
    $region33: #{_lambda_.6} parent=5 // pred_check
      _
    $region34: #{_lambda_.6} parent=5 // pred_check_branch
      %176 = sbr.rel (%p173) target = $region36
    $region35: #{_lambda_.6} parent=5 // pred_region
      %s177 = ssub.s32 %s10, 1
      %p178 = scmp.lt.s32.totalorder %s15, 1
      %s179 = scalar_select %p178, %s15, 1
      %s180 = smul.addr %s179, 36
      %s181 = smul.addr %s180, 4
      %s182 = scalar_lea.vmem %s0, %s181
      %p183 = pneg %p36
      %p184 = pneg %p33
      %p185 = scmp.lt.s32.totalorder %s15, 1
      %s186 = scalar_select %p185, %s15, 1
      %s187 = smul.addr %s186, 36
      %s188 = smul.addr %s187, 4
      %s189 = scalar_lea.vmem %s1, %s188
      %p190 = pneg %p62
      %p191 = pneg %p59
      %p192 = pneg %p83
      %p193 = pneg %p80
      %p194 = pneg %p104
      %p195 = pneg %p101
      %p196 = pneg %p130
      %p197 = pneg %p127
      %p198 = scmp.lt.s32.totalorder %s15, 1
      %s199 = scalar_select %p198, %s15, 1
      %s200 = smul.addr %s199, 8
      %s201 = smul.addr %s200, 4
      %s202 = scalar_lea.vmem %s4, %s201
      %p203 = scmp.lt.s32.totalorder %s15, 1
      %s204 = scalar_select %p203, %s15, 1
      %s205 = smul.addr %s204, 36
      %s206 = smul.addr %s205, 4
      %s207 = scalar_lea.vmem %s0, %s206
      %p208 = scmp.lt.s32.totalorder %s15, 1
      %s209 = scalar_select %p208, %s15, 1
      %s210 = smul.addr %s209, 36
      %s211 = smul.addr %s210, 4
      %s212 = scalar_lea.vmem %s1, %s211
      %p213 = scmp.lt.s32.totalorder %s15, 1
      %s214 = scalar_select %p213, %s15, 1
      %s215 = smul.addr %s214, 8
      %s216 = smul.addr %s215, 4
      %s217 = scalar_lea.vmem %s4, %s216
      %v219 = vld [vmem:[%s207] sm:$0xf]
      %v220 = vld [vmem:[%s207 + $0x10] sm:$0xf]
      %v221 = vld [vmem:[%s207 + $0x20] sm:$0xf]
      %v222 = vld [vmem:[%s207 + $0x30] sm:$0xf]
      %v223 = vld [vmem:[%s207 + $0x40] sm:$0xf]
      %v224 = vld [vmem:[%s207 + $0x50] sm:$0xf]
      %v225 = vld [vmem:[%s207 + $0x60] sm:$0xf]
      %v226 = vld [vmem:[%s207 + $0x70] sm:$0xf]
      %v227 = vld [vmem:[%s2] sm:$0xf]
      %v228 = vld [vmem:[%s2 + $0x4] sm:$0xf]
      %v229 = vld [vmem:[%s2 + $0x8] sm:$0xf]
      %v230 = vld [vmem:[%s2 + $0xc] sm:$0xf]
      %v231 = vld [vmem:[%s212] sm:$0xf]
      %v232 = vld [vmem:[%s212 + $0x10] sm:$0xf]
      %v233 = vld [vmem:[%s212 + $0x20] sm:$0xf]
      %v234 = vld [vmem:[%s212 + $0x30] sm:$0xf]
      %v235 = vld [vmem:[%s212 + $0x40] sm:$0xf]
      %v236 = vld [vmem:[%s212 + $0x50] sm:$0xf]
      %v237 = vld [vmem:[%s212 + $0x60] sm:$0xf]
      %v238 = vld [vmem:[%s212 + $0x70] sm:$0xf]
      %s239 = scalar_lea.vmem %s2, 16
      %v240 = vld [vmem:[%s239] sm:$0xf]
      %v241 = vld [vmem:[%s239 + $0x4] sm:$0xf]
      %v242 = vld [vmem:[%s239 + $0x8] sm:$0xf]
      %v243 = vld [vmem:[%s239 + $0xc] sm:$0xf]
      %v252 = vunpack.c.l.b16 %v231
      %v253 = vunpack.c.l.b16 %v232
      %v254 = vunpack.c.l.b16 %v233
      %v255 = vunpack.c.l.b16 %v234
      %v256 = vunpack.c.l.b16 %v235
      %v257 = vunpack.c.l.b16 %v236
      %v258 = vunpack.c.l.b16 %v237
      %v259 = vunpack.c.l.b16 %v238
      %v260 = vpack.c.b16 %v253, %v252
      %v261 = vpack.c.b16 %v255, %v254
      %v262 = vpack.c.b16 %v257, %v256
      %v263 = vpack.c.b16 %v259, %v258
      %v268 = vunpack.c.l.b16 %v240
      %v269 = vunpack.c.l.b16 %v241
      %v270 = vunpack.c.l.b16 %v242
      %v271 = vunpack.c.l.b16 %v243
      %v272 = vpack.c.b16 %v269, %v268
      %v273 = vpack.c.b16 %v271, %v270
      %vm276 = vcmask 261120
      %v278 = vsel %vm276, %v260, 0
      %v281 = vsel %vm276, %v261, 0
      %v284 = vsel %vm276, %v262, 0
      %v287 = vsel %vm276, %v263, 0
      %289 = vmatprep.subr.bf16.mxu0 0
      %290 = vmatpush1.bf16.msra.mxu0 0
      %291 = vmatprep.subr.bf16.mxu0 0
      %292 = vmatpush1.bf16.msra.mxu0 0
      %293 = vmatprep.subr.bf16.mxu0 0
      %294 = vmatpush1.bf16.msra.mxu0 0
      %295 = vmatprep.subr.bf16.mxu0 0
      %296 = vmatpush1.bf16.msra.mxu0 0
      %297 = vmatprep.subr.bf16.mxu0 0
      %298 = vmatpush1.bf16.msra.mxu0 0
      %299 = vmatprep.subr.bf16.mxu0 0
      %300 = vmatpush1.bf16.msra.mxu0 0
      %301 = vmatprep.subr.bf16.mxu0 0
      %302 = vmatpush1.bf16.msra.mxu0 %v273
      %303 = vmatprep.subr.bf16.mxu0 0
      %304 = vmatpush1.bf16.msra.mxu0 %v272
      %305 = vmatprep.subr.bf16.mxu0 0
      %306 = vmatpush2.bf16.msra.mxu0 0
      %307 = vmatprep.subr.bf16.mxu0 0
      %308 = vmatpush2.bf16.msra.mxu0 0
      %309 = vmatprep.subr.bf16.mxu0 0
      %310 = vmatpush2.bf16.msra.mxu0 0
      %311 = vmatprep.subr.bf16.mxu0 0
      %312 = vmatpush2.bf16.msra.mxu0 0
      %313 = vmatprep.subr.bf16.mxu0 0
      %314 = vmatpush2.bf16.msra.mxu0 0
      %315 = vmatprep.subr.bf16.mxu0 0
      %316 = vmatpush2.bf16.msra.mxu0 0
      %317 = vmatprep.subr.bf16.mxu0 0
      %318 = vmatpush2.bf16.msra.mxu0 0
      %319 = vmatprep.subr.bf16.mxu0 0
      %320 = vmatpush2.bf16.msra.mxu0 0
      %321 = vmatprep.mubr.bf16.mxu0 0
      %322 = vmatmul.mubr.bf16.gmra.mxu0 %v278
      %v323 = vpop.f32.mrf.mxu0
      %v324 = vadd.f32 0.0, %v323
      %v325 = vpop.f32.mrf.mxu0
      %v326 = vpop.f32.mrf.mxu0
      %v327 = vadd.f32 0.0, %v326
      %v328 = vpop.f32.mrf.mxu0
      %329 = vmatprep.mubr.bf16.mxu0 0
      %330 = vmatmul.mubr.bf16.gmra.mxu0 %v281
      %v331 = vpop.f32.mrf.mxu0
      %v332 = vadd.f32 0.0, %v331
      %v333 = vpop.f32.mrf.mxu0
      %v334 = vpop.f32.mrf.mxu0
      %v335 = vadd.f32 0.0, %v334
      %v336 = vpop.f32.mrf.mxu0
      %337 = vmatprep.mubr.bf16.mxu0 0
      %338 = vmatmul.mubr.bf16.gmra.mxu0 %v284
      %v339 = vpop.f32.mrf.mxu0
      %v340 = vadd.f32 0.0, %v339
      %v341 = vpop.f32.mrf.mxu0
      %v342 = vpop.f32.mrf.mxu0
      %v343 = vadd.f32 0.0, %v342
      %v344 = vpop.f32.mrf.mxu0
      %345 = vmatprep.mubr.bf16.mxu0 0
      %346 = vmatmul.mubr.bf16.gmra.mxu0 %v287
      %v347 = vpop.f32.mrf.mxu0
      %v348 = vadd.f32 0.0, %v347
      %v349 = vpop.f32.mrf.mxu0
      %v350 = vpop.f32.mrf.mxu0
      %v351 = vadd.f32 0.0, %v350
      %v352 = vpop.f32.mrf.mxu0
      %353 = vdwg.mxu0
      %v362 = vunpack.c.l.b16 %v219
      %v363 = vunpack.c.l.b16 %v220
      %v364 = vunpack.c.l.b16 %v221
      %v365 = vunpack.c.l.b16 %v222
      %v366 = vunpack.c.l.b16 %v223
      %v367 = vunpack.c.l.b16 %v224
      %v368 = vunpack.c.l.b16 %v225
      %v369 = vunpack.c.l.b16 %v226
      %v370 = vpack.c.b16 %v363, %v362
      %v371 = vpack.c.b16 %v365, %v364
      %v372 = vpack.c.b16 %v367, %v366
      %v373 = vpack.c.b16 %v369, %v368
      %v378 = vunpack.c.l.b16 %v227
      %v379 = vunpack.c.l.b16 %v228
      %v380 = vunpack.c.l.b16 %v229
      %v381 = vunpack.c.l.b16 %v230
      %v382 = vpack.c.b16 %v379, %v378
      %v383 = vpack.c.b16 %v381, %v380
      %v387 = vsel %vm276, %v370, 0
      %v390 = vsel %vm276, %v371, 0
      %v393 = vsel %vm276, %v372, 0
      %v396 = vsel %vm276, %v373, 0
      %398 = vmatprep.subr.bf16.mxu0 0
      %399 = vmatpush1.bf16.msra.mxu0 0
      %400 = vmatprep.subr.bf16.mxu0 0
      %401 = vmatpush1.bf16.msra.mxu0 0
      %402 = vmatprep.subr.bf16.mxu0 0
      %403 = vmatpush1.bf16.msra.mxu0 0
      %404 = vmatprep.subr.bf16.mxu0 0
      %405 = vmatpush1.bf16.msra.mxu0 0
      %406 = vmatprep.subr.bf16.mxu0 0
      %407 = vmatpush1.bf16.msra.mxu0 0
      %408 = vmatprep.subr.bf16.mxu0 0
      %409 = vmatpush1.bf16.msra.mxu0 0
      %410 = vmatprep.subr.bf16.mxu0 0
      %411 = vmatpush1.bf16.msra.mxu0 %v383
      %412 = vmatprep.subr.bf16.mxu0 0
      %413 = vmatpush1.bf16.msra.mxu0 %v382
      %414 = vmatprep.subr.bf16.mxu0 0
      %415 = vmatpush2.bf16.msra.mxu0 0
      %416 = vmatprep.subr.bf16.mxu0 0
      %417 = vmatpush2.bf16.msra.mxu0 0
      %418 = vmatprep.subr.bf16.mxu0 0
      %419 = vmatpush2.bf16.msra.mxu0 0
      %420 = vmatprep.subr.bf16.mxu0 0
      %421 = vmatpush2.bf16.msra.mxu0 0
      %422 = vmatprep.subr.bf16.mxu0 0
      %423 = vmatpush2.bf16.msra.mxu0 0
      %424 = vmatprep.subr.bf16.mxu0 0
      %425 = vmatpush2.bf16.msra.mxu0 0
      %426 = vmatprep.subr.bf16.mxu0 0
      %427 = vmatpush2.bf16.msra.mxu0 0
      %428 = vmatprep.subr.bf16.mxu0 0
      %429 = vmatpush2.bf16.msra.mxu0 0
      %430 = vmatprep.mubr.bf16.mxu0 0
      %431 = vmatmul.mubr.bf16.gmra.mxu0 %v387
      %v432 = vpop.f32.mrf.mxu0
      %v433 = vadd.f32 %v324, %v432
      %v434 = vpop.f32.mrf.mxu0
      %v435 = vpop.f32.mrf.mxu0
      %v436 = vadd.f32 %v327, %v435
      %v437 = vpop.f32.mrf.mxu0
      %438 = vmatprep.mubr.bf16.mxu0 0
      %439 = vmatmul.mubr.bf16.gmra.mxu0 %v390
      %v440 = vpop.f32.mrf.mxu0
      %v441 = vadd.f32 %v332, %v440
      %v442 = vpop.f32.mrf.mxu0
      %v443 = vpop.f32.mrf.mxu0
      %v444 = vadd.f32 %v335, %v443
      %v445 = vpop.f32.mrf.mxu0
      %446 = vmatprep.mubr.bf16.mxu0 0
      %447 = vmatmul.mubr.bf16.gmra.mxu0 %v393
      %v448 = vpop.f32.mrf.mxu0
      %v449 = vadd.f32 %v340, %v448
      %v450 = vpop.f32.mrf.mxu0
      %v451 = vpop.f32.mrf.mxu0
      %v452 = vadd.f32 %v343, %v451
      %v453 = vpop.f32.mrf.mxu0
      %454 = vmatprep.mubr.bf16.mxu0 0
      %455 = vmatmul.mubr.bf16.gmra.mxu0 %v396
      %v456 = vpop.f32.mrf.mxu0
      %v457 = vadd.f32 %v348, %v456
      %v458 = vpop.f32.mrf.mxu0
      %v459 = vpop.f32.mrf.mxu0
      %v460 = vadd.f32 %v351, %v459
      %v461 = vpop.f32.mrf.mxu0
      %462 = vdwg.mxu0
      %v463 = vld [vmem:[%s207] sm:$0xf]
      %v464 = vld [vmem:[%s207 + $0x4] sm:$0x1]
      %v465 = vld [vmem:[%s207 + $0x10] sm:$0xf]
      %v466 = vld [vmem:[%s207 + $0x14] sm:$0x1]
      %v467 = vld [vmem:[%s207 + $0x20] sm:$0xf]
      %v468 = vld [vmem:[%s207 + $0x24] sm:$0x1]
      %v469 = vld [vmem:[%s207 + $0x30] sm:$0xf]
      %v470 = vld [vmem:[%s207 + $0x34] sm:$0x1]
      %v471 = vld [vmem:[%s207 + $0x40] sm:$0xf]
      %v472 = vld [vmem:[%s207 + $0x44] sm:$0x1]
      %v473 = vld [vmem:[%s207 + $0x50] sm:$0xf]
      %v474 = vld [vmem:[%s207 + $0x54] sm:$0x1]
      %v475 = vld [vmem:[%s207 + $0x60] sm:$0xf]
      %v476 = vld [vmem:[%s207 + $0x64] sm:$0x1]
      %v477 = vld [vmem:[%s207 + $0x70] sm:$0xf]
      %v478 = vld [vmem:[%s207 + $0x74] sm:$0x1]
      %vm479 = vsmask.f32 3328
      %vm480 = vsmask.f32 7440
      %vm481 = vmor %vm479, %vm480
      %v483 = vshrl.u32 %v463, 16
      %v485 = vrot.slane %v483, 4
      %v486 = vshll.u32 %v463, 16
      %v488 = vrot.slane %v486, 5
      %v489 = vor.u32 %v485, %v488
      %v490 = vrot.slane %v489, 4
      %v492 = vshll.u32 %v464, 16
      %v494 = vrot.slane %v492, 5
      %v495 = vsel %vm481, %v490, %v494
      %v497 = vshrl.u32 %v465, 16
      %v499 = vrot.slane %v497, 4
      %v500 = vshll.u32 %v465, 16
      %v502 = vrot.slane %v500, 5
      %v503 = vor.u32 %v499, %v502
      %v504 = vrot.slane %v503, 4
      %v506 = vshll.u32 %v466, 16
      %v508 = vrot.slane %v506, 5
      %v509 = vsel %vm481, %v504, %v508
      %v511 = vshrl.u32 %v467, 16
      %v513 = vrot.slane %v511, 4
      %v514 = vshll.u32 %v467, 16
      %v516 = vrot.slane %v514, 5
      %v517 = vor.u32 %v513, %v516
      %v518 = vrot.slane %v517, 4
      %v520 = vshll.u32 %v468, 16
      %v522 = vrot.slane %v520, 5
      %v523 = vsel %vm481, %v518, %v522
      %v525 = vshrl.u32 %v469, 16
      %v527 = vrot.slane %v525, 4
      %v528 = vshll.u32 %v469, 16
      %v530 = vrot.slane %v528, 5
      %v531 = vor.u32 %v527, %v530
      %v532 = vrot.slane %v531, 4
      %v534 = vshll.u32 %v470, 16
      %v536 = vrot.slane %v534, 5
      %v537 = vsel %vm481, %v532, %v536
      %v539 = vshrl.u32 %v471, 16
      %v541 = vrot.slane %v539, 4
      %v542 = vshll.u32 %v471, 16
      %v544 = vrot.slane %v542, 5
      %v545 = vor.u32 %v541, %v544
      %v546 = vrot.slane %v545, 4
      %v548 = vshll.u32 %v472, 16
      %v550 = vrot.slane %v548, 5
      %v551 = vsel %vm481, %v546, %v550
      %v553 = vshrl.u32 %v473, 16
      %v555 = vrot.slane %v553, 4
      %v556 = vshll.u32 %v473, 16
      %v558 = vrot.slane %v556, 5
      %v559 = vor.u32 %v555, %v558
      %v560 = vrot.slane %v559, 4
      %v562 = vshll.u32 %v474, 16
      %v564 = vrot.slane %v562, 5
      %v565 = vsel %vm481, %v560, %v564
      %v567 = vshrl.u32 %v475, 16
      %v569 = vrot.slane %v567, 4
      %v570 = vshll.u32 %v475, 16
      %v572 = vrot.slane %v570, 5
      %v573 = vor.u32 %v569, %v572
      %v574 = vrot.slane %v573, 4
      %v576 = vshll.u32 %v476, 16
      %v578 = vrot.slane %v576, 5
      %v579 = vsel %vm481, %v574, %v578
      %v581 = vshrl.u32 %v477, 16
      %v583 = vrot.slane %v581, 4
      %v584 = vshll.u32 %v477, 16
      %v586 = vrot.slane %v584, 5
      %v587 = vor.u32 %v583, %v586
      %v588 = vrot.slane %v587, 4
      %v590 = vshll.u32 %v478, 16
      %v592 = vrot.slane %v590, 5
      %v593 = vsel %vm481, %v588, %v592
      %s594 = scalar_lea.vmem %s2, 32
      %v595 = vld [vmem:[%s594] sm:$0xf]
      %v596 = vld [vmem:[%s594 + $0x4] sm:$0xf]
      %v597 = vld [vmem:[%s594 + $0x8] sm:$0xf]
      %v598 = vld [vmem:[%s594 + $0xc] sm:$0xf]
      %v599 = vunpack.c.l.b16 %v495
      %v600 = vunpack.c.l.b16 %v509
      %v601 = vunpack.c.l.b16 %v523
      %v602 = vunpack.c.l.b16 %v537
      %v603 = vunpack.c.l.b16 %v551
      %v604 = vunpack.c.l.b16 %v565
      %v605 = vunpack.c.l.b16 %v579
      %v606 = vunpack.c.l.b16 %v593
      %v607 = vpack.c.b16 %v600, %v599
      %v608 = vpack.c.b16 %v602, %v601
      %v609 = vpack.c.b16 %v604, %v603
      %v610 = vpack.c.b16 %v606, %v605
      %v615 = vunpack.c.l.b16 %v595
      %v616 = vunpack.c.l.b16 %v596
      %v617 = vunpack.c.l.b16 %v597
      %v618 = vunpack.c.l.b16 %v598
      %v619 = vpack.c.b16 %v616, %v615
      %v620 = vpack.c.b16 %v618, %v617
      %v624 = vsel %vm276, %v607, 0
      %v627 = vsel %vm276, %v608, 0
      %v630 = vsel %vm276, %v609, 0
      %v633 = vsel %vm276, %v610, 0
      %635 = vmatprep.subr.bf16.mxu0 0
      %636 = vmatpush1.bf16.msra.mxu0 0
      %637 = vmatprep.subr.bf16.mxu0 0
      %638 = vmatpush1.bf16.msra.mxu0 0
      %639 = vmatprep.subr.bf16.mxu0 0
      %640 = vmatpush1.bf16.msra.mxu0 0
      %641 = vmatprep.subr.bf16.mxu0 0
      %642 = vmatpush1.bf16.msra.mxu0 0
      %643 = vmatprep.subr.bf16.mxu0 0
      %644 = vmatpush1.bf16.msra.mxu0 0
      %645 = vmatprep.subr.bf16.mxu0 0
      %646 = vmatpush1.bf16.msra.mxu0 0
      %647 = vmatprep.subr.bf16.mxu0 0
      %648 = vmatpush1.bf16.msra.mxu0 %v620
      %649 = vmatprep.subr.bf16.mxu0 0
      %650 = vmatpush1.bf16.msra.mxu0 %v619
      %651 = vmatprep.subr.bf16.mxu0 0
      %652 = vmatpush2.bf16.msra.mxu0 0
      %653 = vmatprep.subr.bf16.mxu0 0
      %654 = vmatpush2.bf16.msra.mxu0 0
      %655 = vmatprep.subr.bf16.mxu0 0
      %656 = vmatpush2.bf16.msra.mxu0 0
      %657 = vmatprep.subr.bf16.mxu0 0
      %658 = vmatpush2.bf16.msra.mxu0 0
      %659 = vmatprep.subr.bf16.mxu0 0
      %660 = vmatpush2.bf16.msra.mxu0 0
      %661 = vmatprep.subr.bf16.mxu0 0
      %662 = vmatpush2.bf16.msra.mxu0 0
      %663 = vmatprep.subr.bf16.mxu0 0
      %664 = vmatpush2.bf16.msra.mxu0 0
      %665 = vmatprep.subr.bf16.mxu0 0
      %666 = vmatpush2.bf16.msra.mxu0 0
      %667 = vmatprep.mubr.bf16.mxu0 0
      %668 = vmatmul.mubr.bf16.gmra.mxu0 %v624
      %v669 = vpop.f32.mrf.mxu0
      %v670 = vadd.f32 0.0, %v669
      %v671 = vpop.f32.mrf.mxu0
      %v672 = vpop.f32.mrf.mxu0
      %v673 = vadd.f32 0.0, %v672
      %v674 = vpop.f32.mrf.mxu0
      %675 = vmatprep.mubr.bf16.mxu0 0
      %676 = vmatmul.mubr.bf16.gmra.mxu0 %v627
      %v677 = vpop.f32.mrf.mxu0
      %v678 = vadd.f32 0.0, %v677
      %v679 = vpop.f32.mrf.mxu0
      %v680 = vpop.f32.mrf.mxu0
      %v681 = vadd.f32 0.0, %v680
      %v682 = vpop.f32.mrf.mxu0
      %683 = vmatprep.mubr.bf16.mxu0 0
      %684 = vmatmul.mubr.bf16.gmra.mxu0 %v630
      %v685 = vpop.f32.mrf.mxu0
      %v686 = vadd.f32 0.0, %v685
      %v687 = vpop.f32.mrf.mxu0
      %v688 = vpop.f32.mrf.mxu0
      %v689 = vadd.f32 0.0, %v688
      %v690 = vpop.f32.mrf.mxu0
      %691 = vmatprep.mubr.bf16.mxu0 0
      %692 = vmatmul.mubr.bf16.gmra.mxu0 %v633
      %v693 = vpop.f32.mrf.mxu0
      %v694 = vadd.f32 0.0, %v693
      %v695 = vpop.f32.mrf.mxu0
      %v696 = vpop.f32.mrf.mxu0
      %v697 = vadd.f32 0.0, %v696
      %v698 = vpop.f32.mrf.mxu0
      %699 = vdwg.mxu0
      %v700 = vadd.f32 %v433, %v670
      %v701 = vadd.f32 %v436, %v673
      %v702 = vadd.f32 %v441, %v678
      %v703 = vadd.f32 %v444, %v681
      %v704 = vadd.f32 %v449, %v686
      %v705 = vadd.f32 %v452, %v689
      %v706 = vadd.f32 %v457, %v694
      %v707 = vadd.f32 %v460, %v697
      %s708 = scalar_lea.vmem %s207, 8
      %v709 = vld [vmem:[%s708] sm:$0xf]
      %v710 = vld [vmem:[%s708 + $0x10] sm:$0xf]
      %v711 = vld [vmem:[%s708 + $0x20] sm:$0xf]
      %v712 = vld [vmem:[%s708 + $0x30] sm:$0xf]
      %v713 = vld [vmem:[%s708 + $0x40] sm:$0xf]
      %v714 = vld [vmem:[%s708 + $0x50] sm:$0xf]
      %v715 = vld [vmem:[%s708 + $0x60] sm:$0xf]
      %v716 = vld [vmem:[%s708 + $0x70] sm:$0xf]
      %s717 = scalar_lea.vmem %s2, 48
      %v718 = vld [vmem:[%s717] sm:$0xf]
      %v719 = vld [vmem:[%s717 + $0x4] sm:$0xf]
      %v720 = vld [vmem:[%s717 + $0x8] sm:$0xf]
      %v721 = vld [vmem:[%s717 + $0xc] sm:$0xf]
      %v730 = vunpack.c.l.b16 %v709
      %v731 = vunpack.c.l.b16 %v710
      %v732 = vunpack.c.l.b16 %v711
      %v733 = vunpack.c.l.b16 %v712
      %v734 = vunpack.c.l.b16 %v713
      %v735 = vunpack.c.l.b16 %v714
      %v736 = vunpack.c.l.b16 %v715
      %v737 = vunpack.c.l.b16 %v716
      %v738 = vpack.c.b16 %v731, %v730
      %v739 = vpack.c.b16 %v733, %v732
      %v740 = vpack.c.b16 %v735, %v734
      %v741 = vpack.c.b16 %v737, %v736
      %v746 = vunpack.c.l.b16 %v718
      %v747 = vunpack.c.l.b16 %v719
      %v748 = vunpack.c.l.b16 %v720
      %v749 = vunpack.c.l.b16 %v721
      %v750 = vpack.c.b16 %v747, %v746
      %v751 = vpack.c.b16 %v749, %v748
      %v755 = vsel %vm276, %v738, 0
      %v758 = vsel %vm276, %v739, 0
      %v761 = vsel %vm276, %v740, 0
      %v764 = vsel %vm276, %v741, 0
      %766 = vmatprep.subr.bf16.mxu0 0
      %767 = vmatpush1.bf16.msra.mxu0 0
      %768 = vmatprep.subr.bf16.mxu0 0
      %769 = vmatpush1.bf16.msra.mxu0 0
      %770 = vmatprep.subr.bf16.mxu0 0
      %771 = vmatpush1.bf16.msra.mxu0 0
      %772 = vmatprep.subr.bf16.mxu0 0
      %773 = vmatpush1.bf16.msra.mxu0 0
      %774 = vmatprep.subr.bf16.mxu0 0
      %775 = vmatpush1.bf16.msra.mxu0 0
      %776 = vmatprep.subr.bf16.mxu0 0
      %777 = vmatpush1.bf16.msra.mxu0 0
      %778 = vmatprep.subr.bf16.mxu0 0
      %779 = vmatpush1.bf16.msra.mxu0 %v751
      %780 = vmatprep.subr.bf16.mxu0 0
      %781 = vmatpush1.bf16.msra.mxu0 %v750
      %782 = vmatprep.subr.bf16.mxu0 0
      %783 = vmatpush2.bf16.msra.mxu0 0
      %784 = vmatprep.subr.bf16.mxu0 0
      %785 = vmatpush2.bf16.msra.mxu0 0
      %786 = vmatprep.subr.bf16.mxu0 0
      %787 = vmatpush2.bf16.msra.mxu0 0
      %788 = vmatprep.subr.bf16.mxu0 0
      %789 = vmatpush2.bf16.msra.mxu0 0
      %790 = vmatprep.subr.bf16.mxu0 0
      %791 = vmatpush2.bf16.msra.mxu0 0
      %792 = vmatprep.subr.bf16.mxu0 0
      %793 = vmatpush2.bf16.msra.mxu0 0
      %794 = vmatprep.subr.bf16.mxu0 0
      %795 = vmatpush2.bf16.msra.mxu0 0
      %796 = vmatprep.subr.bf16.mxu0 0
      %797 = vmatpush2.bf16.msra.mxu0 0
      %798 = vmatprep.mubr.bf16.mxu0 0
      %799 = vmatmul.mubr.bf16.gmra.mxu0 %v755
      %v800 = vpop.f32.mrf.mxu0
      %v801 = vadd.f32 0.0, %v800
      %v802 = vpop.f32.mrf.mxu0
      %v803 = vpop.f32.mrf.mxu0
      %v804 = vadd.f32 0.0, %v803
      %v805 = vpop.f32.mrf.mxu0
      %806 = vmatprep.mubr.bf16.mxu0 0
      %807 = vmatmul.mubr.bf16.gmra.mxu0 %v758
      %v808 = vpop.f32.mrf.mxu0
      %v809 = vadd.f32 0.0, %v808
      %v810 = vpop.f32.mrf.mxu0
      %v811 = vpop.f32.mrf.mxu0
      %v812 = vadd.f32 0.0, %v811
      %v813 = vpop.f32.mrf.mxu0
      %814 = vmatprep.mubr.bf16.mxu0 0
      %815 = vmatmul.mubr.bf16.gmra.mxu0 %v761
      %v816 = vpop.f32.mrf.mxu0
      %v817 = vadd.f32 0.0, %v816
      %v818 = vpop.f32.mrf.mxu0
      %v819 = vpop.f32.mrf.mxu0
      %v820 = vadd.f32 0.0, %v819
      %v821 = vpop.f32.mrf.mxu0
      %822 = vmatprep.mubr.bf16.mxu0 0
      %823 = vmatmul.mubr.bf16.gmra.mxu0 %v764
      %v824 = vpop.f32.mrf.mxu0
      %v825 = vadd.f32 0.0, %v824
      %v826 = vpop.f32.mrf.mxu0
      %v827 = vpop.f32.mrf.mxu0
      %v828 = vadd.f32 0.0, %v827
      %v829 = vpop.f32.mrf.mxu0
      %830 = vdwg.mxu0
      %v831 = vadd.f32 %v700, %v801
      %v832 = vadd.f32 %v701, %v804
      %v833 = vadd.f32 %v702, %v809
      %v834 = vadd.f32 %v703, %v812
      %v835 = vadd.f32 %v704, %v817
      %v836 = vadd.f32 %v705, %v820
      %v837 = vadd.f32 %v706, %v825
      %v838 = vadd.f32 %v707, %v828
      %s839 = scalar_lea.vmem %s212, 8
      %v840 = vld [vmem:[%s839] sm:$0xf]
      %v841 = vld [vmem:[%s839 + $0x10] sm:$0xf]
      %v842 = vld [vmem:[%s839 + $0x20] sm:$0xf]
      %v843 = vld [vmem:[%s839 + $0x30] sm:$0xf]
      %v844 = vld [vmem:[%s839 + $0x40] sm:$0xf]
      %v845 = vld [vmem:[%s839 + $0x50] sm:$0xf]
      %v846 = vld [vmem:[%s839 + $0x60] sm:$0xf]
      %v847 = vld [vmem:[%s839 + $0x70] sm:$0xf]
      %s848 = scalar_lea.vmem %s2, 64
      %v849 = vld [vmem:[%s848] sm:$0xf]
      %v850 = vld [vmem:[%s848 + $0x4] sm:$0xf]
      %v851 = vld [vmem:[%s848 + $0x8] sm:$0xf]
      %v852 = vld [vmem:[%s848 + $0xc] sm:$0xf]
      %v861 = vunpack.c.l.b16 %v840
      %v862 = vunpack.c.l.b16 %v841
      %v863 = vunpack.c.l.b16 %v842
      %v864 = vunpack.c.l.b16 %v843
      %v865 = vunpack.c.l.b16 %v844
      %v866 = vunpack.c.l.b16 %v845
      %v867 = vunpack.c.l.b16 %v846
      %v868 = vunpack.c.l.b16 %v847
      %v869 = vpack.c.b16 %v862, %v861
      %v870 = vpack.c.b16 %v864, %v863
      %v871 = vpack.c.b16 %v866, %v865
      %v872 = vpack.c.b16 %v868, %v867
      %v877 = vunpack.c.l.b16 %v849
      %v878 = vunpack.c.l.b16 %v850
      %v879 = vunpack.c.l.b16 %v851
      %v880 = vunpack.c.l.b16 %v852
      %v881 = vpack.c.b16 %v878, %v877
      %v882 = vpack.c.b16 %v880, %v879
      %v886 = vsel %vm276, %v869, 0
      %v889 = vsel %vm276, %v870, 0
      %v892 = vsel %vm276, %v871, 0
      %v895 = vsel %vm276, %v872, 0
      %897 = vmatprep.subr.bf16.mxu0 0
      %898 = vmatpush1.bf16.msra.mxu0 0
      %899 = vmatprep.subr.bf16.mxu0 0
      %900 = vmatpush1.bf16.msra.mxu0 0
      %901 = vmatprep.subr.bf16.mxu0 0
      %902 = vmatpush1.bf16.msra.mxu0 0
      %903 = vmatprep.subr.bf16.mxu0 0
      %904 = vmatpush1.bf16.msra.mxu0 0
      %905 = vmatprep.subr.bf16.mxu0 0
      %906 = vmatpush1.bf16.msra.mxu0 0
      %907 = vmatprep.subr.bf16.mxu0 0
      %908 = vmatpush1.bf16.msra.mxu0 0
      %909 = vmatprep.subr.bf16.mxu0 0
      %910 = vmatpush1.bf16.msra.mxu0 %v882
      %911 = vmatprep.subr.bf16.mxu0 0
      %912 = vmatpush1.bf16.msra.mxu0 %v881
      %913 = vmatprep.subr.bf16.mxu0 0
      %914 = vmatpush2.bf16.msra.mxu0 0
      %915 = vmatprep.subr.bf16.mxu0 0
      %916 = vmatpush2.bf16.msra.mxu0 0
      %917 = vmatprep.subr.bf16.mxu0 0
      %918 = vmatpush2.bf16.msra.mxu0 0
      %919 = vmatprep.subr.bf16.mxu0 0
      %920 = vmatpush2.bf16.msra.mxu0 0
      %921 = vmatprep.subr.bf16.mxu0 0
      %922 = vmatpush2.bf16.msra.mxu0 0
      %923 = vmatprep.subr.bf16.mxu0 0
      %924 = vmatpush2.bf16.msra.mxu0 0
      %925 = vmatprep.subr.bf16.mxu0 0
      %926 = vmatpush2.bf16.msra.mxu0 0
      %927 = vmatprep.subr.bf16.mxu0 0
      %928 = vmatpush2.bf16.msra.mxu0 0
      %929 = vmatprep.mubr.bf16.mxu0 0
      %930 = vmatmul.mubr.bf16.gmra.mxu0 %v886
      %v931 = vpop.f32.mrf.mxu0
      %v932 = vadd.f32 0.0, %v931
      %v933 = vpop.f32.mrf.mxu0
      %v934 = vpop.f32.mrf.mxu0
      %v935 = vadd.f32 0.0, %v934
      %v936 = vpop.f32.mrf.mxu0
      %937 = vmatprep.mubr.bf16.mxu0 0
      %938 = vmatmul.mubr.bf16.gmra.mxu0 %v889
      %v939 = vpop.f32.mrf.mxu0
      %v940 = vadd.f32 0.0, %v939
      %v941 = vpop.f32.mrf.mxu0
      %v942 = vpop.f32.mrf.mxu0
      %v943 = vadd.f32 0.0, %v942
      %v944 = vpop.f32.mrf.mxu0
      %945 = vmatprep.mubr.bf16.mxu0 0
      %946 = vmatmul.mubr.bf16.gmra.mxu0 %v892
      %v947 = vpop.f32.mrf.mxu0
      %v948 = vadd.f32 0.0, %v947
      %v949 = vpop.f32.mrf.mxu0
      %v950 = vpop.f32.mrf.mxu0
      %v951 = vadd.f32 0.0, %v950
      %v952 = vpop.f32.mrf.mxu0
      %953 = vmatprep.mubr.bf16.mxu0 0
      %954 = vmatmul.mubr.bf16.gmra.mxu0 %v895
      %v955 = vpop.f32.mrf.mxu0
      %v956 = vadd.f32 0.0, %v955
      %v957 = vpop.f32.mrf.mxu0
      %v958 = vpop.f32.mrf.mxu0
      %v959 = vadd.f32 0.0, %v958
      %v960 = vpop.f32.mrf.mxu0
      %961 = vdwg.mxu0
      %v962 = vadd.f32 %v831, %v932
      %v963 = vadd.f32 %v832, %v935
      %v964 = vadd.f32 %v833, %v940
      %v965 = vadd.f32 %v834, %v943
      %v966 = vadd.f32 %v835, %v948
      %v967 = vadd.f32 %v836, %v951
      %v968 = vadd.f32 %v837, %v956
      %v969 = vadd.f32 %v838, %v959
      %v970 = vld [vmem:[%s708] sm:$0xf]
      %v971 = vld [vmem:[%s708 + $0x4] sm:$0x1]
      %v972 = vld [vmem:[%s708 + $0x10] sm:$0xf]
      %v973 = vld [vmem:[%s708 + $0x14] sm:$0x1]
      %v974 = vld [vmem:[%s708 + $0x20] sm:$0xf]
      %v975 = vld [vmem:[%s708 + $0x24] sm:$0x1]
      %v976 = vld [vmem:[%s708 + $0x30] sm:$0xf]
      %v977 = vld [vmem:[%s708 + $0x34] sm:$0x1]
      %v978 = vld [vmem:[%s708 + $0x40] sm:$0xf]
      %v979 = vld [vmem:[%s708 + $0x44] sm:$0x1]
      %v980 = vld [vmem:[%s708 + $0x50] sm:$0xf]
      %v981 = vld [vmem:[%s708 + $0x54] sm:$0x1]
      %v982 = vld [vmem:[%s708 + $0x60] sm:$0xf]
      %v983 = vld [vmem:[%s708 + $0x64] sm:$0x1]
      %v984 = vld [vmem:[%s708 + $0x70] sm:$0xf]
      %v985 = vld [vmem:[%s708 + $0x74] sm:$0x1]
      %v987 = vshrl.u32 %v970, 16
      %v989 = vrot.slane %v987, 4
      %v990 = vshll.u32 %v970, 16
      %v992 = vrot.slane %v990, 5
      %v993 = vor.u32 %v989, %v992
      %v994 = vrot.slane %v993, 4
      %v996 = vshll.u32 %v971, 16
      %v998 = vrot.slane %v996, 5
      %v999 = vsel %vm481, %v994, %v998
      %v1001 = vshrl.u32 %v972, 16
      %v1003 = vrot.slane %v1001, 4
      %v1004 = vshll.u32 %v972, 16
      %v1006 = vrot.slane %v1004, 5
      %v1007 = vor.u32 %v1003, %v1006
      %v1008 = vrot.slane %v1007, 4
      %v1010 = vshll.u32 %v973, 16
      %v1012 = vrot.slane %v1010, 5
      %v1013 = vsel %vm481, %v1008, %v1012
      %v1015 = vshrl.u32 %v974, 16
      %v1017 = vrot.slane %v1015, 4
      %v1018 = vshll.u32 %v974, 16
      %v1020 = vrot.slane %v1018, 5
      %v1021 = vor.u32 %v1017, %v1020
      %v1022 = vrot.slane %v1021, 4
      %v1024 = vshll.u32 %v975, 16
      %v1026 = vrot.slane %v1024, 5
      %v1027 = vsel %vm481, %v1022, %v1026
      %v1029 = vshrl.u32 %v976, 16
      %v1031 = vrot.slane %v1029, 4
      %v1032 = vshll.u32 %v976, 16
      %v1034 = vrot.slane %v1032, 5
      %v1035 = vor.u32 %v1031, %v1034
      %v1036 = vrot.slane %v1035, 4
      %v1038 = vshll.u32 %v977, 16
      %v1040 = vrot.slane %v1038, 5
      %v1041 = vsel %vm481, %v1036, %v1040
      %v1043 = vshrl.u32 %v978, 16
      %v1045 = vrot.slane %v1043, 4
      %v1046 = vshll.u32 %v978, 16
      %v1048 = vrot.slane %v1046, 5
      %v1049 = vor.u32 %v1045, %v1048
      %v1050 = vrot.slane %v1049, 4
      %v1052 = vshll.u32 %v979, 16
      %v1054 = vrot.slane %v1052, 5
      %v1055 = vsel %vm481, %v1050, %v1054
      %v1057 = vshrl.u32 %v980, 16
      %v1059 = vrot.slane %v1057, 4
      %v1060 = vshll.u32 %v980, 16
      %v1062 = vrot.slane %v1060, 5
      %v1063 = vor.u32 %v1059, %v1062
      %v1064 = vrot.slane %v1063, 4
      %v1066 = vshll.u32 %v981, 16
      %v1068 = vrot.slane %v1066, 5
      %v1069 = vsel %vm481, %v1064, %v1068
      %v1071 = vshrl.u32 %v982, 16
      %v1073 = vrot.slane %v1071, 4
      %v1074 = vshll.u32 %v982, 16
      %v1076 = vrot.slane %v1074, 5
      %v1077 = vor.u32 %v1073, %v1076
      %v1078 = vrot.slane %v1077, 4
      %v1080 = vshll.u32 %v983, 16
      %v1082 = vrot.slane %v1080, 5
      %v1083 = vsel %vm481, %v1078, %v1082
      %v1085 = vshrl.u32 %v984, 16
      %v1087 = vrot.slane %v1085, 4
      %v1088 = vshll.u32 %v984, 16
      %v1090 = vrot.slane %v1088, 5
      %v1091 = vor.u32 %v1087, %v1090
      %v1092 = vrot.slane %v1091, 4
      %v1094 = vshll.u32 %v985, 16
      %v1096 = vrot.slane %v1094, 5
      %v1097 = vsel %vm481, %v1092, %v1096
      %s1098 = scalar_lea.vmem %s2, 80
      %v1099 = vld [vmem:[%s1098] sm:$0xf]
      %v1100 = vld [vmem:[%s1098 + $0x4] sm:$0xf]
      %v1101 = vld [vmem:[%s1098 + $0x8] sm:$0xf]
      %v1102 = vld [vmem:[%s1098 + $0xc] sm:$0xf]
      %v1103 = vunpack.c.l.b16 %v999
      %v1104 = vunpack.c.l.b16 %v1013
      %v1105 = vunpack.c.l.b16 %v1027
      %v1106 = vunpack.c.l.b16 %v1041
      %v1107 = vunpack.c.l.b16 %v1055
      %v1108 = vunpack.c.l.b16 %v1069
      %v1109 = vunpack.c.l.b16 %v1083
      %v1110 = vunpack.c.l.b16 %v1097
      %v1111 = vpack.c.b16 %v1104, %v1103
      %v1112 = vpack.c.b16 %v1106, %v1105
      %v1113 = vpack.c.b16 %v1108, %v1107
      %v1114 = vpack.c.b16 %v1110, %v1109
      %v1119 = vunpack.c.l.b16 %v1099
      %v1120 = vunpack.c.l.b16 %v1100
      %v1121 = vunpack.c.l.b16 %v1101
      %v1122 = vunpack.c.l.b16 %v1102
      %v1123 = vpack.c.b16 %v1120, %v1119
      %v1124 = vpack.c.b16 %v1122, %v1121
      %v1128 = vsel %vm276, %v1111, 0
      %v1131 = vsel %vm276, %v1112, 0
      %v1134 = vsel %vm276, %v1113, 0
      %v1137 = vsel %vm276, %v1114, 0
      %1139 = vmatprep.subr.bf16.mxu0 0
      %1140 = vmatpush1.bf16.msra.mxu0 0
      %1141 = vmatprep.subr.bf16.mxu0 0
      %1142 = vmatpush1.bf16.msra.mxu0 0
      %1143 = vmatprep.subr.bf16.mxu0 0
      %1144 = vmatpush1.bf16.msra.mxu0 0
      %1145 = vmatprep.subr.bf16.mxu0 0
      %1146 = vmatpush1.bf16.msra.mxu0 0
      %1147 = vmatprep.subr.bf16.mxu0 0
      %1148 = vmatpush1.bf16.msra.mxu0 0
      %1149 = vmatprep.subr.bf16.mxu0 0
      %1150 = vmatpush1.bf16.msra.mxu0 0
      %1151 = vmatprep.subr.bf16.mxu0 0
      %1152 = vmatpush1.bf16.msra.mxu0 %v1124
      %1153 = vmatprep.subr.bf16.mxu0 0
      %1154 = vmatpush1.bf16.msra.mxu0 %v1123
      %1155 = vmatprep.subr.bf16.mxu0 0
      %1156 = vmatpush2.bf16.msra.mxu0 0
      %1157 = vmatprep.subr.bf16.mxu0 0
      %1158 = vmatpush2.bf16.msra.mxu0 0
      %1159 = vmatprep.subr.bf16.mxu0 0
      %1160 = vmatpush2.bf16.msra.mxu0 0
      %1161 = vmatprep.subr.bf16.mxu0 0
      %1162 = vmatpush2.bf16.msra.mxu0 0
      %1163 = vmatprep.subr.bf16.mxu0 0
      %1164 = vmatpush2.bf16.msra.mxu0 0
      %1165 = vmatprep.subr.bf16.mxu0 0
      %1166 = vmatpush2.bf16.msra.mxu0 0
      %1167 = vmatprep.subr.bf16.mxu0 0
      %1168 = vmatpush2.bf16.msra.mxu0 0
      %1169 = vmatprep.subr.bf16.mxu0 0
      %1170 = vmatpush2.bf16.msra.mxu0 0
      %1171 = vmatprep.mubr.bf16.mxu0 0
      %1172 = vmatmul.mubr.bf16.gmra.mxu0 %v1128
      %v1173 = vpop.f32.mrf.mxu0
      %v1174 = vadd.f32 0.0, %v1173
      %v1175 = vpop.f32.mrf.mxu0
      %v1176 = vpop.f32.mrf.mxu0
      %v1177 = vadd.f32 0.0, %v1176
      %v1178 = vpop.f32.mrf.mxu0
      %1179 = vmatprep.mubr.bf16.mxu0 0
      %1180 = vmatmul.mubr.bf16.gmra.mxu0 %v1131
      %v1181 = vpop.f32.mrf.mxu0
      %v1182 = vadd.f32 0.0, %v1181
      %v1183 = vpop.f32.mrf.mxu0
      %v1184 = vpop.f32.mrf.mxu0
      %v1185 = vadd.f32 0.0, %v1184
      %v1186 = vpop.f32.mrf.mxu0
      %1187 = vmatprep.mubr.bf16.mxu0 0
      %1188 = vmatmul.mubr.bf16.gmra.mxu0 %v1134
      %v1189 = vpop.f32.mrf.mxu0
      %v1190 = vadd.f32 0.0, %v1189
      %v1191 = vpop.f32.mrf.mxu0
      %v1192 = vpop.f32.mrf.mxu0
      %v1193 = vadd.f32 0.0, %v1192
      %v1194 = vpop.f32.mrf.mxu0
      %1195 = vmatprep.mubr.bf16.mxu0 0
      %1196 = vmatmul.mubr.bf16.gmra.mxu0 %v1137
      %v1197 = vpop.f32.mrf.mxu0
      %v1198 = vadd.f32 0.0, %v1197
      %v1199 = vpop.f32.mrf.mxu0
      %v1200 = vpop.f32.mrf.mxu0
      %v1201 = vadd.f32 0.0, %v1200
      %v1202 = vpop.f32.mrf.mxu0
      %1203 = vdwg.mxu0
      %v1204 = vadd.f32 %v962, %v1174
      %v1205 = vadd.f32 %v963, %v1177
      %v1206 = vadd.f32 %v964, %v1182
      %v1207 = vadd.f32 %v965, %v1185
      %v1208 = vadd.f32 %v966, %v1190
      %v1209 = vadd.f32 %v967, %v1193
      %v1210 = vadd.f32 %v968, %v1198
      %v1211 = vadd.f32 %v969, %v1201
      %s1212 = scalar_lea.vmem %s207, 16
      %v1213 = vld [vmem:[%s1212] sm:$0xf]
      %v1214 = vld [vmem:[%s1212 + $0x10] sm:$0xf]
      %v1215 = vld [vmem:[%s1212 + $0x20] sm:$0xf]
      %v1216 = vld [vmem:[%s1212 + $0x30] sm:$0xf]
      %v1217 = vld [vmem:[%s1212 + $0x40] sm:$0xf]
      %v1218 = vld [vmem:[%s1212 + $0x50] sm:$0xf]
      %v1219 = vld [vmem:[%s1212 + $0x60] sm:$0xf]
      %v1220 = vld [vmem:[%s1212 + $0x70] sm:$0xf]
      %s1221 = scalar_lea.vmem %s2, 96
      %v1222 = vld [vmem:[%s1221] sm:$0xf]
      %v1223 = vld [vmem:[%s1221 + $0x4] sm:$0xf]
      %v1224 = vld [vmem:[%s1221 + $0x8] sm:$0xf]
      %v1225 = vld [vmem:[%s1221 + $0xc] sm:$0xf]
      %v1234 = vunpack.c.l.b16 %v1213
      %v1235 = vunpack.c.l.b16 %v1214
      %v1236 = vunpack.c.l.b16 %v1215
      %v1237 = vunpack.c.l.b16 %v1216
      %v1238 = vunpack.c.l.b16 %v1217
      %v1239 = vunpack.c.l.b16 %v1218
      %v1240 = vunpack.c.l.b16 %v1219
      %v1241 = vunpack.c.l.b16 %v1220
      %v1242 = vpack.c.b16 %v1235, %v1234
      %v1243 = vpack.c.b16 %v1237, %v1236
      %v1244 = vpack.c.b16 %v1239, %v1238
      %v1245 = vpack.c.b16 %v1241, %v1240
      %v1250 = vunpack.c.l.b16 %v1222
      %v1251 = vunpack.c.l.b16 %v1223
      %v1252 = vunpack.c.l.b16 %v1224
      %v1253 = vunpack.c.l.b16 %v1225
      %v1254 = vpack.c.b16 %v1251, %v1250
      %v1255 = vpack.c.b16 %v1253, %v1252
      %v1259 = vsel %vm276, %v1242, 0
      %v1262 = vsel %vm276, %v1243, 0
      %v1265 = vsel %vm276, %v1244, 0
      %v1268 = vsel %vm276, %v1245, 0
      %1270 = vmatprep.subr.bf16.mxu0 0
      %1271 = vmatpush1.bf16.msra.mxu0 0
      %1272 = vmatprep.subr.bf16.mxu0 0
      %1273 = vmatpush1.bf16.msra.mxu0 0
      %1274 = vmatprep.subr.bf16.mxu0 0
      %1275 = vmatpush1.bf16.msra.mxu0 0
      %1276 = vmatprep.subr.bf16.mxu0 0
      %1277 = vmatpush1.bf16.msra.mxu0 0
      %1278 = vmatprep.subr.bf16.mxu0 0
      %1279 = vmatpush1.bf16.msra.mxu0 0
      %1280 = vmatprep.subr.bf16.mxu0 0
      %1281 = vmatpush1.bf16.msra.mxu0 0
      %1282 = vmatprep.subr.bf16.mxu0 0
      %1283 = vmatpush1.bf16.msra.mxu0 %v1255
      %1284 = vmatprep.subr.bf16.mxu0 0
      %1285 = vmatpush1.bf16.msra.mxu0 %v1254
      %1286 = vmatprep.subr.bf16.mxu0 0
      %1287 = vmatpush2.bf16.msra.mxu0 0
      %1288 = vmatprep.subr.bf16.mxu0 0
      %1289 = vmatpush2.bf16.msra.mxu0 0
      %1290 = vmatprep.subr.bf16.mxu0 0
      %1291 = vmatpush2.bf16.msra.mxu0 0
      %1292 = vmatprep.subr.bf16.mxu0 0
      %1293 = vmatpush2.bf16.msra.mxu0 0
      %1294 = vmatprep.subr.bf16.mxu0 0
      %1295 = vmatpush2.bf16.msra.mxu0 0
      %1296 = vmatprep.subr.bf16.mxu0 0
      %1297 = vmatpush2.bf16.msra.mxu0 0
      %1298 = vmatprep.subr.bf16.mxu0 0
      %1299 = vmatpush2.bf16.msra.mxu0 0
      %1300 = vmatprep.subr.bf16.mxu0 0
      %1301 = vmatpush2.bf16.msra.mxu0 0
      %1302 = vmatprep.mubr.bf16.mxu0 0
      %1303 = vmatmul.mubr.bf16.gmra.mxu0 %v1259
      %v1304 = vpop.f32.mrf.mxu0
      %v1305 = vadd.f32 0.0, %v1304
      %v1306 = vpop.f32.mrf.mxu0
      %v1307 = vpop.f32.mrf.mxu0
      %v1308 = vadd.f32 0.0, %v1307
      %v1309 = vpop.f32.mrf.mxu0
      %1310 = vmatprep.mubr.bf16.mxu0 0
      %1311 = vmatmul.mubr.bf16.gmra.mxu0 %v1262
      %v1312 = vpop.f32.mrf.mxu0
      %v1313 = vadd.f32 0.0, %v1312
      %v1314 = vpop.f32.mrf.mxu0
      %v1315 = vpop.f32.mrf.mxu0
      %v1316 = vadd.f32 0.0, %v1315
      %v1317 = vpop.f32.mrf.mxu0
      %1318 = vmatprep.mubr.bf16.mxu0 0
      %1319 = vmatmul.mubr.bf16.gmra.mxu0 %v1265
      %v1320 = vpop.f32.mrf.mxu0
      %v1321 = vadd.f32 0.0, %v1320
      %v1322 = vpop.f32.mrf.mxu0
      %v1323 = vpop.f32.mrf.mxu0
      %v1324 = vadd.f32 0.0, %v1323
      %v1325 = vpop.f32.mrf.mxu0
      %1326 = vmatprep.mubr.bf16.mxu0 0
      %1327 = vmatmul.mubr.bf16.gmra.mxu0 %v1268
      %v1328 = vpop.f32.mrf.mxu0
      %v1329 = vadd.f32 0.0, %v1328
      %v1330 = vpop.f32.mrf.mxu0
      %v1331 = vpop.f32.mrf.mxu0
      %v1332 = vadd.f32 0.0, %v1331
      %v1333 = vpop.f32.mrf.mxu0
      %1334 = vdwg.mxu0
      %v1335 = vadd.f32 %v1204, %v1305
      %v1336 = vadd.f32 %v1205, %v1308
      %v1337 = vadd.f32 %v1206, %v1313
      %v1338 = vadd.f32 %v1207, %v1316
      %v1339 = vadd.f32 %v1208, %v1321
      %v1340 = vadd.f32 %v1209, %v1324
      %v1341 = vadd.f32 %v1210, %v1329
      %v1342 = vadd.f32 %v1211, %v1332
      %s1343 = scalar_lea.vmem %s212, 16
      %v1344 = vld [vmem:[%s1343] sm:$0xf]
      %v1345 = vld [vmem:[%s1343 + $0x10] sm:$0xf]
      %v1346 = vld [vmem:[%s1343 + $0x20] sm:$0xf]
      %v1347 = vld [vmem:[%s1343 + $0x30] sm:$0xf]
      %v1348 = vld [vmem:[%s1343 + $0x40] sm:$0xf]
      %v1349 = vld [vmem:[%s1343 + $0x50] sm:$0xf]
      %v1350 = vld [vmem:[%s1343 + $0x60] sm:$0xf]
      %v1351 = vld [vmem:[%s1343 + $0x70] sm:$0xf]
      %s1352 = scalar_lea.vmem %s2, 112
      %v1353 = vld [vmem:[%s1352] sm:$0xf]
      %v1354 = vld [vmem:[%s1352 + $0x4] sm:$0xf]
      %v1355 = vld [vmem:[%s1352 + $0x8] sm:$0xf]
      %v1356 = vld [vmem:[%s1352 + $0xc] sm:$0xf]
      %v1365 = vunpack.c.l.b16 %v1344
      %v1366 = vunpack.c.l.b16 %v1345
      %v1367 = vunpack.c.l.b16 %v1346
      %v1368 = vunpack.c.l.b16 %v1347
      %v1369 = vunpack.c.l.b16 %v1348
      %v1370 = vunpack.c.l.b16 %v1349
      %v1371 = vunpack.c.l.b16 %v1350
      %v1372 = vunpack.c.l.b16 %v1351
      %v1373 = vpack.c.b16 %v1366, %v1365
      %v1374 = vpack.c.b16 %v1368, %v1367
      %v1375 = vpack.c.b16 %v1370, %v1369
      %v1376 = vpack.c.b16 %v1372, %v1371
      %v1381 = vunpack.c.l.b16 %v1353
      %v1382 = vunpack.c.l.b16 %v1354
      %v1383 = vunpack.c.l.b16 %v1355
      %v1384 = vunpack.c.l.b16 %v1356
      %v1385 = vpack.c.b16 %v1382, %v1381
      %v1386 = vpack.c.b16 %v1384, %v1383
      %v1390 = vsel %vm276, %v1373, 0
      %v1393 = vsel %vm276, %v1374, 0
      %v1396 = vsel %vm276, %v1375, 0
      %v1399 = vsel %vm276, %v1376, 0
      %1401 = vmatprep.subr.bf16.mxu0 0
      %1402 = vmatpush1.bf16.msra.mxu0 0
      %1403 = vmatprep.subr.bf16.mxu0 0
      %1404 = vmatpush1.bf16.msra.mxu0 0
      %1405 = vmatprep.subr.bf16.mxu0 0
      %1406 = vmatpush1.bf16.msra.mxu0 0
      %1407 = vmatprep.subr.bf16.mxu0 0
      %1408 = vmatpush1.bf16.msra.mxu0 0
      %1409 = vmatprep.subr.bf16.mxu0 0
      %1410 = vmatpush1.bf16.msra.mxu0 0
      %1411 = vmatprep.subr.bf16.mxu0 0
      %1412 = vmatpush1.bf16.msra.mxu0 0
      %1413 = vmatprep.subr.bf16.mxu0 0
      %1414 = vmatpush1.bf16.msra.mxu0 %v1386
      %1415 = vmatprep.subr.bf16.mxu0 0
      %1416 = vmatpush1.bf16.msra.mxu0 %v1385
      %1417 = vmatprep.subr.bf16.mxu0 0
      %1418 = vmatpush2.bf16.msra.mxu0 0
      %1419 = vmatprep.subr.bf16.mxu0 0
      %1420 = vmatpush2.bf16.msra.mxu0 0
      %1421 = vmatprep.subr.bf16.mxu0 0
      %1422 = vmatpush2.bf16.msra.mxu0 0
      %1423 = vmatprep.subr.bf16.mxu0 0
      %1424 = vmatpush2.bf16.msra.mxu0 0
      %1425 = vmatprep.subr.bf16.mxu0 0
      %1426 = vmatpush2.bf16.msra.mxu0 0
      %1427 = vmatprep.subr.bf16.mxu0 0
      %1428 = vmatpush2.bf16.msra.mxu0 0
      %1429 = vmatprep.subr.bf16.mxu0 0
      %1430 = vmatpush2.bf16.msra.mxu0 0
      %1431 = vmatprep.subr.bf16.mxu0 0
      %1432 = vmatpush2.bf16.msra.mxu0 0
      %1433 = vmatprep.mubr.bf16.mxu0 0
      %1434 = vmatmul.mubr.bf16.gmra.mxu0 %v1390
      %v1435 = vpop.f32.mrf.mxu0
      %v1436 = vadd.f32 0.0, %v1435
      %v1437 = vpop.f32.mrf.mxu0
      %v1438 = vpop.f32.mrf.mxu0
      %v1439 = vadd.f32 0.0, %v1438
      %v1440 = vpop.f32.mrf.mxu0
      %1441 = vmatprep.mubr.bf16.mxu0 0
      %1442 = vmatmul.mubr.bf16.gmra.mxu0 %v1393
      %v1443 = vpop.f32.mrf.mxu0
      %v1444 = vadd.f32 0.0, %v1443
      %v1445 = vpop.f32.mrf.mxu0
      %v1446 = vpop.f32.mrf.mxu0
      %v1447 = vadd.f32 0.0, %v1446
      %v1448 = vpop.f32.mrf.mxu0
      %1449 = vmatprep.mubr.bf16.mxu0 0
      %1450 = vmatmul.mubr.bf16.gmra.mxu0 %v1396
      %v1451 = vpop.f32.mrf.mxu0
      %v1452 = vadd.f32 0.0, %v1451
      %v1453 = vpop.f32.mrf.mxu0
      %v1454 = vpop.f32.mrf.mxu0
      %v1455 = vadd.f32 0.0, %v1454
      %v1456 = vpop.f32.mrf.mxu0
      %1457 = vmatprep.mubr.bf16.mxu0 0
      %1458 = vmatmul.mubr.bf16.gmra.mxu0 %v1399
      %v1459 = vpop.f32.mrf.mxu0
      %v1460 = vadd.f32 0.0, %v1459
      %v1461 = vpop.f32.mrf.mxu0
      %v1462 = vpop.f32.mrf.mxu0
      %v1463 = vadd.f32 0.0, %v1462
      %v1464 = vpop.f32.mrf.mxu0
      %1465 = vdwg.mxu0
      %v1466 = vadd.f32 %v1335, %v1436
      %v1467 = vadd.f32 %v1336, %v1439
      %v1468 = vadd.f32 %v1337, %v1444
      %v1469 = vadd.f32 %v1338, %v1447
      %v1470 = vadd.f32 %v1339, %v1452
      %v1471 = vadd.f32 %v1340, %v1455
      %v1472 = vadd.f32 %v1341, %v1460
      %v1473 = vadd.f32 %v1342, %v1463
      %v1474 = vld [vmem:[%s1212] sm:$0xf]
      %v1475 = vld [vmem:[%s1212 + $0x4] sm:$0x1]
      %v1476 = vld [vmem:[%s1212 + $0x10] sm:$0xf]
      %v1477 = vld [vmem:[%s1212 + $0x14] sm:$0x1]
      %v1478 = vld [vmem:[%s1212 + $0x20] sm:$0xf]
      %v1479 = vld [vmem:[%s1212 + $0x24] sm:$0x1]
      %v1480 = vld [vmem:[%s1212 + $0x30] sm:$0xf]
      %v1481 = vld [vmem:[%s1212 + $0x34] sm:$0x1]
      %v1482 = vld [vmem:[%s1212 + $0x40] sm:$0xf]
      %v1483 = vld [vmem:[%s1212 + $0x44] sm:$0x1]
      %v1484 = vld [vmem:[%s1212 + $0x50] sm:$0xf]
      %v1485 = vld [vmem:[%s1212 + $0x54] sm:$0x1]
      %v1486 = vld [vmem:[%s1212 + $0x60] sm:$0xf]
      %v1487 = vld [vmem:[%s1212 + $0x64] sm:$0x1]
      %v1488 = vld [vmem:[%s1212 + $0x70] sm:$0xf]
      %v1489 = vld [vmem:[%s1212 + $0x74] sm:$0x1]
      %v1491 = vshrl.u32 %v1474, 16
      %v1493 = vrot.slane %v1491, 4
      %v1494 = vshll.u32 %v1474, 16
      %v1496 = vrot.slane %v1494, 5
      %v1497 = vor.u32 %v1493, %v1496
      %v1498 = vrot.slane %v1497, 4
      %v1500 = vshll.u32 %v1475, 16
      %v1502 = vrot.slane %v1500, 5
      %v1503 = vsel %vm481, %v1498, %v1502
      %v1505 = vshrl.u32 %v1476, 16
      %v1507 = vrot.slane %v1505, 4
      %v1508 = vshll.u32 %v1476, 16
      %v1510 = vrot.slane %v1508, 5
      %v1511 = vor.u32 %v1507, %v1510
      %v1512 = vrot.slane %v1511, 4
      %v1514 = vshll.u32 %v1477, 16
      %v1516 = vrot.slane %v1514, 5
      %v1517 = vsel %vm481, %v1512, %v1516
      %v1519 = vshrl.u32 %v1478, 16
      %v1521 = vrot.slane %v1519, 4
      %v1522 = vshll.u32 %v1478, 16
      %v1524 = vrot.slane %v1522, 5
      %v1525 = vor.u32 %v1521, %v1524
      %v1526 = vrot.slane %v1525, 4
      %v1528 = vshll.u32 %v1479, 16
      %v1530 = vrot.slane %v1528, 5
      %v1531 = vsel %vm481, %v1526, %v1530
      %v1533 = vshrl.u32 %v1480, 16
      %v1535 = vrot.slane %v1533, 4
      %v1536 = vshll.u32 %v1480, 16
      %v1538 = vrot.slane %v1536, 5
      %v1539 = vor.u32 %v1535, %v1538
      %v1540 = vrot.slane %v1539, 4
      %v1542 = vshll.u32 %v1481, 16
      %v1544 = vrot.slane %v1542, 5
      %v1545 = vsel %vm481, %v1540, %v1544
      %v1547 = vshrl.u32 %v1482, 16
      %v1549 = vrot.slane %v1547, 4
      %v1550 = vshll.u32 %v1482, 16
      %v1552 = vrot.slane %v1550, 5
      %v1553 = vor.u32 %v1549, %v1552
      %v1554 = vrot.slane %v1553, 4
      %v1556 = vshll.u32 %v1483, 16
      %v1558 = vrot.slane %v1556, 5
      %v1559 = vsel %vm481, %v1554, %v1558
      %v1561 = vshrl.u32 %v1484, 16
      %v1563 = vrot.slane %v1561, 4
      %v1564 = vshll.u32 %v1484, 16
      %v1566 = vrot.slane %v1564, 5
      %v1567 = vor.u32 %v1563, %v1566
      %v1568 = vrot.slane %v1567, 4
      %v1570 = vshll.u32 %v1485, 16
      %v1572 = vrot.slane %v1570, 5
      %v1573 = vsel %vm481, %v1568, %v1572
      %v1575 = vshrl.u32 %v1486, 16
      %v1577 = vrot.slane %v1575, 4
      %v1578 = vshll.u32 %v1486, 16
      %v1580 = vrot.slane %v1578, 5
      %v1581 = vor.u32 %v1577, %v1580
      %v1582 = vrot.slane %v1581, 4
      %v1584 = vshll.u32 %v1487, 16
      %v1586 = vrot.slane %v1584, 5
      %v1587 = vsel %vm481, %v1582, %v1586
      %v1589 = vshrl.u32 %v1488, 16
      %v1591 = vrot.slane %v1589, 4
      %v1592 = vshll.u32 %v1488, 16
      %v1594 = vrot.slane %v1592, 5
      %v1595 = vor.u32 %v1591, %v1594
      %v1596 = vrot.slane %v1595, 4
      %v1598 = vshll.u32 %v1489, 16
      %v1600 = vrot.slane %v1598, 5
      %v1601 = vsel %vm481, %v1596, %v1600
      %s1602 = scalar_lea.vmem %s2, 128
      %v1603 = vld [vmem:[%s1602] sm:$0xf]
      %v1604 = vld [vmem:[%s1602 + $0x4] sm:$0xf]
      %v1605 = vld [vmem:[%s1602 + $0x8] sm:$0xf]
      %v1606 = vld [vmem:[%s1602 + $0xc] sm:$0xf]
      %v1607 = vunpack.c.l.b16 %v1503
      %v1608 = vunpack.c.l.b16 %v1517
      %v1609 = vunpack.c.l.b16 %v1531
      %v1610 = vunpack.c.l.b16 %v1545
      %v1611 = vunpack.c.l.b16 %v1559
      %v1612 = vunpack.c.l.b16 %v1573
      %v1613 = vunpack.c.l.b16 %v1587
      %v1614 = vunpack.c.l.b16 %v1601
      %v1615 = vpack.c.b16 %v1608, %v1607
      %v1616 = vpack.c.b16 %v1610, %v1609
      %v1617 = vpack.c.b16 %v1612, %v1611
      %v1618 = vpack.c.b16 %v1614, %v1613
      %v1623 = vunpack.c.l.b16 %v1603
      %v1624 = vunpack.c.l.b16 %v1604
      %v1625 = vunpack.c.l.b16 %v1605
      %v1626 = vunpack.c.l.b16 %v1606
      %v1627 = vpack.c.b16 %v1624, %v1623
      %v1628 = vpack.c.b16 %v1626, %v1625
      %v1632 = vsel %vm276, %v1615, 0
      %v1635 = vsel %vm276, %v1616, 0
      %v1638 = vsel %vm276, %v1617, 0
      %v1641 = vsel %vm276, %v1618, 0
      %1643 = vmatprep.subr.bf16.mxu0 0
      %1644 = vmatpush1.bf16.msra.mxu0 0
      %1645 = vmatprep.subr.bf16.mxu0 0
      %1646 = vmatpush1.bf16.msra.mxu0 0
      %1647 = vmatprep.subr.bf16.mxu0 0
      %1648 = vmatpush1.bf16.msra.mxu0 0
      %1649 = vmatprep.subr.bf16.mxu0 0
      %1650 = vmatpush1.bf16.msra.mxu0 0
      %1651 = vmatprep.subr.bf16.mxu0 0
      %1652 = vmatpush1.bf16.msra.mxu0 0
      %1653 = vmatprep.subr.bf16.mxu0 0
      %1654 = vmatpush1.bf16.msra.mxu0 0
      %1655 = vmatprep.subr.bf16.mxu0 0
      %1656 = vmatpush1.bf16.msra.mxu0 %v1628
      %1657 = vmatprep.subr.bf16.mxu0 0
      %1658 = vmatpush1.bf16.msra.mxu0 %v1627
      %1659 = vmatprep.subr.bf16.mxu0 0
      %1660 = vmatpush2.bf16.msra.mxu0 0
      %1661 = vmatprep.subr.bf16.mxu0 0
      %1662 = vmatpush2.bf16.msra.mxu0 0
      %1663 = vmatprep.subr.bf16.mxu0 0
      %1664 = vmatpush2.bf16.msra.mxu0 0
      %1665 = vmatprep.subr.bf16.mxu0 0
      %1666 = vmatpush2.bf16.msra.mxu0 0
      %1667 = vmatprep.subr.bf16.mxu0 0
      %1668 = vmatpush2.bf16.msra.mxu0 0
      %1669 = vmatprep.subr.bf16.mxu0 0
      %1670 = vmatpush2.bf16.msra.mxu0 0
      %1671 = vmatprep.subr.bf16.mxu0 0
      %1672 = vmatpush2.bf16.msra.mxu0 0
      %1673 = vmatprep.subr.bf16.mxu0 0
      %1674 = vmatpush2.bf16.msra.mxu0 0
      %1675 = vmatprep.mubr.bf16.mxu0 0
      %1676 = vmatmul.mubr.bf16.gmra.mxu0 %v1632
      %v1677 = vpop.f32.mrf.mxu0
      %v1678 = vadd.f32 0.0, %v1677
      %v1679 = vpop.f32.mrf.mxu0
      %v1680 = vpop.f32.mrf.mxu0
      %v1681 = vadd.f32 0.0, %v1680
      %v1682 = vpop.f32.mrf.mxu0
      %1683 = vmatprep.mubr.bf16.mxu0 0
      %1684 = vmatmul.mubr.bf16.gmra.mxu0 %v1635
      %v1685 = vpop.f32.mrf.mxu0
      %v1686 = vadd.f32 0.0, %v1685
      %v1687 = vpop.f32.mrf.mxu0
      %v1688 = vpop.f32.mrf.mxu0
      %v1689 = vadd.f32 0.0, %v1688
      %v1690 = vpop.f32.mrf.mxu0
      %1691 = vmatprep.mubr.bf16.mxu0 0
      %1692 = vmatmul.mubr.bf16.gmra.mxu0 %v1638
      %v1693 = vpop.f32.mrf.mxu0
      %v1694 = vadd.f32 0.0, %v1693
      %v1695 = vpop.f32.mrf.mxu0
      %v1696 = vpop.f32.mrf.mxu0
      %v1697 = vadd.f32 0.0, %v1696
      %v1698 = vpop.f32.mrf.mxu0
      %1699 = vmatprep.mubr.bf16.mxu0 0
      %1700 = vmatmul.mubr.bf16.gmra.mxu0 %v1641
      %v1701 = vpop.f32.mrf.mxu0
      %v1702 = vadd.f32 0.0, %v1701
      %v1703 = vpop.f32.mrf.mxu0
      %v1704 = vpop.f32.mrf.mxu0
      %v1705 = vadd.f32 0.0, %v1704
      %v1706 = vpop.f32.mrf.mxu0
      %1707 = vdwg.mxu0
      %v1708 = vadd.f32 %v1466, %v1678
      %v1709 = vadd.f32 %v1467, %v1681
      %v1710 = vadd.f32 %v1468, %v1686
      %v1711 = vadd.f32 %v1469, %v1689
      %v1712 = vadd.f32 %v1470, %v1694
      %v1713 = vadd.f32 %v1471, %v1697
      %v1714 = vadd.f32 %v1472, %v1702
      %v1715 = vadd.f32 %v1473, %v1705
      %v1716 = vld [vmem:[%s3] sm:$0x1]
      %v1718 = vlaneseq
      %v1719 = vshrl.u32 %v1718, 7
      %v1720 = vsub.s32 0, %v1719
      %v1721 = vrot.slane %v1716, %v1720
      %v1723 = vadd.f32 %v1708, %v1721
      %v1724 = vadd.f32 %v1709, %v1721
      %v1725 = vadd.f32 %v1710, %v1721
      %v1726 = vadd.f32 %v1711, %v1721
      %v1727 = vadd.f32 %v1712, %v1721
      %v1728 = vadd.f32 %v1713, %v1721
      %v1729 = vadd.f32 %v1714, %v1721
      %v1730 = vadd.f32 %v1715, %v1721
      %v1731 = vmax.f32 %v1723, 0.0
      %v1732 = vmax.f32 %v1724, 0.0
      %v1733 = vmax.f32 %v1725, 0.0
      %v1734 = vmax.f32 %v1726, 0.0
      %v1735 = vmax.f32 %v1727, 0.0
      %v1736 = vmax.f32 %v1728, 0.0
      %v1737 = vmax.f32 %v1729, 0.0
      %v1738 = vmax.f32 %v1730, 0.0
      %v1739 = vmin.f32 %v1731, 6.0
      %v1740 = vmin.f32 %v1732, 6.0
      %v1741 = vmin.f32 %v1733, 6.0
      %v1742 = vmin.f32 %v1734, 6.0
      %v1743 = vmin.f32 %v1735, 6.0
      %v1744 = vmin.f32 %v1736, 6.0
      %v1745 = vmin.f32 %v1737, 6.0
      %v1746 = vmin.f32 %v1738, 6.0
      %v1747 = vpack.c.bf16 %v1739, %v1739
      %v1748 = vpack.c.bf16 %v1740, %v1740
      %v1749 = vpack.c.bf16 %v1741, %v1741
      %v1750 = vpack.c.bf16 %v1742, %v1742
      %v1751 = vpack.c.bf16 %v1743, %v1743
      %v1752 = vpack.c.bf16 %v1744, %v1744
      %v1753 = vpack.c.bf16 %v1745, %v1745
      %v1754 = vpack.c.bf16 %v1746, %v1746
      %1755 = vst [vmem:[%s217] sm:$0xf] %v1747
      %1756 = vst [vmem:[%s217 + $0x4] sm:$0xf] %v1748
      %1757 = vst [vmem:[%s217 + $0x8] sm:$0xf] %v1749
      %1758 = vst [vmem:[%s217 + $0xc] sm:$0xf] %v1750
      %1759 = vst [vmem:[%s217 + $0x10] sm:$0xf] %v1751
      %1760 = vst [vmem:[%s217 + $0x14] sm:$0xf] %v1752
      %1761 = vst [vmem:[%s217 + $0x18] sm:$0xf] %v1753
      %1762 = vst [vmem:[%s217 + $0x1c] sm:$0xf] %v1754
      %p1763 = scmp.lt.s32.totalorder %s15, 1
      %s1764 = scalar_select %p1763, %s15, 1
      %s1765 = smul.addr %s1764, 8
      %s1766 = smul.addr %s1765, 4
      %s1767 = scalar_lea.vmem %s4, %s1766
      // Predicated region
      $region37: #{_lambda_.6} parent=35 // pred_check
        %p1768 = pneg %p127
      $region38: #{_lambda_.6} parent=35 // pred_check_branch
        %1770 = sbr.rel (%p1768) target = $region40
      $region39: #{_lambda_.6} parent=35 // pred_region
        _
      $region40: #{_lambda_.6} parent=35 // pred_fallthru
        _
    $region36: #{_lambda_.6} parent=5 // pred_fallthru
      _
    %p1771 = scmp.le.s32.totalorder 2, %s10
    // Predicated region
    $region41: #{_lambda_.6} parent=5 // pred_check
      %p1772 = pneg %p1771
    $region42: #{_lambda_.6} parent=5 // pred_check_branch
      %1774 = sbr.rel (%p1772) target = $region44
    $region43: #{_lambda_.6} parent=5 // pred_region
      %s1775 = ssub.s32 %s10, 2
      // Predicated region
      $region45: #{_lambda_.6} parent=43 // pred_check
        %p1776 = pneg %p133
      $region46: #{_lambda_.6} parent=43 // pred_check_branch
        %1778 = sbr.rel (%p1776) target = $region48
      $region47: #{_lambda_.6} parent=43 // pred_region
        %p1779 = scmp.lt.s32.totalorder %s16, 1
        %s1780 = scalar_select %p1779, %s16, 1
        %s1781 = smul.addr %s1780, 8
        %s1782 = smul.addr %s1781, 4
        %s1783 = scalar_lea.vmem %s4, %s1782
      $region48: #{_lambda_.6} parent=43 // pred_fallthru
        _
    $region44: #{_lambda_.6} parent=5 // pred_fallthru
      _
  $region6: #{_lambda_.6} parent=0 // loop_footer
    %s14 = sadd.s32 1, %s10
  $region7: #{_lambda_.6} parent=0 // loop_footer_branch
    %9 = sbr.rel target = $region3
  $region8: #{_lambda_.6} parent=0 // loop_exit
    _

// kernel: _lambda_.9
$region0: #{_lambda_.9}
  #allocation0 [shape = 'u32[]', space=smem, size = 0x4, offset = 0x4, fixed_abs, tag = 'smem constant byte address 0x4 - core index']
  #allocation1 [shape = 'u32[144,128]{1,0:T(1,128)}', space=vmem, size = 0x12000, scoped, tag = 'internal scratch']
  #allocation2 [shape = 'f32[6,6,256]{2,1,0:T(8,128)}', space=vmem, size = 0xc000, scoped, tag = 'scratch operand']
  %s0 = inlined_call_operand.vmem [shape: bf16[2,4,4,128], index: 0, kind: input, shape index: {}]
  %s1 = inlined_call_operand.vmem [shape: bf16[128,256], index: 1, kind: input, shape index: {}]
  %s2 = inlined_call_operand.vmem [shape: f32[1,256], index: 2, kind: input, shape index: {}, may-alias: {2,4}]
  %s3 = inlined_call_operand.vmem [shape: f32[9,256], index: 3, kind: input, shape index: {}]
  %s4 = inlined_call_operand.vmem [shape: f32[1,256], index: 4, kind: input, shape index: {}, may-alias: {2,4}]
  %s5 = inlined_call_operand.vmem [shape: bf16[256,128], index: 5, kind: input, shape index: {}]
  %s6 = inlined_call_operand.vmem [shape: f32[1,128], index: 6, kind: input, shape index: {}]
  %s7 = inlined_call_operand.vmem [shape: bf16[2,4,4,128], index: 7, kind: output, shape index: {}]
  %s8 = sld [smem:[#allocation0]]
  $region61: #{_lambda_.9} parent=0
    _
  %s10 = ssub.s32 1, %s8
  %s11 = scalar_select 0, %s10, %s8
  loop: start=0, step=1, limit=4
  $region2: #{_lambda_.9} parent=0 // loop_pre_header
    _
  $region3: #{_lambda_.9} parent=0 // loop_header
    %s13 = sphi 0, %s17
    %p14 = scmp.ge.s32.totalorder %s13, 4
    %s23 = sphi 0, %s25
    %s26 = sphi 0, %s23
    %s27 = sphi 0, %s26
    %s43 = sphi 0, %s27
    %s47 = sphi 0, %s47
    %s49 = sphi 0, %s47
    %s50 = sphi 0, %s49
    %s64 = sphi 0, %s50
    %s68 = sphi 0, %s68
    %s70 = sphi 0, %s68
    %s71 = sphi 0, %s70
    %s85 = sphi 0, %s71
    %s89 = sphi 0, %s89
    %s91 = sphi 0, %s89
    %s92 = sphi 0, %s91
    %s106 = sphi 0, %s92
    %s110 = sphi 0, %s110
    %s112 = sphi 0, %s110
    %s113 = sphi 0, %s112
    %s127 = sphi 0, %s113
    %s131 = sphi 0, %s131
    %s133 = sphi 0, %s131
    %s134 = sphi 0, %s133
    %s148 = sphi 0, %s134
    %s152 = sphi 0, %s152
    %s154 = sphi 0, %s152
    %s155 = sphi 0, %s154
    %s169 = sphi 0, %s155
    %s175 = sphi 0, %s177
    %s178 = sphi 0, %s175
    %s179 = sphi 0, %s178
    %s195 = sphi 0, %s179
  $region4: #{_lambda_.9} parent=0 // loop_header_branch
    %16 = sbr.rel (%p14) target = $region8
  $region5: #{_lambda_.9} parent=0 // loop_body
    %s18 = ssub.s32 %s13, 1
    %s19 = ssub.s32 %s13, 2
    %s20 = sadd.s32 %s13, 1
    %s21 = ssub.s32 %s13, %s20
    %p22 = scmp.eq.s32.totalorder %s21, 0
    %s24 = sadd.s32 %s23, 1
    %s25 = scalar_select %p22, %s23, %s24
    %p28 = pneg %p22
    %p29 = scmp.eq.s32.totalorder %s13, 1
    %p30 = por %p28, %p29
    %p31 = scmp.ne.s32.totalorder %s23, %s26
    %p32 = scmp.eq.s32.totalorder %s13, 0
    %p33 = por %p31, %p32
    %p34 = scmp.ne.s32.totalorder %s23, %s26
    %p35 = scmp.eq.s32.totalorder %s18, 1
    %p36 = por %p34, %p35
    %p37 = scmp.ne.s32.totalorder %s26, %s27
    %p38 = scmp.eq.s32.totalorder %s18, 0
    %p39 = por %p37, %p38
    %p40 = scmp.ne.s32.totalorder %s26, %s27
    %p41 = scmp.eq.s32.totalorder %s19, 1
    %p42 = por %p40, %p41
    %p44 = scmp.ne.s32.totalorder %s27, %s43
    %p45 = scmp.eq.s32.totalorder %s19, 0
    %p46 = por %p44, %p45
    %s48 = sadd.s32 %s47, 1
    %p51 = scmp.eq.s32.totalorder %s13, 1
    %p52 = scmp.ne.s32.totalorder %s47, %s49
    %p53 = scmp.eq.s32.totalorder %s13, 0
    %p54 = por %p52, %p53
    %p55 = scmp.ne.s32.totalorder %s47, %s49
    %p56 = scmp.eq.s32.totalorder %s18, 1
    %p57 = por %p55, %p56
    %p58 = scmp.ne.s32.totalorder %s49, %s50
    %p59 = scmp.eq.s32.totalorder %s18, 0
    %p60 = por %p58, %p59
    %p61 = scmp.ne.s32.totalorder %s49, %s50
    %p62 = scmp.eq.s32.totalorder %s19, 1
    %p63 = por %p61, %p62
    %p65 = scmp.ne.s32.totalorder %s50, %s64
    %p66 = scmp.eq.s32.totalorder %s19, 0
    %p67 = por %p65, %p66
    %s69 = sadd.s32 %s68, 1
    %p72 = scmp.eq.s32.totalorder %s13, 1
    %p73 = scmp.ne.s32.totalorder %s68, %s70
    %p74 = scmp.eq.s32.totalorder %s13, 0
    %p75 = por %p73, %p74
    %p76 = scmp.ne.s32.totalorder %s68, %s70
    %p77 = scmp.eq.s32.totalorder %s18, 1
    %p78 = por %p76, %p77
    %p79 = scmp.ne.s32.totalorder %s70, %s71
    %p80 = scmp.eq.s32.totalorder %s18, 0
    %p81 = por %p79, %p80
    %p82 = scmp.ne.s32.totalorder %s70, %s71
    %p83 = scmp.eq.s32.totalorder %s19, 1
    %p84 = por %p82, %p83
    %p86 = scmp.ne.s32.totalorder %s71, %s85
    %p87 = scmp.eq.s32.totalorder %s19, 0
    %p88 = por %p86, %p87
    %s90 = sadd.s32 %s89, 1
    %p93 = scmp.eq.s32.totalorder %s13, 1
    %p94 = scmp.ne.s32.totalorder %s89, %s91
    %p95 = scmp.eq.s32.totalorder %s13, 0
    %p96 = por %p94, %p95
    %p97 = scmp.ne.s32.totalorder %s89, %s91
    %p98 = scmp.eq.s32.totalorder %s18, 1
    %p99 = por %p97, %p98
    %p100 = scmp.ne.s32.totalorder %s91, %s92
    %p101 = scmp.eq.s32.totalorder %s18, 0
    %p102 = por %p100, %p101
    %p103 = scmp.ne.s32.totalorder %s91, %s92
    %p104 = scmp.eq.s32.totalorder %s19, 1
    %p105 = por %p103, %p104
    %p107 = scmp.ne.s32.totalorder %s92, %s106
    %p108 = scmp.eq.s32.totalorder %s19, 0
    %p109 = por %p107, %p108
    %s111 = sadd.s32 %s110, 1
    %p114 = scmp.eq.s32.totalorder %s13, 1
    %p115 = scmp.ne.s32.totalorder %s110, %s112
    %p116 = scmp.eq.s32.totalorder %s13, 0
    %p117 = por %p115, %p116
    %p118 = scmp.ne.s32.totalorder %s110, %s112
    %p119 = scmp.eq.s32.totalorder %s18, 1
    %p120 = por %p118, %p119
    %p121 = scmp.ne.s32.totalorder %s112, %s113
    %p122 = scmp.eq.s32.totalorder %s18, 0
    %p123 = por %p121, %p122
    %p124 = scmp.ne.s32.totalorder %s112, %s113
    %p125 = scmp.eq.s32.totalorder %s19, 1
    %p126 = por %p124, %p125
    %p128 = scmp.ne.s32.totalorder %s113, %s127
    %p129 = scmp.eq.s32.totalorder %s19, 0
    %p130 = por %p128, %p129
    %s132 = sadd.s32 %s131, 1
    %p135 = scmp.eq.s32.totalorder %s13, 1
    %p136 = scmp.ne.s32.totalorder %s131, %s133
    %p137 = scmp.eq.s32.totalorder %s13, 0
    %p138 = por %p136, %p137
    %p139 = scmp.ne.s32.totalorder %s131, %s133
    %p140 = scmp.eq.s32.totalorder %s18, 1
    %p141 = por %p139, %p140
    %p142 = scmp.ne.s32.totalorder %s133, %s134
    %p143 = scmp.eq.s32.totalorder %s18, 0
    %p144 = por %p142, %p143
    %p145 = scmp.ne.s32.totalorder %s133, %s134
    %p146 = scmp.eq.s32.totalorder %s19, 1
    %p147 = por %p145, %p146
    %p149 = scmp.ne.s32.totalorder %s134, %s148
    %p150 = scmp.eq.s32.totalorder %s19, 0
    %p151 = por %p149, %p150
    %s153 = sadd.s32 %s152, 1
    %p156 = scmp.eq.s32.totalorder %s13, 1
    %p157 = scmp.ne.s32.totalorder %s152, %s154
    %p158 = scmp.eq.s32.totalorder %s13, 0
    %p159 = por %p157, %p158
    %p160 = scmp.ne.s32.totalorder %s152, %s154
    %p161 = scmp.eq.s32.totalorder %s18, 1
    %p162 = por %p160, %p161
    %p163 = scmp.ne.s32.totalorder %s154, %s155
    %p164 = scmp.eq.s32.totalorder %s18, 0
    %p165 = por %p163, %p164
    %p166 = scmp.ne.s32.totalorder %s154, %s155
    %p167 = scmp.eq.s32.totalorder %s19, 1
    %p168 = por %p166, %p167
    %p170 = scmp.ne.s32.totalorder %s155, %s169
    %p171 = scmp.eq.s32.totalorder %s19, 0
    %p172 = por %p170, %p171
    %s173 = ssub.s32 %s13, %s20
    %p174 = scmp.eq.s32.totalorder %s173, 0
    %s176 = sadd.s32 %s175, 1
    %s177 = scalar_select %p174, %s175, %s176
    %p180 = pneg %p174
    %p181 = scmp.eq.s32.totalorder %s13, 1
    %p182 = por %p180, %p181
    %p183 = scmp.ne.s32.totalorder %s175, %s178
    %p184 = scmp.eq.s32.totalorder %s13, 0
    %p185 = por %p183, %p184
    %p186 = scmp.ne.s32.totalorder %s175, %s178
    %p187 = scmp.eq.s32.totalorder %s18, 1
    %p188 = por %p186, %p187
    %p189 = scmp.ne.s32.totalorder %s178, %s179
    %p190 = scmp.eq.s32.totalorder %s18, 0
    %p191 = por %p189, %p190
    %p192 = scmp.ne.s32.totalorder %s178, %s179
    %p193 = scmp.eq.s32.totalorder %s19, 1
    %p194 = por %p192, %p193
    %p196 = scmp.ne.s32.totalorder %s179, %s195
    %p197 = scmp.eq.s32.totalorder %s19, 0
    %p198 = por %p196, %p197
    %p199 = scmp.le.s32.totalorder 1, %s13
    %p200 = scmp.lt.s32.totalorder %s13, 3
    %p201 = pnand %p199, %p200
    %p202 = pneg %p201
    // Predicated region
    $region9: #{_lambda_.9} parent=5 // pred_check
      _
    $region10: #{_lambda_.9} parent=5 // pred_check_branch
      %204 = sbr.rel (%p201) target = $region12
    $region11: #{_lambda_.9} parent=5 // pred_region
      %s205 = ssub.s32 %s13, 1
      // Predicated region
      $region13: #{_lambda_.9} parent=11 // pred_check
        %p206 = pneg %p60
      $region14: #{_lambda_.9} parent=11 // pred_check_branch
        %208 = sbr.rel (%p206) target = $region16
      $region15: #{_lambda_.9} parent=11 // pred_region
        _
      $region16: #{_lambda_.9} parent=11 // pred_fallthru
        _
      // Predicated region
      $region17: #{_lambda_.9} parent=11 // pred_check
        %p209 = pneg %p81
      $region18: #{_lambda_.9} parent=11 // pred_check_branch
        %211 = sbr.rel (%p209) target = $region20
      $region19: #{_lambda_.9} parent=11 // pred_region
        _
      $region20: #{_lambda_.9} parent=11 // pred_fallthru
        _
      // Predicated region
      $region21: #{_lambda_.9} parent=11 // pred_check
        %p212 = pneg %p102
      $region22: #{_lambda_.9} parent=11 // pred_check_branch
        %214 = sbr.rel (%p212) target = $region24
      $region23: #{_lambda_.9} parent=11 // pred_region
        _
      $region24: #{_lambda_.9} parent=11 // pred_fallthru
        _
      // Predicated region
      $region25: #{_lambda_.9} parent=11 // pred_check
        %p215 = pneg %p123
      $region26: #{_lambda_.9} parent=11 // pred_check_branch
        %217 = sbr.rel (%p215) target = $region28
      $region27: #{_lambda_.9} parent=11 // pred_region
        _
      $region28: #{_lambda_.9} parent=11 // pred_fallthru
        _
      // Predicated region
      $region29: #{_lambda_.9} parent=11 // pred_check
        %p218 = pneg %p144
      $region30: #{_lambda_.9} parent=11 // pred_check_branch
        %220 = sbr.rel (%p218) target = $region32
      $region31: #{_lambda_.9} parent=11 // pred_region
        _
      $region32: #{_lambda_.9} parent=11 // pred_fallthru
        _
      // Predicated region
      $region33: #{_lambda_.9} parent=11 // pred_check
        %p221 = pneg %p165
      $region34: #{_lambda_.9} parent=11 // pred_check_branch
        %223 = sbr.rel (%p221) target = $region36
      $region35: #{_lambda_.9} parent=11 // pred_region
        _
      $region36: #{_lambda_.9} parent=11 // pred_fallthru
        _
    $region12: #{_lambda_.9} parent=5 // pred_fallthru
      _
    %p224 = scmp.lt.s32.totalorder %s13, 2
    // Predicated region
    $region37: #{_lambda_.9} parent=5 // pred_check
      %p225 = pneg %p224
    $region38: #{_lambda_.9} parent=5 // pred_check_branch
      %227 = sbr.rel (%p225) target = $region40
    $region39: #{_lambda_.9} parent=5 // pred_region
      // Predicated region
      $region41: #{_lambda_.9} parent=39 // pred_check
        %p228 = pneg %p33
      $region42: #{_lambda_.9} parent=39 // pred_check_branch
        %230 = sbr.rel (%p228) target = $region44
      $region43: #{_lambda_.9} parent=39 // pred_region
        %p231 = scmp.lt.s32.totalorder %s13, 1
        %s232 = scalar_select %p231, %s13, 1
        %s233 = smul.addr %s232, 4
        %s234 = smul.addr %s233, 2
        %s235 = scalar_lea.vmem %s0, %s234
      $region44: #{_lambda_.9} parent=39 // pred_fallthru
        _
    $region40: #{_lambda_.9} parent=5 // pred_fallthru
      _
    %p236 = scmp.le.s32.totalorder 1, %s13
    %p237 = scmp.lt.s32.totalorder %s13, 3
    %p238 = pnand %p236, %p237
    %p239 = pneg %p238
    // Predicated region
    $region45: #{_lambda_.9} parent=5 // pred_check
      _
    $region46: #{_lambda_.9} parent=5 // pred_check_branch
      %241 = sbr.rel (%p238) target = $region48
    $region47: #{_lambda_.9} parent=5 // pred_region
      %s242 = ssub.s32 %s13, 1
      %p243 = scmp.lt.s32.totalorder %s18, 1
      %s244 = scalar_select %p243, %s18, 1
      %s245 = smul.addr %s244, 4
      %s246 = smul.addr %s245, 2
      %s247 = scalar_lea.vmem %s0, %s246
      %p248 = pneg %p39
      %p249 = pneg %p36
      %p250 = pneg %p60
      %p251 = pneg %p57
      %p252 = pneg %p81
      %p253 = pneg %p78
      %p254 = pneg %p102
      %p255 = pneg %p99
      %p256 = pneg %p123
      %p257 = pneg %p120
      %p258 = pneg %p144
      %p259 = pneg %p141
      %p260 = pneg %p165
      %p261 = pneg %p162
      %p262 = pneg %p191
      %p263 = pneg %p188
      %p264 = scmp.lt.s32.totalorder %s18, 1
      %s265 = scalar_select %p264, %s18, 1
      %s266 = smul.addr %s265, 4
      %s267 = smul.addr %s266, 2
      %s268 = scalar_lea.vmem %s7, %s267
      %p269 = scmp.lt.s32.totalorder %s18, 1
      %s270 = scalar_select %p269, %s18, 1
      %s271 = smul.addr %s270, 4
      %s272 = smul.addr %s271, 2
      %s273 = scalar_lea.vmem %s0, %s272
      %p274 = scmp.lt.s32.totalorder %s18, 1
      %s275 = scalar_select %p274, %s18, 1
      %s276 = smul.addr %s275, 4
      %s277 = smul.addr %s276, 2
      %s278 = scalar_lea.vmem %s7, %s277
      %280 = vst [vmem:[#allocation2] sm:$0x3f] 0.0
      %281 = vst [vmem:[#allocation2 + $0x8] sm:$0x3f] 0.0
      %s282 = scalar_lea.vmem [#allocation2], 80
      %283 = vst [vmem:[%s282] sm:$0x3f] 0.0
      %284 = vst [vmem:[%s282 + $0x8] sm:$0x3f] 0.0
      %v285 = vlaneseq
      %vm286 = vcmp.ge.s32.totalorder %v285, 0
      %vm287 = vcmp.lt.s32.totalorder %v285, 256
      %vm288 = vmand %vm286, %vm287
      %289 = vst.msk [vmem:[#allocation2] ss:$8 sm:$0x3] %vm288, 0.0
      %290 = vst.msk [vmem:[#allocation2] ss:$8 sm:$0x0] %vm288, 0.0
      %s291 = scalar_lea.vmem [#allocation2], 16
      %292 = vst.msk [vmem:[%s291] ss:$8 sm:$0x3] %vm288, 0.0
      %293 = vst.msk [vmem:[%s291] ss:$8 sm:$0x0] %vm288, 0.0
      %s294 = scalar_lea.vmem [#allocation2], 32
      %295 = vst.msk [vmem:[%s294] ss:$8 sm:$0x3] %vm288, 0.0
      %296 = vst.msk [vmem:[%s294] ss:$8 sm:$0x0] %vm288, 0.0
      %s297 = scalar_lea.vmem [#allocation2], 48
      %298 = vst.msk [vmem:[%s297] ss:$8 sm:$0x3] %vm288, 0.0
      %299 = vst.msk [vmem:[%s297] ss:$8 sm:$0x0] %vm288, 0.0
      %s300 = scalar_lea.vmem [#allocation2], 64
      %301 = vst.msk [vmem:[%s300] ss:$8 sm:$0x3] %vm288, 0.0
      %302 = vst.msk [vmem:[%s300] ss:$8 sm:$0x0] %vm288, 0.0
      %s303 = scalar_lea.vmem [#allocation2], 80
      %304 = vst.msk [vmem:[%s303] ss:$8 sm:$0x3] %vm288, 0.0
      %305 = vst.msk [vmem:[%s303] ss:$8 sm:$0x0] %vm288, 0.0
      %s306 = scalar_lea.vmem [#allocation2], 5
      %307 = vst.msk [vmem:[%s306] ss:$8 sm:$0x3] %vm288, 0.0
      %308 = vst.msk [vmem:[%s306] ss:$8 sm:$0x0] %vm288, 0.0
      %s309 = scalar_lea.vmem [#allocation2], 21
      %310 = vst.msk [vmem:[%s309] ss:$8 sm:$0x3] %vm288, 0.0
      %311 = vst.msk [vmem:[%s309] ss:$8 sm:$0x0] %vm288, 0.0
      %s312 = scalar_lea.vmem [#allocation2], 37
      %313 = vst.msk [vmem:[%s312] ss:$8 sm:$0x3] %vm288, 0.0
      %314 = vst.msk [vmem:[%s312] ss:$8 sm:$0x0] %vm288, 0.0
      %s315 = scalar_lea.vmem [#allocation2], 53
      %316 = vst.msk [vmem:[%s315] ss:$8 sm:$0x3] %vm288, 0.0
      %317 = vst.msk [vmem:[%s315] ss:$8 sm:$0x0] %vm288, 0.0
      %s318 = scalar_lea.vmem [#allocation2], 69
      %319 = vst.msk [vmem:[%s318] ss:$8 sm:$0x3] %vm288, 0.0
      %320 = vst.msk [vmem:[%s318] ss:$8 sm:$0x0] %vm288, 0.0
      %s321 = scalar_lea.vmem [#allocation2], 85
      %322 = vst.msk [vmem:[%s321] ss:$8 sm:$0x3] %vm288, 0.0
      %323 = vst.msk [vmem:[%s321] ss:$8 sm:$0x0] %vm288, 0.0
      %v324 = vld [vmem:[%s273] sm:$0x3]
      %v325 = vld [vmem:[%s273 + $0x2] sm:$0x3]
      %v326 = vld [vmem:[%s273 + $0x4] sm:$0x3]
      %v327 = vld [vmem:[%s273 + $0x6] sm:$0x3]
      %v328 = vld [vmem:[%s1] sm:$0xff]
      %v329 = vld [vmem:[%s1 + $0x8] sm:$0xff]
      %v330 = vld [vmem:[%s1 + $0x10] sm:$0xff]
      %v331 = vld [vmem:[%s1 + $0x18] sm:$0xff]
      %v332 = vld [vmem:[%s1 + $0x20] sm:$0xff]
      %v333 = vld [vmem:[%s1 + $0x28] sm:$0xff]
      %v334 = vld [vmem:[%s1 + $0x30] sm:$0xff]
      %v335 = vld [vmem:[%s1 + $0x38] sm:$0xff]
      %v336 = vld [vmem:[%s1 + $0x40] sm:$0xff]
      %v337 = vld [vmem:[%s1 + $0x48] sm:$0xff]
      %v338 = vld [vmem:[%s1 + $0x50] sm:$0xff]
      %v339 = vld [vmem:[%s1 + $0x58] sm:$0xff]
      %v340 = vld [vmem:[%s1 + $0x60] sm:$0xff]
      %v341 = vld [vmem:[%s1 + $0x68] sm:$0xff]
      %v342 = vld [vmem:[%s1 + $0x70] sm:$0xff]
      %v343 = vld [vmem:[%s1 + $0x78] sm:$0xff]
      %v344 = vld [vmem:[%s2] sm:$0x3]
      %v346 = vlaneseq
      %v347 = vshrl.u32 %v346, 7
      %v348 = vsub.s32 0, %v347
      %v349 = vrot.slane %v344, %v348
      %v350 = vlaneseq
      %v351 = vshrl.u32 %v350, 7
      %v352 = vsub.s32 1, %v351
      %v353 = vrot.slane %v344, %v352
      %v360 = vcombine.low %v324, %v325
      %v361 = vcombine.low %v326, %v327
      %v363 = vunpack.c.l.s4 1983009808
      %v364 = vunpack.c.0.s8 %v363
      %v365 = vlaneseq
      %v366 = vshrl.u32 %v365, 7
      %v367 = vsub.s32 %v364, %v366
      %v368 = vrot.slane %v360, %v367
      %v370 = vunpack.c.l.s4 1983009808
      %v371 = vunpack.c.0.s8 %v370
      %v372 = vlaneseq
      %v373 = vshrl.u32 %v372, 7
      %v374 = vsub.s32 %v371, %v373
      %v375 = vrot.slane %v361, %v374
      %v376 = vcombine.low %v368, %v375
      %v394 = vunpack.c.l.b16 %v328
      %v395 = vunpack.c.h.b16 %v328
      %v396 = vunpack.c.l.b16 %v329
      %v397 = vunpack.c.h.b16 %v329
      %v398 = vunpack.c.l.b16 %v330
      %v399 = vunpack.c.h.b16 %v330
      %v400 = vunpack.c.l.b16 %v331
      %v401 = vunpack.c.h.b16 %v331
      %v402 = vunpack.c.l.b16 %v332
      %v403 = vunpack.c.h.b16 %v332
      %v404 = vunpack.c.l.b16 %v333
      %v405 = vunpack.c.h.b16 %v333
      %v406 = vunpack.c.l.b16 %v334
      %v407 = vunpack.c.h.b16 %v334
      %v408 = vunpack.c.l.b16 %v335
      %v409 = vunpack.c.h.b16 %v335
      %v410 = vunpack.c.l.b16 %v336
      %v411 = vunpack.c.h.b16 %v336
      %v412 = vunpack.c.l.b16 %v337
      %v413 = vunpack.c.h.b16 %v337
      %v414 = vunpack.c.l.b16 %v338
      %v415 = vunpack.c.h.b16 %v338
      %v416 = vunpack.c.l.b16 %v339
      %v417 = vunpack.c.h.b16 %v339
      %v418 = vunpack.c.l.b16 %v340
      %v419 = vunpack.c.h.b16 %v340
      %v420 = vunpack.c.l.b16 %v341
      %v421 = vunpack.c.h.b16 %v341
      %v422 = vunpack.c.l.b16 %v342
      %v423 = vunpack.c.h.b16 %v342
      %v424 = vunpack.c.l.b16 %v343
      %v425 = vunpack.c.h.b16 %v343
      %v426 = vpack.c.b16 %v396, %v394
      %v427 = vpack.c.b16 %v397, %v395
      %v428 = vpack.c.b16 %v400, %v398
      %v429 = vpack.c.b16 %v401, %v399
      %v430 = vpack.c.b16 %v404, %v402
      %v431 = vpack.c.b16 %v405, %v403
      %v432 = vpack.c.b16 %v408, %v406
      %v433 = vpack.c.b16 %v409, %v407
      %v434 = vpack.c.b16 %v412, %v410
      %v435 = vpack.c.b16 %v413, %v411
      %v436 = vpack.c.b16 %v416, %v414
      %v437 = vpack.c.b16 %v417, %v415
      %v438 = vpack.c.b16 %v420, %v418
      %v439 = vpack.c.b16 %v421, %v419
      %v440 = vpack.c.b16 %v424, %v422
      %v441 = vpack.c.b16 %v425, %v423
      %458 = vmatprep.subr.bf16.mxu0 %v441
      %459 = vmatpush1.bf16.msra.mxu0 %v440
      %460 = vmatprep.subr.bf16.mxu0 %v439
      %461 = vmatpush1.bf16.msra.mxu0 %v438
      %462 = vmatprep.subr.bf16.mxu0 %v437
      %463 = vmatpush1.bf16.msra.mxu0 %v436
      %464 = vmatprep.subr.bf16.mxu0 %v435
      %465 = vmatpush1.bf16.msra.mxu0 %v434
      %466 = vmatprep.subr.bf16.mxu0 %v433
      %467 = vmatpush1.bf16.msra.mxu0 %v432
      %468 = vmatprep.subr.bf16.mxu0 %v431
      %469 = vmatpush1.bf16.msra.mxu0 %v430
      %470 = vmatprep.subr.bf16.mxu0 %v429
      %471 = vmatpush1.bf16.msra.mxu0 %v428
      %472 = vmatprep.subr.bf16.mxu0 %v427
      %473 = vmatpush1.bf16.msra.mxu0 %v426
      %474 = vmatprep.subr.bf16.mxu0 0
      %475 = vmatpush2.bf16.msra.mxu0 0
      %476 = vmatprep.subr.bf16.mxu0 0
      %477 = vmatpush2.bf16.msra.mxu0 0
      %478 = vmatprep.subr.bf16.mxu0 0
      %479 = vmatpush2.bf16.msra.mxu0 0
      %480 = vmatprep.subr.bf16.mxu0 0
      %481 = vmatpush2.bf16.msra.mxu0 0
      %482 = vmatprep.subr.bf16.mxu0 0
      %483 = vmatpush2.bf16.msra.mxu0 0
      %484 = vmatprep.subr.bf16.mxu0 0
      %485 = vmatpush2.bf16.msra.mxu0 0
      %486 = vmatprep.subr.bf16.mxu0 0
      %487 = vmatpush2.bf16.msra.mxu0 0
      %488 = vmatprep.subr.bf16.mxu0 0
      %489 = vmatpush2.bf16.msra.mxu0 0
      %490 = vmatprep.mubr.bf16.mxu0 0
      %491 = vmatmul.mubr.bf16.gmra.mxu0 %v376
      %v492 = vpop.f32.mrf.mxu0
      %v493 = vadd.f32 %v349, %v492
      %v494 = vpop.f32.mrf.mxu0
      %v495 = vadd.f32 %v353, %v494
      %v496 = vpop.f32.mrf.mxu0
      %v497 = vadd.f32 %v349, %v496
      %v498 = vpop.f32.mrf.mxu0
      %v499 = vadd.f32 %v353, %v498
      %500 = vdwg.mxu0
      %v501 = vmax.f32 %v493, 0.0
      %v502 = vmax.f32 %v495, 0.0
      %v503 = vmax.f32 %v497, 0.0
      %v504 = vmax.f32 %v499, 0.0
      %v505 = vmin.f32 %v501, 6.0
      %v506 = vmin.f32 %v502, 6.0
      %v507 = vmin.f32 %v503, 6.0
      %v508 = vmin.f32 %v504, 6.0
      %v513 = vcombine.low %v505, %v506
      %v514 = vcombine.high %v505, %v506
      %v515 = vcombine.low %v507, %v508
      %v516 = vcombine.high %v507, %v508
      %v517 = vcombine.high %v513, %v513
      %v518 = vcombine.high %v514, %v514
      %v519 = vcombine.high %v515, %v515
      %v520 = vcombine.high %v516, %v516
      %v521 = vrot.slane %v513, 7
      %v522 = vrot.slane %v517, 7
      %v523 = vrot.slane %v514, 7
      %v524 = vrot.slane %v518, 7
      %v525 = vrot.slane %v515, 7
      %v526 = vrot.slane %v519, 7
      %v527 = vrot.slane %v516, 7
      %v528 = vrot.slane %v520, 7
      %s537 = scalar_lea.vmem [#allocation2], 16
      %538 = vst [vmem:[%s537] sm:$0x1e] %v521
      %539 = vst [vmem:[%s537 + $0x8] sm:$0x1e] %v522
      %540 = vst [vmem:[%s537 + $0x10] sm:$0x1e] %v523
      %541 = vst [vmem:[%s537 + $0x18] sm:$0x1e] %v524
      %542 = vst [vmem:[%s537 + $0x20] sm:$0x1e] %v525
      %543 = vst [vmem:[%s537 + $0x28] sm:$0x1e] %v526
      %544 = vst [vmem:[%s537 + $0x30] sm:$0x1e] %v527
      %545 = vst [vmem:[%s537 + $0x38] sm:$0x1e] %v528
      %v546 = vld [vmem:[#allocation2] sm:$0xf]
      %v547 = vld [vmem:[#allocation2 + $0x8] sm:$0xf]
      %v548 = vld [vmem:[#allocation2 + $0x10] sm:$0xf]
      %v549 = vld [vmem:[#allocation2 + $0x18] sm:$0xf]
      %v550 = vld [vmem:[#allocation2 + $0x20] sm:$0xf]
      %v551 = vld [vmem:[#allocation2 + $0x28] sm:$0xf]
      %v552 = vld [vmem:[#allocation2 + $0x30] sm:$0xf]
      %v553 = vld [vmem:[#allocation2 + $0x38] sm:$0xf]
      %v554 = vld [vmem:[%s3] ss:$8 sm:$0x3]
      %v556 = vlaneseq
      %v557 = vshrl.u32 %v556, 7
      %v558 = vsub.s32 0, %v557
      %v559 = vrot.slane %v554, %v558
      %v560 = vlaneseq
      %v561 = vshrl.u32 %v560, 7
      %v562 = vsub.s32 1, %v561
      %v563 = vrot.slane %v554, %v562
      %v566 = vmul.f32 %v546, %v559
      %v567 = vmul.f32 %v547, %v563
      %v568 = vmul.f32 %v548, %v559
      %v569 = vmul.f32 %v549, %v563
      %v570 = vmul.f32 %v550, %v559
      %v571 = vmul.f32 %v551, %v563
      %v572 = vmul.f32 %v552, %v559
      %v573 = vmul.f32 %v553, %v563
      %v574 = vadd.f32 %v566, 0.0
      %v575 = vadd.f32 %v567, 0.0
      %v576 = vadd.f32 %v568, 0.0
      %v577 = vadd.f32 %v569, 0.0
      %v578 = vadd.f32 %v570, 0.0
      %v579 = vadd.f32 %v571, 0.0
      %v580 = vadd.f32 %v572, 0.0
      %v581 = vadd.f32 %v573, 0.0
      %v582 = vld [vmem:[#allocation2] sm:$0x1e]
      %v583 = vld [vmem:[#allocation2 + $0x8] sm:$0x1e]
      %v584 = vld [vmem:[#allocation2 + $0x10] sm:$0x1e]
      %v585 = vld [vmem:[#allocation2 + $0x18] sm:$0x1e]
      %v586 = vld [vmem:[#allocation2 + $0x20] sm:$0x1e]
      %v587 = vld [vmem:[#allocation2 + $0x28] sm:$0x1e]
      %v588 = vld [vmem:[#allocation2 + $0x30] sm:$0x1e]
      %v589 = vld [vmem:[#allocation2 + $0x38] sm:$0x1e]
      %s590 = scalar_lea.vmem %s3, 1
      %v591 = vld [vmem:[%s590] ss:$8 sm:$0x3]
      %v593 = vlaneseq
      %v594 = vshrl.u32 %v593, 7
      %v595 = vsub.s32 0, %v594
      %v596 = vrot.slane %v591, %v595
      %v597 = vlaneseq
      %v598 = vshrl.u32 %v597, 7
      %v599 = vsub.s32 1, %v598
      %v600 = vrot.slane %v591, %v599
      %v603 = vmul.f32 %v582, %v596
      %v604 = vmul.f32 %v583, %v600
      %v605 = vmul.f32 %v584, %v596
      %v606 = vmul.f32 %v585, %v600
      %v607 = vmul.f32 %v586, %v596
      %v608 = vmul.f32 %v587, %v600
      %v609 = vmul.f32 %v588, %v596
      %v610 = vmul.f32 %v589, %v600
      %v619 = vrot.slane %v603, 1
      %v620 = vrot.slane %v604, 1
      %v621 = vrot.slane %v605, 1
      %v622 = vrot.slane %v606, 1
      %v623 = vrot.slane %v607, 1
      %v624 = vrot.slane %v608, 1
      %v625 = vrot.slane %v609, 1
      %v626 = vrot.slane %v610, 1
      %v635 = vadd.f32 %v574, %v619
      %v636 = vadd.f32 %v575, %v620
      %v637 = vadd.f32 %v576, %v621
      %v638 = vadd.f32 %v577, %v622
      %v639 = vadd.f32 %v578, %v623
      %v640 = vadd.f32 %v579, %v624
      %v641 = vadd.f32 %v580, %v625
      %v642 = vadd.f32 %v581, %v626
      %v643 = vld [vmem:[#allocation2] sm:$0x3c]
      %v644 = vld [vmem:[#allocation2 + $0x8] sm:$0x3c]
      %v645 = vld [vmem:[#allocation2 + $0x10] sm:$0x3c]
      %v646 = vld [vmem:[#allocation2 + $0x18] sm:$0x3c]
      %v647 = vld [vmem:[#allocation2 + $0x20] sm:$0x3c]
      %v648 = vld [vmem:[#allocation2 + $0x28] sm:$0x3c]
      %v649 = vld [vmem:[#allocation2 + $0x30] sm:$0x3c]
      %v650 = vld [vmem:[#allocation2 + $0x38] sm:$0x3c]
      %s651 = scalar_lea.vmem %s3, 2
      %v652 = vld [vmem:[%s651] ss:$8 sm:$0x3]
      %v654 = vlaneseq
      %v655 = vshrl.u32 %v654, 7
      %v656 = vsub.s32 0, %v655
      %v657 = vrot.slane %v652, %v656
      %v658 = vlaneseq
      %v659 = vshrl.u32 %v658, 7
      %v660 = vsub.s32 1, %v659
      %v661 = vrot.slane %v652, %v660
      %v664 = vmul.f32 %v643, %v657
      %v665 = vmul.f32 %v644, %v661
      %v666 = vmul.f32 %v645, %v657
      %v667 = vmul.f32 %v646, %v661
      %v668 = vmul.f32 %v647, %v657
      %v669 = vmul.f32 %v648, %v661
      %v670 = vmul.f32 %v649, %v657
      %v671 = vmul.f32 %v650, %v661
      %v680 = vrot.slane %v664, 2
      %v681 = vrot.slane %v665, 2
      %v682 = vrot.slane %v666, 2
      %v683 = vrot.slane %v667, 2
      %v684 = vrot.slane %v668, 2
      %v685 = vrot.slane %v669, 2
      %v686 = vrot.slane %v670, 2
      %v687 = vrot.slane %v671, 2
      %v696 = vadd.f32 %v635, %v680
      %v697 = vadd.f32 %v636, %v681
      %v698 = vadd.f32 %v637, %v682
      %v699 = vadd.f32 %v638, %v683
      %v700 = vadd.f32 %v639, %v684
      %v701 = vadd.f32 %v640, %v685
      %v702 = vadd.f32 %v641, %v686
      %v703 = vadd.f32 %v642, %v687
      %v704 = vld [vmem:[%s537] sm:$0xf]
      %v705 = vld [vmem:[%s537 + $0x8] sm:$0xf]
      %v706 = vld [vmem:[%s537 + $0x10] sm:$0xf]
      %v707 = vld [vmem:[%s537 + $0x18] sm:$0xf]
      %v708 = vld [vmem:[%s537 + $0x20] sm:$0xf]
      %v709 = vld [vmem:[%s537 + $0x28] sm:$0xf]
      %v710 = vld [vmem:[%s537 + $0x30] sm:$0xf]
      %v711 = vld [vmem:[%s537 + $0x38] sm:$0xf]
      %s712 = scalar_lea.vmem %s3, 3
      %v713 = vld [vmem:[%s712] ss:$8 sm:$0x3]
      %v715 = vlaneseq
      %v716 = vshrl.u32 %v715, 7
      %v717 = vsub.s32 0, %v716
      %v718 = vrot.slane %v713, %v717
      %v719 = vlaneseq
      %v720 = vshrl.u32 %v719, 7
      %v721 = vsub.s32 1, %v720
      %v722 = vrot.slane %v713, %v721
      %v725 = vmul.f32 %v704, %v718
      %v726 = vmul.f32 %v705, %v722
      %v727 = vmul.f32 %v706, %v718
      %v728 = vmul.f32 %v707, %v722
      %v729 = vmul.f32 %v708, %v718
      %v730 = vmul.f32 %v709, %v722
      %v731 = vmul.f32 %v710, %v718
      %v732 = vmul.f32 %v711, %v722
      %v733 = vadd.f32 %v696, %v725
      %v734 = vadd.f32 %v697, %v726
      %v735 = vadd.f32 %v698, %v727
      %v736 = vadd.f32 %v699, %v728
      %v737 = vadd.f32 %v700, %v729
      %v738 = vadd.f32 %v701, %v730
      %v739 = vadd.f32 %v702, %v731
      %v740 = vadd.f32 %v703, %v732
      %v741 = vld [vmem:[%s537] sm:$0x1e]
      %v742 = vld [vmem:[%s537 + $0x8] sm:$0x1e]
      %v743 = vld [vmem:[%s537 + $0x10] sm:$0x1e]
      %v744 = vld [vmem:[%s537 + $0x18] sm:$0x1e]
      %v745 = vld [vmem:[%s537 + $0x20] sm:$0x1e]
      %v746 = vld [vmem:[%s537 + $0x28] sm:$0x1e]
      %v747 = vld [vmem:[%s537 + $0x30] sm:$0x1e]
      %v748 = vld [vmem:[%s537 + $0x38] sm:$0x1e]
      %s749 = scalar_lea.vmem %s3, 4
      %v750 = vld [vmem:[%s749] ss:$8 sm:$0x3]
      %v752 = vlaneseq
      %v753 = vshrl.u32 %v752, 7
      %v754 = vsub.s32 0, %v753
      %v755 = vrot.slane %v750, %v754
      %v756 = vlaneseq
      %v757 = vshrl.u32 %v756, 7
      %v758 = vsub.s32 1, %v757
      %v759 = vrot.slane %v750, %v758
      %v762 = vmul.f32 %v741, %v755
      %v763 = vmul.f32 %v742, %v759
      %v764 = vmul.f32 %v743, %v755
      %v765 = vmul.f32 %v744, %v759
      %v766 = vmul.f32 %v745, %v755
      %v767 = vmul.f32 %v746, %v759
      %v768 = vmul.f32 %v747, %v755
      %v769 = vmul.f32 %v748, %v759
      %v778 = vrot.slane %v762, 1
      %v779 = vrot.slane %v763, 1
      %v780 = vrot.slane %v764, 1
      %v781 = vrot.slane %v765, 1
      %v782 = vrot.slane %v766, 1
      %v783 = vrot.slane %v767, 1
      %v784 = vrot.slane %v768, 1
      %v785 = vrot.slane %v769, 1
      %v794 = vadd.f32 %v733, %v778
      %v795 = vadd.f32 %v734, %v779
      %v796 = vadd.f32 %v735, %v780
      %v797 = vadd.f32 %v736, %v781
      %v798 = vadd.f32 %v737, %v782
      %v799 = vadd.f32 %v738, %v783
      %v800 = vadd.f32 %v739, %v784
      %v801 = vadd.f32 %v740, %v785
      %v802 = vld [vmem:[%s537] sm:$0x3c]
      %v803 = vld [vmem:[%s537 + $0x8] sm:$0x3c]
      %v804 = vld [vmem:[%s537 + $0x10] sm:$0x3c]
      %v805 = vld [vmem:[%s537 + $0x18] sm:$0x3c]
      %v806 = vld [vmem:[%s537 + $0x20] sm:$0x3c]
      %v807 = vld [vmem:[%s537 + $0x28] sm:$0x3c]
      %v808 = vld [vmem:[%s537 + $0x30] sm:$0x3c]
      %v809 = vld [vmem:[%s537 + $0x38] sm:$0x3c]
      %s810 = scalar_lea.vmem %s3, 5
      %v811 = vld [vmem:[%s810] ss:$8 sm:$0x3]
      %v813 = vlaneseq
      %v814 = vshrl.u32 %v813, 7
      %v815 = vsub.s32 0, %v814
      %v816 = vrot.slane %v811, %v815
      %v817 = vlaneseq
      %v818 = vshrl.u32 %v817, 7
      %v819 = vsub.s32 1, %v818
      %v820 = vrot.slane %v811, %v819
      %v823 = vmul.f32 %v802, %v816
      %v824 = vmul.f32 %v803, %v820
      %v825 = vmul.f32 %v804, %v816
      %v826 = vmul.f32 %v805, %v820
      %v827 = vmul.f32 %v806, %v816
      %v828 = vmul.f32 %v807, %v820
      %v829 = vmul.f32 %v808, %v816
      %v830 = vmul.f32 %v809, %v820
      %v839 = vrot.slane %v823, 2
      %v840 = vrot.slane %v824, 2
      %v841 = vrot.slane %v825, 2
      %v842 = vrot.slane %v826, 2
      %v843 = vrot.slane %v827, 2
      %v844 = vrot.slane %v828, 2
      %v845 = vrot.slane %v829, 2
      %v846 = vrot.slane %v830, 2
      %v855 = vadd.f32 %v794, %v839
      %v856 = vadd.f32 %v795, %v840
      %v857 = vadd.f32 %v796, %v841
      %v858 = vadd.f32 %v797, %v842
      %v859 = vadd.f32 %v798, %v843
      %v860 = vadd.f32 %v799, %v844
      %v861 = vadd.f32 %v800, %v845
      %v862 = vadd.f32 %v801, %v846
      %s863 = scalar_lea.vmem [#allocation2], 32
      %v864 = vld [vmem:[%s863] sm:$0xf]
      %v865 = vld [vmem:[%s863 + $0x8] sm:$0xf]
      %v866 = vld [vmem:[%s863 + $0x10] sm:$0xf]
      %v867 = vld [vmem:[%s863 + $0x18] sm:$0xf]
      %v868 = vld [vmem:[%s863 + $0x20] sm:$0xf]
      %v869 = vld [vmem:[%s863 + $0x28] sm:$0xf]
      %v870 = vld [vmem:[%s863 + $0x30] sm:$0xf]
      %v871 = vld [vmem:[%s863 + $0x38] sm:$0xf]
      %s872 = scalar_lea.vmem %s3, 6
      %v873 = vld [vmem:[%s872] ss:$8 sm:$0x3]
      %v875 = vlaneseq
      %v876 = vshrl.u32 %v875, 7
      %v877 = vsub.s32 0, %v876
      %v878 = vrot.slane %v873, %v877
      %v879 = vlaneseq
      %v880 = vshrl.u32 %v879, 7
      %v881 = vsub.s32 1, %v880
      %v882 = vrot.slane %v873, %v881
      %v885 = vmul.f32 %v864, %v878
      %v886 = vmul.f32 %v865, %v882
      %v887 = vmul.f32 %v866, %v878
      %v888 = vmul.f32 %v867, %v882
      %v889 = vmul.f32 %v868, %v878
      %v890 = vmul.f32 %v869, %v882
      %v891 = vmul.f32 %v870, %v878
      %v892 = vmul.f32 %v871, %v882
      %v893 = vadd.f32 %v855, %v885
      %v894 = vadd.f32 %v856, %v886
      %v895 = vadd.f32 %v857, %v887
      %v896 = vadd.f32 %v858, %v888
      %v897 = vadd.f32 %v859, %v889
      %v898 = vadd.f32 %v860, %v890
      %v899 = vadd.f32 %v861, %v891
      %v900 = vadd.f32 %v862, %v892
      %v901 = vld [vmem:[%s863] sm:$0x1e]
      %v902 = vld [vmem:[%s863 + $0x8] sm:$0x1e]
      %v903 = vld [vmem:[%s863 + $0x10] sm:$0x1e]
      %v904 = vld [vmem:[%s863 + $0x18] sm:$0x1e]
      %v905 = vld [vmem:[%s863 + $0x20] sm:$0x1e]
      %v906 = vld [vmem:[%s863 + $0x28] sm:$0x1e]
      %v907 = vld [vmem:[%s863 + $0x30] sm:$0x1e]
      %v908 = vld [vmem:[%s863 + $0x38] sm:$0x1e]
      %s909 = scalar_lea.vmem %s3, 7
      %v910 = vld [vmem:[%s909] ss:$8 sm:$0x3]
      %v912 = vlaneseq
      %v913 = vshrl.u32 %v912, 7
      %v914 = vsub.s32 0, %v913
      %v915 = vrot.slane %v910, %v914
      %v916 = vlaneseq
      %v917 = vshrl.u32 %v916, 7
      %v918 = vsub.s32 1, %v917
      %v919 = vrot.slane %v910, %v918
      %v922 = vmul.f32 %v901, %v915
      %v923 = vmul.f32 %v902, %v919
      %v924 = vmul.f32 %v903, %v915
      %v925 = vmul.f32 %v904, %v919
      %v926 = vmul.f32 %v905, %v915
      %v927 = vmul.f32 %v906, %v919
      %v928 = vmul.f32 %v907, %v915
      %v929 = vmul.f32 %v908, %v919
      %v938 = vrot.slane %v922, 1
      %v939 = vrot.slane %v923, 1
      %v940 = vrot.slane %v924, 1
      %v941 = vrot.slane %v925, 1
      %v942 = vrot.slane %v926, 1
      %v943 = vrot.slane %v927, 1
      %v944 = vrot.slane %v928, 1
      %v945 = vrot.slane %v929, 1
      %v954 = vadd.f32 %v893, %v938
      %v955 = vadd.f32 %v894, %v939
      %v956 = vadd.f32 %v895, %v940
      %v957 = vadd.f32 %v896, %v941
      %v958 = vadd.f32 %v897, %v942
      %v959 = vadd.f32 %v898, %v943
      %v960 = vadd.f32 %v899, %v944
      %v961 = vadd.f32 %v900, %v945
      %v962 = vld [vmem:[%s863] sm:$0x3c]
      %v963 = vld [vmem:[%s863 + $0x8] sm:$0x3c]
      %v964 = vld [vmem:[%s863 + $0x10] sm:$0x3c]
      %v965 = vld [vmem:[%s863 + $0x18] sm:$0x3c]
      %v966 = vld [vmem:[%s863 + $0x20] sm:$0x3c]
      %v967 = vld [vmem:[%s863 + $0x28] sm:$0x3c]
      %v968 = vld [vmem:[%s863 + $0x30] sm:$0x3c]
      %v969 = vld [vmem:[%s863 + $0x38] sm:$0x3c]
      %s970 = scalar_lea.vmem %s3, 16
      %v971 = vld [vmem:[%s970] ss:$8 sm:$0x3]
      %v973 = vlaneseq
      %v974 = vshrl.u32 %v973, 7
      %v975 = vsub.s32 0, %v974
      %v976 = vrot.slane %v971, %v975
      %v977 = vlaneseq
      %v978 = vshrl.u32 %v977, 7
      %v979 = vsub.s32 1, %v978
      %v980 = vrot.slane %v971, %v979
      %v983 = vmul.f32 %v962, %v976
      %v984 = vmul.f32 %v963, %v980
      %v985 = vmul.f32 %v964, %v976
      %v986 = vmul.f32 %v965, %v980
      %v987 = vmul.f32 %v966, %v976
      %v988 = vmul.f32 %v967, %v980
      %v989 = vmul.f32 %v968, %v976
      %v990 = vmul.f32 %v969, %v980
      %v999 = vrot.slane %v983, 2
      %v1000 = vrot.slane %v984, 2
      %v1001 = vrot.slane %v985, 2
      %v1002 = vrot.slane %v986, 2
      %v1003 = vrot.slane %v987, 2
      %v1004 = vrot.slane %v988, 2
      %v1005 = vrot.slane %v989, 2
      %v1006 = vrot.slane %v990, 2
      %v1015 = vadd.f32 %v954, %v999
      %v1016 = vadd.f32 %v955, %v1000
      %v1017 = vadd.f32 %v956, %v1001
      %v1018 = vadd.f32 %v957, %v1002
      %v1019 = vadd.f32 %v958, %v1003
      %v1020 = vadd.f32 %v959, %v1004
      %v1021 = vadd.f32 %v960, %v1005
      %v1022 = vadd.f32 %v961, %v1006
      %v1023 = vld [vmem:[%s4] sm:$0x3]
      %v1025 = vlaneseq
      %v1026 = vshrl.u32 %v1025, 7
      %v1027 = vsub.s32 0, %v1026
      %v1028 = vrot.slane %v1023, %v1027
      %v1029 = vlaneseq
      %v1030 = vshrl.u32 %v1029, 7
      %v1031 = vsub.s32 1, %v1030
      %v1032 = vrot.slane %v1023, %v1031
      %v1035 = vadd.f32 %v1015, %v1028
      %v1036 = vadd.f32 %v1016, %v1032
      %v1037 = vadd.f32 %v1017, %v1028
      %v1038 = vadd.f32 %v1018, %v1032
      %v1039 = vadd.f32 %v1019, %v1028
      %v1040 = vadd.f32 %v1020, %v1032
      %v1041 = vadd.f32 %v1021, %v1028
      %v1042 = vadd.f32 %v1022, %v1032
      %v1043 = vmax.f32 %v1035, 0.0
      %v1044 = vmax.f32 %v1036, 0.0
      %v1045 = vmax.f32 %v1037, 0.0
      %v1046 = vmax.f32 %v1038, 0.0
      %v1047 = vmax.f32 %v1039, 0.0
      %v1048 = vmax.f32 %v1040, 0.0
      %v1049 = vmax.f32 %v1041, 0.0
      %v1050 = vmax.f32 %v1042, 0.0
      %v1051 = vmin.f32 %v1043, 6.0
      %v1052 = vmin.f32 %v1044, 6.0
      %v1053 = vmin.f32 %v1045, 6.0
      %v1054 = vmin.f32 %v1046, 6.0
      %v1055 = vmin.f32 %v1047, 6.0
      %v1056 = vmin.f32 %v1048, 6.0
      %v1057 = vmin.f32 %v1049, 6.0
      %v1058 = vmin.f32 %v1050, 6.0
      %v1067 = vcombine.low %v1051, %v1052
      %v1068 = vcombine.low %v1053, %v1054
      %v1069 = vcombine.low %v1055, %v1056
      %v1070 = vcombine.low %v1057, %v1058
      %v1071 = vcombine.low %v1067, %v1068
      %v1072 = vcombine.high %v1067, %v1068
      %v1073 = vcombine.low %v1069, %v1070
      %v1074 = vcombine.high %v1069, %v1070
      %v1079 = vpack.c.bf16 %v1073, %v1071
      %v1080 = vpack.c.bf16 %v1074, %v1072
      %v1081 = vld [vmem:[%s5] sm:$0xf]
      %v1082 = vld [vmem:[%s5 + $0x4] sm:$0xf]
      %v1083 = vld [vmem:[%s5 + $0x8] sm:$0xf]
      %v1084 = vld [vmem:[%s5 + $0xc] sm:$0xf]
      %v1085 = vld [vmem:[%s5 + $0x10] sm:$0xf]
      %v1086 = vld [vmem:[%s5 + $0x14] sm:$0xf]
      %v1087 = vld [vmem:[%s5 + $0x18] sm:$0xf]
      %v1088 = vld [vmem:[%s5 + $0x1c] sm:$0xf]
      %v1089 = vld [vmem:[%s5 + $0x20] sm:$0xf]
      %v1090 = vld [vmem:[%s5 + $0x24] sm:$0xf]
      %v1091 = vld [vmem:[%s5 + $0x28] sm:$0xf]
      %v1092 = vld [vmem:[%s5 + $0x2c] sm:$0xf]
      %v1093 = vld [vmem:[%s5 + $0x30] sm:$0xf]
      %v1094 = vld [vmem:[%s5 + $0x34] sm:$0xf]
      %v1095 = vld [vmem:[%s5 + $0x38] sm:$0xf]
      %v1096 = vld [vmem:[%s5 + $0x3c] sm:$0xf]
      %v1097 = vld [vmem:[%s5 + $0x40] sm:$0xf]
      %v1098 = vld [vmem:[%s5 + $0x44] sm:$0xf]
      %v1099 = vld [vmem:[%s5 + $0x48] sm:$0xf]
      %v1100 = vld [vmem:[%s5 + $0x4c] sm:$0xf]
      %v1101 = vld [vmem:[%s5 + $0x50] sm:$0xf]
      %v1102 = vld [vmem:[%s5 + $0x54] sm:$0xf]
      %v1103 = vld [vmem:[%s5 + $0x58] sm:$0xf]
      %v1104 = vld [vmem:[%s5 + $0x5c] sm:$0xf]
      %v1105 = vld [vmem:[%s5 + $0x60] sm:$0xf]
      %v1106 = vld [vmem:[%s5 + $0x64] sm:$0xf]
      %v1107 = vld [vmem:[%s5 + $0x68] sm:$0xf]
      %v1108 = vld [vmem:[%s5 + $0x6c] sm:$0xf]
      %v1109 = vld [vmem:[%s5 + $0x70] sm:$0xf]
      %v1110 = vld [vmem:[%s5 + $0x74] sm:$0xf]
      %v1111 = vld [vmem:[%s5 + $0x78] sm:$0xf]
      %v1112 = vld [vmem:[%s5 + $0x7c] sm:$0xf]
      %v1113 = vld [vmem:[%s6] sm:$0x1]
      %v1115 = vlaneseq
      %v1116 = vshrl.u32 %v1115, 7
      %v1117 = vsub.s32 0, %v1116
      %v1118 = vrot.slane %v1113, %v1117
      %v1152 = vunpack.c.l.b16 %v1081
      %v1153 = vunpack.c.l.b16 %v1082
      %v1154 = vunpack.c.l.b16 %v1083
      %v1155 = vunpack.c.l.b16 %v1084
      %v1156 = vunpack.c.l.b16 %v1085
      %v1157 = vunpack.c.l.b16 %v1086
      %v1158 = vunpack.c.l.b16 %v1087
      %v1159 = vunpack.c.l.b16 %v1088
      %v1160 = vunpack.c.l.b16 %v1089
      %v1161 = vunpack.c.l.b16 %v1090
      %v1162 = vunpack.c.l.b16 %v1091
      %v1163 = vunpack.c.l.b16 %v1092
      %v1164 = vunpack.c.l.b16 %v1093
      %v1165 = vunpack.c.l.b16 %v1094
      %v1166 = vunpack.c.l.b16 %v1095
      %v1167 = vunpack.c.l.b16 %v1096
      %v1168 = vunpack.c.l.b16 %v1097
      %v1169 = vunpack.c.l.b16 %v1098
      %v1170 = vunpack.c.l.b16 %v1099
      %v1171 = vunpack.c.l.b16 %v1100
      %v1172 = vunpack.c.l.b16 %v1101
      %v1173 = vunpack.c.l.b16 %v1102
      %v1174 = vunpack.c.l.b16 %v1103
      %v1175 = vunpack.c.l.b16 %v1104
      %v1176 = vunpack.c.l.b16 %v1105
      %v1177 = vunpack.c.l.b16 %v1106
      %v1178 = vunpack.c.l.b16 %v1107
      %v1179 = vunpack.c.l.b16 %v1108
      %v1180 = vunpack.c.l.b16 %v1109
      %v1181 = vunpack.c.l.b16 %v1110
      %v1182 = vunpack.c.l.b16 %v1111
      %v1183 = vunpack.c.l.b16 %v1112
      %v1184 = vpack.c.b16 %v1153, %v1152
      %v1185 = vpack.c.b16 %v1155, %v1154
      %v1186 = vpack.c.b16 %v1157, %v1156
      %v1187 = vpack.c.b16 %v1159, %v1158
      %v1188 = vpack.c.b16 %v1161, %v1160
      %v1189 = vpack.c.b16 %v1163, %v1162
      %v1190 = vpack.c.b16 %v1165, %v1164
      %v1191 = vpack.c.b16 %v1167, %v1166
      %v1192 = vpack.c.b16 %v1169, %v1168
      %v1193 = vpack.c.b16 %v1171, %v1170
      %v1194 = vpack.c.b16 %v1173, %v1172
      %v1195 = vpack.c.b16 %v1175, %v1174
      %v1196 = vpack.c.b16 %v1177, %v1176
      %v1197 = vpack.c.b16 %v1179, %v1178
      %v1198 = vpack.c.b16 %v1181, %v1180
      %v1199 = vpack.c.b16 %v1183, %v1182
      %1216 = vmatprep.subr.bf16.mxu0 0
      %1217 = vmatpush1.bf16.msra.mxu0 %v1191
      %1218 = vmatprep.subr.bf16.mxu0 0
      %1219 = vmatpush1.bf16.msra.mxu0 %v1190
      %1220 = vmatprep.subr.bf16.mxu0 0
      %1221 = vmatpush1.bf16.msra.mxu0 %v1189
      %1222 = vmatprep.subr.bf16.mxu0 0
      %1223 = vmatpush1.bf16.msra.mxu0 %v1188
      %1224 = vmatprep.subr.bf16.mxu0 0
      %1225 = vmatpush1.bf16.msra.mxu0 %v1187
      %1226 = vmatprep.subr.bf16.mxu0 0
      %1227 = vmatpush1.bf16.msra.mxu0 %v1186
      %1228 = vmatprep.subr.bf16.mxu0 0
      %1229 = vmatpush1.bf16.msra.mxu0 %v1185
      %1230 = vmatprep.subr.bf16.mxu0 0
      %1231 = vmatpush1.bf16.msra.mxu0 %v1184
      %1232 = vmatprep.subr.bf16.mxu0 0
      %1233 = vmatpush2.bf16.msra.mxu0 %v1199
      %1234 = vmatprep.subr.bf16.mxu0 0
      %1235 = vmatpush2.bf16.msra.mxu0 %v1198
      %1236 = vmatprep.subr.bf16.mxu0 0
      %1237 = vmatpush2.bf16.msra.mxu0 %v1197
      %1238 = vmatprep.subr.bf16.mxu0 0
      %1239 = vmatpush2.bf16.msra.mxu0 %v1196
      %1240 = vmatprep.subr.bf16.mxu0 0
      %1241 = vmatpush2.bf16.msra.mxu0 %v1195
      %1242 = vmatprep.subr.bf16.mxu0 0
      %1243 = vmatpush2.bf16.msra.mxu0 %v1194
      %1244 = vmatprep.subr.bf16.mxu0 0
      %1245 = vmatpush2.bf16.msra.mxu0 %v1193
      %1246 = vmatprep.subr.bf16.mxu0 0
      %1247 = vmatpush2.bf16.msra.mxu0 %v1192
      %1248 = vmatprep.mubr.bf16.mxu0 %v1080
      %1249 = vmatmul.mubr.bf16.gmra.mxu0 %v1079
      %v1250 = vpop.f32.mrf.mxu0
      %v1251 = vadd.f32 %v1118, %v1250
      %v1252 = vpop.f32.mrf.mxu0
      %v1253 = vpop.f32.mrf.mxu0
      %v1254 = vadd.f32 %v1118, %v1253
      %v1255 = vpop.f32.mrf.mxu0
      %1256 = vdwg.mxu0
      %v1257 = vunpack.c.l.bf16 %v324
      %v1258 = vunpack.c.l.bf16 %v325
      %v1259 = vunpack.c.l.bf16 %v326
      %v1260 = vunpack.c.l.bf16 %v327
      %v1265 = vcombine.low %v1257, %v1258
      %v1266 = vcombine.low %v1259, %v1260
      %v1269 = vadd.f32 %v1251, %v1265
      %v1270 = vadd.f32 %v1254, %v1266
      %v1273 = vcombine.high %v1269, %v1269
      %v1274 = vcombine.high %v1270, %v1270
      %v1277 = vpack.c.bf16 %v1269, %v1269
      %v1278 = vpack.c.bf16 %v1273, %v1273
      %v1279 = vpack.c.bf16 %v1270, %v1270
      %v1280 = vpack.c.bf16 %v1274, %v1274
      %1281 = vst [vmem:[%s278] sm:$0x3] %v1277
      %1282 = vst [vmem:[%s278 + $0x2] sm:$0x3] %v1278
      %1283 = vst [vmem:[%s278 + $0x4] sm:$0x3] %v1279
      %1284 = vst [vmem:[%s278 + $0x6] sm:$0x3] %v1280
      %p1285 = scmp.lt.s32.totalorder %s18, 1
      %s1286 = scalar_select %p1285, %s18, 1
      %s1287 = smul.addr %s1286, 4
      %s1288 = smul.addr %s1287, 2
      %s1289 = scalar_lea.vmem %s7, %s1288
      // Predicated region
      $region49: #{_lambda_.9} parent=47 // pred_check
        %p1290 = pneg %p188
      $region50: #{_lambda_.9} parent=47 // pred_check_branch
        %1292 = sbr.rel (%p1290) target = $region52
      $region51: #{_lambda_.9} parent=47 // pred_region
        _
      $region52: #{_lambda_.9} parent=47 // pred_fallthru
        _
    $region48: #{_lambda_.9} parent=5 // pred_fallthru
      _
    %p1293 = scmp.le.s32.totalorder 2, %s13
    // Predicated region
    $region53: #{_lambda_.9} parent=5 // pred_check
      %p1294 = pneg %p1293
    $region54: #{_lambda_.9} parent=5 // pred_check_branch
      %1296 = sbr.rel (%p1294) target = $region56
    $region55: #{_lambda_.9} parent=5 // pred_region
      %s1297 = ssub.s32 %s13, 2
      // Predicated region
      $region57: #{_lambda_.9} parent=55 // pred_check
        %p1298 = pneg %p194
      $region58: #{_lambda_.9} parent=55 // pred_check_branch
        %1300 = sbr.rel (%p1298) target = $region60
      $region59: #{_lambda_.9} parent=55 // pred_region
        %p1301 = scmp.lt.s32.totalorder %s19, 1
        %s1302 = scalar_select %p1301, %s19, 1
        %s1303 = smul.addr %s1302, 4
        %s1304 = smul.addr %s1303, 2
        %s1305 = scalar_lea.vmem %s7, %s1304
      $region60: #{_lambda_.9} parent=55 // pred_fallthru
        _
    $region56: #{_lambda_.9} parent=5 // pred_fallthru
      _
  $region6: #{_lambda_.9} parent=0 // loop_footer
    %s17 = sadd.s32 1, %s13
  $region7: #{_lambda_.9} parent=0 // loop_footer_branch
    %12 = sbr.rel target = $region3
  $region8: #{_lambda_.9} parent=0 // loop_exit
    _

// kernel: _lambda_.8
$region0: #{_lambda_.8}
  #allocation0 [shape = 'u32[]', space=smem, size = 0x4, offset = 0x4, fixed_abs, tag = 'smem constant byte address 0x4 - core index']
  #allocation1 [shape = 'u32[144,128]{1,0:T(1,128)}', space=vmem, size = 0x12000, scoped, tag = 'internal scratch']
  #allocation2 [shape = 'f32[10,5,128]{2,1,0:T(8,128)}', space=vmem, size = 0xa000, scoped, tag = 'scratch operand']
  #allocation3 [shape = 'f32[10,5,128]{2,1,0:T(8,128)}', space=vmem, size = 0xa000, scoped, tag = 'scratch operand']
  %s0 = inlined_call_operand.vmem [shape: bf16[2,8,4,128], index: 0, kind: input, shape index: {}]
  %s1 = inlined_call_operand.vmem [shape: bf16[2,8,4,128], index: 1, kind: input, shape index: {}]
  %s2 = inlined_call_operand.vmem [shape: bf16[128,128], index: 2, kind: input, shape index: {}]
  %s3 = inlined_call_operand.vmem [shape: f32[1,128], index: 3, kind: input, shape index: {}, may-alias: {3,5,7}]
  %s4 = inlined_call_operand.vmem [shape: f32[9,128], index: 4, kind: input, shape index: {}]
  %s5 = inlined_call_operand.vmem [shape: f32[1,128], index: 5, kind: input, shape index: {}, may-alias: {3,5,7}]
  %s6 = inlined_call_operand.vmem [shape: bf16[128,128], index: 6, kind: input, shape index: {}]
  %s7 = inlined_call_operand.vmem [shape: f32[1,128], index: 7, kind: input, shape index: {}, may-alias: {3,5,7}]
  %s8 = inlined_call_operand.vmem [shape: bf16[2,4,4,128], index: 8, kind: output, shape index: {}]
  %s9 = sld [smem:[#allocation0]]
  $region65: #{_lambda_.8} parent=0
    _
  %s11 = ssub.s32 1, %s9
  %s12 = scalar_select 0, %s11, %s9
  loop: start=0, step=1, limit=4
  $region2: #{_lambda_.8} parent=0 // loop_pre_header
    _
  $region3: #{_lambda_.8} parent=0 // loop_header
    %s14 = sphi 0, %s18
    %p15 = scmp.ge.s32.totalorder %s14, 4
    %s24 = sphi 0, %s26
    %s27 = sphi 0, %s24
    %s28 = sphi 0, %s27
    %s44 = sphi 0, %s28
    %s50 = sphi 0, %s52
    %s53 = sphi 0, %s50
    %s54 = sphi 0, %s53
    %s70 = sphi 0, %s54
    %s74 = sphi 0, %s74
    %s76 = sphi 0, %s74
    %s77 = sphi 0, %s76
    %s91 = sphi 0, %s77
    %s95 = sphi 0, %s95
    %s97 = sphi 0, %s95
    %s98 = sphi 0, %s97
    %s112 = sphi 0, %s98
    %s116 = sphi 0, %s116
    %s118 = sphi 0, %s116
    %s119 = sphi 0, %s118
    %s133 = sphi 0, %s119
    %s137 = sphi 0, %s137
    %s139 = sphi 0, %s137
    %s140 = sphi 0, %s139
    %s154 = sphi 0, %s140
    %s158 = sphi 0, %s158
    %s160 = sphi 0, %s158
    %s161 = sphi 0, %s160
    %s175 = sphi 0, %s161
    %s179 = sphi 0, %s179
    %s181 = sphi 0, %s179
    %s182 = sphi 0, %s181
    %s196 = sphi 0, %s182
    %s202 = sphi 0, %s204
    %s205 = sphi 0, %s202
    %s206 = sphi 0, %s205
    %s222 = sphi 0, %s206
  $region4: #{_lambda_.8} parent=0 // loop_header_branch
    %17 = sbr.rel (%p15) target = $region8
  $region5: #{_lambda_.8} parent=0 // loop_body
    %s19 = ssub.s32 %s14, 1
    %s20 = ssub.s32 %s14, 2
    %s21 = sadd.s32 %s14, 1
    %s22 = ssub.s32 %s14, %s21
    %p23 = scmp.eq.s32.totalorder %s22, 0
    %s25 = sadd.s32 %s24, 1
    %s26 = scalar_select %p23, %s24, %s25
    %p29 = pneg %p23
    %p30 = scmp.eq.s32.totalorder %s14, 1
    %p31 = por %p29, %p30
    %p32 = scmp.ne.s32.totalorder %s24, %s27
    %p33 = scmp.eq.s32.totalorder %s14, 0
    %p34 = por %p32, %p33
    %p35 = scmp.ne.s32.totalorder %s24, %s27
    %p36 = scmp.eq.s32.totalorder %s19, 1
    %p37 = por %p35, %p36
    %p38 = scmp.ne.s32.totalorder %s27, %s28
    %p39 = scmp.eq.s32.totalorder %s19, 0
    %p40 = por %p38, %p39
    %p41 = scmp.ne.s32.totalorder %s27, %s28
    %p42 = scmp.eq.s32.totalorder %s20, 1
    %p43 = por %p41, %p42
    %p45 = scmp.ne.s32.totalorder %s28, %s44
    %p46 = scmp.eq.s32.totalorder %s20, 0
    %p47 = por %p45, %p46
    %s48 = ssub.s32 %s14, %s21
    %p49 = scmp.eq.s32.totalorder %s48, 0
    %s51 = sadd.s32 %s50, 1
    %s52 = scalar_select %p49, %s50, %s51
    %p55 = pneg %p49
    %p56 = scmp.eq.s32.totalorder %s14, 1
    %p57 = por %p55, %p56
    %p58 = scmp.ne.s32.totalorder %s50, %s53
    %p59 = scmp.eq.s32.totalorder %s14, 0
    %p60 = por %p58, %p59
    %p61 = scmp.ne.s32.totalorder %s50, %s53
    %p62 = scmp.eq.s32.totalorder %s19, 1
    %p63 = por %p61, %p62
    %p64 = scmp.ne.s32.totalorder %s53, %s54
    %p65 = scmp.eq.s32.totalorder %s19, 0
    %p66 = por %p64, %p65
    %p67 = scmp.ne.s32.totalorder %s53, %s54
    %p68 = scmp.eq.s32.totalorder %s20, 1
    %p69 = por %p67, %p68
    %p71 = scmp.ne.s32.totalorder %s54, %s70
    %p72 = scmp.eq.s32.totalorder %s20, 0
    %p73 = por %p71, %p72
    %s75 = sadd.s32 %s74, 1
    %p78 = scmp.eq.s32.totalorder %s14, 1
    %p79 = scmp.ne.s32.totalorder %s74, %s76
    %p80 = scmp.eq.s32.totalorder %s14, 0
    %p81 = por %p79, %p80
    %p82 = scmp.ne.s32.totalorder %s74, %s76
    %p83 = scmp.eq.s32.totalorder %s19, 1
    %p84 = por %p82, %p83
    %p85 = scmp.ne.s32.totalorder %s76, %s77
    %p86 = scmp.eq.s32.totalorder %s19, 0
    %p87 = por %p85, %p86
    %p88 = scmp.ne.s32.totalorder %s76, %s77
    %p89 = scmp.eq.s32.totalorder %s20, 1
    %p90 = por %p88, %p89
    %p92 = scmp.ne.s32.totalorder %s77, %s91
    %p93 = scmp.eq.s32.totalorder %s20, 0
    %p94 = por %p92, %p93
    %s96 = sadd.s32 %s95, 1
    %p99 = scmp.eq.s32.totalorder %s14, 1
    %p100 = scmp.ne.s32.totalorder %s95, %s97
    %p101 = scmp.eq.s32.totalorder %s14, 0
    %p102 = por %p100, %p101
    %p103 = scmp.ne.s32.totalorder %s95, %s97
    %p104 = scmp.eq.s32.totalorder %s19, 1
    %p105 = por %p103, %p104
    %p106 = scmp.ne.s32.totalorder %s97, %s98
    %p107 = scmp.eq.s32.totalorder %s19, 0
    %p108 = por %p106, %p107
    %p109 = scmp.ne.s32.totalorder %s97, %s98
    %p110 = scmp.eq.s32.totalorder %s20, 1
    %p111 = por %p109, %p110
    %p113 = scmp.ne.s32.totalorder %s98, %s112
    %p114 = scmp.eq.s32.totalorder %s20, 0
    %p115 = por %p113, %p114
    %s117 = sadd.s32 %s116, 1
    %p120 = scmp.eq.s32.totalorder %s14, 1
    %p121 = scmp.ne.s32.totalorder %s116, %s118
    %p122 = scmp.eq.s32.totalorder %s14, 0
    %p123 = por %p121, %p122
    %p124 = scmp.ne.s32.totalorder %s116, %s118
    %p125 = scmp.eq.s32.totalorder %s19, 1
    %p126 = por %p124, %p125
    %p127 = scmp.ne.s32.totalorder %s118, %s119
    %p128 = scmp.eq.s32.totalorder %s19, 0
    %p129 = por %p127, %p128
    %p130 = scmp.ne.s32.totalorder %s118, %s119
    %p131 = scmp.eq.s32.totalorder %s20, 1
    %p132 = por %p130, %p131
    %p134 = scmp.ne.s32.totalorder %s119, %s133
    %p135 = scmp.eq.s32.totalorder %s20, 0
    %p136 = por %p134, %p135
    %s138 = sadd.s32 %s137, 1
    %p141 = scmp.eq.s32.totalorder %s14, 1
    %p142 = scmp.ne.s32.totalorder %s137, %s139
    %p143 = scmp.eq.s32.totalorder %s14, 0
    %p144 = por %p142, %p143
    %p145 = scmp.ne.s32.totalorder %s137, %s139
    %p146 = scmp.eq.s32.totalorder %s19, 1
    %p147 = por %p145, %p146
    %p148 = scmp.ne.s32.totalorder %s139, %s140
    %p149 = scmp.eq.s32.totalorder %s19, 0
    %p150 = por %p148, %p149
    %p151 = scmp.ne.s32.totalorder %s139, %s140
    %p152 = scmp.eq.s32.totalorder %s20, 1
    %p153 = por %p151, %p152
    %p155 = scmp.ne.s32.totalorder %s140, %s154
    %p156 = scmp.eq.s32.totalorder %s20, 0
    %p157 = por %p155, %p156
    %s159 = sadd.s32 %s158, 1
    %p162 = scmp.eq.s32.totalorder %s14, 1
    %p163 = scmp.ne.s32.totalorder %s158, %s160
    %p164 = scmp.eq.s32.totalorder %s14, 0
    %p165 = por %p163, %p164
    %p166 = scmp.ne.s32.totalorder %s158, %s160
    %p167 = scmp.eq.s32.totalorder %s19, 1
    %p168 = por %p166, %p167
    %p169 = scmp.ne.s32.totalorder %s160, %s161
    %p170 = scmp.eq.s32.totalorder %s19, 0
    %p171 = por %p169, %p170
    %p172 = scmp.ne.s32.totalorder %s160, %s161
    %p173 = scmp.eq.s32.totalorder %s20, 1
    %p174 = por %p172, %p173
    %p176 = scmp.ne.s32.totalorder %s161, %s175
    %p177 = scmp.eq.s32.totalorder %s20, 0
    %p178 = por %p176, %p177
    %s180 = sadd.s32 %s179, 1
    %p183 = scmp.eq.s32.totalorder %s14, 1
    %p184 = scmp.ne.s32.totalorder %s179, %s181
    %p185 = scmp.eq.s32.totalorder %s14, 0
    %p186 = por %p184, %p185
    %p187 = scmp.ne.s32.totalorder %s179, %s181
    %p188 = scmp.eq.s32.totalorder %s19, 1
    %p189 = por %p187, %p188
    %p190 = scmp.ne.s32.totalorder %s181, %s182
    %p191 = scmp.eq.s32.totalorder %s19, 0
    %p192 = por %p190, %p191
    %p193 = scmp.ne.s32.totalorder %s181, %s182
    %p194 = scmp.eq.s32.totalorder %s20, 1
    %p195 = por %p193, %p194
    %p197 = scmp.ne.s32.totalorder %s182, %s196
    %p198 = scmp.eq.s32.totalorder %s20, 0
    %p199 = por %p197, %p198
    %s200 = ssub.s32 %s14, %s21
    %p201 = scmp.eq.s32.totalorder %s200, 0
    %s203 = sadd.s32 %s202, 1
    %s204 = scalar_select %p201, %s202, %s203
    %p207 = pneg %p201
    %p208 = scmp.eq.s32.totalorder %s14, 1
    %p209 = por %p207, %p208
    %p210 = scmp.ne.s32.totalorder %s202, %s205
    %p211 = scmp.eq.s32.totalorder %s14, 0
    %p212 = por %p210, %p211
    %p213 = scmp.ne.s32.totalorder %s202, %s205
    %p214 = scmp.eq.s32.totalorder %s19, 1
    %p215 = por %p213, %p214
    %p216 = scmp.ne.s32.totalorder %s205, %s206
    %p217 = scmp.eq.s32.totalorder %s19, 0
    %p218 = por %p216, %p217
    %p219 = scmp.ne.s32.totalorder %s205, %s206
    %p220 = scmp.eq.s32.totalorder %s20, 1
    %p221 = por %p219, %p220
    %p223 = scmp.ne.s32.totalorder %s206, %s222
    %p224 = scmp.eq.s32.totalorder %s20, 0
    %p225 = por %p223, %p224
    %p226 = scmp.le.s32.totalorder 1, %s14
    %p227 = scmp.lt.s32.totalorder %s14, 3
    %p228 = pnand %p226, %p227
    %p229 = pneg %p228
    // Predicated region
    $region9: #{_lambda_.8} parent=5 // pred_check
      _
    $region10: #{_lambda_.8} parent=5 // pred_check_branch
      %231 = sbr.rel (%p228) target = $region12
    $region11: #{_lambda_.8} parent=5 // pred_region
      %s232 = ssub.s32 %s14, 1
      // Predicated region
      $region13: #{_lambda_.8} parent=11 // pred_check
        %p233 = pneg %p87
      $region14: #{_lambda_.8} parent=11 // pred_check_branch
        %235 = sbr.rel (%p233) target = $region16
      $region15: #{_lambda_.8} parent=11 // pred_region
        _
      $region16: #{_lambda_.8} parent=11 // pred_fallthru
        _
      // Predicated region
      $region17: #{_lambda_.8} parent=11 // pred_check
        %p236 = pneg %p108
      $region18: #{_lambda_.8} parent=11 // pred_check_branch
        %238 = sbr.rel (%p236) target = $region20
      $region19: #{_lambda_.8} parent=11 // pred_region
        _
      $region20: #{_lambda_.8} parent=11 // pred_fallthru
        _
      // Predicated region
      $region21: #{_lambda_.8} parent=11 // pred_check
        %p239 = pneg %p129
      $region22: #{_lambda_.8} parent=11 // pred_check_branch
        %241 = sbr.rel (%p239) target = $region24
      $region23: #{_lambda_.8} parent=11 // pred_region
        _
      $region24: #{_lambda_.8} parent=11 // pred_fallthru
        _
      // Predicated region
      $region25: #{_lambda_.8} parent=11 // pred_check
        %p242 = pneg %p150
      $region26: #{_lambda_.8} parent=11 // pred_check_branch
        %244 = sbr.rel (%p242) target = $region28
      $region27: #{_lambda_.8} parent=11 // pred_region
        _
      $region28: #{_lambda_.8} parent=11 // pred_fallthru
        _
      // Predicated region
      $region29: #{_lambda_.8} parent=11 // pred_check
        %p245 = pneg %p171
      $region30: #{_lambda_.8} parent=11 // pred_check_branch
        %247 = sbr.rel (%p245) target = $region32
      $region31: #{_lambda_.8} parent=11 // pred_region
        _
      $region32: #{_lambda_.8} parent=11 // pred_fallthru
        _
      // Predicated region
      $region33: #{_lambda_.8} parent=11 // pred_check
        %p248 = pneg %p192
      $region34: #{_lambda_.8} parent=11 // pred_check_branch
        %250 = sbr.rel (%p248) target = $region36
      $region35: #{_lambda_.8} parent=11 // pred_region
        _
      $region36: #{_lambda_.8} parent=11 // pred_fallthru
        _
    $region12: #{_lambda_.8} parent=5 // pred_fallthru
      _
    %p251 = scmp.lt.s32.totalorder %s14, 2
    // Predicated region
    $region37: #{_lambda_.8} parent=5 // pred_check
      %p252 = pneg %p251
    $region38: #{_lambda_.8} parent=5 // pred_check_branch
      %254 = sbr.rel (%p252) target = $region40
    $region39: #{_lambda_.8} parent=5 // pred_region
      // Predicated region
      $region41: #{_lambda_.8} parent=39 // pred_check
        %p255 = pneg %p34
      $region42: #{_lambda_.8} parent=39 // pred_check_branch
        %257 = sbr.rel (%p255) target = $region44
      $region43: #{_lambda_.8} parent=39 // pred_region
        %p258 = scmp.lt.s32.totalorder %s14, 1
        %s259 = scalar_select %p258, %s14, 1
        %s260 = smul.addr %s259, 8
        %s261 = smul.addr %s260, 2
        %s262 = scalar_lea.vmem %s0, %s261
      $region44: #{_lambda_.8} parent=39 // pred_fallthru
        _
      // Predicated region
      $region45: #{_lambda_.8} parent=39 // pred_check
        %p263 = pneg %p60
      $region46: #{_lambda_.8} parent=39 // pred_check_branch
        %265 = sbr.rel (%p263) target = $region48
      $region47: #{_lambda_.8} parent=39 // pred_region
        %p266 = scmp.lt.s32.totalorder %s14, 1
        %s267 = scalar_select %p266, %s14, 1
        %s268 = smul.addr %s267, 8
        %s269 = smul.addr %s268, 2
        %s270 = scalar_lea.vmem %s1, %s269
      $region48: #{_lambda_.8} parent=39 // pred_fallthru
        _
    $region40: #{_lambda_.8} parent=5 // pred_fallthru
      _
    %p271 = scmp.le.s32.totalorder 1, %s14
    %p272 = scmp.lt.s32.totalorder %s14, 3
    %p273 = pnand %p271, %p272
    %p274 = pneg %p273
    // Predicated region
    $region49: #{_lambda_.8} parent=5 // pred_check
      _
    $region50: #{_lambda_.8} parent=5 // pred_check_branch
      %276 = sbr.rel (%p273) target = $region52
    $region51: #{_lambda_.8} parent=5 // pred_region
      %s277 = ssub.s32 %s14, 1
      %p278 = scmp.lt.s32.totalorder %s19, 1
      %s279 = scalar_select %p278, %s19, 1
      %s280 = smul.addr %s279, 8
      %s281 = smul.addr %s280, 2
      %s282 = scalar_lea.vmem %s0, %s281
      %p283 = pneg %p40
      %p284 = pneg %p37
      %p285 = scmp.lt.s32.totalorder %s19, 1
      %s286 = scalar_select %p285, %s19, 1
      %s287 = smul.addr %s286, 8
      %s288 = smul.addr %s287, 2
      %s289 = scalar_lea.vmem %s1, %s288
      %p290 = pneg %p66
      %p291 = pneg %p63
      %p292 = pneg %p87
      %p293 = pneg %p84
      %p294 = pneg %p108
      %p295 = pneg %p105
      %p296 = pneg %p129
      %p297 = pneg %p126
      %p298 = pneg %p150
      %p299 = pneg %p147
      %p300 = pneg %p171
      %p301 = pneg %p168
      %p302 = pneg %p192
      %p303 = pneg %p189
      %p304 = pneg %p218
      %p305 = pneg %p215
      %p306 = scmp.lt.s32.totalorder %s19, 1
      %s307 = scalar_select %p306, %s19, 1
      %s308 = smul.addr %s307, 4
      %s309 = smul.addr %s308, 2
      %s310 = scalar_lea.vmem %s8, %s309
      %p311 = scmp.lt.s32.totalorder %s19, 1
      %s312 = scalar_select %p311, %s19, 1
      %s313 = smul.addr %s312, 8
      %s314 = smul.addr %s313, 2
      %s315 = scalar_lea.vmem %s0, %s314
      %p316 = scmp.lt.s32.totalorder %s19, 1
      %s317 = scalar_select %p316, %s19, 1
      %s318 = smul.addr %s317, 8
      %s319 = smul.addr %s318, 2
      %s320 = scalar_lea.vmem %s1, %s319
      %p321 = scmp.lt.s32.totalorder %s19, 1
      %s322 = scalar_select %p321, %s19, 1
      %s323 = smul.addr %s322, 4
      %s324 = smul.addr %s323, 2
      %s325 = scalar_lea.vmem %s8, %s324
      %327 = vst [vmem:[#allocation2] sm:$0x1f] 0.0
      %s328 = scalar_lea.vmem [#allocation2], 72
      %329 = vst [vmem:[%s328] sm:$0x1f] 0.0
      %330 = vst [vmem:[#allocation3] sm:$0x1f] 0.0
      %s331 = scalar_lea.vmem [#allocation3], 72
      %332 = vst [vmem:[%s331] sm:$0x1f] 0.0
      %333 = vst [vmem:[#allocation2] sm:$0x1] 0.0
      %334 = vst [vmem:[#allocation2 + $0x8] sm:$0x1] 0.0
      %335 = vst [vmem:[#allocation2 + $0x10] sm:$0x1] 0.0
      %336 = vst [vmem:[#allocation2 + $0x18] sm:$0x1] 0.0
      %337 = vst [vmem:[#allocation2 + $0x20] sm:$0x1] 0.0
      %338 = vst [vmem:[#allocation2 + $0x28] sm:$0x1] 0.0
      %339 = vst [vmem:[#allocation2 + $0x30] sm:$0x1] 0.0
      %340 = vst [vmem:[#allocation2 + $0x38] sm:$0x1] 0.0
      %341 = vst [vmem:[#allocation2 + $0x40] sm:$0x1] 0.0
      %342 = vst [vmem:[#allocation2 + $0x48] sm:$0x1] 0.0
      %343 = vst [vmem:[#allocation3 + $0x4] sm:$0x1] 0.0
      %344 = vst [vmem:[#allocation3 + $0xc] sm:$0x1] 0.0
      %345 = vst [vmem:[#allocation3 + $0x14] sm:$0x1] 0.0
      %346 = vst [vmem:[#allocation3 + $0x1c] sm:$0x1] 0.0
      %347 = vst [vmem:[#allocation3 + $0x24] sm:$0x1] 0.0
      %348 = vst [vmem:[#allocation3 + $0x2c] sm:$0x1] 0.0
      %349 = vst [vmem:[#allocation3 + $0x34] sm:$0x1] 0.0
      %350 = vst [vmem:[#allocation3 + $0x3c] sm:$0x1] 0.0
      %351 = vst [vmem:[#allocation3 + $0x44] sm:$0x1] 0.0
      %352 = vst [vmem:[#allocation3 + $0x4c] sm:$0x1] 0.0
      %v353 = vld [vmem:[%s315] sm:$0x3]
      %v354 = vld [vmem:[%s315 + $0x2] sm:$0x3]
      %v355 = vld [vmem:[%s315 + $0x4] sm:$0x3]
      %v356 = vld [vmem:[%s315 + $0x6] sm:$0x3]
      %v357 = vld [vmem:[%s315 + $0x8] sm:$0x3]
      %v358 = vld [vmem:[%s315 + $0xa] sm:$0x3]
      %v359 = vld [vmem:[%s315 + $0xc] sm:$0x3]
      %v360 = vld [vmem:[%s315 + $0xe] sm:$0x3]
      %v361 = vld [vmem:[%s2] sm:$0xf]
      %v362 = vld [vmem:[%s2 + $0x4] sm:$0xf]
      %v363 = vld [vmem:[%s2 + $0x8] sm:$0xf]
      %v364 = vld [vmem:[%s2 + $0xc] sm:$0xf]
      %v365 = vld [vmem:[%s2 + $0x10] sm:$0xf]
      %v366 = vld [vmem:[%s2 + $0x14] sm:$0xf]
      %v367 = vld [vmem:[%s2 + $0x18] sm:$0xf]
      %v368 = vld [vmem:[%s2 + $0x1c] sm:$0xf]
      %v369 = vld [vmem:[%s2 + $0x20] sm:$0xf]
      %v370 = vld [vmem:[%s2 + $0x24] sm:$0xf]
      %v371 = vld [vmem:[%s2 + $0x28] sm:$0xf]
      %v372 = vld [vmem:[%s2 + $0x2c] sm:$0xf]
      %v373 = vld [vmem:[%s2 + $0x30] sm:$0xf]
      %v374 = vld [vmem:[%s2 + $0x34] sm:$0xf]
      %v375 = vld [vmem:[%s2 + $0x38] sm:$0xf]
      %v376 = vld [vmem:[%s2 + $0x3c] sm:$0xf]
      %v377 = vld [vmem:[%s3] sm:$0x1]
      %v379 = vlaneseq
      %v380 = vshrl.u32 %v379, 7
      %v381 = vsub.s32 0, %v380
      %v382 = vrot.slane %v377, %v381
      %v392 = vcombine.low %v353, %v354
      %v393 = vcombine.low %v355, %v356
      %v395 = vunpack.c.l.s4 1983009808
      %v396 = vunpack.c.0.s8 %v395
      %v397 = vlaneseq
      %v398 = vshrl.u32 %v397, 7
      %v399 = vsub.s32 %v396, %v398
      %v400 = vrot.slane %v392, %v399
      %v402 = vunpack.c.l.s4 1983009808
      %v403 = vunpack.c.0.s8 %v402
      %v404 = vlaneseq
      %v405 = vshrl.u32 %v404, 7
      %v406 = vsub.s32 %v403, %v405
      %v407 = vrot.slane %v393, %v406
      %v408 = vcombine.low %v400, %v407
      %v409 = vcombine.low %v357, %v358
      %v410 = vcombine.low %v359, %v360
      %v412 = vunpack.c.l.s4 1983009808
      %v413 = vunpack.c.0.s8 %v412
      %v414 = vlaneseq
      %v415 = vshrl.u32 %v414, 7
      %v416 = vsub.s32 %v413, %v415
      %v417 = vrot.slane %v409, %v416
      %v419 = vunpack.c.l.s4 1983009808
      %v420 = vunpack.c.0.s8 %v419
      %v421 = vlaneseq
      %v422 = vshrl.u32 %v421, 7
      %v423 = vsub.s32 %v420, %v422
      %v424 = vrot.slane %v410, %v423
      %v425 = vcombine.low %v417, %v424
      %v444 = vunpack.c.l.b16 %v361
      %v445 = vunpack.c.l.b16 %v362
      %v446 = vunpack.c.l.b16 %v363
      %v447 = vunpack.c.l.b16 %v364
      %v448 = vunpack.c.l.b16 %v365
      %v449 = vunpack.c.l.b16 %v366
      %v450 = vunpack.c.l.b16 %v367
      %v451 = vunpack.c.l.b16 %v368
      %v452 = vunpack.c.l.b16 %v369
      %v453 = vunpack.c.l.b16 %v370
      %v454 = vunpack.c.l.b16 %v371
      %v455 = vunpack.c.l.b16 %v372
      %v456 = vunpack.c.l.b16 %v373
      %v457 = vunpack.c.l.b16 %v374
      %v458 = vunpack.c.l.b16 %v375
      %v459 = vunpack.c.l.b16 %v376
      %v460 = vpack.c.b16 %v445, %v444
      %v461 = vpack.c.b16 %v447, %v446
      %v462 = vpack.c.b16 %v449, %v448
      %v463 = vpack.c.b16 %v451, %v450
      %v464 = vpack.c.b16 %v453, %v452
      %v465 = vpack.c.b16 %v455, %v454
      %v466 = vpack.c.b16 %v457, %v456
      %v467 = vpack.c.b16 %v459, %v458
      %476 = vmatprep.subr.bf16.mxu0 0
      %477 = vmatpush1.bf16.msra.mxu0 %v467
      %478 = vmatprep.subr.bf16.mxu0 0
      %479 = vmatpush1.bf16.msra.mxu0 %v466
      %480 = vmatprep.subr.bf16.mxu0 0
      %481 = vmatpush1.bf16.msra.mxu0 %v465
      %482 = vmatprep.subr.bf16.mxu0 0
      %483 = vmatpush1.bf16.msra.mxu0 %v464
      %484 = vmatprep.subr.bf16.mxu0 0
      %485 = vmatpush1.bf16.msra.mxu0 %v463
      %486 = vmatprep.subr.bf16.mxu0 0
      %487 = vmatpush1.bf16.msra.mxu0 %v462
      %488 = vmatprep.subr.bf16.mxu0 0
      %489 = vmatpush1.bf16.msra.mxu0 %v461
      %490 = vmatprep.subr.bf16.mxu0 0
      %491 = vmatpush1.bf16.msra.mxu0 %v460
      %492 = vmatprep.subr.bf16.mxu0 0
      %493 = vmatpush2.bf16.msra.mxu0 0
      %494 = vmatprep.subr.bf16.mxu0 0
      %495 = vmatpush2.bf16.msra.mxu0 0
      %496 = vmatprep.subr.bf16.mxu0 0
      %497 = vmatpush2.bf16.msra.mxu0 0
      %498 = vmatprep.subr.bf16.mxu0 0
      %499 = vmatpush2.bf16.msra.mxu0 0
      %500 = vmatprep.subr.bf16.mxu0 0
      %501 = vmatpush2.bf16.msra.mxu0 0
      %502 = vmatprep.subr.bf16.mxu0 0
      %503 = vmatpush2.bf16.msra.mxu0 0
      %504 = vmatprep.subr.bf16.mxu0 0
      %505 = vmatpush2.bf16.msra.mxu0 0
      %506 = vmatprep.subr.bf16.mxu0 0
      %507 = vmatpush2.bf16.msra.mxu0 0
      %508 = vmatprep.mubr.bf16.mxu0 0
      %509 = vmatmul.mubr.bf16.gmra.mxu0 %v408
      %v510 = vpop.f32.mrf.mxu0
      %v511 = vadd.f32 %v382, %v510
      %v512 = vpop.f32.mrf.mxu0
      %v513 = vpop.f32.mrf.mxu0
      %v514 = vadd.f32 %v382, %v513
      %v515 = vpop.f32.mrf.mxu0
      %516 = vmatprep.mubr.bf16.mxu0 0
      %517 = vmatmul.mubr.bf16.gmra.mxu0 %v425
      %v518 = vpop.f32.mrf.mxu0
      %v519 = vadd.f32 %v382, %v518
      %v520 = vpop.f32.mrf.mxu0
      %v521 = vpop.f32.mrf.mxu0
      %v522 = vadd.f32 %v382, %v521
      %v523 = vpop.f32.mrf.mxu0
      %524 = vdwg.mxu0
      %v525 = vmax.f32 %v511, 0.0
      %v526 = vmax.f32 %v514, 0.0
      %v527 = vmax.f32 %v519, 0.0
      %v528 = vmax.f32 %v522, 0.0
      %v529 = vmin.f32 %v525, 6.0
      %v530 = vmin.f32 %v526, 6.0
      %v531 = vmin.f32 %v527, 6.0
      %v532 = vmin.f32 %v528, 6.0
      %v537 = vcombine.high %v529, %v529
      %v538 = vcombine.high %v530, %v530
      %v539 = vcombine.high %v531, %v531
      %v540 = vcombine.high %v532, %v532
      %s545 = scalar_lea.vmem [#allocation3], 8
      %546 = vst [vmem:[%s545] sm:$0xf] %v529
      %547 = vst [vmem:[%s545 + $0x8] sm:$0xf] %v537
      %548 = vst [vmem:[%s545 + $0x10] sm:$0xf] %v530
      %549 = vst [vmem:[%s545 + $0x18] sm:$0xf] %v538
      %550 = vst [vmem:[%s545 + $0x20] sm:$0xf] %v531
      %551 = vst [vmem:[%s545 + $0x28] sm:$0xf] %v539
      %552 = vst [vmem:[%s545 + $0x30] sm:$0xf] %v532
      %553 = vst [vmem:[%s545 + $0x38] sm:$0xf] %v540
      %v554 = vld [vmem:[%s320] sm:$0x3]
      %v555 = vld [vmem:[%s320 + $0x2] sm:$0x3]
      %v556 = vld [vmem:[%s320 + $0x4] sm:$0x3]
      %v557 = vld [vmem:[%s320 + $0x6] sm:$0x3]
      %v558 = vld [vmem:[%s320 + $0x8] sm:$0x3]
      %v559 = vld [vmem:[%s320 + $0xa] sm:$0x3]
      %v560 = vld [vmem:[%s320 + $0xc] sm:$0x3]
      %v561 = vld [vmem:[%s320 + $0xe] sm:$0x3]
      %v562 = vld [vmem:[%s2] sm:$0xf]
      %v563 = vld [vmem:[%s2 + $0x4] sm:$0xf]
      %v564 = vld [vmem:[%s2 + $0x8] sm:$0xf]
      %v565 = vld [vmem:[%s2 + $0xc] sm:$0xf]
      %v566 = vld [vmem:[%s2 + $0x10] sm:$0xf]
      %v567 = vld [vmem:[%s2 + $0x14] sm:$0xf]
      %v568 = vld [vmem:[%s2 + $0x18] sm:$0xf]
      %v569 = vld [vmem:[%s2 + $0x1c] sm:$0xf]
      %v570 = vld [vmem:[%s2 + $0x20] sm:$0xf]
      %v571 = vld [vmem:[%s2 + $0x24] sm:$0xf]
      %v572 = vld [vmem:[%s2 + $0x28] sm:$0xf]
      %v573 = vld [vmem:[%s2 + $0x2c] sm:$0xf]
      %v574 = vld [vmem:[%s2 + $0x30] sm:$0xf]
      %v575 = vld [vmem:[%s2 + $0x34] sm:$0xf]
      %v576 = vld [vmem:[%s2 + $0x38] sm:$0xf]
      %v577 = vld [vmem:[%s2 + $0x3c] sm:$0xf]
      %v578 = vld [vmem:[%s3] sm:$0x1]
      %v580 = vlaneseq
      %v581 = vshrl.u32 %v580, 7
      %v582 = vsub.s32 0, %v581
      %v583 = vrot.slane %v578, %v582
      %v593 = vcombine.low %v554, %v555
      %v594 = vcombine.low %v556, %v557
      %v596 = vunpack.c.l.s4 1983009808
      %v597 = vunpack.c.0.s8 %v596
      %v598 = vlaneseq
      %v599 = vshrl.u32 %v598, 7
      %v600 = vsub.s32 %v597, %v599
      %v601 = vrot.slane %v593, %v600
      %v603 = vunpack.c.l.s4 1983009808
      %v604 = vunpack.c.0.s8 %v603
      %v605 = vlaneseq
      %v606 = vshrl.u32 %v605, 7
      %v607 = vsub.s32 %v604, %v606
      %v608 = vrot.slane %v594, %v607
      %v609 = vcombine.low %v601, %v608
      %v610 = vcombine.low %v558, %v559
      %v611 = vcombine.low %v560, %v561
      %v613 = vunpack.c.l.s4 1983009808
      %v614 = vunpack.c.0.s8 %v613
      %v615 = vlaneseq
      %v616 = vshrl.u32 %v615, 7
      %v617 = vsub.s32 %v614, %v616
      %v618 = vrot.slane %v610, %v617
      %v620 = vunpack.c.l.s4 1983009808
      %v621 = vunpack.c.0.s8 %v620
      %v622 = vlaneseq
      %v623 = vshrl.u32 %v622, 7
      %v624 = vsub.s32 %v621, %v623
      %v625 = vrot.slane %v611, %v624
      %v626 = vcombine.low %v618, %v625
      %v645 = vunpack.c.l.b16 %v562
      %v646 = vunpack.c.l.b16 %v563
      %v647 = vunpack.c.l.b16 %v564
      %v648 = vunpack.c.l.b16 %v565
      %v649 = vunpack.c.l.b16 %v566
      %v650 = vunpack.c.l.b16 %v567
      %v651 = vunpack.c.l.b16 %v568
      %v652 = vunpack.c.l.b16 %v569
      %v653 = vunpack.c.l.b16 %v570
      %v654 = vunpack.c.l.b16 %v571
      %v655 = vunpack.c.l.b16 %v572
      %v656 = vunpack.c.l.b16 %v573
      %v657 = vunpack.c.l.b16 %v574
      %v658 = vunpack.c.l.b16 %v575
      %v659 = vunpack.c.l.b16 %v576
      %v660 = vunpack.c.l.b16 %v577
      %v661 = vpack.c.b16 %v646, %v645
      %v662 = vpack.c.b16 %v648, %v647
      %v663 = vpack.c.b16 %v650, %v649
      %v664 = vpack.c.b16 %v652, %v651
      %v665 = vpack.c.b16 %v654, %v653
      %v666 = vpack.c.b16 %v656, %v655
      %v667 = vpack.c.b16 %v658, %v657
      %v668 = vpack.c.b16 %v660, %v659
      %677 = vmatprep.subr.bf16.mxu0 0
      %678 = vmatpush1.bf16.msra.mxu0 %v668
      %679 = vmatprep.subr.bf16.mxu0 0
      %680 = vmatpush1.bf16.msra.mxu0 %v667
      %681 = vmatprep.subr.bf16.mxu0 0
      %682 = vmatpush1.bf16.msra.mxu0 %v666
      %683 = vmatprep.subr.bf16.mxu0 0
      %684 = vmatpush1.bf16.msra.mxu0 %v665
      %685 = vmatprep.subr.bf16.mxu0 0
      %686 = vmatpush1.bf16.msra.mxu0 %v664
      %687 = vmatprep.subr.bf16.mxu0 0
      %688 = vmatpush1.bf16.msra.mxu0 %v663
      %689 = vmatprep.subr.bf16.mxu0 0
      %690 = vmatpush1.bf16.msra.mxu0 %v662
      %691 = vmatprep.subr.bf16.mxu0 0
      %692 = vmatpush1.bf16.msra.mxu0 %v661
      %693 = vmatprep.subr.bf16.mxu0 0
      %694 = vmatpush2.bf16.msra.mxu0 0
      %695 = vmatprep.subr.bf16.mxu0 0
      %696 = vmatpush2.bf16.msra.mxu0 0
      %697 = vmatprep.subr.bf16.mxu0 0
      %698 = vmatpush2.bf16.msra.mxu0 0
      %699 = vmatprep.subr.bf16.mxu0 0
      %700 = vmatpush2.bf16.msra.mxu0 0
      %701 = vmatprep.subr.bf16.mxu0 0
      %702 = vmatpush2.bf16.msra.mxu0 0
      %703 = vmatprep.subr.bf16.mxu0 0
      %704 = vmatpush2.bf16.msra.mxu0 0
      %705 = vmatprep.subr.bf16.mxu0 0
      %706 = vmatpush2.bf16.msra.mxu0 0
      %707 = vmatprep.subr.bf16.mxu0 0
      %708 = vmatpush2.bf16.msra.mxu0 0
      %709 = vmatprep.mubr.bf16.mxu0 0
      %710 = vmatmul.mubr.bf16.gmra.mxu0 %v609
      %v711 = vpop.f32.mrf.mxu0
      %v712 = vadd.f32 %v583, %v711
      %v713 = vpop.f32.mrf.mxu0
      %v714 = vpop.f32.mrf.mxu0
      %v715 = vadd.f32 %v583, %v714
      %v716 = vpop.f32.mrf.mxu0
      %717 = vmatprep.mubr.bf16.mxu0 0
      %718 = vmatmul.mubr.bf16.gmra.mxu0 %v626
      %v719 = vpop.f32.mrf.mxu0
      %v720 = vadd.f32 %v583, %v719
      %v721 = vpop.f32.mrf.mxu0
      %v722 = vpop.f32.mrf.mxu0
      %v723 = vadd.f32 %v583, %v722
      %v724 = vpop.f32.mrf.mxu0
      %725 = vdwg.mxu0
      %v726 = vmax.f32 %v712, 0.0
      %v727 = vmax.f32 %v715, 0.0
      %v728 = vmax.f32 %v720, 0.0
      %v729 = vmax.f32 %v723, 0.0
      %v730 = vmin.f32 %v726, 6.0
      %v731 = vmin.f32 %v727, 6.0
      %v732 = vmin.f32 %v728, 6.0
      %v733 = vmin.f32 %v729, 6.0
      %v738 = vcombine.high %v730, %v730
      %v739 = vcombine.high %v731, %v731
      %v740 = vcombine.high %v732, %v732
      %v741 = vcombine.high %v733, %v733
      %s746 = scalar_lea.vmem [#allocation2], 8
      %747 = vst [vmem:[%s746 + $0x1] sm:$0xf] %v730
      %748 = vst [vmem:[%s746 + $0x9] sm:$0xf] %v738
      %749 = vst [vmem:[%s746 + $0x11] sm:$0xf] %v731
      %750 = vst [vmem:[%s746 + $0x19] sm:$0xf] %v739
      %751 = vst [vmem:[%s746 + $0x21] sm:$0xf] %v732
      %752 = vst [vmem:[%s746 + $0x29] sm:$0xf] %v740
      %753 = vst [vmem:[%s746 + $0x31] sm:$0xf] %v733
      %754 = vst [vmem:[%s746 + $0x39] sm:$0xf] %v741
      %v755 = vld [vmem:[#allocation2] sm:$0xf]
      %v756 = vld [vmem:[#allocation2 + $0x10] sm:$0xf]
      %v757 = vld [vmem:[#allocation2 + $0x20] sm:$0xf]
      %v758 = vld [vmem:[#allocation2 + $0x30] sm:$0xf]
      %v759 = vld [vmem:[%s4] sm:$0x1]
      %v760 = vlaneseq
      %v761 = vshrl.u32 %v760, 7
      %v762 = vsub.s32 0, %v761
      %v763 = vrot.slane %v759, %v762
      %v764 = vmul.f32 %v755, %v763
      %v765 = vmul.f32 %v756, %v763
      %v766 = vmul.f32 %v757, %v763
      %v767 = vmul.f32 %v758, %v763
      %v768 = vadd.f32 %v764, 0.0
      %v769 = vadd.f32 %v765, 0.0
      %v770 = vadd.f32 %v766, 0.0
      %v771 = vadd.f32 %v767, 0.0
      %v772 = vld [vmem:[#allocation3] sm:$0xf]
      %v773 = vld [vmem:[#allocation3 + $0x10] sm:$0xf]
      %v774 = vld [vmem:[#allocation3 + $0x20] sm:$0xf]
      %v775 = vld [vmem:[#allocation3 + $0x30] sm:$0xf]
      %v776 = vld [vmem:[%s4 + $0x1] sm:$0x1]
      %v777 = vlaneseq
      %v778 = vshrl.u32 %v777, 7
      %v779 = vsub.s32 0, %v778
      %v780 = vrot.slane %v776, %v779
      %v781 = vmul.f32 %v772, %v780
      %v782 = vmul.f32 %v773, %v780
      %v783 = vmul.f32 %v774, %v780
      %v784 = vmul.f32 %v775, %v780
      %v785 = vadd.f32 %v768, %v781
      %v786 = vadd.f32 %v769, %v782
      %v787 = vadd.f32 %v770, %v783
      %v788 = vadd.f32 %v771, %v784
      %v789 = vld [vmem:[#allocation2 + $0x1] sm:$0xf]
      %v790 = vld [vmem:[#allocation2 + $0x11] sm:$0xf]
      %v791 = vld [vmem:[#allocation2 + $0x21] sm:$0xf]
      %v792 = vld [vmem:[#allocation2 + $0x31] sm:$0xf]
      %v793 = vld [vmem:[%s4 + $0x2] sm:$0x1]
      %v794 = vlaneseq
      %v795 = vshrl.u32 %v794, 7
      %v796 = vsub.s32 0, %v795
      %v797 = vrot.slane %v793, %v796
      %v798 = vmul.f32 %v789, %v797
      %v799 = vmul.f32 %v790, %v797
      %v800 = vmul.f32 %v791, %v797
      %v801 = vmul.f32 %v792, %v797
      %v802 = vadd.f32 %v785, %v798
      %v803 = vadd.f32 %v786, %v799
      %v804 = vadd.f32 %v787, %v800
      %v805 = vadd.f32 %v788, %v801
      %v806 = vld [vmem:[%s746] sm:$0xf]
      %v807 = vld [vmem:[%s746 + $0x10] sm:$0xf]
      %v808 = vld [vmem:[%s746 + $0x20] sm:$0xf]
      %v809 = vld [vmem:[%s746 + $0x30] sm:$0xf]
      %v810 = vld [vmem:[%s4 + $0x3] sm:$0x1]
      %v811 = vlaneseq
      %v812 = vshrl.u32 %v811, 7
      %v813 = vsub.s32 0, %v812
      %v814 = vrot.slane %v810, %v813
      %v815 = vmul.f32 %v806, %v814
      %v816 = vmul.f32 %v807, %v814
      %v817 = vmul.f32 %v808, %v814
      %v818 = vmul.f32 %v809, %v814
      %v819 = vadd.f32 %v802, %v815
      %v820 = vadd.f32 %v803, %v816
      %v821 = vadd.f32 %v804, %v817
      %v822 = vadd.f32 %v805, %v818
      %v823 = vld [vmem:[%s545] sm:$0xf]
      %v824 = vld [vmem:[%s545 + $0x10] sm:$0xf]
      %v825 = vld [vmem:[%s545 + $0x20] sm:$0xf]
      %v826 = vld [vmem:[%s545 + $0x30] sm:$0xf]
      %v827 = vld [vmem:[%s4 + $0x4] sm:$0x1]
      %v828 = vlaneseq
      %v829 = vshrl.u32 %v828, 7
      %v830 = vsub.s32 0, %v829
      %v831 = vrot.slane %v827, %v830
      %v832 = vmul.f32 %v823, %v831
      %v833 = vmul.f32 %v824, %v831
      %v834 = vmul.f32 %v825, %v831
      %v835 = vmul.f32 %v826, %v831
      %v836 = vadd.f32 %v819, %v832
      %v837 = vadd.f32 %v820, %v833
      %v838 = vadd.f32 %v821, %v834
      %v839 = vadd.f32 %v822, %v835
      %v840 = vld [vmem:[%s746 + $0x1] sm:$0xf]
      %v841 = vld [vmem:[%s746 + $0x11] sm:$0xf]
      %v842 = vld [vmem:[%s746 + $0x21] sm:$0xf]
      %v843 = vld [vmem:[%s746 + $0x31] sm:$0xf]
      %v844 = vld [vmem:[%s4 + $0x5] sm:$0x1]
      %v845 = vlaneseq
      %v846 = vshrl.u32 %v845, 7
      %v847 = vsub.s32 0, %v846
      %v848 = vrot.slane %v844, %v847
      %v849 = vmul.f32 %v840, %v848
      %v850 = vmul.f32 %v841, %v848
      %v851 = vmul.f32 %v842, %v848
      %v852 = vmul.f32 %v843, %v848
      %v853 = vadd.f32 %v836, %v849
      %v854 = vadd.f32 %v837, %v850
      %v855 = vadd.f32 %v838, %v851
      %v856 = vadd.f32 %v839, %v852
      %s857 = scalar_lea.vmem [#allocation2], 16
      %v858 = vld [vmem:[%s857] sm:$0xf]
      %v859 = vld [vmem:[%s857 + $0x10] sm:$0xf]
      %v860 = vld [vmem:[%s857 + $0x20] sm:$0xf]
      %v861 = vld [vmem:[%s857 + $0x30] sm:$0xf]
      %v862 = vld [vmem:[%s4 + $0x6] sm:$0x1]
      %v863 = vlaneseq
      %v864 = vshrl.u32 %v863, 7
      %v865 = vsub.s32 0, %v864
      %v866 = vrot.slane %v862, %v865
      %v867 = vmul.f32 %v858, %v866
      %v868 = vmul.f32 %v859, %v866
      %v869 = vmul.f32 %v860, %v866
      %v870 = vmul.f32 %v861, %v866
      %v871 = vadd.f32 %v853, %v867
      %v872 = vadd.f32 %v854, %v868
      %v873 = vadd.f32 %v855, %v869
      %v874 = vadd.f32 %v856, %v870
      %s875 = scalar_lea.vmem [#allocation3], 16
      %v876 = vld [vmem:[%s875] sm:$0xf]
      %v877 = vld [vmem:[%s875 + $0x10] sm:$0xf]
      %v878 = vld [vmem:[%s875 + $0x20] sm:$0xf]
      %v879 = vld [vmem:[%s875 + $0x30] sm:$0xf]
      %v880 = vld [vmem:[%s4 + $0x7] sm:$0x1]
      %v881 = vlaneseq
      %v882 = vshrl.u32 %v881, 7
      %v883 = vsub.s32 0, %v882
      %v884 = vrot.slane %v880, %v883
      %v885 = vmul.f32 %v876, %v884
      %v886 = vmul.f32 %v877, %v884
      %v887 = vmul.f32 %v878, %v884
      %v888 = vmul.f32 %v879, %v884
      %v889 = vadd.f32 %v871, %v885
      %v890 = vadd.f32 %v872, %v886
      %v891 = vadd.f32 %v873, %v887
      %v892 = vadd.f32 %v874, %v888
      %v893 = vld [vmem:[%s857 + $0x1] sm:$0xf]
      %v894 = vld [vmem:[%s857 + $0x11] sm:$0xf]
      %v895 = vld [vmem:[%s857 + $0x21] sm:$0xf]
      %v896 = vld [vmem:[%s857 + $0x31] sm:$0xf]
      %v897 = vld [vmem:[%s4 + $0x8] sm:$0x1]
      %v898 = vlaneseq
      %v899 = vshrl.u32 %v898, 7
      %v900 = vsub.s32 0, %v899
      %v901 = vrot.slane %v897, %v900
      %v902 = vmul.f32 %v893, %v901
      %v903 = vmul.f32 %v894, %v901
      %v904 = vmul.f32 %v895, %v901
      %v905 = vmul.f32 %v896, %v901
      %v906 = vadd.f32 %v889, %v902
      %v907 = vadd.f32 %v890, %v903
      %v908 = vadd.f32 %v891, %v904
      %v909 = vadd.f32 %v892, %v905
      %v910 = vld [vmem:[%s5] sm:$0x1]
      %v912 = vlaneseq
      %v913 = vshrl.u32 %v912, 7
      %v914 = vsub.s32 0, %v913
      %v915 = vrot.slane %v910, %v914
      %v917 = vadd.f32 %v906, %v915
      %v918 = vadd.f32 %v907, %v915
      %v919 = vadd.f32 %v908, %v915
      %v920 = vadd.f32 %v909, %v915
      %v921 = vmax.f32 %v917, 0.0
      %v922 = vmax.f32 %v918, 0.0
      %v923 = vmax.f32 %v919, 0.0
      %v924 = vmax.f32 %v920, 0.0
      %v925 = vmin.f32 %v921, 6.0
      %v926 = vmin.f32 %v922, 6.0
      %v927 = vmin.f32 %v923, 6.0
      %v928 = vmin.f32 %v924, 6.0
      %v933 = vcombine.low %v925, %v926
      %v934 = vcombine.low %v927, %v928
      %v937 = vpack.c.bf16 %v934, %v933
      %v938 = vld [vmem:[%s6] sm:$0xf]
      %v939 = vld [vmem:[%s6 + $0x4] sm:$0xf]
      %v940 = vld [vmem:[%s6 + $0x8] sm:$0xf]
      %v941 = vld [vmem:[%s6 + $0xc] sm:$0xf]
      %v942 = vld [vmem:[%s6 + $0x10] sm:$0xf]
      %v943 = vld [vmem:[%s6 + $0x14] sm:$0xf]
      %v944 = vld [vmem:[%s6 + $0x18] sm:$0xf]
      %v945 = vld [vmem:[%s6 + $0x1c] sm:$0xf]
      %v946 = vld [vmem:[%s6 + $0x20] sm:$0xf]
      %v947 = vld [vmem:[%s6 + $0x24] sm:$0xf]
      %v948 = vld [vmem:[%s6 + $0x28] sm:$0xf]
      %v949 = vld [vmem:[%s6 + $0x2c] sm:$0xf]
      %v950 = vld [vmem:[%s6 + $0x30] sm:$0xf]
      %v951 = vld [vmem:[%s6 + $0x34] sm:$0xf]
      %v952 = vld [vmem:[%s6 + $0x38] sm:$0xf]
      %v953 = vld [vmem:[%s6 + $0x3c] sm:$0xf]
      %v954 = vld [vmem:[%s7] sm:$0x1]
      %v956 = vlaneseq
      %v957 = vshrl.u32 %v956, 7
      %v958 = vsub.s32 0, %v957
      %v959 = vrot.slane %v954, %v958
      %v977 = vunpack.c.l.b16 %v938
      %v978 = vunpack.c.l.b16 %v939
      %v979 = vunpack.c.l.b16 %v940
      %v980 = vunpack.c.l.b16 %v941
      %v981 = vunpack.c.l.b16 %v942
      %v982 = vunpack.c.l.b16 %v943
      %v983 = vunpack.c.l.b16 %v944
      %v984 = vunpack.c.l.b16 %v945
      %v985 = vunpack.c.l.b16 %v946
      %v986 = vunpack.c.l.b16 %v947
      %v987 = vunpack.c.l.b16 %v948
      %v988 = vunpack.c.l.b16 %v949
      %v989 = vunpack.c.l.b16 %v950
      %v990 = vunpack.c.l.b16 %v951
      %v991 = vunpack.c.l.b16 %v952
      %v992 = vunpack.c.l.b16 %v953
      %v993 = vpack.c.b16 %v978, %v977
      %v994 = vpack.c.b16 %v980, %v979
      %v995 = vpack.c.b16 %v982, %v981
      %v996 = vpack.c.b16 %v984, %v983
      %v997 = vpack.c.b16 %v986, %v985
      %v998 = vpack.c.b16 %v988, %v987
      %v999 = vpack.c.b16 %v990, %v989
      %v1000 = vpack.c.b16 %v992, %v991
      %1009 = vmatprep.subr.bf16.mxu0 0
      %1010 = vmatpush1.bf16.msra.mxu0 %v1000
      %1011 = vmatprep.subr.bf16.mxu0 0
      %1012 = vmatpush1.bf16.msra.mxu0 %v999
      %1013 = vmatprep.subr.bf16.mxu0 0
      %1014 = vmatpush1.bf16.msra.mxu0 %v998
      %1015 = vmatprep.subr.bf16.mxu0 0
      %1016 = vmatpush1.bf16.msra.mxu0 %v997
      %1017 = vmatprep.subr.bf16.mxu0 0
      %1018 = vmatpush1.bf16.msra.mxu0 %v996
      %1019 = vmatprep.subr.bf16.mxu0 0
      %1020 = vmatpush1.bf16.msra.mxu0 %v995
      %1021 = vmatprep.subr.bf16.mxu0 0
      %1022 = vmatpush1.bf16.msra.mxu0 %v994
      %1023 = vmatprep.subr.bf16.mxu0 0
      %1024 = vmatpush1.bf16.msra.mxu0 %v993
      %1025 = vmatprep.subr.bf16.mxu0 0
      %1026 = vmatpush2.bf16.msra.mxu0 0
      %1027 = vmatprep.subr.bf16.mxu0 0
      %1028 = vmatpush2.bf16.msra.mxu0 0
      %1029 = vmatprep.subr.bf16.mxu0 0
      %1030 = vmatpush2.bf16.msra.mxu0 0
      %1031 = vmatprep.subr.bf16.mxu0 0
      %1032 = vmatpush2.bf16.msra.mxu0 0
      %1033 = vmatprep.subr.bf16.mxu0 0
      %1034 = vmatpush2.bf16.msra.mxu0 0
      %1035 = vmatprep.subr.bf16.mxu0 0
      %1036 = vmatpush2.bf16.msra.mxu0 0
      %1037 = vmatprep.subr.bf16.mxu0 0
      %1038 = vmatpush2.bf16.msra.mxu0 0
      %1039 = vmatprep.subr.bf16.mxu0 0
      %1040 = vmatpush2.bf16.msra.mxu0 0
      %1041 = vmatprep.mubr.bf16.mxu0 0
      %1042 = vmatmul.mubr.bf16.gmra.mxu0 %v937
      %v1043 = vpop.f32.mrf.mxu0
      %v1044 = vadd.f32 %v959, %v1043
      %v1045 = vpop.f32.mrf.mxu0
      %v1046 = vpop.f32.mrf.mxu0
      %v1047 = vadd.f32 %v959, %v1046
      %v1048 = vpop.f32.mrf.mxu0
      %1049 = vdwg.mxu0
      %v1052 = vcombine.high %v1044, %v1044
      %v1053 = vcombine.high %v1047, %v1047
      %v1056 = vpack.c.bf16 %v1044, %v1044
      %v1057 = vpack.c.bf16 %v1052, %v1052
      %v1058 = vpack.c.bf16 %v1047, %v1047
      %v1059 = vpack.c.bf16 %v1053, %v1053
      %1060 = vst [vmem:[%s325] sm:$0x3] %v1056
      %1061 = vst [vmem:[%s325 + $0x2] sm:$0x3] %v1057
      %1062 = vst [vmem:[%s325 + $0x4] sm:$0x3] %v1058
      %1063 = vst [vmem:[%s325 + $0x6] sm:$0x3] %v1059
      %p1064 = scmp.lt.s32.totalorder %s19, 1
      %s1065 = scalar_select %p1064, %s19, 1
      %s1066 = smul.addr %s1065, 4
      %s1067 = smul.addr %s1066, 2
      %s1068 = scalar_lea.vmem %s8, %s1067
      // Predicated region
      $region53: #{_lambda_.8} parent=51 // pred_check
        %p1069 = pneg %p215
      $region54: #{_lambda_.8} parent=51 // pred_check_branch
        %1071 = sbr.rel (%p1069) target = $region56
      $region55: #{_lambda_.8} parent=51 // pred_region
        _
      $region56: #{_lambda_.8} parent=51 // pred_fallthru
        _
    $region52: #{_lambda_.8} parent=5 // pred_fallthru
      _
    %p1072 = scmp.le.s32.totalorder 2, %s14
    // Predicated region
    $region57: #{_lambda_.8} parent=5 // pred_check
      %p1073 = pneg %p1072
    $region58: #{_lambda_.8} parent=5 // pred_check_branch
      %1075 = sbr.rel (%p1073) target = $region60
    $region59: #{_lambda_.8} parent=5 // pred_region
      %s1076 = ssub.s32 %s14, 2
      // Predicated region
      $region61: #{_lambda_.8} parent=59 // pred_check
        %p1077 = pneg %p221
      $region62: #{_lambda_.8} parent=59 // pred_check_branch
        %1079 = sbr.rel (%p1077) target = $region64
      $region63: #{_lambda_.8} parent=59 // pred_region
        %p1080 = scmp.lt.s32.totalorder %s20, 1
        %s1081 = scalar_select %p1080, %s20, 1
        %s1082 = smul.addr %s1081, 4
        %s1083 = smul.addr %s1082, 2
        %s1084 = scalar_lea.vmem %s8, %s1083
      $region64: #{_lambda_.8} parent=59 // pred_fallthru
        _
    $region60: #{_lambda_.8} parent=5 // pred_fallthru
      _
  $region6: #{_lambda_.8} parent=0 // loop_footer
    %s18 = sadd.s32 1, %s14
  $region7: #{_lambda_.8} parent=0 // loop_footer_branch
    %13 = sbr.rel target = $region3
  $region8: #{_lambda_.8} parent=0 // loop_exit
    _

// kernel: _lambda_.11
$region0: #{_lambda_.11}
  #allocation0 [shape = 'u32[]', space=smem, size = 0x4, offset = 0x4, fixed_abs, tag = 'smem constant byte address 0x4 - core index']
  #allocation1 [shape = 'u32[144,128]{1,0:T(1,128)}', space=vmem, size = 0x12000, scoped, tag = 'internal scratch']
  %s0 = inlined_call_operand.vmem [shape: bf16[2,2,2,128], index: 0, kind: input, shape index: {}]
  %s1 = inlined_call_operand.vmem [shape: bf16[128,128], index: 1, kind: input, shape index: {}]
  %s2 = inlined_call_operand.vmem [shape: f32[1,128], index: 2, kind: input, shape index: {}, may-alias: {2,4}]
  %s3 = inlined_call_operand.vmem [shape: bf16[128,128], index: 3, kind: input, shape index: {}]
  %s4 = inlined_call_operand.vmem [shape: f32[1,128], index: 4, kind: input, shape index: {}, may-alias: {2,4}]
  %s5 = inlined_call_operand.vmem [shape: f32[2,1,128], index: 5, kind: output, shape index: {}]
  %s6 = sld [smem:[#allocation0]]
  $region53: #{_lambda_.11} parent=0
    _
  %s8 = ssub.s32 1, %s6
  %s9 = scalar_select 0, %s8, %s6
  loop: start=0, step=1, limit=4
  $region2: #{_lambda_.11} parent=0 // loop_pre_header
    _
  $region3: #{_lambda_.11} parent=0 // loop_header
    %s11 = sphi 0, %s15
    %p12 = scmp.ge.s32.totalorder %s11, 4
    %s21 = sphi 0, %s23
    %s24 = sphi 0, %s21
    %s25 = sphi 0, %s24
    %s41 = sphi 0, %s25
    %s45 = sphi 0, %s45
    %s47 = sphi 0, %s45
    %s48 = sphi 0, %s47
    %s62 = sphi 0, %s48
    %s66 = sphi 0, %s66
    %s68 = sphi 0, %s66
    %s69 = sphi 0, %s68
    %s83 = sphi 0, %s69
    %s87 = sphi 0, %s87
    %s89 = sphi 0, %s87
    %s90 = sphi 0, %s89
    %s104 = sphi 0, %s90
    %s108 = sphi 0, %s108
    %s110 = sphi 0, %s108
    %s111 = sphi 0, %s110
    %s125 = sphi 0, %s111
    %s131 = sphi 0, %s133
    %s134 = sphi 0, %s131
    %s135 = sphi 0, %s134
    %s151 = sphi 0, %s135
  $region4: #{_lambda_.11} parent=0 // loop_header_branch
    %14 = sbr.rel (%p12) target = $region8
  $region5: #{_lambda_.11} parent=0 // loop_body
    %s16 = ssub.s32 %s11, 1
    %s17 = ssub.s32 %s11, 2
    %s18 = sadd.s32 %s11, 1
    %s19 = ssub.s32 %s11, %s18
    %p20 = scmp.eq.s32.totalorder %s19, 0
    %s22 = sadd.s32 %s21, 1
    %s23 = scalar_select %p20, %s21, %s22
    %p26 = pneg %p20
    %p27 = scmp.eq.s32.totalorder %s11, 1
    %p28 = por %p26, %p27
    %p29 = scmp.ne.s32.totalorder %s21, %s24
    %p30 = scmp.eq.s32.totalorder %s11, 0
    %p31 = por %p29, %p30
    %p32 = scmp.ne.s32.totalorder %s21, %s24
    %p33 = scmp.eq.s32.totalorder %s16, 1
    %p34 = por %p32, %p33
    %p35 = scmp.ne.s32.totalorder %s24, %s25
    %p36 = scmp.eq.s32.totalorder %s16, 0
    %p37 = por %p35, %p36
    %p38 = scmp.ne.s32.totalorder %s24, %s25
    %p39 = scmp.eq.s32.totalorder %s17, 1
    %p40 = por %p38, %p39
    %p42 = scmp.ne.s32.totalorder %s25, %s41
    %p43 = scmp.eq.s32.totalorder %s17, 0
    %p44 = por %p42, %p43
    %s46 = sadd.s32 %s45, 1
    %p49 = scmp.eq.s32.totalorder %s11, 1
    %p50 = scmp.ne.s32.totalorder %s45, %s47
    %p51 = scmp.eq.s32.totalorder %s11, 0
    %p52 = por %p50, %p51
    %p53 = scmp.ne.s32.totalorder %s45, %s47
    %p54 = scmp.eq.s32.totalorder %s16, 1
    %p55 = por %p53, %p54
    %p56 = scmp.ne.s32.totalorder %s47, %s48
    %p57 = scmp.eq.s32.totalorder %s16, 0
    %p58 = por %p56, %p57
    %p59 = scmp.ne.s32.totalorder %s47, %s48
    %p60 = scmp.eq.s32.totalorder %s17, 1
    %p61 = por %p59, %p60
    %p63 = scmp.ne.s32.totalorder %s48, %s62
    %p64 = scmp.eq.s32.totalorder %s17, 0
    %p65 = por %p63, %p64
    %s67 = sadd.s32 %s66, 1
    %p70 = scmp.eq.s32.totalorder %s11, 1
    %p71 = scmp.ne.s32.totalorder %s66, %s68
    %p72 = scmp.eq.s32.totalorder %s11, 0
    %p73 = por %p71, %p72
    %p74 = scmp.ne.s32.totalorder %s66, %s68
    %p75 = scmp.eq.s32.totalorder %s16, 1
    %p76 = por %p74, %p75
    %p77 = scmp.ne.s32.totalorder %s68, %s69
    %p78 = scmp.eq.s32.totalorder %s16, 0
    %p79 = por %p77, %p78
    %p80 = scmp.ne.s32.totalorder %s68, %s69
    %p81 = scmp.eq.s32.totalorder %s17, 1
    %p82 = por %p80, %p81
    %p84 = scmp.ne.s32.totalorder %s69, %s83
    %p85 = scmp.eq.s32.totalorder %s17, 0
    %p86 = por %p84, %p85
    %s88 = sadd.s32 %s87, 1
    %p91 = scmp.eq.s32.totalorder %s11, 1
    %p92 = scmp.ne.s32.totalorder %s87, %s89
    %p93 = scmp.eq.s32.totalorder %s11, 0
    %p94 = por %p92, %p93
    %p95 = scmp.ne.s32.totalorder %s87, %s89
    %p96 = scmp.eq.s32.totalorder %s16, 1
    %p97 = por %p95, %p96
    %p98 = scmp.ne.s32.totalorder %s89, %s90
    %p99 = scmp.eq.s32.totalorder %s16, 0
    %p100 = por %p98, %p99
    %p101 = scmp.ne.s32.totalorder %s89, %s90
    %p102 = scmp.eq.s32.totalorder %s17, 1
    %p103 = por %p101, %p102
    %p105 = scmp.ne.s32.totalorder %s90, %s104
    %p106 = scmp.eq.s32.totalorder %s17, 0
    %p107 = por %p105, %p106
    %s109 = sadd.s32 %s108, 1
    %p112 = scmp.eq.s32.totalorder %s11, 1
    %p113 = scmp.ne.s32.totalorder %s108, %s110
    %p114 = scmp.eq.s32.totalorder %s11, 0
    %p115 = por %p113, %p114
    %p116 = scmp.ne.s32.totalorder %s108, %s110
    %p117 = scmp.eq.s32.totalorder %s16, 1
    %p118 = por %p116, %p117
    %p119 = scmp.ne.s32.totalorder %s110, %s111
    %p120 = scmp.eq.s32.totalorder %s16, 0
    %p121 = por %p119, %p120
    %p122 = scmp.ne.s32.totalorder %s110, %s111
    %p123 = scmp.eq.s32.totalorder %s17, 1
    %p124 = por %p122, %p123
    %p126 = scmp.ne.s32.totalorder %s111, %s125
    %p127 = scmp.eq.s32.totalorder %s17, 0
    %p128 = por %p126, %p127
    %s129 = ssub.s32 %s11, %s18
    %p130 = scmp.eq.s32.totalorder %s129, 0
    %s132 = sadd.s32 %s131, 1
    %s133 = scalar_select %p130, %s131, %s132
    %p136 = pneg %p130
    %p137 = scmp.eq.s32.totalorder %s11, 1
    %p138 = por %p136, %p137
    %p139 = scmp.ne.s32.totalorder %s131, %s134
    %p140 = scmp.eq.s32.totalorder %s11, 0
    %p141 = por %p139, %p140
    %p142 = scmp.ne.s32.totalorder %s131, %s134
    %p143 = scmp.eq.s32.totalorder %s16, 1
    %p144 = por %p142, %p143
    %p145 = scmp.ne.s32.totalorder %s134, %s135
    %p146 = scmp.eq.s32.totalorder %s16, 0
    %p147 = por %p145, %p146
    %p148 = scmp.ne.s32.totalorder %s134, %s135
    %p149 = scmp.eq.s32.totalorder %s17, 1
    %p150 = por %p148, %p149
    %p152 = scmp.ne.s32.totalorder %s135, %s151
    %p153 = scmp.eq.s32.totalorder %s17, 0
    %p154 = por %p152, %p153
    %p155 = scmp.le.s32.totalorder 1, %s11
    %p156 = scmp.lt.s32.totalorder %s11, 3
    %p157 = pnand %p155, %p156
    %p158 = pneg %p157
    // Predicated region
    $region9: #{_lambda_.11} parent=5 // pred_check
      _
    $region10: #{_lambda_.11} parent=5 // pred_check_branch
      %160 = sbr.rel (%p157) target = $region12
    $region11: #{_lambda_.11} parent=5 // pred_region
      %s161 = ssub.s32 %s11, 1
      // Predicated region
      $region13: #{_lambda_.11} parent=11 // pred_check
        %p162 = pneg %p58
      $region14: #{_lambda_.11} parent=11 // pred_check_branch
        %164 = sbr.rel (%p162) target = $region16
      $region15: #{_lambda_.11} parent=11 // pred_region
        _
      $region16: #{_lambda_.11} parent=11 // pred_fallthru
        _
      // Predicated region
      $region17: #{_lambda_.11} parent=11 // pred_check
        %p165 = pneg %p79
      $region18: #{_lambda_.11} parent=11 // pred_check_branch
        %167 = sbr.rel (%p165) target = $region20
      $region19: #{_lambda_.11} parent=11 // pred_region
        _
      $region20: #{_lambda_.11} parent=11 // pred_fallthru
        _
      // Predicated region
      $region21: #{_lambda_.11} parent=11 // pred_check
        %p168 = pneg %p100
      $region22: #{_lambda_.11} parent=11 // pred_check_branch
        %170 = sbr.rel (%p168) target = $region24
      $region23: #{_lambda_.11} parent=11 // pred_region
        _
      $region24: #{_lambda_.11} parent=11 // pred_fallthru
        _
      // Predicated region
      $region25: #{_lambda_.11} parent=11 // pred_check
        %p171 = pneg %p121
      $region26: #{_lambda_.11} parent=11 // pred_check_branch
        %173 = sbr.rel (%p171) target = $region28
      $region27: #{_lambda_.11} parent=11 // pred_region
        _
      $region28: #{_lambda_.11} parent=11 // pred_fallthru
        _
    $region12: #{_lambda_.11} parent=5 // pred_fallthru
      _
    %p174 = scmp.lt.s32.totalorder %s11, 2
    // Predicated region
    $region29: #{_lambda_.11} parent=5 // pred_check
      %p175 = pneg %p174
    $region30: #{_lambda_.11} parent=5 // pred_check_branch
      %177 = sbr.rel (%p175) target = $region32
    $region31: #{_lambda_.11} parent=5 // pred_region
      // Predicated region
      $region33: #{_lambda_.11} parent=31 // pred_check
        %p178 = pneg %p31
      $region34: #{_lambda_.11} parent=31 // pred_check_branch
        %180 = sbr.rel (%p178) target = $region36
      $region35: #{_lambda_.11} parent=31 // pred_region
        %p181 = scmp.lt.s32.totalorder %s11, 1
        %s182 = scalar_select %p181, %s11, 1
        %s183 = smul.addr %s182, 2
        %s184 = scalar_lea.vmem %s0, %s183
      $region36: #{_lambda_.11} parent=31 // pred_fallthru
        _
    $region32: #{_lambda_.11} parent=5 // pred_fallthru
      _
    %p185 = scmp.le.s32.totalorder 1, %s11
    %p186 = scmp.lt.s32.totalorder %s11, 3
    %p187 = pnand %p185, %p186
    %p188 = pneg %p187
    // Predicated region
    $region37: #{_lambda_.11} parent=5 // pred_check
      _
    $region38: #{_lambda_.11} parent=5 // pred_check_branch
      %190 = sbr.rel (%p187) target = $region40
    $region39: #{_lambda_.11} parent=5 // pred_region
      %s191 = ssub.s32 %s11, 1
      %p192 = scmp.lt.s32.totalorder %s16, 1
      %s193 = scalar_select %p192, %s16, 1
      %s194 = smul.addr %s193, 2
      %s195 = scalar_lea.vmem %s0, %s194
      %p196 = pneg %p37
      %p197 = pneg %p34
      %p198 = pneg %p58
      %p199 = pneg %p55
      %p200 = pneg %p79
      %p201 = pneg %p76
      %p202 = pneg %p100
      %p203 = pneg %p97
      %p204 = pneg %p121
      %p205 = pneg %p118
      %p206 = pneg %p147
      %p207 = pneg %p144
      %p208 = scmp.lt.s32.totalorder %s16, 1
      %s209 = scalar_select %p208, %s16, 1
      %s210 = scalar_lea.vmem %s5, %s209
      %p211 = scmp.lt.s32.totalorder %s16, 1
      %s212 = scalar_select %p211, %s16, 1
      %s213 = smul.addr %s212, 2
      %s214 = scalar_lea.vmem %s0, %s213
      %p215 = scmp.lt.s32.totalorder %s16, 1
      %s216 = scalar_select %p215, %s16, 1
      %s217 = scalar_lea.vmem %s5, %s216
      %v219 = vld [vmem:[%s214] sm:$0x1]
      %v220 = vld [vmem:[%s214 + $0x1] sm:$0x1]
      %v221 = vld [vmem:[%s1] sm:$0xf]
      %v222 = vld [vmem:[%s1 + $0x4] sm:$0xf]
      %v223 = vld [vmem:[%s1 + $0x8] sm:$0xf]
      %v224 = vld [vmem:[%s1 + $0xc] sm:$0xf]
      %v225 = vld [vmem:[%s1 + $0x10] sm:$0xf]
      %v226 = vld [vmem:[%s1 + $0x14] sm:$0xf]
      %v227 = vld [vmem:[%s1 + $0x18] sm:$0xf]
      %v228 = vld [vmem:[%s1 + $0x1c] sm:$0xf]
      %v229 = vld [vmem:[%s1 + $0x20] sm:$0xf]
      %v230 = vld [vmem:[%s1 + $0x24] sm:$0xf]
      %v231 = vld [vmem:[%s1 + $0x28] sm:$0xf]
      %v232 = vld [vmem:[%s1 + $0x2c] sm:$0xf]
      %v233 = vld [vmem:[%s1 + $0x30] sm:$0xf]
      %v234 = vld [vmem:[%s1 + $0x34] sm:$0xf]
      %v235 = vld [vmem:[%s1 + $0x38] sm:$0xf]
      %v236 = vld [vmem:[%s1 + $0x3c] sm:$0xf]
      %v237 = vld [vmem:[%s2] sm:$0x1]
      %v239 = vlaneseq
      %v240 = vshrl.u32 %v239, 7
      %v241 = vsub.s32 0, %v240
      %v242 = vrot.slane %v237, %v241
      %v246 = vcombine.low %v219, %v220
      %v248 = vunpack.c.l.s4 1966171168
      %v249 = vunpack.c.0.s8 %v248
      %v250 = vlaneseq
      %v251 = vshrl.u32 %v250, 7
      %v252 = vsub.s32 %v249, %v251
      %v253 = vrot.slane %v246, %v252
      %v255 = vunpack.c.l.s4 1966171168
      %v256 = vunpack.c.0.s8 %v255
      %v257 = vlaneseq
      %v258 = vshrl.u32 %v257, 7
      %v259 = vsub.s32 %v256, %v258
      %v260 = vrot.slane %v253, %v259
      %v278 = vunpack.c.l.b16 %v221
      %v279 = vunpack.c.l.b16 %v222
      %v280 = vunpack.c.l.b16 %v223
      %v281 = vunpack.c.l.b16 %v224
      %v282 = vunpack.c.l.b16 %v225
      %v283 = vunpack.c.l.b16 %v226
      %v284 = vunpack.c.l.b16 %v227
      %v285 = vunpack.c.l.b16 %v228
      %v286 = vunpack.c.l.b16 %v229
      %v287 = vunpack.c.l.b16 %v230
      %v288 = vunpack.c.l.b16 %v231
      %v289 = vunpack.c.l.b16 %v232
      %v290 = vunpack.c.l.b16 %v233
      %v291 = vunpack.c.l.b16 %v234
      %v292 = vunpack.c.l.b16 %v235
      %v293 = vunpack.c.l.b16 %v236
      %v294 = vpack.c.b16 %v279, %v278
      %v295 = vpack.c.b16 %v281, %v280
      %v296 = vpack.c.b16 %v283, %v282
      %v297 = vpack.c.b16 %v285, %v284
      %v298 = vpack.c.b16 %v287, %v286
      %v299 = vpack.c.b16 %v289, %v288
      %v300 = vpack.c.b16 %v291, %v290
      %v301 = vpack.c.b16 %v293, %v292
      %310 = vmatprep.subr.bf16.mxu0 0
      %311 = vmatpush1.bf16.msra.mxu0 %v301
      %312 = vmatprep.subr.bf16.mxu0 0
      %313 = vmatpush1.bf16.msra.mxu0 %v300
      %314 = vmatprep.subr.bf16.mxu0 0
      %315 = vmatpush1.bf16.msra.mxu0 %v299
      %316 = vmatprep.subr.bf16.mxu0 0
      %317 = vmatpush1.bf16.msra.mxu0 %v298
      %318 = vmatprep.subr.bf16.mxu0 0
      %319 = vmatpush1.bf16.msra.mxu0 %v297
      %320 = vmatprep.subr.bf16.mxu0 0
      %321 = vmatpush1.bf16.msra.mxu0 %v296
      %322 = vmatprep.subr.bf16.mxu0 0
      %323 = vmatpush1.bf16.msra.mxu0 %v295
      %324 = vmatprep.subr.bf16.mxu0 0
      %325 = vmatpush1.bf16.msra.mxu0 %v294
      %326 = vmatprep.subr.bf16.mxu0 0
      %327 = vmatpush2.bf16.msra.mxu0 0
      %328 = vmatprep.subr.bf16.mxu0 0
      %329 = vmatpush2.bf16.msra.mxu0 0
      %330 = vmatprep.subr.bf16.mxu0 0
      %331 = vmatpush2.bf16.msra.mxu0 0
      %332 = vmatprep.subr.bf16.mxu0 0
      %333 = vmatpush2.bf16.msra.mxu0 0
      %334 = vmatprep.subr.bf16.mxu0 0
      %335 = vmatpush2.bf16.msra.mxu0 0
      %336 = vmatprep.subr.bf16.mxu0 0
      %337 = vmatpush2.bf16.msra.mxu0 0
      %338 = vmatprep.subr.bf16.mxu0 0
      %339 = vmatpush2.bf16.msra.mxu0 0
      %340 = vmatprep.subr.bf16.mxu0 0
      %341 = vmatpush2.bf16.msra.mxu0 0
      %342 = vmatprep.mubr.bf16.mxu0 0
      %343 = vmatmul.mubr.bf16.gmra.mxu0 %v260
      %v344 = vpop.f32.mrf.mxu0
      %v345 = vadd.f32 %v242, %v344
      %v346 = vpop.f32.mrf.mxu0
      %v347 = vpop.f32.mrf.mxu0
      %v348 = vpop.f32.mrf.mxu0
      %349 = vdwg.mxu0
      %v350 = vmax.f32 %v345, 0.0
      %v351 = vmin.f32 %v350, 6.0
      %vm352 = vcmask 1043456
      %v353 = vsel %vm352, %v351, 0.0
      %v354 = vrot.slane %v353, 4
      %v355 = vadd.f32 %v353, %v354
      %v356 = vrot.slane %v355, 2
      %v357 = vadd.f32 %v355, %v356
      %v358 = vrot.slane %v357, 1
      %v359 = vadd.f32 %v357, %v358
      %v360 = vrcp.pop 4.0
      %v361 = vmul.f32 %v359, %v360
      %v362 = vpack.c.bf16 %v361, %v361
      %v363 = vld [vmem:[%s3] sm:$0xf]
      %v364 = vld [vmem:[%s3 + $0x4] sm:$0xf]
      %v365 = vld [vmem:[%s3 + $0x8] sm:$0xf]
      %v366 = vld [vmem:[%s3 + $0xc] sm:$0xf]
      %v367 = vld [vmem:[%s3 + $0x10] sm:$0xf]
      %v368 = vld [vmem:[%s3 + $0x14] sm:$0xf]
      %v369 = vld [vmem:[%s3 + $0x18] sm:$0xf]
      %v370 = vld [vmem:[%s3 + $0x1c] sm:$0xf]
      %v371 = vld [vmem:[%s3 + $0x20] sm:$0xf]
      %v372 = vld [vmem:[%s3 + $0x24] sm:$0xf]
      %v373 = vld [vmem:[%s3 + $0x28] sm:$0xf]
      %v374 = vld [vmem:[%s3 + $0x2c] sm:$0xf]
      %v375 = vld [vmem:[%s3 + $0x30] sm:$0xf]
      %v376 = vld [vmem:[%s3 + $0x34] sm:$0xf]
      %v377 = vld [vmem:[%s3 + $0x38] sm:$0xf]
      %v378 = vld [vmem:[%s3 + $0x3c] sm:$0xf]
      %v379 = vld [vmem:[%s4] sm:$0x1]
      %v396 = vunpack.c.l.b16 %v363
      %v397 = vunpack.c.l.b16 %v364
      %v398 = vunpack.c.l.b16 %v365
      %v399 = vunpack.c.l.b16 %v366
      %v400 = vunpack.c.l.b16 %v367
      %v401 = vunpack.c.l.b16 %v368
      %v402 = vunpack.c.l.b16 %v369
      %v403 = vunpack.c.l.b16 %v370
      %v404 = vunpack.c.l.b16 %v371
      %v405 = vunpack.c.l.b16 %v372
      %v406 = vunpack.c.l.b16 %v373
      %v407 = vunpack.c.l.b16 %v374
      %v408 = vunpack.c.l.b16 %v375
      %v409 = vunpack.c.l.b16 %v376
      %v410 = vunpack.c.l.b16 %v377
      %v411 = vunpack.c.l.b16 %v378
      %v412 = vpack.c.b16 %v397, %v396
      %v413 = vpack.c.b16 %v399, %v398
      %v414 = vpack.c.b16 %v401, %v400
      %v415 = vpack.c.b16 %v403, %v402
      %v416 = vpack.c.b16 %v405, %v404
      %v417 = vpack.c.b16 %v407, %v406
      %v418 = vpack.c.b16 %v409, %v408
      %v419 = vpack.c.b16 %v411, %v410
      %428 = vmatprep.subr.bf16.mxu0 0
      %429 = vmatpush1.bf16.msra.mxu0 %v419
      %430 = vmatprep.subr.bf16.mxu0 0
      %431 = vmatpush1.bf16.msra.mxu0 %v418
      %432 = vmatprep.subr.bf16.mxu0 0
      %433 = vmatpush1.bf16.msra.mxu0 %v417
      %434 = vmatprep.subr.bf16.mxu0 0
      %435 = vmatpush1.bf16.msra.mxu0 %v416
      %436 = vmatprep.subr.bf16.mxu0 0
      %437 = vmatpush1.bf16.msra.mxu0 %v415
      %438 = vmatprep.subr.bf16.mxu0 0
      %439 = vmatpush1.bf16.msra.mxu0 %v414
      %440 = vmatprep.subr.bf16.mxu0 0
      %441 = vmatpush1.bf16.msra.mxu0 %v413
      %442 = vmatprep.subr.bf16.mxu0 0
      %443 = vmatpush1.bf16.msra.mxu0 %v412
      %444 = vmatprep.subr.bf16.mxu0 0
      %445 = vmatpush2.bf16.msra.mxu0 0
      %446 = vmatprep.subr.bf16.mxu0 0
      %447 = vmatpush2.bf16.msra.mxu0 0
      %448 = vmatprep.subr.bf16.mxu0 0
      %449 = vmatpush2.bf16.msra.mxu0 0
      %450 = vmatprep.subr.bf16.mxu0 0
      %451 = vmatpush2.bf16.msra.mxu0 0
      %452 = vmatprep.subr.bf16.mxu0 0
      %453 = vmatpush2.bf16.msra.mxu0 0
      %454 = vmatprep.subr.bf16.mxu0 0
      %455 = vmatpush2.bf16.msra.mxu0 0
      %456 = vmatprep.subr.bf16.mxu0 0
      %457 = vmatpush2.bf16.msra.mxu0 0
      %458 = vmatprep.subr.bf16.mxu0 0
      %459 = vmatpush2.bf16.msra.mxu0 0
      %460 = vmatprep.mubr.bf16.mxu0 0
      %461 = vmatmul.mubr.bf16.gmra.mxu0 %v362
      %v462 = vpop.f32.mrf.mxu0
      %v463 = vadd.f32 %v379, %v462
      %v464 = vpop.f32.mrf.mxu0
      %v465 = vpop.f32.mrf.mxu0
      %v466 = vpop.f32.mrf.mxu0
      %467 = vdwg.mxu0
      %468 = vst [vmem:[%s217] sm:$0x1] %v463
      %p469 = scmp.lt.s32.totalorder %s16, 1
      %s470 = scalar_select %p469, %s16, 1
      %s471 = scalar_lea.vmem %s5, %s470
      // Predicated region
      $region41: #{_lambda_.11} parent=39 // pred_check
        %p472 = pneg %p144
      $region42: #{_lambda_.11} parent=39 // pred_check_branch
        %474 = sbr.rel (%p472) target = $region44
      $region43: #{_lambda_.11} parent=39 // pred_region
        _
      $region44: #{_lambda_.11} parent=39 // pred_fallthru
        _
    $region40: #{_lambda_.11} parent=5 // pred_fallthru
      _
    %p475 = scmp.le.s32.totalorder 2, %s11
    // Predicated region
    $region45: #{_lambda_.11} parent=5 // pred_check
      %p476 = pneg %p475
    $region46: #{_lambda_.11} parent=5 // pred_check_branch
      %478 = sbr.rel (%p476) target = $region48
    $region47: #{_lambda_.11} parent=5 // pred_region
      %s479 = ssub.s32 %s11, 2
      // Predicated region
      $region49: #{_lambda_.11} parent=47 // pred_check
        %p480 = pneg %p150
      $region50: #{_lambda_.11} parent=47 // pred_check_branch
        %482 = sbr.rel (%p480) target = $region52
      $region51: #{_lambda_.11} parent=47 // pred_region
        %p483 = scmp.lt.s32.totalorder %s17, 1
        %s484 = scalar_select %p483, %s17, 1
        %s485 = scalar_lea.vmem %s5, %s484
      $region52: #{_lambda_.11} parent=47 // pred_fallthru
        _
    $region48: #{_lambda_.11} parent=5 // pred_fallthru
      _
  $region6: #{_lambda_.11} parent=0 // loop_footer
    %s15 = sadd.s32 1, %s11
  $region7: #{_lambda_.11} parent=0 // loop_footer_branch
    %10 = sbr.rel target = $region3
  $region8: #{_lambda_.11} parent=0 // loop_exit
    _

// kernel: _lambda_.10
$region0: #{_lambda_.10}
  #allocation0 [shape = 'u32[]', space=smem, size = 0x4, offset = 0x4, fixed_abs, tag = 'smem constant byte address 0x4 - core index']
  #allocation1 [shape = 'u32[144,128]{1,0:T(1,128)}', space=vmem, size = 0x12000, scoped, tag = 'internal scratch']
  #allocation2 [shape = 'f32[6,3,256]{2,1,0:T(4,128)}', space=vmem, size = 0x6000, scoped, tag = 'scratch operand']
  #allocation3 [shape = 'f32[6,3,256]{2,1,0:T(4,128)}', space=vmem, size = 0x6000, scoped, tag = 'scratch operand']
  %s0 = inlined_call_operand.vmem [shape: bf16[2,4,2,128], index: 0, kind: input, shape index: {}]
  %s1 = inlined_call_operand.vmem [shape: bf16[2,4,2,128], index: 1, kind: input, shape index: {}]
  %s2 = inlined_call_operand.vmem [shape: bf16[128,256], index: 2, kind: input, shape index: {}]
  %s3 = inlined_call_operand.vmem [shape: f32[1,256], index: 3, kind: input, shape index: {}, may-alias: {3,5}]
  %s4 = inlined_call_operand.vmem [shape: f32[9,256], index: 4, kind: input, shape index: {}]
  %s5 = inlined_call_operand.vmem [shape: f32[1,256], index: 5, kind: input, shape index: {}, may-alias: {3,5}]
  %s6 = inlined_call_operand.vmem [shape: bf16[256,128], index: 6, kind: input, shape index: {}]
  %s7 = inlined_call_operand.vmem [shape: f32[1,128], index: 7, kind: input, shape index: {}]
  %s8 = inlined_call_operand.vmem [shape: bf16[2,2,2,128], index: 8, kind: output, shape index: {}]
  %s9 = sld [smem:[#allocation0]]
  $region65: #{_lambda_.10} parent=0
    _
  %s11 = ssub.s32 1, %s9
  %s12 = scalar_select 0, %s11, %s9
  loop: start=0, step=1, limit=4
  $region2: #{_lambda_.10} parent=0 // loop_pre_header
    _
  $region3: #{_lambda_.10} parent=0 // loop_header
    %s14 = sphi 0, %s18
    %p15 = scmp.ge.s32.totalorder %s14, 4
    %s24 = sphi 0, %s26
    %s27 = sphi 0, %s24
    %s28 = sphi 0, %s27
    %s44 = sphi 0, %s28
    %s50 = sphi 0, %s52
    %s53 = sphi 0, %s50
    %s54 = sphi 0, %s53
    %s70 = sphi 0, %s54
    %s74 = sphi 0, %s74
    %s76 = sphi 0, %s74
    %s77 = sphi 0, %s76
    %s91 = sphi 0, %s77
    %s95 = sphi 0, %s95
    %s97 = sphi 0, %s95
    %s98 = sphi 0, %s97
    %s112 = sphi 0, %s98
    %s116 = sphi 0, %s116
    %s118 = sphi 0, %s116
    %s119 = sphi 0, %s118
    %s133 = sphi 0, %s119
    %s137 = sphi 0, %s137
    %s139 = sphi 0, %s137
    %s140 = sphi 0, %s139
    %s154 = sphi 0, %s140
    %s158 = sphi 0, %s158
    %s160 = sphi 0, %s158
    %s161 = sphi 0, %s160
    %s175 = sphi 0, %s161
    %s179 = sphi 0, %s179
    %s181 = sphi 0, %s179
    %s182 = sphi 0, %s181
    %s196 = sphi 0, %s182
    %s202 = sphi 0, %s204
    %s205 = sphi 0, %s202
    %s206 = sphi 0, %s205
    %s222 = sphi 0, %s206
  $region4: #{_lambda_.10} parent=0 // loop_header_branch
    %17 = sbr.rel (%p15) target = $region8
  $region5: #{_lambda_.10} parent=0 // loop_body
    %s19 = ssub.s32 %s14, 1
    %s20 = ssub.s32 %s14, 2
    %s21 = sadd.s32 %s14, 1
    %s22 = ssub.s32 %s14, %s21
    %p23 = scmp.eq.s32.totalorder %s22, 0
    %s25 = sadd.s32 %s24, 1
    %s26 = scalar_select %p23, %s24, %s25
    %p29 = pneg %p23
    %p30 = scmp.eq.s32.totalorder %s14, 1
    %p31 = por %p29, %p30
    %p32 = scmp.ne.s32.totalorder %s24, %s27
    %p33 = scmp.eq.s32.totalorder %s14, 0
    %p34 = por %p32, %p33
    %p35 = scmp.ne.s32.totalorder %s24, %s27
    %p36 = scmp.eq.s32.totalorder %s19, 1
    %p37 = por %p35, %p36
    %p38 = scmp.ne.s32.totalorder %s27, %s28
    %p39 = scmp.eq.s32.totalorder %s19, 0
    %p40 = por %p38, %p39
    %p41 = scmp.ne.s32.totalorder %s27, %s28
    %p42 = scmp.eq.s32.totalorder %s20, 1
    %p43 = por %p41, %p42
    %p45 = scmp.ne.s32.totalorder %s28, %s44
    %p46 = scmp.eq.s32.totalorder %s20, 0
    %p47 = por %p45, %p46
    %s48 = ssub.s32 %s14, %s21
    %p49 = scmp.eq.s32.totalorder %s48, 0
    %s51 = sadd.s32 %s50, 1
    %s52 = scalar_select %p49, %s50, %s51
    %p55 = pneg %p49
    %p56 = scmp.eq.s32.totalorder %s14, 1
    %p57 = por %p55, %p56
    %p58 = scmp.ne.s32.totalorder %s50, %s53
    %p59 = scmp.eq.s32.totalorder %s14, 0
    %p60 = por %p58, %p59
    %p61 = scmp.ne.s32.totalorder %s50, %s53
    %p62 = scmp.eq.s32.totalorder %s19, 1
    %p63 = por %p61, %p62
    %p64 = scmp.ne.s32.totalorder %s53, %s54
    %p65 = scmp.eq.s32.totalorder %s19, 0
    %p66 = por %p64, %p65
    %p67 = scmp.ne.s32.totalorder %s53, %s54
    %p68 = scmp.eq.s32.totalorder %s20, 1
    %p69 = por %p67, %p68
    %p71 = scmp.ne.s32.totalorder %s54, %s70
    %p72 = scmp.eq.s32.totalorder %s20, 0
    %p73 = por %p71, %p72
    %s75 = sadd.s32 %s74, 1
    %p78 = scmp.eq.s32.totalorder %s14, 1
    %p79 = scmp.ne.s32.totalorder %s74, %s76
    %p80 = scmp.eq.s32.totalorder %s14, 0
    %p81 = por %p79, %p80
    %p82 = scmp.ne.s32.totalorder %s74, %s76
    %p83 = scmp.eq.s32.totalorder %s19, 1
    %p84 = por %p82, %p83
    %p85 = scmp.ne.s32.totalorder %s76, %s77
    %p86 = scmp.eq.s32.totalorder %s19, 0
    %p87 = por %p85, %p86
    %p88 = scmp.ne.s32.totalorder %s76, %s77
    %p89 = scmp.eq.s32.totalorder %s20, 1
    %p90 = por %p88, %p89
    %p92 = scmp.ne.s32.totalorder %s77, %s91
    %p93 = scmp.eq.s32.totalorder %s20, 0
    %p94 = por %p92, %p93
    %s96 = sadd.s32 %s95, 1
    %p99 = scmp.eq.s32.totalorder %s14, 1
    %p100 = scmp.ne.s32.totalorder %s95, %s97
    %p101 = scmp.eq.s32.totalorder %s14, 0
    %p102 = por %p100, %p101
    %p103 = scmp.ne.s32.totalorder %s95, %s97
    %p104 = scmp.eq.s32.totalorder %s19, 1
    %p105 = por %p103, %p104
    %p106 = scmp.ne.s32.totalorder %s97, %s98
    %p107 = scmp.eq.s32.totalorder %s19, 0
    %p108 = por %p106, %p107
    %p109 = scmp.ne.s32.totalorder %s97, %s98
    %p110 = scmp.eq.s32.totalorder %s20, 1
    %p111 = por %p109, %p110
    %p113 = scmp.ne.s32.totalorder %s98, %s112
    %p114 = scmp.eq.s32.totalorder %s20, 0
    %p115 = por %p113, %p114
    %s117 = sadd.s32 %s116, 1
    %p120 = scmp.eq.s32.totalorder %s14, 1
    %p121 = scmp.ne.s32.totalorder %s116, %s118
    %p122 = scmp.eq.s32.totalorder %s14, 0
    %p123 = por %p121, %p122
    %p124 = scmp.ne.s32.totalorder %s116, %s118
    %p125 = scmp.eq.s32.totalorder %s19, 1
    %p126 = por %p124, %p125
    %p127 = scmp.ne.s32.totalorder %s118, %s119
    %p128 = scmp.eq.s32.totalorder %s19, 0
    %p129 = por %p127, %p128
    %p130 = scmp.ne.s32.totalorder %s118, %s119
    %p131 = scmp.eq.s32.totalorder %s20, 1
    %p132 = por %p130, %p131
    %p134 = scmp.ne.s32.totalorder %s119, %s133
    %p135 = scmp.eq.s32.totalorder %s20, 0
    %p136 = por %p134, %p135
    %s138 = sadd.s32 %s137, 1
    %p141 = scmp.eq.s32.totalorder %s14, 1
    %p142 = scmp.ne.s32.totalorder %s137, %s139
    %p143 = scmp.eq.s32.totalorder %s14, 0
    %p144 = por %p142, %p143
    %p145 = scmp.ne.s32.totalorder %s137, %s139
    %p146 = scmp.eq.s32.totalorder %s19, 1
    %p147 = por %p145, %p146
    %p148 = scmp.ne.s32.totalorder %s139, %s140
    %p149 = scmp.eq.s32.totalorder %s19, 0
    %p150 = por %p148, %p149
    %p151 = scmp.ne.s32.totalorder %s139, %s140
    %p152 = scmp.eq.s32.totalorder %s20, 1
    %p153 = por %p151, %p152
    %p155 = scmp.ne.s32.totalorder %s140, %s154
    %p156 = scmp.eq.s32.totalorder %s20, 0
    %p157 = por %p155, %p156
    %s159 = sadd.s32 %s158, 1
    %p162 = scmp.eq.s32.totalorder %s14, 1
    %p163 = scmp.ne.s32.totalorder %s158, %s160
    %p164 = scmp.eq.s32.totalorder %s14, 0
    %p165 = por %p163, %p164
    %p166 = scmp.ne.s32.totalorder %s158, %s160
    %p167 = scmp.eq.s32.totalorder %s19, 1
    %p168 = por %p166, %p167
    %p169 = scmp.ne.s32.totalorder %s160, %s161
    %p170 = scmp.eq.s32.totalorder %s19, 0
    %p171 = por %p169, %p170
    %p172 = scmp.ne.s32.totalorder %s160, %s161
    %p173 = scmp.eq.s32.totalorder %s20, 1
    %p174 = por %p172, %p173
    %p176 = scmp.ne.s32.totalorder %s161, %s175
    %p177 = scmp.eq.s32.totalorder %s20, 0
    %p178 = por %p176, %p177
    %s180 = sadd.s32 %s179, 1
    %p183 = scmp.eq.s32.totalorder %s14, 1
    %p184 = scmp.ne.s32.totalorder %s179, %s181
    %p185 = scmp.eq.s32.totalorder %s14, 0
    %p186 = por %p184, %p185
    %p187 = scmp.ne.s32.totalorder %s179, %s181
    %p188 = scmp.eq.s32.totalorder %s19, 1
    %p189 = por %p187, %p188
    %p190 = scmp.ne.s32.totalorder %s181, %s182
    %p191 = scmp.eq.s32.totalorder %s19, 0
    %p192 = por %p190, %p191
    %p193 = scmp.ne.s32.totalorder %s181, %s182
    %p194 = scmp.eq.s32.totalorder %s20, 1
    %p195 = por %p193, %p194
    %p197 = scmp.ne.s32.totalorder %s182, %s196
    %p198 = scmp.eq.s32.totalorder %s20, 0
    %p199 = por %p197, %p198
    %s200 = ssub.s32 %s14, %s21
    %p201 = scmp.eq.s32.totalorder %s200, 0
    %s203 = sadd.s32 %s202, 1
    %s204 = scalar_select %p201, %s202, %s203
    %p207 = pneg %p201
    %p208 = scmp.eq.s32.totalorder %s14, 1
    %p209 = por %p207, %p208
    %p210 = scmp.ne.s32.totalorder %s202, %s205
    %p211 = scmp.eq.s32.totalorder %s14, 0
    %p212 = por %p210, %p211
    %p213 = scmp.ne.s32.totalorder %s202, %s205
    %p214 = scmp.eq.s32.totalorder %s19, 1
    %p215 = por %p213, %p214
    %p216 = scmp.ne.s32.totalorder %s205, %s206
    %p217 = scmp.eq.s32.totalorder %s19, 0
    %p218 = por %p216, %p217
    %p219 = scmp.ne.s32.totalorder %s205, %s206
    %p220 = scmp.eq.s32.totalorder %s20, 1
    %p221 = por %p219, %p220
    %p223 = scmp.ne.s32.totalorder %s206, %s222
    %p224 = scmp.eq.s32.totalorder %s20, 0
    %p225 = por %p223, %p224
    %p226 = scmp.le.s32.totalorder 1, %s14
    %p227 = scmp.lt.s32.totalorder %s14, 3
    %p228 = pnand %p226, %p227
    %p229 = pneg %p228
    // Predicated region
    $region9: #{_lambda_.10} parent=5 // pred_check
      _
    $region10: #{_lambda_.10} parent=5 // pred_check_branch
      %231 = sbr.rel (%p228) target = $region12
    $region11: #{_lambda_.10} parent=5 // pred_region
      %s232 = ssub.s32 %s14, 1
      // Predicated region
      $region13: #{_lambda_.10} parent=11 // pred_check
        %p233 = pneg %p87
      $region14: #{_lambda_.10} parent=11 // pred_check_branch
        %235 = sbr.rel (%p233) target = $region16
      $region15: #{_lambda_.10} parent=11 // pred_region
        _
      $region16: #{_lambda_.10} parent=11 // pred_fallthru
        _
      // Predicated region
      $region17: #{_lambda_.10} parent=11 // pred_check
        %p236 = pneg %p108
      $region18: #{_lambda_.10} parent=11 // pred_check_branch
        %238 = sbr.rel (%p236) target = $region20
      $region19: #{_lambda_.10} parent=11 // pred_region
        _
      $region20: #{_lambda_.10} parent=11 // pred_fallthru
        _
      // Predicated region
      $region21: #{_lambda_.10} parent=11 // pred_check
        %p239 = pneg %p129
      $region22: #{_lambda_.10} parent=11 // pred_check_branch
        %241 = sbr.rel (%p239) target = $region24
      $region23: #{_lambda_.10} parent=11 // pred_region
        _
      $region24: #{_lambda_.10} parent=11 // pred_fallthru
        _
      // Predicated region
      $region25: #{_lambda_.10} parent=11 // pred_check
        %p242 = pneg %p150
      $region26: #{_lambda_.10} parent=11 // pred_check_branch
        %244 = sbr.rel (%p242) target = $region28
      $region27: #{_lambda_.10} parent=11 // pred_region
        _
      $region28: #{_lambda_.10} parent=11 // pred_fallthru
        _
      // Predicated region
      $region29: #{_lambda_.10} parent=11 // pred_check
        %p245 = pneg %p171
      $region30: #{_lambda_.10} parent=11 // pred_check_branch
        %247 = sbr.rel (%p245) target = $region32
      $region31: #{_lambda_.10} parent=11 // pred_region
        _
      $region32: #{_lambda_.10} parent=11 // pred_fallthru
        _
      // Predicated region
      $region33: #{_lambda_.10} parent=11 // pred_check
        %p248 = pneg %p192
      $region34: #{_lambda_.10} parent=11 // pred_check_branch
        %250 = sbr.rel (%p248) target = $region36
      $region35: #{_lambda_.10} parent=11 // pred_region
        _
      $region36: #{_lambda_.10} parent=11 // pred_fallthru
        _
    $region12: #{_lambda_.10} parent=5 // pred_fallthru
      _
    %p251 = scmp.lt.s32.totalorder %s14, 2
    // Predicated region
    $region37: #{_lambda_.10} parent=5 // pred_check
      %p252 = pneg %p251
    $region38: #{_lambda_.10} parent=5 // pred_check_branch
      %254 = sbr.rel (%p252) target = $region40
    $region39: #{_lambda_.10} parent=5 // pred_region
      // Predicated region
      $region41: #{_lambda_.10} parent=39 // pred_check
        %p255 = pneg %p34
      $region42: #{_lambda_.10} parent=39 // pred_check_branch
        %257 = sbr.rel (%p255) target = $region44
      $region43: #{_lambda_.10} parent=39 // pred_region
        %p258 = scmp.lt.s32.totalorder %s14, 1
        %s259 = scalar_select %p258, %s14, 1
        %s260 = smul.addr %s259, 4
        %s261 = scalar_lea.vmem %s0, %s260
      $region44: #{_lambda_.10} parent=39 // pred_fallthru
        _
      // Predicated region
      $region45: #{_lambda_.10} parent=39 // pred_check
        %p262 = pneg %p60
      $region46: #{_lambda_.10} parent=39 // pred_check_branch
        %264 = sbr.rel (%p262) target = $region48
      $region47: #{_lambda_.10} parent=39 // pred_region
        %p265 = scmp.lt.s32.totalorder %s14, 1
        %s266 = scalar_select %p265, %s14, 1
        %s267 = smul.addr %s266, 4
        %s268 = scalar_lea.vmem %s1, %s267
      $region48: #{_lambda_.10} parent=39 // pred_fallthru
        _
    $region40: #{_lambda_.10} parent=5 // pred_fallthru
      _
    %p269 = scmp.le.s32.totalorder 1, %s14
    %p270 = scmp.lt.s32.totalorder %s14, 3
    %p271 = pnand %p269, %p270
    %p272 = pneg %p271
    // Predicated region
    $region49: #{_lambda_.10} parent=5 // pred_check
      _
    $region50: #{_lambda_.10} parent=5 // pred_check_branch
      %274 = sbr.rel (%p271) target = $region52
    $region51: #{_lambda_.10} parent=5 // pred_region
      %s275 = ssub.s32 %s14, 1
      %p276 = scmp.lt.s32.totalorder %s19, 1
      %s277 = scalar_select %p276, %s19, 1
      %s278 = smul.addr %s277, 4
      %s279 = scalar_lea.vmem %s0, %s278
      %p280 = pneg %p40
      %p281 = pneg %p37
      %p282 = scmp.lt.s32.totalorder %s19, 1
      %s283 = scalar_select %p282, %s19, 1
      %s284 = smul.addr %s283, 4
      %s285 = scalar_lea.vmem %s1, %s284
      %p286 = pneg %p66
      %p287 = pneg %p63
      %p288 = pneg %p87
      %p289 = pneg %p84
      %p290 = pneg %p108
      %p291 = pneg %p105
      %p292 = pneg %p129
      %p293 = pneg %p126
      %p294 = pneg %p150
      %p295 = pneg %p147
      %p296 = pneg %p171
      %p297 = pneg %p168
      %p298 = pneg %p192
      %p299 = pneg %p189
      %p300 = pneg %p218
      %p301 = pneg %p215
      %p302 = scmp.lt.s32.totalorder %s19, 1
      %s303 = scalar_select %p302, %s19, 1
      %s304 = smul.addr %s303, 2
      %s305 = scalar_lea.vmem %s8, %s304
      %p306 = scmp.lt.s32.totalorder %s19, 1
      %s307 = scalar_select %p306, %s19, 1
      %s308 = smul.addr %s307, 4
      %s309 = scalar_lea.vmem %s0, %s308
      %p310 = scmp.lt.s32.totalorder %s19, 1
      %s311 = scalar_select %p310, %s19, 1
      %s312 = smul.addr %s311, 4
      %s313 = scalar_lea.vmem %s1, %s312
      %p314 = scmp.lt.s32.totalorder %s19, 1
      %s315 = scalar_select %p314, %s19, 1
      %s316 = smul.addr %s315, 2
      %s317 = scalar_lea.vmem %s8, %s316
      %319 = vst [vmem:[#allocation2] sm:$0x77] 0.0
      %s320 = scalar_lea.vmem [#allocation2], 40
      %321 = vst [vmem:[%s320] sm:$0x77] 0.0
      %322 = vst [vmem:[#allocation3] sm:$0x77] 0.0
      %s323 = scalar_lea.vmem [#allocation3], 40
      %324 = vst [vmem:[%s323] sm:$0x77] 0.0
      %v325 = vlaneseq
      %vm326 = vcmp.ge.s32.totalorder %v325, 0
      %vm327 = vcmp.lt.s32.totalorder %v325, 256
      %vm328 = vmand %vm326, %vm327
      %329 = vst.msk [vmem:[#allocation2] ss:$4 sm:$0x3] %vm328, 0.0
      %s330 = scalar_lea.vmem [#allocation2], 8
      %331 = vst.msk [vmem:[%s330] ss:$4 sm:$0x3] %vm328, 0.0
      %s332 = scalar_lea.vmem [#allocation2], 16
      %333 = vst.msk [vmem:[%s332] ss:$4 sm:$0x3] %vm328, 0.0
      %s334 = scalar_lea.vmem [#allocation2], 24
      %335 = vst.msk [vmem:[%s334] ss:$4 sm:$0x3] %vm328, 0.0
      %s336 = scalar_lea.vmem [#allocation2], 32
      %337 = vst.msk [vmem:[%s336] ss:$4 sm:$0x3] %vm328, 0.0
      %s338 = scalar_lea.vmem [#allocation2], 40
      %339 = vst.msk [vmem:[%s338] ss:$4 sm:$0x3] %vm328, 0.0
      %s340 = scalar_lea.vmem [#allocation3], 2
      %341 = vst.msk [vmem:[%s340] ss:$4 sm:$0x3] %vm328, 0.0
      %s342 = scalar_lea.vmem [#allocation3], 10
      %343 = vst.msk [vmem:[%s342] ss:$4 sm:$0x3] %vm328, 0.0
      %s344 = scalar_lea.vmem [#allocation3], 18
      %345 = vst.msk [vmem:[%s344] ss:$4 sm:$0x3] %vm328, 0.0
      %s346 = scalar_lea.vmem [#allocation3], 26
      %347 = vst.msk [vmem:[%s346] ss:$4 sm:$0x3] %vm328, 0.0
      %s348 = scalar_lea.vmem [#allocation3], 34
      %349 = vst.msk [vmem:[%s348] ss:$4 sm:$0x3] %vm328, 0.0
      %s350 = scalar_lea.vmem [#allocation3], 42
      %351 = vst.msk [vmem:[%s350] ss:$4 sm:$0x3] %vm328, 0.0
      %v352 = vld [vmem:[%s309] sm:$0x1]
      %v353 = vld [vmem:[%s309 + $0x1] sm:$0x1]
      %v354 = vld [vmem:[%s309 + $0x2] sm:$0x1]
      %v355 = vld [vmem:[%s309 + $0x3] sm:$0x1]
      %v356 = vld [vmem:[%s2] sm:$0xff]
      %v357 = vld [vmem:[%s2 + $0x8] sm:$0xff]
      %v358 = vld [vmem:[%s2 + $0x10] sm:$0xff]
      %v359 = vld [vmem:[%s2 + $0x18] sm:$0xff]
      %v360 = vld [vmem:[%s2 + $0x20] sm:$0xff]
      %v361 = vld [vmem:[%s2 + $0x28] sm:$0xff]
      %v362 = vld [vmem:[%s2 + $0x30] sm:$0xff]
      %v363 = vld [vmem:[%s2 + $0x38] sm:$0xff]
      %v364 = vld [vmem:[%s2 + $0x40] sm:$0xff]
      %v365 = vld [vmem:[%s2 + $0x48] sm:$0xff]
      %v366 = vld [vmem:[%s2 + $0x50] sm:$0xff]
      %v367 = vld [vmem:[%s2 + $0x58] sm:$0xff]
      %v368 = vld [vmem:[%s2 + $0x60] sm:$0xff]
      %v369 = vld [vmem:[%s2 + $0x68] sm:$0xff]
      %v370 = vld [vmem:[%s2 + $0x70] sm:$0xff]
      %v371 = vld [vmem:[%s2 + $0x78] sm:$0xff]
      %v372 = vld [vmem:[%s3] sm:$0x3]
      %v374 = vlaneseq
      %v375 = vshrl.u32 %v374, 7
      %v376 = vsub.s32 0, %v375
      %v377 = vrot.slane %v372, %v376
      %v378 = vlaneseq
      %v379 = vshrl.u32 %v378, 7
      %v380 = vsub.s32 1, %v379
      %v381 = vrot.slane %v372, %v380
      %v388 = vcombine.low %v352, %v353
      %v389 = vcombine.low %v354, %v355
      %v391 = vunpack.c.l.s4 1966171168
      %v392 = vunpack.c.0.s8 %v391
      %v393 = vlaneseq
      %v394 = vshrl.u32 %v393, 7
      %v395 = vsub.s32 %v392, %v394
      %v396 = vrot.slane %v388, %v395
      %v398 = vunpack.c.l.s4 1966171168
      %v399 = vunpack.c.0.s8 %v398
      %v400 = vlaneseq
      %v401 = vshrl.u32 %v400, 7
      %v402 = vsub.s32 %v399, %v401
      %v403 = vrot.slane %v389, %v402
      %v404 = vcombine.low %v396, %v403
      %v406 = vunpack.c.l.s4 1966171168
      %v407 = vunpack.c.0.s8 %v406
      %v408 = vlaneseq
      %v409 = vshrl.u32 %v408, 7
      %v410 = vsub.s32 %v407, %v409
      %v411 = vrot.slane %v404, %v410
      %v429 = vunpack.c.l.b16 %v356
      %v430 = vunpack.c.h.b16 %v356
      %v431 = vunpack.c.l.b16 %v357
      %v432 = vunpack.c.h.b16 %v357
      %v433 = vunpack.c.l.b16 %v358
      %v434 = vunpack.c.h.b16 %v358
      %v435 = vunpack.c.l.b16 %v359
      %v436 = vunpack.c.h.b16 %v359
      %v437 = vunpack.c.l.b16 %v360
      %v438 = vunpack.c.h.b16 %v360
      %v439 = vunpack.c.l.b16 %v361
      %v440 = vunpack.c.h.b16 %v361
      %v441 = vunpack.c.l.b16 %v362
      %v442 = vunpack.c.h.b16 %v362
      %v443 = vunpack.c.l.b16 %v363
      %v444 = vunpack.c.h.b16 %v363
      %v445 = vunpack.c.l.b16 %v364
      %v446 = vunpack.c.h.b16 %v364
      %v447 = vunpack.c.l.b16 %v365
      %v448 = vunpack.c.h.b16 %v365
      %v449 = vunpack.c.l.b16 %v366
      %v450 = vunpack.c.h.b16 %v366
      %v451 = vunpack.c.l.b16 %v367
      %v452 = vunpack.c.h.b16 %v367
      %v453 = vunpack.c.l.b16 %v368
      %v454 = vunpack.c.h.b16 %v368
      %v455 = vunpack.c.l.b16 %v369
      %v456 = vunpack.c.h.b16 %v369
      %v457 = vunpack.c.l.b16 %v370
      %v458 = vunpack.c.h.b16 %v370
      %v459 = vunpack.c.l.b16 %v371
      %v460 = vunpack.c.h.b16 %v371
      %v461 = vpack.c.b16 %v431, %v429
      %v462 = vpack.c.b16 %v432, %v430
      %v463 = vpack.c.b16 %v435, %v433
      %v464 = vpack.c.b16 %v436, %v434
      %v465 = vpack.c.b16 %v439, %v437
      %v466 = vpack.c.b16 %v440, %v438
      %v467 = vpack.c.b16 %v443, %v441
      %v468 = vpack.c.b16 %v444, %v442
      %v469 = vpack.c.b16 %v447, %v445
      %v470 = vpack.c.b16 %v448, %v446
      %v471 = vpack.c.b16 %v451, %v449
      %v472 = vpack.c.b16 %v452, %v450
      %v473 = vpack.c.b16 %v455, %v453
      %v474 = vpack.c.b16 %v456, %v454
      %v475 = vpack.c.b16 %v459, %v457
      %v476 = vpack.c.b16 %v460, %v458
      %493 = vmatprep.subr.bf16.mxu0 %v476
      %494 = vmatpush1.bf16.msra.mxu0 %v475
      %495 = vmatprep.subr.bf16.mxu0 %v474
      %496 = vmatpush1.bf16.msra.mxu0 %v473
      %497 = vmatprep.subr.bf16.mxu0 %v472
      %498 = vmatpush1.bf16.msra.mxu0 %v471
      %499 = vmatprep.subr.bf16.mxu0 %v470
      %500 = vmatpush1.bf16.msra.mxu0 %v469
      %501 = vmatprep.subr.bf16.mxu0 %v468
      %502 = vmatpush1.bf16.msra.mxu0 %v467
      %503 = vmatprep.subr.bf16.mxu0 %v466
      %504 = vmatpush1.bf16.msra.mxu0 %v465
      %505 = vmatprep.subr.bf16.mxu0 %v464
      %506 = vmatpush1.bf16.msra.mxu0 %v463
      %507 = vmatprep.subr.bf16.mxu0 %v462
      %508 = vmatpush1.bf16.msra.mxu0 %v461
      %509 = vmatprep.subr.bf16.mxu0 0
      %510 = vmatpush2.bf16.msra.mxu0 0
      %511 = vmatprep.subr.bf16.mxu0 0
      %512 = vmatpush2.bf16.msra.mxu0 0
      %513 = vmatprep.subr.bf16.mxu0 0
      %514 = vmatpush2.bf16.msra.mxu0 0
      %515 = vmatprep.subr.bf16.mxu0 0
      %516 = vmatpush2.bf16.msra.mxu0 0
      %517 = vmatprep.subr.bf16.mxu0 0
      %518 = vmatpush2.bf16.msra.mxu0 0
      %519 = vmatprep.subr.bf16.mxu0 0
      %520 = vmatpush2.bf16.msra.mxu0 0
      %521 = vmatprep.subr.bf16.mxu0 0
      %522 = vmatpush2.bf16.msra.mxu0 0
      %523 = vmatprep.subr.bf16.mxu0 0
      %524 = vmatpush2.bf16.msra.mxu0 0
      %525 = vmatprep.mubr.bf16.mxu0 0
      %526 = vmatmul.mubr.bf16.gmra.mxu0 %v411
      %v527 = vpop.f32.mrf.mxu0
      %v528 = vadd.f32 %v377, %v527
      %v529 = vpop.f32.mrf.mxu0
      %v530 = vadd.f32 %v381, %v529
      %v531 = vpop.f32.mrf.mxu0
      %v532 = vpop.f32.mrf.mxu0
      %533 = vdwg.mxu0
      %v534 = vmax.f32 %v528, 0.0
      %v535 = vmax.f32 %v530, 0.0
      %v536 = vmin.f32 %v534, 6.0
      %v537 = vmin.f32 %v535, 6.0
      %v540 = vcombine.low %v536, %v537
      %v541 = vcombine.high %v536, %v537
      %v543 = vunpack.c.l.s4 1983009808
      %v544 = vunpack.c.0.s8 %v543
      %v545 = vlaneseq
      %v546 = vshrl.u32 %v545, 7
      %v547 = vsub.s32 %v544, %v546
      %v548 = vrot.slane %v540, %v547
      %v550 = vunpack.c.l.s4 1983009808
      %v551 = vunpack.c.0.s8 %v550
      %v552 = vlaneseq
      %v553 = vshrl.u32 %v552, 7
      %v554 = vsub.s32 %v551, %v553
      %v555 = vrot.slane %v541, %v554
      %v556 = vcombine.high %v548, %v548
      %v557 = vcombine.high %v555, %v555
      %v559 = vunpack.c.l.s4 1983009808
      %v560 = vunpack.c.0.s8 %v559
      %v561 = vlaneseq
      %v562 = vshrl.u32 %v561, 7
      %v563 = vsub.s32 %v560, %v562
      %v564 = vrot.slane %v548, %v563
      %v566 = vunpack.c.l.s4 1983009808
      %v567 = vunpack.c.0.s8 %v566
      %v568 = vlaneseq
      %v569 = vshrl.u32 %v568, 7
      %v570 = vsub.s32 %v567, %v569
      %v571 = vrot.slane %v556, %v570
      %v573 = vunpack.c.l.s4 1983009808
      %v574 = vunpack.c.0.s8 %v573
      %v575 = vlaneseq
      %v576 = vshrl.u32 %v575, 7
      %v577 = vsub.s32 %v574, %v576
      %v578 = vrot.slane %v555, %v577
      %v580 = vunpack.c.l.s4 1983009808
      %v581 = vunpack.c.0.s8 %v580
      %v582 = vlaneseq
      %v583 = vshrl.u32 %v582, 7
      %v584 = vsub.s32 %v581, %v583
      %v585 = vrot.slane %v557, %v584
      %s590 = scalar_lea.vmem [#allocation3], 8
      %591 = vst [vmem:[%s590] sm:$0x33] %v564
      %592 = vst [vmem:[%s590 + $0x8] sm:$0x33] %v571
      %593 = vst [vmem:[%s590 + $0x10] sm:$0x33] %v578
      %594 = vst [vmem:[%s590 + $0x18] sm:$0x33] %v585
      %v595 = vld [vmem:[%s313] sm:$0x1]
      %v596 = vld [vmem:[%s313 + $0x1] sm:$0x1]
      %v597 = vld [vmem:[%s313 + $0x2] sm:$0x1]
      %v598 = vld [vmem:[%s313 + $0x3] sm:$0x1]
      %v599 = vld [vmem:[%s2] sm:$0xff]
      %v600 = vld [vmem:[%s2 + $0x8] sm:$0xff]
      %v601 = vld [vmem:[%s2 + $0x10] sm:$0xff]
      %v602 = vld [vmem:[%s2 + $0x18] sm:$0xff]
      %v603 = vld [vmem:[%s2 + $0x20] sm:$0xff]
      %v604 = vld [vmem:[%s2 + $0x28] sm:$0xff]
      %v605 = vld [vmem:[%s2 + $0x30] sm:$0xff]
      %v606 = vld [vmem:[%s2 + $0x38] sm:$0xff]
      %v607 = vld [vmem:[%s2 + $0x40] sm:$0xff]
      %v608 = vld [vmem:[%s2 + $0x48] sm:$0xff]
      %v609 = vld [vmem:[%s2 + $0x50] sm:$0xff]
      %v610 = vld [vmem:[%s2 + $0x58] sm:$0xff]
      %v611 = vld [vmem:[%s2 + $0x60] sm:$0xff]
      %v612 = vld [vmem:[%s2 + $0x68] sm:$0xff]
      %v613 = vld [vmem:[%s2 + $0x70] sm:$0xff]
      %v614 = vld [vmem:[%s2 + $0x78] sm:$0xff]
      %v615 = vld [vmem:[%s3] sm:$0x3]
      %v617 = vlaneseq
      %v618 = vshrl.u32 %v617, 7
      %v619 = vsub.s32 0, %v618
      %v620 = vrot.slane %v615, %v619
      %v621 = vlaneseq
      %v622 = vshrl.u32 %v621, 7
      %v623 = vsub.s32 1, %v622
      %v624 = vrot.slane %v615, %v623
      %v631 = vcombine.low %v595, %v596
      %v632 = vcombine.low %v597, %v598
      %v634 = vunpack.c.l.s4 1966171168
      %v635 = vunpack.c.0.s8 %v634
      %v636 = vlaneseq
      %v637 = vshrl.u32 %v636, 7
      %v638 = vsub.s32 %v635, %v637
      %v639 = vrot.slane %v631, %v638
      %v641 = vunpack.c.l.s4 1966171168
      %v642 = vunpack.c.0.s8 %v641
      %v643 = vlaneseq
      %v644 = vshrl.u32 %v643, 7
      %v645 = vsub.s32 %v642, %v644
      %v646 = vrot.slane %v632, %v645
      %v647 = vcombine.low %v639, %v646
      %v649 = vunpack.c.l.s4 1966171168
      %v650 = vunpack.c.0.s8 %v649
      %v651 = vlaneseq
      %v652 = vshrl.u32 %v651, 7
      %v653 = vsub.s32 %v650, %v652
      %v654 = vrot.slane %v647, %v653
      %v672 = vunpack.c.l.b16 %v599
      %v673 = vunpack.c.h.b16 %v599
      %v674 = vunpack.c.l.b16 %v600
      %v675 = vunpack.c.h.b16 %v600
      %v676 = vunpack.c.l.b16 %v601
      %v677 = vunpack.c.h.b16 %v601
      %v678 = vunpack.c.l.b16 %v602
      %v679 = vunpack.c.h.b16 %v602
      %v680 = vunpack.c.l.b16 %v603
      %v681 = vunpack.c.h.b16 %v603
      %v682 = vunpack.c.l.b16 %v604
      %v683 = vunpack.c.h.b16 %v604
      %v684 = vunpack.c.l.b16 %v605
      %v685 = vunpack.c.h.b16 %v605
      %v686 = vunpack.c.l.b16 %v606
      %v687 = vunpack.c.h.b16 %v606
      %v688 = vunpack.c.l.b16 %v607
      %v689 = vunpack.c.h.b16 %v607
      %v690 = vunpack.c.l.b16 %v608
      %v691 = vunpack.c.h.b16 %v608
      %v692 = vunpack.c.l.b16 %v609
      %v693 = vunpack.c.h.b16 %v609
      %v694 = vunpack.c.l.b16 %v610
      %v695 = vunpack.c.h.b16 %v610
      %v696 = vunpack.c.l.b16 %v611
      %v697 = vunpack.c.h.b16 %v611
      %v698 = vunpack.c.l.b16 %v612
      %v699 = vunpack.c.h.b16 %v612
      %v700 = vunpack.c.l.b16 %v613
      %v701 = vunpack.c.h.b16 %v613
      %v702 = vunpack.c.l.b16 %v614
      %v703 = vunpack.c.h.b16 %v614
      %v704 = vpack.c.b16 %v674, %v672
      %v705 = vpack.c.b16 %v675, %v673
      %v706 = vpack.c.b16 %v678, %v676
      %v707 = vpack.c.b16 %v679, %v677
      %v708 = vpack.c.b16 %v682, %v680
      %v709 = vpack.c.b16 %v683, %v681
      %v710 = vpack.c.b16 %v686, %v684
      %v711 = vpack.c.b16 %v687, %v685
      %v712 = vpack.c.b16 %v690, %v688
      %v713 = vpack.c.b16 %v691, %v689
      %v714 = vpack.c.b16 %v694, %v692
      %v715 = vpack.c.b16 %v695, %v693
      %v716 = vpack.c.b16 %v698, %v696
      %v717 = vpack.c.b16 %v699, %v697
      %v718 = vpack.c.b16 %v702, %v700
      %v719 = vpack.c.b16 %v703, %v701
      %736 = vmatprep.subr.bf16.mxu0 %v719
      %737 = vmatpush1.bf16.msra.mxu0 %v718
      %738 = vmatprep.subr.bf16.mxu0 %v717
      %739 = vmatpush1.bf16.msra.mxu0 %v716
      %740 = vmatprep.subr.bf16.mxu0 %v715
      %741 = vmatpush1.bf16.msra.mxu0 %v714
      %742 = vmatprep.subr.bf16.mxu0 %v713
      %743 = vmatpush1.bf16.msra.mxu0 %v712
      %744 = vmatprep.subr.bf16.mxu0 %v711
      %745 = vmatpush1.bf16.msra.mxu0 %v710
      %746 = vmatprep.subr.bf16.mxu0 %v709
      %747 = vmatpush1.bf16.msra.mxu0 %v708
      %748 = vmatprep.subr.bf16.mxu0 %v707
      %749 = vmatpush1.bf16.msra.mxu0 %v706
      %750 = vmatprep.subr.bf16.mxu0 %v705
      %751 = vmatpush1.bf16.msra.mxu0 %v704
      %752 = vmatprep.subr.bf16.mxu0 0
      %753 = vmatpush2.bf16.msra.mxu0 0
      %754 = vmatprep.subr.bf16.mxu0 0
      %755 = vmatpush2.bf16.msra.mxu0 0
      %756 = vmatprep.subr.bf16.mxu0 0
      %757 = vmatpush2.bf16.msra.mxu0 0
      %758 = vmatprep.subr.bf16.mxu0 0
      %759 = vmatpush2.bf16.msra.mxu0 0
      %760 = vmatprep.subr.bf16.mxu0 0
      %761 = vmatpush2.bf16.msra.mxu0 0
      %762 = vmatprep.subr.bf16.mxu0 0
      %763 = vmatpush2.bf16.msra.mxu0 0
      %764 = vmatprep.subr.bf16.mxu0 0
      %765 = vmatpush2.bf16.msra.mxu0 0
      %766 = vmatprep.subr.bf16.mxu0 0
      %767 = vmatpush2.bf16.msra.mxu0 0
      %768 = vmatprep.mubr.bf16.mxu0 0
      %769 = vmatmul.mubr.bf16.gmra.mxu0 %v654
      %v770 = vpop.f32.mrf.mxu0
      %v771 = vadd.f32 %v620, %v770
      %v772 = vpop.f32.mrf.mxu0
      %v773 = vadd.f32 %v624, %v772
      %v774 = vpop.f32.mrf.mxu0
      %v775 = vpop.f32.mrf.mxu0
      %776 = vdwg.mxu0
      %v777 = vmax.f32 %v771, 0.0
      %v778 = vmax.f32 %v773, 0.0
      %v779 = vmin.f32 %v777, 6.0
      %v780 = vmin.f32 %v778, 6.0
      %v783 = vcombine.low %v779, %v780
      %v784 = vcombine.high %v779, %v780
      %v786 = vunpack.c.l.s4 1983009808
      %v787 = vunpack.c.0.s8 %v786
      %v788 = vlaneseq
      %v789 = vshrl.u32 %v788, 7
      %v790 = vsub.s32 %v787, %v789
      %v791 = vrot.slane %v783, %v790
      %v793 = vunpack.c.l.s4 1983009808
      %v794 = vunpack.c.0.s8 %v793
      %v795 = vlaneseq
      %v796 = vshrl.u32 %v795, 7
      %v797 = vsub.s32 %v794, %v796
      %v798 = vrot.slane %v784, %v797
      %v799 = vcombine.high %v791, %v791
      %v800 = vcombine.high %v798, %v798
      %v802 = vunpack.c.l.s4 1983009808
      %v803 = vunpack.c.0.s8 %v802
      %v804 = vlaneseq
      %v805 = vshrl.u32 %v804, 7
      %v806 = vsub.s32 %v803, %v805
      %v807 = vrot.slane %v791, %v806
      %v809 = vunpack.c.l.s4 1983009808
      %v810 = vunpack.c.0.s8 %v809
      %v811 = vlaneseq
      %v812 = vshrl.u32 %v811, 7
      %v813 = vsub.s32 %v810, %v812
      %v814 = vrot.slane %v799, %v813
      %v816 = vunpack.c.l.s4 1983009808
      %v817 = vunpack.c.0.s8 %v816
      %v818 = vlaneseq
      %v819 = vshrl.u32 %v818, 7
      %v820 = vsub.s32 %v817, %v819
      %v821 = vrot.slane %v798, %v820
      %v823 = vunpack.c.l.s4 1983009808
      %v824 = vunpack.c.0.s8 %v823
      %v825 = vlaneseq
      %v826 = vshrl.u32 %v825, 7
      %v827 = vsub.s32 %v824, %v826
      %v828 = vrot.slane %v800, %v827
      %v829 = vrot.slane %v807, 7
      %v830 = vrot.slane %v814, 7
      %v831 = vrot.slane %v821, 7
      %v832 = vrot.slane %v828, 7
      %s837 = scalar_lea.vmem [#allocation2], 8
      %838 = vst [vmem:[%s837] sm:$0x66] %v829
      %839 = vst [vmem:[%s837 + $0x8] sm:$0x66] %v830
      %840 = vst [vmem:[%s837 + $0x10] sm:$0x66] %v831
      %841 = vst [vmem:[%s837 + $0x18] sm:$0x66] %v832
      %v842 = vld [vmem:[#allocation2] sm:$0x33]
      %v843 = vld [vmem:[#allocation2 + $0x10] sm:$0x33]
      %v844 = vld [vmem:[%s4] ss:$8 sm:$0x3]
      %v846 = vlaneseq
      %v847 = vshrl.u32 %v846, 7
      %v848 = vsub.s32 0, %v847
      %v849 = vrot.slane %v844, %v848
      %v850 = vlaneseq
      %v851 = vshrl.u32 %v850, 7
      %v852 = vsub.s32 1, %v851
      %v853 = vrot.slane %v844, %v852
      %v854 = vcombine.low %v849, %v853
      %v856 = vmul.f32 %v842, %v854
      %v857 = vmul.f32 %v843, %v854
      %v858 = vadd.f32 %v856, 0.0
      %v859 = vadd.f32 %v857, 0.0
      %v860 = vld [vmem:[#allocation3] sm:$0x33]
      %v861 = vld [vmem:[#allocation3 + $0x10] sm:$0x33]
      %s862 = scalar_lea.vmem %s4, 1
      %v863 = vld [vmem:[%s862] ss:$8 sm:$0x3]
      %v865 = vlaneseq
      %v866 = vshrl.u32 %v865, 7
      %v867 = vsub.s32 0, %v866
      %v868 = vrot.slane %v863, %v867
      %v869 = vlaneseq
      %v870 = vshrl.u32 %v869, 7
      %v871 = vsub.s32 1, %v870
      %v872 = vrot.slane %v863, %v871
      %v873 = vcombine.low %v868, %v872
      %v875 = vmul.f32 %v860, %v873
      %v876 = vmul.f32 %v861, %v873
      %v877 = vadd.f32 %v858, %v875
      %v878 = vadd.f32 %v859, %v876
      %v879 = vld [vmem:[#allocation2] sm:$0x66]
      %v880 = vld [vmem:[#allocation2 + $0x10] sm:$0x66]
      %s881 = scalar_lea.vmem %s4, 2
      %v882 = vld [vmem:[%s881] ss:$8 sm:$0x3]
      %v884 = vlaneseq
      %v885 = vshrl.u32 %v884, 7
      %v886 = vsub.s32 0, %v885
      %v887 = vrot.slane %v882, %v886
      %v888 = vlaneseq
      %v889 = vshrl.u32 %v888, 7
      %v890 = vsub.s32 1, %v889
      %v891 = vrot.slane %v882, %v890
      %v892 = vcombine.low %v887, %v891
      %v893 = vrot.slane %v892, 7
      %v895 = vmul.f32 %v879, %v893
      %v896 = vmul.f32 %v880, %v893
      %v899 = vrot.slane %v895, 5
      %v900 = vrot.slane %v899, 4
      %v901 = vrot.slane %v896, 5
      %v902 = vrot.slane %v901, 4
      %v905 = vadd.f32 %v877, %v900
      %v906 = vadd.f32 %v878, %v902
      %v907 = vld [vmem:[%s837] sm:$0x33]
      %v908 = vld [vmem:[%s837 + $0x10] sm:$0x33]
      %s909 = scalar_lea.vmem %s4, 3
      %v910 = vld [vmem:[%s909] ss:$8 sm:$0x3]
      %v912 = vlaneseq
      %v913 = vshrl.u32 %v912, 7
      %v914 = vsub.s32 0, %v913
      %v915 = vrot.slane %v910, %v914
      %v916 = vlaneseq
      %v917 = vshrl.u32 %v916, 7
      %v918 = vsub.s32 1, %v917
      %v919 = vrot.slane %v910, %v918
      %v920 = vcombine.low %v915, %v919
      %v922 = vmul.f32 %v907, %v920
      %v923 = vmul.f32 %v908, %v920
      %v924 = vadd.f32 %v905, %v922
      %v925 = vadd.f32 %v906, %v923
      %v926 = vld [vmem:[%s590] sm:$0x33]
      %v927 = vld [vmem:[%s590 + $0x10] sm:$0x33]
      %s928 = scalar_lea.vmem %s4, 4
      %v929 = vld [vmem:[%s928] ss:$8 sm:$0x3]
      %v931 = vlaneseq
      %v932 = vshrl.u32 %v931, 7
      %v933 = vsub.s32 0, %v932
      %v934 = vrot.slane %v929, %v933
      %v935 = vlaneseq
      %v936 = vshrl.u32 %v935, 7
      %v937 = vsub.s32 1, %v936
      %v938 = vrot.slane %v929, %v937
      %v939 = vcombine.low %v934, %v938
      %v941 = vmul.f32 %v926, %v939
      %v942 = vmul.f32 %v927, %v939
      %v943 = vadd.f32 %v924, %v941
      %v944 = vadd.f32 %v925, %v942
      %v945 = vld [vmem:[%s837] sm:$0x66]
      %v946 = vld [vmem:[%s837 + $0x10] sm:$0x66]
      %s947 = scalar_lea.vmem %s4, 5
      %v948 = vld [vmem:[%s947] ss:$8 sm:$0x3]
      %v950 = vlaneseq
      %v951 = vshrl.u32 %v950, 7
      %v952 = vsub.s32 0, %v951
      %v953 = vrot.slane %v948, %v952
      %v954 = vlaneseq
      %v955 = vshrl.u32 %v954, 7
      %v956 = vsub.s32 1, %v955
      %v957 = vrot.slane %v948, %v956
      %v958 = vcombine.low %v953, %v957
      %v959 = vrot.slane %v958, 7
      %v961 = vmul.f32 %v945, %v959
      %v962 = vmul.f32 %v946, %v959
      %v965 = vrot.slane %v961, 5
      %v966 = vrot.slane %v965, 4
      %v967 = vrot.slane %v962, 5
      %v968 = vrot.slane %v967, 4
      %v971 = vadd.f32 %v943, %v966
      %v972 = vadd.f32 %v944, %v968
      %s973 = scalar_lea.vmem [#allocation2], 16
      %v974 = vld [vmem:[%s973] sm:$0x33]
      %v975 = vld [vmem:[%s973 + $0x10] sm:$0x33]
      %s976 = scalar_lea.vmem %s4, 6
      %v977 = vld [vmem:[%s976] ss:$8 sm:$0x3]
      %v979 = vlaneseq
      %v980 = vshrl.u32 %v979, 7
      %v981 = vsub.s32 0, %v980
      %v982 = vrot.slane %v977, %v981
      %v983 = vlaneseq
      %v984 = vshrl.u32 %v983, 7
      %v985 = vsub.s32 1, %v984
      %v986 = vrot.slane %v977, %v985
      %v987 = vcombine.low %v982, %v986
      %v989 = vmul.f32 %v974, %v987
      %v990 = vmul.f32 %v975, %v987
      %v991 = vadd.f32 %v971, %v989
      %v992 = vadd.f32 %v972, %v990
      %s993 = scalar_lea.vmem [#allocation3], 16
      %v994 = vld [vmem:[%s993] sm:$0x33]
      %v995 = vld [vmem:[%s993 + $0x10] sm:$0x33]
      %s996 = scalar_lea.vmem %s4, 7
      %v997 = vld [vmem:[%s996] ss:$8 sm:$0x3]
      %v999 = vlaneseq
      %v1000 = vshrl.u32 %v999, 7
      %v1001 = vsub.s32 0, %v1000
      %v1002 = vrot.slane %v997, %v1001
      %v1003 = vlaneseq
      %v1004 = vshrl.u32 %v1003, 7
      %v1005 = vsub.s32 1, %v1004
      %v1006 = vrot.slane %v997, %v1005
      %v1007 = vcombine.low %v1002, %v1006
      %v1009 = vmul.f32 %v994, %v1007
      %v1010 = vmul.f32 %v995, %v1007
      %v1011 = vadd.f32 %v991, %v1009
      %v1012 = vadd.f32 %v992, %v1010
      %v1013 = vld [vmem:[%s973] sm:$0x66]
      %v1014 = vld [vmem:[%s973 + $0x10] sm:$0x66]
      %s1015 = scalar_lea.vmem %s4, 16
      %v1016 = vld [vmem:[%s1015] ss:$8 sm:$0x3]
      %v1018 = vlaneseq
      %v1019 = vshrl.u32 %v1018, 7
      %v1020 = vsub.s32 0, %v1019
      %v1021 = vrot.slane %v1016, %v1020
      %v1022 = vlaneseq
      %v1023 = vshrl.u32 %v1022, 7
      %v1024 = vsub.s32 1, %v1023
      %v1025 = vrot.slane %v1016, %v1024
      %v1026 = vcombine.low %v1021, %v1025
      %v1027 = vrot.slane %v1026, 7
      %v1029 = vmul.f32 %v1013, %v1027
      %v1030 = vmul.f32 %v1014, %v1027
      %v1033 = vrot.slane %v1029, 5
      %v1034 = vrot.slane %v1033, 4
      %v1035 = vrot.slane %v1030, 5
      %v1036 = vrot.slane %v1035, 4
      %v1039 = vadd.f32 %v1011, %v1034
      %v1040 = vadd.f32 %v1012, %v1036
      %v1041 = vld [vmem:[%s5] sm:$0x3]
      %v1043 = vlaneseq
      %v1044 = vshrl.u32 %v1043, 7
      %v1045 = vsub.s32 0, %v1044
      %v1046 = vrot.slane %v1041, %v1045
      %v1047 = vlaneseq
      %v1048 = vshrl.u32 %v1047, 7
      %v1049 = vsub.s32 1, %v1048
      %v1050 = vrot.slane %v1041, %v1049
      %v1051 = vcombine.low %v1046, %v1050
      %v1053 = vadd.f32 %v1039, %v1051
      %v1054 = vadd.f32 %v1040, %v1051
      %v1055 = vmax.f32 %v1053, 0.0
      %v1056 = vmax.f32 %v1054, 0.0
      %v1057 = vmin.f32 %v1055, 6.0
      %v1058 = vmin.f32 %v1056, 6.0
      %v1062 = vunpack.c.l.s4 1983009808
      %v1063 = vunpack.c.0.s8 %v1062
      %v1064 = vlaneseq
      %v1065 = vshrl.u32 %v1064, 7
      %v1066 = vsub.s32 %v1063, %v1065
      %v1067 = vrot.slane %v1057, %v1066
      %v1069 = vunpack.c.l.s4 1983009808
      %v1070 = vunpack.c.0.s8 %v1069
      %v1071 = vlaneseq
      %v1072 = vshrl.u32 %v1071, 7
      %v1073 = vsub.s32 %v1070, %v1072
      %v1074 = vrot.slane %v1058, %v1073
      %v1075 = vcombine.low %v1067, %v1074
      %v1077 = vunpack.c.l.s4 1983009808
      %v1078 = vunpack.c.0.s8 %v1077
      %v1079 = vlaneseq
      %v1080 = vshrl.u32 %v1079, 7
      %v1081 = vsub.s32 %v1078, %v1080
      %v1082 = vrot.slane %v1075, %v1081
      %v1083 = vcombine.high %v1082, %v1082
      %v1086 = vpack.c.bf16 %v1082, %v1082
      %v1087 = vpack.c.bf16 %v1083, %v1083
      %v1088 = vld [vmem:[%s6] sm:$0xf]
      %v1089 = vld [vmem:[%s6 + $0x4] sm:$0xf]
      %v1090 = vld [vmem:[%s6 + $0x8] sm:$0xf]
      %v1091 = vld [vmem:[%s6 + $0xc] sm:$0xf]
      %v1092 = vld [vmem:[%s6 + $0x10] sm:$0xf]
      %v1093 = vld [vmem:[%s6 + $0x14] sm:$0xf]
      %v1094 = vld [vmem:[%s6 + $0x18] sm:$0xf]
      %v1095 = vld [vmem:[%s6 + $0x1c] sm:$0xf]
      %v1096 = vld [vmem:[%s6 + $0x20] sm:$0xf]
      %v1097 = vld [vmem:[%s6 + $0x24] sm:$0xf]
      %v1098 = vld [vmem:[%s6 + $0x28] sm:$0xf]
      %v1099 = vld [vmem:[%s6 + $0x2c] sm:$0xf]
      %v1100 = vld [vmem:[%s6 + $0x30] sm:$0xf]
      %v1101 = vld [vmem:[%s6 + $0x34] sm:$0xf]
      %v1102 = vld [vmem:[%s6 + $0x38] sm:$0xf]
      %v1103 = vld [vmem:[%s6 + $0x3c] sm:$0xf]
      %v1104 = vld [vmem:[%s6 + $0x40] sm:$0xf]
      %v1105 = vld [vmem:[%s6 + $0x44] sm:$0xf]
      %v1106 = vld [vmem:[%s6 + $0x48] sm:$0xf]
      %v1107 = vld [vmem:[%s6 + $0x4c] sm:$0xf]
      %v1108 = vld [vmem:[%s6 + $0x50] sm:$0xf]
      %v1109 = vld [vmem:[%s6 + $0x54] sm:$0xf]
      %v1110 = vld [vmem:[%s6 + $0x58] sm:$0xf]
      %v1111 = vld [vmem:[%s6 + $0x5c] sm:$0xf]
      %v1112 = vld [vmem:[%s6 + $0x60] sm:$0xf]
      %v1113 = vld [vmem:[%s6 + $0x64] sm:$0xf]
      %v1114 = vld [vmem:[%s6 + $0x68] sm:$0xf]
      %v1115 = vld [vmem:[%s6 + $0x6c] sm:$0xf]
      %v1116 = vld [vmem:[%s6 + $0x70] sm:$0xf]
      %v1117 = vld [vmem:[%s6 + $0x74] sm:$0xf]
      %v1118 = vld [vmem:[%s6 + $0x78] sm:$0xf]
      %v1119 = vld [vmem:[%s6 + $0x7c] sm:$0xf]
      %v1120 = vld [vmem:[%s7] sm:$0x1]
      %v1122 = vlaneseq
      %v1123 = vshrl.u32 %v1122, 7
      %v1124 = vsub.s32 0, %v1123
      %v1125 = vrot.slane %v1120, %v1124
      %v1159 = vunpack.c.l.b16 %v1088
      %v1160 = vunpack.c.l.b16 %v1089
      %v1161 = vunpack.c.l.b16 %v1090
      %v1162 = vunpack.c.l.b16 %v1091
      %v1163 = vunpack.c.l.b16 %v1092
      %v1164 = vunpack.c.l.b16 %v1093
      %v1165 = vunpack.c.l.b16 %v1094
      %v1166 = vunpack.c.l.b16 %v1095
      %v1167 = vunpack.c.l.b16 %v1096
      %v1168 = vunpack.c.l.b16 %v1097
      %v1169 = vunpack.c.l.b16 %v1098
      %v1170 = vunpack.c.l.b16 %v1099
      %v1171 = vunpack.c.l.b16 %v1100
      %v1172 = vunpack.c.l.b16 %v1101
      %v1173 = vunpack.c.l.b16 %v1102
      %v1174 = vunpack.c.l.b16 %v1103
      %v1175 = vunpack.c.l.b16 %v1104
      %v1176 = vunpack.c.l.b16 %v1105
      %v1177 = vunpack.c.l.b16 %v1106
      %v1178 = vunpack.c.l.b16 %v1107
      %v1179 = vunpack.c.l.b16 %v1108
      %v1180 = vunpack.c.l.b16 %v1109
      %v1181 = vunpack.c.l.b16 %v1110
      %v1182 = vunpack.c.l.b16 %v1111
      %v1183 = vunpack.c.l.b16 %v1112
      %v1184 = vunpack.c.l.b16 %v1113
      %v1185 = vunpack.c.l.b16 %v1114
      %v1186 = vunpack.c.l.b16 %v1115
      %v1187 = vunpack.c.l.b16 %v1116
      %v1188 = vunpack.c.l.b16 %v1117
      %v1189 = vunpack.c.l.b16 %v1118
      %v1190 = vunpack.c.l.b16 %v1119
      %v1191 = vpack.c.b16 %v1160, %v1159
      %v1192 = vpack.c.b16 %v1162, %v1161
      %v1193 = vpack.c.b16 %v1164, %v1163
      %v1194 = vpack.c.b16 %v1166, %v1165
      %v1195 = vpack.c.b16 %v1168, %v1167
      %v1196 = vpack.c.b16 %v1170, %v1169
      %v1197 = vpack.c.b16 %v1172, %v1171
      %v1198 = vpack.c.b16 %v1174, %v1173
      %v1199 = vpack.c.b16 %v1176, %v1175
      %v1200 = vpack.c.b16 %v1178, %v1177
      %v1201 = vpack.c.b16 %v1180, %v1179
      %v1202 = vpack.c.b16 %v1182, %v1181
      %v1203 = vpack.c.b16 %v1184, %v1183
      %v1204 = vpack.c.b16 %v1186, %v1185
      %v1205 = vpack.c.b16 %v1188, %v1187
      %v1206 = vpack.c.b16 %v1190, %v1189
      %1223 = vmatprep.subr.bf16.mxu0 0
      %1224 = vmatpush1.bf16.msra.mxu0 %v1198
      %1225 = vmatprep.subr.bf16.mxu0 0
      %1226 = vmatpush1.bf16.msra.mxu0 %v1197
      %1227 = vmatprep.subr.bf16.mxu0 0
      %1228 = vmatpush1.bf16.msra.mxu0 %v1196
      %1229 = vmatprep.subr.bf16.mxu0 0
      %1230 = vmatpush1.bf16.msra.mxu0 %v1195
      %1231 = vmatprep.subr.bf16.mxu0 0
      %1232 = vmatpush1.bf16.msra.mxu0 %v1194
      %1233 = vmatprep.subr.bf16.mxu0 0
      %1234 = vmatpush1.bf16.msra.mxu0 %v1193
      %1235 = vmatprep.subr.bf16.mxu0 0
      %1236 = vmatpush1.bf16.msra.mxu0 %v1192
      %1237 = vmatprep.subr.bf16.mxu0 0
      %1238 = vmatpush1.bf16.msra.mxu0 %v1191
      %1239 = vmatprep.subr.bf16.mxu0 0
      %1240 = vmatpush2.bf16.msra.mxu0 %v1206
      %1241 = vmatprep.subr.bf16.mxu0 0
      %1242 = vmatpush2.bf16.msra.mxu0 %v1205
      %1243 = vmatprep.subr.bf16.mxu0 0
      %1244 = vmatpush2.bf16.msra.mxu0 %v1204
      %1245 = vmatprep.subr.bf16.mxu0 0
      %1246 = vmatpush2.bf16.msra.mxu0 %v1203
      %1247 = vmatprep.subr.bf16.mxu0 0
      %1248 = vmatpush2.bf16.msra.mxu0 %v1202
      %1249 = vmatprep.subr.bf16.mxu0 0
      %1250 = vmatpush2.bf16.msra.mxu0 %v1201
      %1251 = vmatprep.subr.bf16.mxu0 0
      %1252 = vmatpush2.bf16.msra.mxu0 %v1200
      %1253 = vmatprep.subr.bf16.mxu0 0
      %1254 = vmatpush2.bf16.msra.mxu0 %v1199
      %1255 = vmatprep.mubr.bf16.mxu0 %v1087
      %1256 = vmatmul.mubr.bf16.gmra.mxu0 %v1086
      %v1257 = vpop.f32.mrf.mxu0
      %v1258 = vadd.f32 %v1125, %v1257
      %v1259 = vpop.f32.mrf.mxu0
      %v1260 = vpop.f32.mrf.mxu0
      %v1261 = vpop.f32.mrf.mxu0
      %1262 = vdwg.mxu0
      %v1265 = vunpack.c.l.s4 1983009808
      %v1266 = vunpack.c.0.s8 %v1265
      %v1267 = vlaneseq
      %v1268 = vshrl.u32 %v1267, 7
      %v1269 = vsub.s32 %v1266, %v1268
      %v1270 = vrot.slane %v1258, %v1269
      %v1271 = vcombine.high %v1270, %v1270
      %v1274 = vpack.c.bf16 %v1270, %v1270
      %v1275 = vpack.c.bf16 %v1271, %v1271
      %1276 = vst [vmem:[%s317] sm:$0x1] %v1274
      %1277 = vst [vmem:[%s317 + $0x1] sm:$0x1] %v1275
      %p1278 = scmp.lt.s32.totalorder %s19, 1
      %s1279 = scalar_select %p1278, %s19, 1
      %s1280 = smul.addr %s1279, 2
      %s1281 = scalar_lea.vmem %s8, %s1280
      // Predicated region
      $region53: #{_lambda_.10} parent=51 // pred_check
        %p1282 = pneg %p215
      $region54: #{_lambda_.10} parent=51 // pred_check_branch
        %1284 = sbr.rel (%p1282) target = $region56
      $region55: #{_lambda_.10} parent=51 // pred_region
        _
      $region56: #{_lambda_.10} parent=51 // pred_fallthru
        _
    $region52: #{_lambda_.10} parent=5 // pred_fallthru
      _
    %p1285 = scmp.le.s32.totalorder 2, %s14
    // Predicated region
    $region57: #{_lambda_.10} parent=5 // pred_check
      %p1286 = pneg %p1285
    $region58: #{_lambda_.10} parent=5 // pred_check_branch
      %1288 = sbr.rel (%p1286) target = $region60
    $region59: #{_lambda_.10} parent=5 // pred_region
      %s1289 = ssub.s32 %s14, 2
      // Predicated region
      $region61: #{_lambda_.10} parent=59 // pred_check
        %p1290 = pneg %p221
      $region62: #{_lambda_.10} parent=59 // pred_check_branch
        %1292 = sbr.rel (%p1290) target = $region64
      $region63: #{_lambda_.10} parent=59 // pred_region
        %p1293 = scmp.lt.s32.totalorder %s20, 1
        %s1294 = scalar_select %p1293, %s20, 1
        %s1295 = smul.addr %s1294, 2
        %s1296 = scalar_lea.vmem %s8, %s1295
      $region64: #{_lambda_.10} parent=59 // pred_fallthru
        _
    $region60: #{_lambda_.10} parent=5 // pred_fallthru
      _
  $region6: #{_lambda_.10} parent=0 // loop_footer
    %s18 = sadd.s32 1, %s14
  $region7: #{_lambda_.10} parent=0 // loop_footer_branch
    %13 = sbr.rel target = $region3
  $region8: #{_lambda_.10} parent=0 // loop_exit
    _

</llo_original>
